<compile_context>
chip_gen: v6e
topology: v6e:2x2x1
jax: 0.10.0
libtpu: 0.0.40
codegen_flags: <defaults>
</compile_context>

<pallas_src>
import math

import jax
import jax.numpy as jnp
from jax.experimental import pallas as pl
from jax.experimental.pallas import tpu as pltpu


def _pe_kernel(sin_x_ref, cos_x_ref, sin_y_ref, cos_y_ref, out_ref):
    """Reconstruct random-Fourier positional embeddings for one spatial block.

    sin_x_ref / cos_x_ref : (F, bw)  per-column sin/cos of a_x = 2*pi*g_x*x
    sin_y_ref / cos_y_ref : (bh, F)  per-row    sin/cos of a_y = 2*pi*g_y*y
    out_ref               : (2F, bh, bw) channel-major output tile
    """
    num_feats = sin_x_ref.shape[0]
    # Static Python unroll over features: static table slices and static
    # leading-axis stores; per-iteration temporaries die at the stores, and the
    # LLO scheduler can co-issue the FMAs against the store slots.
    for f in range(num_feats):
        sx = sin_x_ref[f:f + 1, :]        # (1, bw)  row vector (sublane bcast)
        cx = cos_x_ref[f:f + 1, :]
        sy = sin_y_ref[:, f:f + 1]        # (bh, 1)  column vector (lane bcast)
        cy = cos_y_ref[:, f:f + 1]
        # sin(a_x + a_y) and cos(a_x + a_y) via the angle-addition identity.
        out_ref[f] = sx * cy + cx * sy                  # channels [0, F)
        out_ref[num_feats + f] = cx * cy - sx * sy      # channels [F, 2F)


def _pick_blocks(h: int, w: int, c: int):
    """Spatial block for the (c, h, w) channel-major output.

    Keeps one f32 output block <= ~4 MiB (so the double-buffered pair fits the
    default scoped VMEM on v5e/v6e/v7x), with the last two block dims either
    full-extent or (8, 128)-aligned. Small images become a single grid step.
    """
    budget = (4 * 1024 * 1024) // (4 * c)     # spatial elements per block
    budget = max(budget, 8 * 128)             # never below one (8,128) tile

    # Lane (w) dimension: full width when it fits with >= 8 rows, else a
    # multiple-of-128 tile.
    if 8 * w <= budget or w <= 128:
        bw = w
    else:
        bw = max(128, min(512, ((budget // 8) // 128) * 128))

    # Sublane (h) dimension: fill the remaining budget, multiple of 8 (or full).
    bh = budget // bw
    if bh >= h:
        bh = h
    else:
        bh = max(8, (bh // 8) * 8)
    return bh, bw


class PositionEmbeddingRandomPallas:
    """Deterministic JAX/Pallas equivalent of PositionEmbeddingRandom."""

    def __init__(self, num_pos_feats: int = 64, scale: float = 1.0, seed: int = 0):
        self.num_pos_feats = num_pos_feats
        if scale is None or scale <= 0.0:
            scale = 1.0
        key = jax.random.PRNGKey(seed)
        self.gaussian = scale * jax.random.normal(
            key, (2, num_pos_feats), dtype=jnp.float32)

    def __call__(self, shape):
        h, w = shape
        nf = self.num_pos_feats
        c = 2 * nf

        bh, bw = _pick_blocks(h, w, c)
        grid = (pl.cdiv(h, bh), pl.cdiv(w, bw))

        # Tiny wrapper-side tables: (h + w) * F transcendentals total instead of
        # 2 * h * w * F inside the kernel (genuine work reduction, not the
        # "pre-scale in the wrapper" anti-pattern).
        two_pi = jnp.float32(2.0 * math.pi)
        xs = (jnp.arange(w, dtype=jnp.float32) + 0.5) * jnp.float32(2.0 / w) - 1.0
        ys = (jnp.arange(h, dtype=jnp.float32) + 0.5) * jnp.float32(2.0 / h) - 1.0
        gx = two_pi * self.gaussian[0]                      # (F,)
        gy = two_pi * self.gaussian[1]                      # (F,)
        ang_x = gx[:, None] * xs[None, :]                   # (F, w)
        ang_y = ys[:, None] * gy[None, :]                   # (h, F)
        sin_x, cos_x = jnp.sin(ang_x), jnp.cos(ang_x)
        sin_y, cos_y = jnp.sin(ang_y), jnp.cos(ang_y)

        # TODO(synk): if num_pos_feats is made very large (2F in the thousands)
        # the channel axis should also be tiled; for SAM's F=64 this is moot.
        return pl.pallas_call(
            _pe_kernel,
            out_shape=jax.ShapeDtypeStruct((c, h, w), jnp.float32),
            grid_spec=pltpu.PrefetchScalarGridSpec(
                num_scalar_prefetch=0,
                grid=grid,
                in_specs=[
                    pl.BlockSpec((nf, bw), lambda i, j: (0, j)),  # sin_x
                    pl.BlockSpec((nf, bw), lambda i, j: (0, j)),  # cos_x
                    pl.BlockSpec((bh, nf), lambda i, j: (i, 0)),  # sin_y
                    pl.BlockSpec((bh, nf), lambda i, j: (i, 0)),  # cos_y
                ],
                # Channel-major output written directly: no post-kernel transpose.
                out_specs=pl.BlockSpec((c, bh, bw), lambda i, j: (0, i, j)),
            ),
            compiler_params=pltpu.CompilerParams(
                dimension_semantics=("parallel", "parallel")),
        )(sin_x, cos_x, sin_y, cos_y)


def _reference(gaussian, h, w):
    """Pure-JAX reference of the same math for a correctness check."""
    y = (jnp.arange(h, dtype=jnp.float32) + 0.5) / h
    x = (jnp.arange(w, dtype=jnp.float32) + 0.5) / w
    yy, xx = jnp.meshgrid(y, x, indexing="ij")
    coords = jnp.stack([xx, yy], axis=-1)          # (h, w, 2)
    coords = 2.0 * coords - 1.0
    proj = coords @ gaussian                       # (h, w, F)
    proj = 2.0 * math.pi * proj
    pe = jnp.concatenate([jnp.sin(proj), jnp.cos(proj)], axis=-1)
    return jnp.transpose(pe, (2, 0, 1))            # (2F, h, w)


if __name__ == "__main__":
    num_pos_feats = 64
    module = PositionEmbeddingRandomPallas(num_pos_feats=num_pos_feats, seed=0)

    for (h, w) in [(16, 16), (64, 64)]:
        out = jax.block_until_ready(module((h, w)))
        assert out.shape == (2 * num_pos_feats, h, w), out.shape
        assert out.dtype == jnp.float32
        ref = _reference(module.gaussian, h, w)
        max_err = float(jnp.max(jnp.abs(out - ref)))
        assert max_err < 5e-5, max_err

    print("KERNEL_OK")
</pallas_src>

<mosaic_0001>
module attributes {stable_mosaic.version = 11 : i64} {
  func.func @_pe_kernel(%arg0: i32, %arg1: i32, %arg2: memref<64x16xf32, #tpu.memory_space<vmem>>, %arg3: memref<64x16xf32, #tpu.memory_space<vmem>>, %arg4: memref<16x64xf32, #tpu.memory_space<vmem>>, %arg5: memref<16x64xf32, #tpu.memory_space<vmem>>, %arg6: memref<128x16x16xf32, #tpu.memory_space<vmem>>) attributes {dimension_semantics = [#tpu.dimension_semantics<parallel>, #tpu.dimension_semantics<parallel>], iteration_bounds = array<i64: 1, 1>, scalar_prefetch = 0 : i64, scratch_operands = 0 : i64, tpu.core_type = #tpu.core_type<tc>, window_params = [{transform_indices = @transform_0, window_bounds = array<i64: 64, 16>}, {transform_indices = @transform_1, window_bounds = array<i64: 64, 16>}, {transform_indices = @transform_2, window_bounds = array<i64: 16, 64>}, {transform_indices = @transform_3, window_bounds = array<i64: 16, 64>}, {transform_indices = @transform_4, window_bounds = array<i64: 128, 16, 16>}]} {
    %c0 = arith.constant 0 : index
    %c0_0 = arith.constant 0 : index
    %0 = vector.load %arg2[%c0, %c0_0] : memref<64x16xf32, #tpu.memory_space<vmem>>, vector<1x16xf32>
    %c0_1 = arith.constant 0 : index
    %c0_2 = arith.constant 0 : index
    %1 = vector.load %arg3[%c0_1, %c0_2] : memref<64x16xf32, #tpu.memory_space<vmem>>, vector<1x16xf32>
    %c0_3 = arith.constant 0 : index
    %c0_4 = arith.constant 0 : index
    %2 = vector.load %arg4[%c0_3, %c0_4] : memref<16x64xf32, #tpu.memory_space<vmem>>, vector<16x1xf32>
    %c0_5 = arith.constant 0 : index
    %c0_6 = arith.constant 0 : index
    %3 = vector.load %arg5[%c0_5, %c0_6] : memref<16x64xf32, #tpu.memory_space<vmem>>, vector<16x1xf32>
    %4 = vector.broadcast %0 : vector<1x16xf32> to vector<16x16xf32>
    %5 = vector.broadcast %3 : vector<16x1xf32> to vector<16x16xf32>
    %6 = arith.mulf %4, %5 : vector<16x16xf32>
    %7 = vector.broadcast %1 : vector<1x16xf32> to vector<16x16xf32>
    %8 = vector.broadcast %2 : vector<16x1xf32> to vector<16x16xf32>
    %9 = arith.mulf %7, %8 : vector<16x16xf32>
    %10 = arith.addf %6, %9 : vector<16x16xf32>
    %c0_7 = arith.constant 0 : index
    %c0_8 = arith.constant 0 : index
    %c0_9 = arith.constant 0 : index
    %11 = vector.load %arg6[%c0_7, %c0_8, %c0_9] : memref<128x16x16xf32, #tpu.memory_space<vmem>>, vector<1x16x16xf32>
    %12 = vector.shape_cast %11 : vector<1x16x16xf32> to vector<16x16xf32>
    %13 = vector.shape_cast %10 : vector<16x16xf32> to vector<1x16x16xf32>
    tpu.vector_store %arg6[%c0_7, %c0_8, %c0_9], %13 {strides = array<i32>} : memref<128x16x16xf32, #tpu.memory_space<vmem>>, vector<1x16x16xf32>,
    %14 = vector.broadcast %1 : vector<1x16xf32> to vector<16x16xf32>
    %15 = vector.broadcast %3 : vector<16x1xf32> to vector<16x16xf32>
    %16 = arith.mulf %14, %15 : vector<16x16xf32>
    %17 = vector.broadcast %0 : vector<1x16xf32> to vector<16x16xf32>
    %18 = vector.broadcast %2 : vector<16x1xf32> to vector<16x16xf32>
    %19 = arith.mulf %17, %18 : vector<16x16xf32>
    %20 = arith.subf %16, %19 : vector<16x16xf32>
    %c64 = arith.constant 64 : index
    %c0_10 = arith.constant 0 : index
    %c0_11 = arith.constant 0 : index
    %21 = vector.load %arg6[%c64, %c0_10, %c0_11] : memref<128x16x16xf32, #tpu.memory_space<vmem>>, vector<1x16x16xf32>
    %22 = vector.shape_cast %21 : vector<1x16x16xf32> to vector<16x16xf32>
    %23 = vector.shape_cast %20 : vector<16x16xf32> to vector<1x16x16xf32>
    tpu.vector_store %arg6[%c64, %c0_10, %c0_11], %23 {strides = array<i32>} : memref<128x16x16xf32, #tpu.memory_space<vmem>>, vector<1x16x16xf32>,
    %c1 = arith.constant 1 : index
    %c0_12 = arith.constant 0 : index
    %24 = vector.load %arg2[%c1, %c0_12] : memref<64x16xf32, #tpu.memory_space<vmem>>, vector<1x16xf32>
    %c1_13 = arith.constant 1 : index
    %c0_14 = arith.constant 0 : index
    %25 = vector.load %arg3[%c1_13, %c0_14] : memref<64x16xf32, #tpu.memory_space<vmem>>, vector<1x16xf32>
    %c0_15 = arith.constant 0 : index
    %c1_16 = arith.constant 1 : index
    %26 = vector.load %arg4[%c0_15, %c1_16] : memref<16x64xf32, #tpu.memory_space<vmem>>, vector<16x1xf32>
    %c0_17 = arith.constant 0 : index
    %c1_18 = arith.constant 1 : index
    %27 = vector.load %arg5[%c0_17, %c1_18] : memref<16x64xf32, #tpu.memory_space<vmem>>, vector<16x1xf32>
    %28 = vector.broadcast %24 : vector<1x16xf32> to vector<16x16xf32>
    %29 = vector.broadcast %27 : vector<16x1xf32> to vector<16x16xf32>
    %30 = arith.mulf %28, %29 : vector<16x16xf32>
    %31 = vector.broadcast %25 : vector<1x16xf32> to vector<16x16xf32>
    %32 = vector.broadcast %26 : vector<16x1xf32> to vector<16x16xf32>
    %33 = arith.mulf %31, %32 : vector<16x16xf32>
    %34 = arith.addf %30, %33 : vector<16x16xf32>
    %c1_19 = arith.constant 1 : index
    %c0_20 = arith.constant 0 : index
    %c0_21 = arith.constant 0 : index
    %35 = vector.load %arg6[%c1_19, %c0_20, %c0_21] : memref<128x16x16xf32, #tpu.memory_space<vmem>>, vector<1x16x16xf32>
    %36 = vector.shape_cast %35 : vector<1x16x16xf32> to vector<16x16xf32>
    %37 = vector.shape_cast %34 : vector<16x16xf32> to vector<1x16x16xf32>
    tpu.vector_store %arg6[%c1_19, %c0_20, %c0_21], %37 {strides = array<i32>} : memref<128x16x16xf32, #tpu.memory_space<vmem>>, vector<1x16x16xf32>,
    %38 = vector.broadcast %25 : vector<1x16xf32> to vector<16x16xf32>
    %39 = vector.broadcast %27 : vector<16x1xf32> to vector<16x16xf32>
    %40 = arith.mulf %38, %39 : vector<16x16xf32>
    %41 = vector.broadcast %24 : vector<1x16xf32> to vector<16x16xf32>
    %42 = vector.broadcast %26 : vector<16x1xf32> to vector<16x16xf32>
    %43 = arith.mulf %41, %42 : vector<16x16xf32>
    %44 = arith.subf %40, %43 : vector<16x16xf32>
    %c65 = arith.constant 65 : index
    %c0_22 = arith.constant 0 : index
    %c0_23 = arith.constant 0 : index
    %45 = vector.load %arg6[%c65, %c0_22, %c0_23] : memref<128x16x16xf32, #tpu.memory_space<vmem>>, vector<1x16x16xf32>
    %46 = vector.shape_cast %45 : vector<1x16x16xf32> to vector<16x16xf32>
    %47 = vector.shape_cast %44 : vector<16x16xf32> to vector<1x16x16xf32>
    tpu.vector_store %arg6[%c65, %c0_22, %c0_23], %47 {strides = array<i32>} : memref<128x16x16xf32, #tpu.memory_space<vmem>>, vector<1x16x16xf32>,
    %c2 = arith.constant 2 : index
    %c0_24 = arith.constant 0 : index
    %48 = vector.load %arg2[%c2, %c0_24] : memref<64x16xf32, #tpu.memory_space<vmem>>, vector<1x16xf32>
    %c2_25 = arith.constant 2 : index
    %c0_26 = arith.constant 0 : index
    %49 = vector.load %arg3[%c2_25, %c0_26] : memref<64x16xf32, #tpu.memory_space<vmem>>, vector<1x16xf32>
    %c0_27 = arith.constant 0 : index
    %c2_28 = arith.constant 2 : index
    %50 = vector.load %arg4[%c0_27, %c2_28] : memref<16x64xf32, #tpu.memory_space<vmem>>, vector<16x1xf32>
    %c0_29 = arith.constant 0 : index
    %c2_30 = arith.constant 2 : index
    %51 = vector.load %arg5[%c0_29, %c2_30] : memref<16x64xf32, #tpu.memory_space<vmem>>, vector<16x1xf32>
    %52 = vector.broadcast %48 : vector<1x16xf32> to vector<16x16xf32>
    %53 = vector.broadcast %51 : vector<16x1xf32> to vector<16x16xf32>
    %54 = arith.mulf %52, %53 : vector<16x16xf32>
    %55 = vector.broadcast %49 : vector<1x16xf32> to vector<16x16xf32>
    %56 = vector.broadcast %50 : vector<16x1xf32> to vector<16x16xf32>
    %57 = arith.mulf %55, %56 : vector<16x16xf32>
    %58 = arith.addf %54, %57 : vector<16x16xf32>
    %c2_31 = arith.constant 2 : index
    %c0_32 = arith.constant 0 : index
    %c0_33 = arith.constant 0 : index
    %59 = vector.load %arg6[%c2_31, %c0_32, %c0_33] : memref<128x16x16xf32, #tpu.memory_space<vmem>>, vector<1x16x16xf32>
    %60 = vector.shape_cast %59 : vector<1x16x16xf32> to vector<16x16xf32>
    %61 = vector.shape_cast %58 : vector<16x16xf32> to vector<1x16x16xf32>
    tpu.vector_store %arg6[%c2_31, %c0_32, %c0_33], %61 {strides = array<i32>} : memref<128x16x16xf32, #tpu.memory_space<vmem>>, vector<1x16x16xf32>,
    %62 = vector.broadcast %49 : vector<1x16xf32> to vector<16x16xf32>
    %63 = vector.broadcast %51 : vector<16x1xf32> to vector<16x16xf32>
    %64 = arith.mulf %62, %63 : vector<16x16xf32>
    %65 = vector.broadcast %48 : vector<1x16xf32> to vector<16x16xf32>
    %66 = vector.broadcast %50 : vector<16x1xf32> to vector<16x16xf32>
    %67 = arith.mulf %65, %66 : vector<16x16xf32>
    %68 = arith.subf %64, %67 : vector<16x16xf32>
    %c66 = arith.constant 66 : index
    %c0_34 = arith.constant 0 : index
    %c0_35 = arith.constant 0 : index
    %69 = vector.load %arg6[%c66, %c0_34, %c0_35] : memref<128x16x16xf32, #tpu.memory_space<vmem>>, vector<1x16x16xf32>
    %70 = vector.shape_cast %69 : vector<1x16x16xf32> to vector<16x16xf32>
    %71 = vector.shape_cast %68 : vector<16x16xf32> to vector<1x16x16xf32>
    tpu.vector_store %arg6[%c66, %c0_34, %c0_35], %71 {strides = array<i32>} : memref<128x16x16xf32, #tpu.memory_space<vmem>>, vector<1x16x16xf32>,
    %c3 = arith.constant 3 : index
    %c0_36 = arith.constant 0 : index
    %72 = vector.load %arg2[%c3, %c0_36] : memref<64x16xf32, #tpu.memory_space<vmem>>, vector<1x16xf32>
    %c3_37 = arith.constant 3 : index
    %c0_38 = arith.constant 0 : index
    %73 = vector.load %arg3[%c3_37, %c0_38] : memref<64x16xf32, #tpu.memory_space<vmem>>, vector<1x16xf32>
    %c0_39 = arith.constant 0 : index
    %c3_40 = arith.constant 3 : index
    %74 = vector.load %arg4[%c0_39, %c3_40] : memref<16x64xf32, #tpu.memory_space<vmem>>, vector<16x1xf32>
    %c0_41 = arith.constant 0 : index
    %c3_42 = arith.constant 3 : index
    %75 = vector.load %arg5[%c0_41, %c3_42] : memref<16x64xf32, #tpu.memory_space<vmem>>, vector<16x1xf32>
    %76 = vector.broadcast %72 : vector<1x16xf32> to vector<16x16xf32>
    %77 = vector.broadcast %75 : vector<16x1xf32> to vector<16x16xf32>
    %78 = arith.mulf %76, %77 : vector<16x16xf32>
    %79 = vector.broadcast %73 : vector<1x16xf32> to vector<16x16xf32>
    %80 = vector.broadcast %74 : vector<16x1xf32> to vector<16x16xf32>
    %81 = arith.mulf %79, %80 : vector<16x16xf32>
    %82 = arith.addf %78, %81 : vector<16x16xf32>
    %c3_43 = arith.constant 3 : index
    %c0_44 = arith.constant 0 : index
    %c0_45 = arith.constant 0 : index
    %83 = vector.load %arg6[%c3_43, %c0_44, %c0_45] : memref<128x16x16xf32, #tpu.memory_space<vmem>>, vector<1x16x16xf32>
    %84 = vector.shape_cast %83 : vector<1x16x16xf32> to vector<16x16xf32>
    %85 = vector.shape_cast %82 : vector<16x16xf32> to vector<1x16x16xf32>
    tpu.vector_store %arg6[%c3_43, %c0_44, %c0_45], %85 {strides = array<i32>} : memref<128x16x16xf32, #tpu.memory_space<vmem>>, vector<1x16x16xf32>,
    %86 = vector.broadcast %73 : vector<1x16xf32> to vector<16x16xf32>
    %87 = vector.broadcast %75 : vector<16x1xf32> to vector<16x16xf32>
    %88 = arith.mulf %86, %87 : vector<16x16xf32>
    %89 = vector.broadcast %72 : vector<1x16xf32> to vector<16x16xf32>
    %90 = vector.broadcast %74 : vector<16x1xf32> to vector<16x16xf32>
    %91 = arith.mulf %89, %90 : vector<16x16xf32>
    %92 = arith.subf %88, %91 : vector<16x16xf32>
    %c67 = arith.constant 67 : index
    %c0_46 = arith.constant 0 : index
    %c0_47 = arith.constant 0 : index
    %93 = vector.load %arg6[%c67, %c0_46, %c0_47] : memref<128x16x16xf32, #tpu.memory_space<vmem>>, vector<1x16x16xf32>
    %94 = vector.shape_cast %93 : vector<1x16x16xf32> to vector<16x16xf32>
    %95 = vector.shape_cast %92 : vector<16x16xf32> to vector<1x16x16xf32>
    tpu.vector_store %arg6[%c67, %c0_46, %c0_47], %95 {strides = array<i32>} : memref<128x16x16xf32, #tpu.memory_space<vmem>>, vector<1x16x16xf32>,
    %c4 = arith.constant 4 : index
    %c0_48 = arith.constant 0 : index
    %96 = vector.load %arg2[%c4, %c0_48] : memref<64x16xf32, #tpu.memory_space<vmem>>, vector<1x16xf32>
    %c4_49 = arith.constant 4 : index
    %c0_50 = arith.constant 0 : index
    %97 = vector.load %arg3[%c4_49, %c0_50] : memref<64x16xf32, #tpu.memory_space<vmem>>, vector<1x16xf32>
    %c0_51 = arith.constant 0 : index
    %c4_52 = arith.constant 4 : index
    %98 = vector.load %arg4[%c0_51, %c4_52] : memref<16x64xf32, #tpu.memory_space<vmem>>, vector<16x1xf32>
    %c0_53 = arith.constant 0 : index
    %c4_54 = arith.constant 4 : index
    %99 = vector.load %arg5[%c0_53, %c4_54] : memref<16x64xf32, #tpu.memory_space<vmem>>, vector<16x1xf32>
    %100 = vector.broadcast %96 : vector<1x16xf32> to vector<16x16xf32>
    %101 = vector.broadcast %99 : vector<16x1xf32> to vector<16x16xf32>
    %102 = arith.mulf %100, %101 : vector<16x16xf32>
    %103 = vector.broadcast %97 : vector<1x16xf32> to vector<16x16xf32>
    %104 = vector.broadcast %98 : vector<16x1xf32> to vector<16x16xf32>
    %105 = arith.mulf %103, %104 : vector<16x16xf32>
    %106 = arith.addf %102, %105 : vector<16x16xf32>
    %c4_55 = arith.constant 4 : index
    %c0_56 = arith.constant 0 : index
    %c0_57 = arith.constant 0 : index
    %107 = vector.load %arg6[%c4_55, %c0_56, %c0_57] : memref<128x16x16xf32, #tpu.memory_space<vmem>>, vector<1x16x16xf32>
    %108 = vector.shape_cast %107 : vector<1x16x16xf32> to vector<16x16xf32>
    %109 = vector.shape_cast %106 : vector<16x16xf32> to vector<1x16x16xf32>
    tpu.vector_store %arg6[%c4_55, %c0_56, %c0_57], %109 {strides = array<i32>} : memref<128x16x16xf32, #tpu.memory_space<vmem>>, vector<1x16x16xf32>,
    %110 = vector.broadcast %97 : vector<1x16xf32> to vector<16x16xf32>
    %111 = vector.broadcast %99 : vector<16x1xf32> to vector<16x16xf32>
    %112 = arith.mulf %110, %111 : vector<16x16xf32>
    %113 = vector.broadcast %96 : vector<1x16xf32> to vector<16x16xf32>
    %114 = vector.broadcast %98 : vector<16x1xf32> to vector<16x16xf32>
    %115 = arith.mulf %113, %114 : vector<16x16xf32>
    %116 = arith.subf %112, %115 : vector<16x16xf32>
    %c68 = arith.constant 68 : index
    %c0_58 = arith.constant 0 : index
    %c0_59 = arith.constant 0 : index
    %117 = vector.load %arg6[%c68, %c0_58, %c0_59] : memref<128x16x16xf32, #tpu.memory_space<vmem>>, vector<1x16x16xf32>
    %118 = vector.shape_cast %117 : vector<1x16x16xf32> to vector<16x16xf32>
    %119 = vector.shape_cast %116 : vector<16x16xf32> to vector<1x16x16xf32>
    tpu.vector_store %arg6[%c68, %c0_58, %c0_59], %119 {strides = array<i32>} : memref<128x16x16xf32, #tpu.memory_space<vmem>>, vector<1x16x16xf32>,
    %c5 = arith.constant 5 : index
    %c0_60 = arith.constant 0 : index
    %120 = vector.load %arg2[%c5, %c0_60] : memref<64x16xf32, #tpu.memory_space<vmem>>, vector<1x16xf32>
    %c5_61 = arith.constant 5 : index
    %c0_62 = arith.constant 0 : index
    %121 = vector.load %arg3[%c5_61, %c0_62] : memref<64x16xf32, #tpu.memory_space<vmem>>, vector<1x16xf32>
    %c0_63 = arith.constant 0 : index
    %c5_64 = arith.constant 5 : index
    %122 = vector.load %arg4[%c0_63, %c5_64] : memref<16x64xf32, #tpu.memory_space<vmem>>, vector<16x1xf32>
    %c0_65 = arith.constant 0 : index
    %c5_66 = arith.constant 5 : index
    %123 = vector.load %arg5[%c0_65, %c5_66] : memref<16x64xf32, #tpu.memory_space<vmem>>, vector<16x1xf32>
    %124 = vector.broadcast %120 : vector<1x16xf32> to vector<16x16xf32>
    %125 = vector.broadcast %123 : vector<16x1xf32> to vector<16x16xf32>
    %126 = arith.mulf %124, %125 : vector<16x16xf32>
    %127 = vector.broadcast %121 : vector<1x16xf32> to vector<16x16xf32>
    %128 = vector.broadcast %122 : vector<16x1xf32> to vector<16x16xf32>
    %129 = arith.mulf %127, %128 : vector<16x16xf32>
    %130 = arith.addf %126, %129 : vector<16x16xf32>
    %c5_67 = arith.constant 5 : index
    %c0_68 = arith.constant 0 : index
    %c0_69 = arith.constant 0 : index
    %131 = vector.load %arg6[%c5_67, %c0_68, %c0_69] : memref<128x16x16xf32, #tpu.memory_space<vmem>>, vector<1x16x16xf32>
    %132 = vector.shape_cast %131 : vector<1x16x16xf32> to vector<16x16xf32>
    %133 = vector.shape_cast %130 : vector<16x16xf32> to vector<1x16x16xf32>
    tpu.vector_store %arg6[%c5_67, %c0_68, %c0_69], %133 {strides = array<i32>} : memref<128x16x16xf32, #tpu.memory_space<vmem>>, vector<1x16x16xf32>,
    %134 = vector.broadcast %121 : vector<1x16xf32> to vector<16x16xf32>
    %135 = vector.broadcast %123 : vector<16x1xf32> to vector<16x16xf32>
    %136 = arith.mulf %134, %135 : vector<16x16xf32>
    %137 = vector.broadcast %120 : vector<1x16xf32> to vector<16x16xf32>
    %138 = vector.broadcast %122 : vector<16x1xf32> to vector<16x16xf32>
    %139 = arith.mulf %137, %138 : vector<16x16xf32>
    %140 = arith.subf %136, %139 : vector<16x16xf32>
    %c69 = arith.constant 69 : index
    %c0_70 = arith.constant 0 : index
    %c0_71 = arith.constant 0 : index
    %141 = vector.load %arg6[%c69, %c0_70, %c0_71] : memref<128x16x16xf32, #tpu.memory_space<vmem>>, vector<1x16x16xf32>
    %142 = vector.shape_cast %141 : vector<1x16x16xf32> to vector<16x16xf32>
    %143 = vector.shape_cast %140 : vector<16x16xf32> to vector<1x16x16xf32>
    tpu.vector_store %arg6[%c69, %c0_70, %c0_71], %143 {strides = array<i32>} : memref<128x16x16xf32, #tpu.memory_space<vmem>>, vector<1x16x16xf32>,
    %c6 = arith.constant 6 : index
    %c0_72 = arith.constant 0 : index
    %144 = vector.load %arg2[%c6, %c0_72] : memref<64x16xf32, #tpu.memory_space<vmem>>, vector<1x16xf32>
    %c6_73 = arith.constant 6 : index
    %c0_74 = arith.constant 0 : index
    %145 = vector.load %arg3[%c6_73, %c0_74] : memref<64x16xf32, #tpu.memory_space<vmem>>, vector<1x16xf32>
    %c0_75 = arith.constant 0 : index
    %c6_76 = arith.constant 6 : index
    %146 = vector.load %arg4[%c0_75, %c6_76] : memref<16x64xf32, #tpu.memory_space<vmem>>, vector<16x1xf32>
    %c0_77 = arith.constant 0 : index
    %c6_78 = arith.constant 6 : index
    %147 = vector.load %arg5[%c0_77, %c6_78] : memref<16x64xf32, #tpu.memory_space<vmem>>, vector<16x1xf32>
    %148 = vector.broadcast %144 : vector<1x16xf32> to vector<16x16xf32>
    %149 = vector.broadcast %147 : vector<16x1xf32> to vector<16x16xf32>
    %150 = arith.mulf %148, %149 : vector<16x16xf32>
    %151 = vector.broadcast %145 : vector<1x16xf32> to vector<16x16xf32>
    %152 = vector.broadcast %146 : vector<16x1xf32> to vector<16x16xf32>
    %153 = arith.mulf %151, %152 : vector<16x16xf32>
    %154 = arith.addf %150, %153 : vector<16x16xf32>
    %c6_79 = arith.constant 6 : index
    %c0_80 = arith.constant 0 : index
    %c0_81 = arith.constant 0 : index
    %155 = vector.load %arg6[%c6_79, %c0_80, %c0_81] : memref<128x16x16xf32, #tpu.memory_space<vmem>>, vector<1x16x16xf32>
    %156 = vector.shape_cast %155 : vector<1x16x16xf32> to vector<16x16xf32>
    %157 = vector.shape_cast %154 : vector<16x16xf32> to vector<1x16x16xf32>
    tpu.vector_store %arg6[%c6_79, %c0_80, %c0_81], %157 {strides = array<i32>} : memref<128x16x16xf32, #tpu.memory_space<vmem>>, vector<1x16x16xf32>,
    %158 = vector.broadcast %145 : vector<1x16xf32> to vector<16x16xf32>
    %159 = vector.broadcast %147 : vector<16x1xf32> to vector<16x16xf32>
    %160 = arith.mulf %158, %159 : vector<16x16xf32>
    %161 = vector.broadcast %144 : vector<1x16xf32> to vector<16x16xf32>
    %162 = vector.broadcast %146 : vector<16x1xf32> to vector<16x16xf32>
    %163 = arith.mulf %161, %162 : vector<16x16xf32>
    %164 = arith.subf %160, %163 : vector<16x16xf32>
    %c70 = arith.constant 70 : index
    %c0_82 = arith.constant 0 : index
    %c0_83 = arith.constant 0 : index
    %165 = vector.load %arg6[%c70, %c0_82, %c0_83] : memref<128x16x16xf32, #tpu.memory_space<vmem>>, vector<1x16x16xf32>
    %166 = vector.shape_cast %165 : vector<1x16x16xf32> to vector<16x16xf32>
    %167 = vector.shape_cast %164 : vector<16x16xf32> to vector<1x16x16xf32>
    tpu.vector_store %arg6[%c70, %c0_82, %c0_83], %167 {strides = array<i32>} : memref<128x16x16xf32, #tpu.memory_space<vmem>>, vector<1x16x16xf32>,
    %c7 = arith.constant 7 : index
    %c0_84 = arith.constant 0 : index
    %168 = vector.load %arg2[%c7, %c0_84] : memref<64x16xf32, #tpu.memory_space<vmem>>, vector<1x16xf32>
    %c7_85 = arith.constant 7 : index
    %c0_86 = arith.constant 0 : index
    %169 = vector.load %arg3[%c7_85, %c0_86] : memref<64x16xf32, #tpu.memory_space<vmem>>, vector<1x16xf32>
    %c0_87 = arith.constant 0 : index
    %c7_88 = arith.constant 7 : index
    %170 = vector.load %arg4[%c0_87, %c7_88] : memref<16x64xf32, #tpu.memory_space<vmem>>, vector<16x1xf32>
    %c0_89 = arith.constant 0 : index
    %c7_90 = arith.constant 7 : index
    %171 = vector.load %arg5[%c0_89, %c7_90] : memref<16x64xf32, #tpu.memory_space<vmem>>, vector<16x1xf32>
    %172 = vector.broadcast %168 : vector<1x16xf32> to vector<16x16xf32>
    %173 = vector.broadcast %171 : vector<16x1xf32> to vector<16x16xf32>
    %174 = arith.mulf %172, %173 : vector<16x16xf32>
    %175 = vector.broadcast %169 : vector<1x16xf32> to vector<16x16xf32>
    %176 = vector.broadcast %170 : vector<16x1xf32> to vector<16x16xf32>
    %177 = arith.mulf %175, %176 : vector<16x16xf32>
    %178 = arith.addf %174, %177 : vector<16x16xf32>
    %c7_91 = arith.constant 7 : index
    %c0_92 = arith.constant 0 : index
    %c0_93 = arith.constant 0 : index
    %179 = vector.load %arg6[%c7_91, %c0_92, %c0_93] : memref<128x16x16xf32, #tpu.memory_space<vmem>>, vector<1x16x16xf32>
    %180 = vector.shape_cast %179 : vector<1x16x16xf32> to vector<16x16xf32>
    %181 = vector.shape_cast %178 : vector<16x16xf32> to vector<1x16x16xf32>
    tpu.vector_store %arg6[%c7_91, %c0_92, %c0_93], %181 {strides = array<i32>} : memref<128x16x16xf32, #tpu.memory_space<vmem>>, vector<1x16x16xf32>,
    %182 = vector.broadcast %169 : vector<1x16xf32> to vector<16x16xf32>
    %183 = vector.broadcast %171 : vector<16x1xf32> to vector<16x16xf32>
    %184 = arith.mulf %182, %183 : vector<16x16xf32>
    %185 = vector.broadcast %168 : vector<1x16xf32> to vector<16x16xf32>
    %186 = vector.broadcast %170 : vector<16x1xf32> to vector<16x16xf32>
    %187 = arith.mulf %185, %186 : vector<16x16xf32>
    %188 = arith.subf %184, %187 : vector<16x16xf32>
    %c71 = arith.constant 71 : index
    %c0_94 = arith.constant 0 : index
    %c0_95 = arith.constant 0 : index
    %189 = vector.load %arg6[%c71, %c0_94, %c0_95] : memref<128x16x16xf32, #tpu.memory_space<vmem>>, vector<1x16x16xf32>
    %190 = vector.shape_cast %189 : vector<1x16x16xf32> to vector<16x16xf32>
    %191 = vector.shape_cast %188 : vector<16x16xf32> to vector<1x16x16xf32>
    tpu.vector_store %arg6[%c71, %c0_94, %c0_95], %191 {strides = array<i32>} : memref<128x16x16xf32, #tpu.memory_space<vmem>>, vector<1x16x16xf32>,
    %c8 = arith.constant 8 : index
    %c0_96 = arith.constant 0 : index
    %192 = vector.load %arg2[%c8, %c0_96] : memref<64x16xf32, #tpu.memory_space<vmem>>, vector<1x16xf32>
    %c8_97 = arith.constant 8 : index
    %c0_98 = arith.constant 0 : index
    %193 = vector.load %arg3[%c8_97, %c0_98] : memref<64x16xf32, #tpu.memory_space<vmem>>, vector<1x16xf32>
    %c0_99 = arith.constant 0 : index
    %c8_100 = arith.constant 8 : index
    %194 = vector.load %arg4[%c0_99, %c8_100] : memref<16x64xf32, #tpu.memory_space<vmem>>, vector<16x1xf32>
    %c0_101 = arith.constant 0 : index
    %c8_102 = arith.constant 8 : index
    %195 = vector.load %arg5[%c0_101, %c8_102] : memref<16x64xf32, #tpu.memory_space<vmem>>, vector<16x1xf32>
    %196 = vector.broadcast %192 : vector<1x16xf32> to vector<16x16xf32>
    %197 = vector.broadcast %195 : vector<16x1xf32> to vector<16x16xf32>
    %198 = arith.mulf %196, %197 : vector<16x16xf32>
    %199 = vector.broadcast %193 : vector<1x16xf32> to vector<16x16xf32>
    %200 = vector.broadcast %194 : vector<16x1xf32> to vector<16x16xf32>
    %201 = arith.mulf %199, %200 : vector<16x16xf32>
    %202 = arith.addf %198, %201 : vector<16x16xf32>
    %c8_103 = arith.constant 8 : index
    %c0_104 = arith.constant 0 : index
    %c0_105 = arith.constant 0 : index
    %203 = vector.load %arg6[%c8_103, %c0_104, %c0_105] : memref<128x16x16xf32, #tpu.memory_space<vmem>>, vector<1x16x16xf32>
    %204 = vector.shape_cast %203 : vector<1x16x16xf32> to vector<16x16xf32>
    %205 = vector.shape_cast %202 : vector<16x16xf32> to vector<1x16x16xf32>
    tpu.vector_store %arg6[%c8_103, %c0_104, %c0_105], %205 {strides = array<i32>} : memref<128x16x16xf32, #tpu.memory_space<vmem>>, vector<1x16x16xf32>,
    %206 = vector.broadcast %193 : vector<1x16xf32> to vector<16x16xf32>
    %207 = vector.broadcast %195 : vector<16x1xf32> to vector<16x16xf32>
    %208 = arith.mulf %206, %207 : vector<16x16xf32>
    %209 = vector.broadcast %192 : vector<1x16xf32> to vector<16x16xf32>
    %210 = vector.broadcast %194 : vector<16x1xf32> to vector<16x16xf32>
    %211 = arith.mulf %209, %210 : vector<16x16xf32>
    %212 = arith.subf %208, %211 : vector<16x16xf32>
    %c72 = arith.constant 72 : index
    %c0_106 = arith.constant 0 : index
    %c0_107 = arith.constant 0 : index
    %213 = vector.load %arg6[%c72, %c0_106, %c0_107] : memref<128x16x16xf32, #tpu.memory_space<vmem>>, vector<1x16x16xf32>
    %214 = vector.shape_cast %213 : vector<1x16x16xf32> to vector<16x16xf32>
    %215 = vector.shape_cast %212 : vector<16x16xf32> to vector<1x16x16xf32>
    tpu.vector_store %arg6[%c72, %c0_106, %c0_107], %215 {strides = array<i32>} : memref<128x16x16xf32, #tpu.memory_space<vmem>>, vector<1x16x16xf32>,
    %c9 = arith.constant 9 : index
    %c0_108 = arith.constant 0 : index
    %216 = vector.load %arg2[%c9, %c0_108] : memref<64x16xf32, #tpu.memory_space<vmem>>, vector<1x16xf32>
    %c9_109 = arith.constant 9 : index
    %c0_110 = arith.constant 0 : index
    %217 = vector.load %arg3[%c9_109, %c0_110] : memref<64x16xf32, #tpu.memory_space<vmem>>, vector<1x16xf32>
    %c0_111 = arith.constant 0 : index
    %c9_112 = arith.constant 9 : index
    %218 = vector.load %arg4[%c0_111, %c9_112] : memref<16x64xf32, #tpu.memory_space<vmem>>, vector<16x1xf32>
    %c0_113 = arith.constant 0 : index
    %c9_114 = arith.constant 9 : index
    %219 = vector.load %arg5[%c0_113, %c9_114] : memref<16x64xf32, #tpu.memory_space<vmem>>, vector<16x1xf32>
    %220 = vector.broadcast %216 : vector<1x16xf32> to vector<16x16xf32>
    %221 = vector.broadcast %219 : vector<16x1xf32> to vector<16x16xf32>
    %222 = arith.mulf %220, %221 : vector<16x16xf32>
    %223 = vector.broadcast %217 : vector<1x16xf32> to vector<16x16xf32>
    %224 = vector.broadcast %218 : vector<16x1xf32> to vector<16x16xf32>
    %225 = arith.mulf %223, %224 : vector<16x16xf32>
    %226 = arith.addf %222, %225 : vector<16x16xf32>
    %c9_115 = arith.constant 9 : index
    %c0_116 = arith.constant 0 : index
    %c0_117 = arith.constant 0 : index
    %227 = vector.load %arg6[%c9_115, %c0_116, %c0_117] : memref<128x16x16xf32, #tpu.memory_space<vmem>>, vector<1x16x16xf32>
    %228 = vector.shape_cast %227 : vector<1x16x16xf32> to vector<16x16xf32>
    %229 = vector.shape_cast %226 : vector<16x16xf32> to vector<1x16x16xf32>
    tpu.vector_store %arg6[%c9_115, %c0_116, %c0_117], %229 {strides = array<i32>} : memref<128x16x16xf32, #tpu.memory_space<vmem>>, vector<1x16x16xf32>,
    %230 = vector.broadcast %217 : vector<1x16xf32> to vector<16x16xf32>
    %231 = vector.broadcast %219 : vector<16x1xf32> to vector<16x16xf32>
    %232 = arith.mulf %230, %231 : vector<16x16xf32>
    %233 = vector.broadcast %216 : vector<1x16xf32> to vector<16x16xf32>
    %234 = vector.broadcast %218 : vector<16x1xf32> to vector<16x16xf32>
    %235 = arith.mulf %233, %234 : vector<16x16xf32>
    %236 = arith.subf %232, %235 : vector<16x16xf32>
    %c73 = arith.constant 73 : index
    %c0_118 = arith.constant 0 : index
    %c0_119 = arith.constant 0 : index
    %237 = vector.load %arg6[%c73, %c0_118, %c0_119] : memref<128x16x16xf32, #tpu.memory_space<vmem>>, vector<1x16x16xf32>
    %238 = vector.shape_cast %237 : vector<1x16x16xf32> to vector<16x16xf32>
    %239 = vector.shape_cast %236 : vector<16x16xf32> to vector<1x16x16xf32>
    tpu.vector_store %arg6[%c73, %c0_118, %c0_119], %239 {strides = array<i32>} : memref<128x16x16xf32, #tpu.memory_space<vmem>>, vector<1x16x16xf32>,
    %c10 = arith.constant 10 : index
    %c0_120 = arith.constant 0 : index
    %240 = vector.load %arg2[%c10, %c0_120] : memref<64x16xf32, #tpu.memory_space<vmem>>, vector<1x16xf32>
    %c10_121 = arith.constant 10 : index
    %c0_122 = arith.constant 0 : index
    %241 = vector.load %arg3[%c10_121, %c0_122] : memref<64x16xf32, #tpu.memory_space<vmem>>, vector<1x16xf32>
    %c0_123 = arith.constant 0 : index
    %c10_124 = arith.constant 10 : index
    %242 = vector.load %arg4[%c0_123, %c10_124] : memref<16x64xf32, #tpu.memory_space<vmem>>, vector<16x1xf32>
    %c0_125 = arith.constant 0 : index
    %c10_126 = arith.constant 10 : index
    %243 = vector.load %arg5[%c0_125, %c10_126] : memref<16x64xf32, #tpu.memory_space<vmem>>, vector<16x1xf32>
    %244 = vector.broadcast %240 : vector<1x16xf32> to vector<16x16xf32>
    %245 = vector.broadcast %243 : vector<16x1xf32> to vector<16x16xf32>
    %246 = arith.mulf %244, %245 : vector<16x16xf32>
    %247 = vector.broadcast %241 : vector<1x16xf32> to vector<16x16xf32>
    %248 = vector.broadcast %242 : vector<16x1xf32> to vector<16x16xf32>
    %249 = arith.mulf %247, %248 : vector<16x16xf32>
    %250 = arith.addf %246, %249 : vector<16x16xf32>
    %c10_127 = arith.constant 10 : index
    %c0_128 = arith.constant 0 : index
    %c0_129 = arith.constant 0 : index
    %251 = vector.load %arg6[%c10_127, %c0_128, %c0_129] : memref<128x16x16xf32, #tpu.memory_space<vmem>>, vector<1x16x16xf32>
    %252 = vector.shape_cast %251 : vector<1x16x16xf32> to vector<16x16xf32>
    %253 = vector.shape_cast %250 : vector<16x16xf32> to vector<1x16x16xf32>
    tpu.vector_store %arg6[%c10_127, %c0_128, %c0_129], %253 {strides = array<i32>} : memref<128x16x16xf32, #tpu.memory_space<vmem>>, vector<1x16x16xf32>,
    %254 = vector.broadcast %241 : vector<1x16xf32> to vector<16x16xf32>
    %255 = vector.broadcast %243 : vector<16x1xf32> to vector<16x16xf32>
    %256 = arith.mulf %254, %255 : vector<16x16xf32>
    %257 = vector.broadcast %240 : vector<1x16xf32> to vector<16x16xf32>
    %258 = vector.broadcast %242 : vector<16x1xf32> to vector<16x16xf32>
    %259 = arith.mulf %257, %258 : vector<16x16xf32>
    %260 = arith.subf %256, %259 : vector<16x16xf32>
    %c74 = arith.constant 74 : index
    %c0_130 = arith.constant 0 : index
    %c0_131 = arith.constant 0 : index
    %261 = vector.load %arg6[%c74, %c0_130, %c0_131] : memref<128x16x16xf32, #tpu.memory_space<vmem>>, vector<1x16x16xf32>
    %262 = vector.shape_cast %261 : vector<1x16x16xf32> to vector<16x16xf32>
    %263 = vector.shape_cast %260 : vector<16x16xf32> to vector<1x16x16xf32>
    tpu.vector_store %arg6[%c74, %c0_130, %c0_131], %263 {strides = array<i32>} : memref<128x16x16xf32, #tpu.memory_space<vmem>>, vector<1x16x16xf32>,
    %c11 = arith.constant 11 : index
    %c0_132 = arith.constant 0 : index
    %264 = vector.load %arg2[%c11, %c0_132] : memref<64x16xf32, #tpu.memory_space<vmem>>, vector<1x16xf32>
    %c11_133 = arith.constant 11 : index
    %c0_134 = arith.constant 0 : index
    %265 = vector.load %arg3[%c11_133, %c0_134] : memref<64x16xf32, #tpu.memory_space<vmem>>, vector<1x16xf32>
    %c0_135 = arith.constant 0 : index
    %c11_136 = arith.constant 11 : index
    %266 = vector.load %arg4[%c0_135, %c11_136] : memref<16x64xf32, #tpu.memory_space<vmem>>, vector<16x1xf32>
    %c0_137 = arith.constant 0 : index
    %c11_138 = arith.constant 11 : index
    %267 = vector.load %arg5[%c0_137, %c11_138] : memref<16x64xf32, #tpu.memory_space<vmem>>, vector<16x1xf32>
    %268 = vector.broadcast %264 : vector<1x16xf32> to vector<16x16xf32>
    %269 = vector.broadcast %267 : vector<16x1xf32> to vector<16x16xf32>
    %270 = arith.mulf %268, %269 : vector<16x16xf32>
    %271 = vector.broadcast %265 : vector<1x16xf32> to vector<16x16xf32>
    %272 = vector.broadcast %266 : vector<16x1xf32> to vector<16x16xf32>
    %273 = arith.mulf %271, %272 : vector<16x16xf32>
    %274 = arith.addf %270, %273 : vector<16x16xf32>
    %c11_139 = arith.constant 11 : index
    %c0_140 = arith.constant 0 : index
    %c0_141 = arith.constant 0 : index
    %275 = vector.load %arg6[%c11_139, %c0_140, %c0_141] : memref<128x16x16xf32, #tpu.memory_space<vmem>>, vector<1x16x16xf32>
    %276 = vector.shape_cast %275 : vector<1x16x16xf32> to vector<16x16xf32>
    %277 = vector.shape_cast %274 : vector<16x16xf32> to vector<1x16x16xf32>
    tpu.vector_store %arg6[%c11_139, %c0_140, %c0_141], %277 {strides = array<i32>} : memref<128x16x16xf32, #tpu.memory_space<vmem>>, vector<1x16x16xf32>,
    %278 = vector.broadcast %265 : vector<1x16xf32> to vector<16x16xf32>
    %279 = vector.broadcast %267 : vector<16x1xf32> to vector<16x16xf32>
    %280 = arith.mulf %278, %279 : vector<16x16xf32>
    %281 = vector.broadcast %264 : vector<1x16xf32> to vector<16x16xf32>
    %282 = vector.broadcast %266 : vector<16x1xf32> to vector<16x16xf32>
    %283 = arith.mulf %281, %282 : vector<16x16xf32>
    %284 = arith.subf %280, %283 : vector<16x16xf32>
    %c75 = arith.constant 75 : index
    %c0_142 = arith.constant 0 : index
    %c0_143 = arith.constant 0 : index
    %285 = vector.load %arg6[%c75, %c0_142, %c0_143] : memref<128x16x16xf32, #tpu.memory_space<vmem>>, vector<1x16x16xf32>
    %286 = vector.shape_cast %285 : vector<1x16x16xf32> to vector<16x16xf32>
    %287 = vector.shape_cast %284 : vector<16x16xf32> to vector<1x16x16xf32>
    tpu.vector_store %arg6[%c75, %c0_142, %c0_143], %287 {strides = array<i32>} : memref<128x16x16xf32, #tpu.memory_space<vmem>>, vector<1x16x16xf32>,
    %c12 = arith.constant 12 : index
    %c0_144 = arith.constant 0 : index
    %288 = vector.load %arg2[%c12, %c0_144] : memref<64x16xf32, #tpu.memory_space<vmem>>, vector<1x16xf32>
    %c12_145 = arith.constant 12 : index
    %c0_146 = arith.constant 0 : index
    %289 = vector.load %arg3[%c12_145, %c0_146] : memref<64x16xf32, #tpu.memory_space<vmem>>, vector<1x16xf32>
    %c0_147 = arith.constant 0 : index
    %c12_148 = arith.constant 12 : index
    %290 = vector.load %arg4[%c0_147, %c12_148] : memref<16x64xf32, #tpu.memory_space<vmem>>, vector<16x1xf32>
    %c0_149 = arith.constant 0 : index
    %c12_150 = arith.constant 12 : index
    %291 = vector.load %arg5[%c0_149, %c12_150] : memref<16x64xf32, #tpu.memory_space<vmem>>, vector<16x1xf32>
    %292 = vector.broadcast %288 : vector<1x16xf32> to vector<16x16xf32>
    %293 = vector.broadcast %291 : vector<16x1xf32> to vector<16x16xf32>
    %294 = arith.mulf %292, %293 : vector<16x16xf32>
    %295 = vector.broadcast %289 : vector<1x16xf32> to vector<16x16xf32>
    %296 = vector.broadcast %290 : vector<16x1xf32> to vector<16x16xf32>
    %297 = arith.mulf %295, %296 : vector<16x16xf32>
    %298 = arith.addf %294, %297 : vector<16x16xf32>
    %c12_151 = arith.constant 12 : index
    %c0_152 = arith.constant 0 : index
    %c0_153 = arith.constant 0 : index
    %299 = vector.load %arg6[%c12_151, %c0_152, %c0_153] : memref<128x16x16xf32, #tpu.memory_space<vmem>>, vector<1x16x16xf32>
    %300 = vector.shape_cast %299 : vector<1x16x16xf32> to vector<16x16xf32>
    %301 = vector.shape_cast %298 : vector<16x16xf32> to vector<1x16x16xf32>
    tpu.vector_store %arg6[%c12_151, %c0_152, %c0_153], %301 {strides = array<i32>} : memref<128x16x16xf32, #tpu.memory_space<vmem>>, vector<1x16x16xf32>,
    %302 = vector.broadcast %289 : vector<1x16xf32> to vector<16x16xf32>
    %303 = vector.broadcast %291 : vector<16x1xf32> to vector<16x16xf32>
    %304 = arith.mulf %302, %303 : vector<16x16xf32>
    %305 = vector.broadcast %288 : vector<1x16xf32> to vector<16x16xf32>
    %306 = vector.broadcast %290 : vector<16x1xf32> to vector<16x16xf32>
    %307 = arith.mulf %305, %306 : vector<16x16xf32>
    %308 = arith.subf %304, %307 : vector<16x16xf32>
    %c76 = arith.constant 76 : index
    %c0_154 = arith.constant 0 : index
    %c0_155 = arith.constant 0 : index
    %309 = vector.load %arg6[%c76, %c0_154, %c0_155] : memref<128x16x16xf32, #tpu.memory_space<vmem>>, vector<1x16x16xf32>
    %310 = vector.shape_cast %309 : vector<1x16x16xf32> to vector<16x16xf32>
    %311 = vector.shape_cast %308 : vector<16x16xf32> to vector<1x16x16xf32>
    tpu.vector_store %arg6[%c76, %c0_154, %c0_155], %311 {strides = array<i32>} : memref<128x16x16xf32, #tpu.memory_space<vmem>>, vector<1x16x16xf32>,
    %c13 = arith.constant 13 : index
    %c0_156 = arith.constant 0 : index
    %312 = vector.load %arg2[%c13, %c0_156] : memref<64x16xf32, #tpu.memory_space<vmem>>, vector<1x16xf32>
    %c13_157 = arith.constant 13 : index
    %c0_158 = arith.constant 0 : index
    %313 = vector.load %arg3[%c13_157, %c0_158] : memref<64x16xf32, #tpu.memory_space<vmem>>, vector<1x16xf32>
    %c0_159 = arith.constant 0 : index
    %c13_160 = arith.constant 13 : index
    %314 = vector.load %arg4[%c0_159, %c13_160] : memref<16x64xf32, #tpu.memory_space<vmem>>, vector<16x1xf32>
    %c0_161 = arith.constant 0 : index
    %c13_162 = arith.constant 13 : index
    %315 = vector.load %arg5[%c0_161, %c13_162] : memref<16x64xf32, #tpu.memory_space<vmem>>, vector<16x1xf32>
    %316 = vector.broadcast %312 : vector<1x16xf32> to vector<16x16xf32>
    %317 = vector.broadcast %315 : vector<16x1xf32> to vector<16x16xf32>
    %318 = arith.mulf %316, %317 : vector<16x16xf32>
    %319 = vector.broadcast %313 : vector<1x16xf32> to vector<16x16xf32>
    %320 = vector.broadcast %314 : vector<16x1xf32> to vector<16x16xf32>
    %321 = arith.mulf %319, %320 : vector<16x16xf32>
    %322 = arith.addf %318, %321 : vector<16x16xf32>
    %c13_163 = arith.constant 13 : index
    %c0_164 = arith.constant 0 : index
    %c0_165 = arith.constant 0 : index
    %323 = vector.load %arg6[%c13_163, %c0_164, %c0_165] : memref<128x16x16xf32, #tpu.memory_space<vmem>>, vector<1x16x16xf32>
    %324 = vector.shape_cast %323 : vector<1x16x16xf32> to vector<16x16xf32>
    %325 = vector.shape_cast %322 : vector<16x16xf32> to vector<1x16x16xf32>
    tpu.vector_store %arg6[%c13_163, %c0_164, %c0_165], %325 {strides = array<i32>} : memref<128x16x16xf32, #tpu.memory_space<vmem>>, vector<1x16x16xf32>,
    %326 = vector.broadcast %313 : vector<1x16xf32> to vector<16x16xf32>
    %327 = vector.broadcast %315 : vector<16x1xf32> to vector<16x16xf32>
    %328 = arith.mulf %326, %327 : vector<16x16xf32>
    %329 = vector.broadcast %312 : vector<1x16xf32> to vector<16x16xf32>
    %330 = vector.broadcast %314 : vector<16x1xf32> to vector<16x16xf32>
    %331 = arith.mulf %329, %330 : vector<16x16xf32>
    %332 = arith.subf %328, %331 : vector<16x16xf32>
    %c77 = arith.constant 77 : index
    %c0_166 = arith.constant 0 : index
    %c0_167 = arith.constant 0 : index
    %333 = vector.load %arg6[%c77, %c0_166, %c0_167] : memref<128x16x16xf32, #tpu.memory_space<vmem>>, vector<1x16x16xf32>
    %334 = vector.shape_cast %333 : vector<1x16x16xf32> to vector<16x16xf32>
    %335 = vector.shape_cast %332 : vector<16x16xf32> to vector<1x16x16xf32>
    tpu.vector_store %arg6[%c77, %c0_166, %c0_167], %335 {strides = array<i32>} : memref<128x16x16xf32, #tpu.memory_space<vmem>>, vector<1x16x16xf32>,
    %c14 = arith.constant 14 : index
    %c0_168 = arith.constant 0 : index
    %336 = vector.load %arg2[%c14, %c0_168] : memref<64x16xf32, #tpu.memory_space<vmem>>, vector<1x16xf32>
    %c14_169 = arith.constant 14 : index
    %c0_170 = arith.constant 0 : index
    %337 = vector.load %arg3[%c14_169, %c0_170] : memref<64x16xf32, #tpu.memory_space<vmem>>, vector<1x16xf32>
    %c0_171 = arith.constant 0 : index
    %c14_172 = arith.constant 14 : index
    %338 = vector.load %arg4[%c0_171, %c14_172] : memref<16x64xf32, #tpu.memory_space<vmem>>, vector<16x1xf32>
    %c0_173 = arith.constant 0 : index
    %c14_174 = arith.constant 14 : index
    %339 = vector.load %arg5[%c0_173, %c14_174] : memref<16x64xf32, #tpu.memory_space<vmem>>, vector<16x1xf32>
    %340 = vector.broadcast %336 : vector<1x16xf32> to vector<16x16xf32>
    %341 = vector.broadcast %339 : vector<16x1xf32> to vector<16x16xf32>
    %342 = arith.mulf %340, %341 : vector<16x16xf32>
    %343 = vector.broadcast %337 : vector<1x16xf32> to vector<16x16xf32>
    %344 = vector.broadcast %338 : vector<16x1xf32> to vector<16x16xf32>
    %345 = arith.mulf %343, %344 : vector<16x16xf32>
    %346 = arith.addf %342, %345 : vector<16x16xf32>
    %c14_175 = arith.constant 14 : index
    %c0_176 = arith.constant 0 : index
    %c0_177 = arith.constant 0 : index
    %347 = vector.load %arg6[%c14_175, %c0_176, %c0_177] : memref<128x16x16xf32, #tpu.memory_space<vmem>>, vector<1x16x16xf32>
    %348 = vector.shape_cast %347 : vector<1x16x16xf32> to vector<16x16xf32>
    %349 = vector.shape_cast %346 : vector<16x16xf32> to vector<1x16x16xf32>
    tpu.vector_store %arg6[%c14_175, %c0_176, %c0_177], %349 {strides = array<i32>} : memref<128x16x16xf32, #tpu.memory_space<vmem>>, vector<1x16x16xf32>,
    %350 = vector.broadcast %337 : vector<1x16xf32> to vector<16x16xf32>
    %351 = vector.broadcast %339 : vector<16x1xf32> to vector<16x16xf32>
    %352 = arith.mulf %350, %351 : vector<16x16xf32>
    %353 = vector.broadcast %336 : vector<1x16xf32> to vector<16x16xf32>
    %354 = vector.broadcast %338 : vector<16x1xf32> to vector<16x16xf32>
    %355 = arith.mulf %353, %354 : vector<16x16xf32>
    %356 = arith.subf %352, %355 : vector<16x16xf32>
    %c78 = arith.constant 78 : index
    %c0_178 = arith.constant 0 : index
    %c0_179 = arith.constant 0 : index
    %357 = vector.load %arg6[%c78, %c0_178, %c0_179] : memref<128x16x16xf32, #tpu.memory_space<vmem>>, vector<1x16x16xf32>
    %358 = vector.shape_cast %357 : vector<1x16x16xf32> to vector<16x16xf32>
    %359 = vector.shape_cast %356 : vector<16x16xf32> to vector<1x16x16xf32>
    tpu.vector_store %arg6[%c78, %c0_178, %c0_179], %359 {strides = array<i32>} : memref<128x16x16xf32, #tpu.memory_space<vmem>>, vector<1x16x16xf32>,
    %c15 = arith.constant 15 : index
    %c0_180 = arith.constant 0 : index
    %360 = vector.load %arg2[%c15, %c0_180] : memref<64x16xf32, #tpu.memory_space<vmem>>, vector<1x16xf32>
    %c15_181 = arith.constant 15 : index
    %c0_182 = arith.constant 0 : index
    %361 = vector.load %arg3[%c15_181, %c0_182] : memref<64x16xf32, #tpu.memory_space<vmem>>, vector<1x16xf32>
    %c0_183 = arith.constant 0 : index
    %c15_184 = arith.constant 15 : index
    %362 = vector.load %arg4[%c0_183, %c15_184] : memref<16x64xf32, #tpu.memory_space<vmem>>, vector<16x1xf32>
    %c0_185 = arith.constant 0 : index
    %c15_186 = arith.constant 15 : index
    %363 = vector.load %arg5[%c0_185, %c15_186] : memref<16x64xf32, #tpu.memory_space<vmem>>, vector<16x1xf32>
    %364 = vector.broadcast %360 : vector<1x16xf32> to vector<16x16xf32>
    %365 = vector.broadcast %363 : vector<16x1xf32> to vector<16x16xf32>
    %366 = arith.mulf %364, %365 : vector<16x16xf32>
    %367 = vector.broadcast %361 : vector<1x16xf32> to vector<16x16xf32>
    %368 = vector.broadcast %362 : vector<16x1xf32> to vector<16x16xf32>
    %369 = arith.mulf %367, %368 : vector<16x16xf32>
    %370 = arith.addf %366, %369 : vector<16x16xf32>
    %c15_187 = arith.constant 15 : index
    %c0_188 = arith.constant 0 : index
    %c0_189 = arith.constant 0 : index
    %371 = vector.load %arg6[%c15_187, %c0_188, %c0_189] : memref<128x16x16xf32, #tpu.memory_space<vmem>>, vector<1x16x16xf32>
    %372 = vector.shape_cast %371 : vector<1x16x16xf32> to vector<16x16xf32>
    %373 = vector.shape_cast %370 : vector<16x16xf32> to vector<1x16x16xf32>
    tpu.vector_store %arg6[%c15_187, %c0_188, %c0_189], %373 {strides = array<i32>} : memref<128x16x16xf32, #tpu.memory_space<vmem>>, vector<1x16x16xf32>,
    %374 = vector.broadcast %361 : vector<1x16xf32> to vector<16x16xf32>
    %375 = vector.broadcast %363 : vector<16x1xf32> to vector<16x16xf32>
    %376 = arith.mulf %374, %375 : vector<16x16xf32>
    %377 = vector.broadcast %360 : vector<1x16xf32> to vector<16x16xf32>
    %378 = vector.broadcast %362 : vector<16x1xf32> to vector<16x16xf32>
    %379 = arith.mulf %377, %378 : vector<16x16xf32>
    %380 = arith.subf %376, %379 : vector<16x16xf32>
    %c79 = arith.constant 79 : index
    %c0_190 = arith.constant 0 : index
    %c0_191 = arith.constant 0 : index
    %381 = vector.load %arg6[%c79, %c0_190, %c0_191] : memref<128x16x16xf32, #tpu.memory_space<vmem>>, vector<1x16x16xf32>
    %382 = vector.shape_cast %381 : vector<1x16x16xf32> to vector<16x16xf32>
    %383 = vector.shape_cast %380 : vector<16x16xf32> to vector<1x16x16xf32>
    tpu.vector_store %arg6[%c79, %c0_190, %c0_191], %383 {strides = array<i32>} : memref<128x16x16xf32, #tpu.memory_space<vmem>>, vector<1x16x16xf32>,
    %c16 = arith.constant 16 : index
    %c0_192 = arith.constant 0 : index
    %384 = vector.load %arg2[%c16, %c0_192] : memref<64x16xf32, #tpu.memory_space<vmem>>, vector<1x16xf32>
    %c16_193 = arith.constant 16 : index
    %c0_194 = arith.constant 0 : index
    %385 = vector.load %arg3[%c16_193, %c0_194] : memref<64x16xf32, #tpu.memory_space<vmem>>, vector<1x16xf32>
    %c0_195 = arith.constant 0 : index
    %c16_196 = arith.constant 16 : index
    %386 = vector.load %arg4[%c0_195, %c16_196] : memref<16x64xf32, #tpu.memory_space<vmem>>, vector<16x1xf32>
    %c0_197 = arith.constant 0 : index
    %c16_198 = arith.constant 16 : index
    %387 = vector.load %arg5[%c0_197, %c16_198] : memref<16x64xf32, #tpu.memory_space<vmem>>, vector<16x1xf32>
    %388 = vector.broadcast %384 : vector<1x16xf32> to vector<16x16xf32>
    %389 = vector.broadcast %387 : vector<16x1xf32> to vector<16x16xf32>
    %390 = arith.mulf %388, %389 : vector<16x16xf32>
    %391 = vector.broadcast %385 : vector<1x16xf32> to vector<16x16xf32>
    %392 = vector.broadcast %386 : vector<16x1xf32> to vector<16x16xf32>
    %393 = arith.mulf %391, %392 : vector<16x16xf32>
    %394 = arith.addf %390, %393 : vector<16x16xf32>
    %c16_199 = arith.constant 16 : index
    %c0_200 = arith.constant 0 : index
    %c0_201 = arith.constant 0 : index
    %395 = vector.load %arg6[%c16_199, %c0_200, %c0_201] : memref<128x16x16xf32, #tpu.memory_space<vmem>>, vector<1x16x16xf32>
    %396 = vector.shape_cast %395 : vector<1x16x16xf32> to vector<16x16xf32>
    %397 = vector.shape_cast %394 : vector<16x16xf32> to vector<1x16x16xf32>
    tpu.vector_store %arg6[%c16_199, %c0_200, %c0_201], %397 {strides = array<i32>} : memref<128x16x16xf32, #tpu.memory_space<vmem>>, vector<1x16x16xf32>,
    %398 = vector.broadcast %385 : vector<1x16xf32> to vector<16x16xf32>
    %399 = vector.broadcast %387 : vector<16x1xf32> to vector<16x16xf32>
    %400 = arith.mulf %398, %399 : vector<16x16xf32>
    %401 = vector.broadcast %384 : vector<1x16xf32> to vector<16x16xf32>
    %402 = vector.broadcast %386 : vector<16x1xf32> to vector<16x16xf32>
    %403 = arith.mulf %401, %402 : vector<16x16xf32>
    %404 = arith.subf %400, %403 : vector<16x16xf32>
    %c80 = arith.constant 80 : index
    %c0_202 = arith.constant 0 : index
    %c0_203 = arith.constant 0 : index
    %405 = vector.load %arg6[%c80, %c0_202, %c0_203] : memref<128x16x16xf32, #tpu.memory_space<vmem>>, vector<1x16x16xf32>
    %406 = vector.shape_cast %405 : vector<1x16x16xf32> to vector<16x16xf32>
    %407 = vector.shape_cast %404 : vector<16x16xf32> to vector<1x16x16xf32>
    tpu.vector_store %arg6[%c80, %c0_202, %c0_203], %407 {strides = array<i32>} : memref<128x16x16xf32, #tpu.memory_space<vmem>>, vector<1x16x16xf32>,
    %c17 = arith.constant 17 : index
    %c0_204 = arith.constant 0 : index
    %408 = vector.load %arg2[%c17, %c0_204] : memref<64x16xf32, #tpu.memory_space<vmem>>, vector<1x16xf32>
    %c17_205 = arith.constant 17 : index
    %c0_206 = arith.constant 0 : index
    %409 = vector.load %arg3[%c17_205, %c0_206] : memref<64x16xf32, #tpu.memory_space<vmem>>, vector<1x16xf32>
    %c0_207 = arith.constant 0 : index
    %c17_208 = arith.constant 17 : index
    %410 = vector.load %arg4[%c0_207, %c17_208] : memref<16x64xf32, #tpu.memory_space<vmem>>, vector<16x1xf32>
    %c0_209 = arith.constant 0 : index
    %c17_210 = arith.constant 17 : index
    %411 = vector.load %arg5[%c0_209, %c17_210] : memref<16x64xf32, #tpu.memory_space<vmem>>, vector<16x1xf32>
    %412 = vector.broadcast %408 : vector<1x16xf32> to vector<16x16xf32>
    %413 = vector.broadcast %411 : vector<16x1xf32> to vector<16x16xf32>
    %414 = arith.mulf %412, %413 : vector<16x16xf32>
    %415 = vector.broadcast %409 : vector<1x16xf32> to vector<16x16xf32>
    %416 = vector.broadcast %410 : vector<16x1xf32> to vector<16x16xf32>
    %417 = arith.mulf %415, %416 : vector<16x16xf32>
    %418 = arith.addf %414, %417 : vector<16x16xf32>
    %c17_211 = arith.constant 17 : index
    %c0_212 = arith.constant 0 : index
    %c0_213 = arith.constant 0 : index
    %419 = vector.load %arg6[%c17_211, %c0_212, %c0_213] : memref<128x16x16xf32, #tpu.memory_space<vmem>>, vector<1x16x16xf32>
    %420 = vector.shape_cast %419 : vector<1x16x16xf32> to vector<16x16xf32>
    %421 = vector.shape_cast %418 : vector<16x16xf32> to vector<1x16x16xf32>
    tpu.vector_store %arg6[%c17_211, %c0_212, %c0_213], %421 {strides = array<i32>} : memref<128x16x16xf32, #tpu.memory_space<vmem>>, vector<1x16x16xf32>,
    %422 = vector.broadcast %409 : vector<1x16xf32> to vector<16x16xf32>
    %423 = vector.broadcast %411 : vector<16x1xf32> to vector<16x16xf32>
    %424 = arith.mulf %422, %423 : vector<16x16xf32>
    %425 = vector.broadcast %408 : vector<1x16xf32> to vector<16x16xf32>
    %426 = vector.broadcast %410 : vector<16x1xf32> to vector<16x16xf32>
    %427 = arith.mulf %425, %426 : vector<16x16xf32>
    %428 = arith.subf %424, %427 : vector<16x16xf32>
    %c81 = arith.constant 81 : index
    %c0_214 = arith.constant 0 : index
    %c0_215 = arith.constant 0 : index
    %429 = vector.load %arg6[%c81, %c0_214, %c0_215] : memref<128x16x16xf32, #tpu.memory_space<vmem>>, vector<1x16x16xf32>
    %430 = vector.shape_cast %429 : vector<1x16x16xf32> to vector<16x16xf32>
    %431 = vector.shape_cast %428 : vector<16x16xf32> to vector<1x16x16xf32>
    tpu.vector_store %arg6[%c81, %c0_214, %c0_215], %431 {strides = array<i32>} : memref<128x16x16xf32, #tpu.memory_space<vmem>>, vector<1x16x16xf32>,
    %c18 = arith.constant 18 : index
    %c0_216 = arith.constant 0 : index
    %432 = vector.load %arg2[%c18, %c0_216] : memref<64x16xf32, #tpu.memory_space<vmem>>, vector<1x16xf32>
    %c18_217 = arith.constant 18 : index
    %c0_218 = arith.constant 0 : index
    %433 = vector.load %arg3[%c18_217, %c0_218] : memref<64x16xf32, #tpu.memory_space<vmem>>, vector<1x16xf32>
    %c0_219 = arith.constant 0 : index
    %c18_220 = arith.constant 18 : index
    %434 = vector.load %arg4[%c0_219, %c18_220] : memref<16x64xf32, #tpu.memory_space<vmem>>, vector<16x1xf32>
    %c0_221 = arith.constant 0 : index
    %c18_222 = arith.constant 18 : index
    %435 = vector.load %arg5[%c0_221, %c18_222] : memref<16x64xf32, #tpu.memory_space<vmem>>, vector<16x1xf32>
    %436 = vector.broadcast %432 : vector<1x16xf32> to vector<16x16xf32>
    %437 = vector.broadcast %435 : vector<16x1xf32> to vector<16x16xf32>
    %438 = arith.mulf %436, %437 : vector<16x16xf32>
    %439 = vector.broadcast %433 : vector<1x16xf32> to vector<16x16xf32>
    %440 = vector.broadcast %434 : vector<16x1xf32> to vector<16x16xf32>
    %441 = arith.mulf %439, %440 : vector<16x16xf32>
    %442 = arith.addf %438, %441 : vector<16x16xf32>
    %c18_223 = arith.constant 18 : index
    %c0_224 = arith.constant 0 : index
    %c0_225 = arith.constant 0 : index
    %443 = vector.load %arg6[%c18_223, %c0_224, %c0_225] : memref<128x16x16xf32, #tpu.memory_space<vmem>>, vector<1x16x16xf32>
    %444 = vector.shape_cast %443 : vector<1x16x16xf32> to vector<16x16xf32>
    %445 = vector.shape_cast %442 : vector<16x16xf32> to vector<1x16x16xf32>
    tpu.vector_store %arg6[%c18_223, %c0_224, %c0_225], %445 {strides = array<i32>} : memref<128x16x16xf32, #tpu.memory_space<vmem>>, vector<1x16x16xf32>,
    %446 = vector.broadcast %433 : vector<1x16xf32> to vector<16x16xf32>
    %447 = vector.broadcast %435 : vector<16x1xf32> to vector<16x16xf32>
    %448 = arith.mulf %446, %447 : vector<16x16xf32>
    %449 = vector.broadcast %432 : vector<1x16xf32> to vector<16x16xf32>
    %450 = vector.broadcast %434 : vector<16x1xf32> to vector<16x16xf32>
    %451 = arith.mulf %449, %450 : vector<16x16xf32>
    %452 = arith.subf %448, %451 : vector<16x16xf32>
    %c82 = arith.constant 82 : index
    %c0_226 = arith.constant 0 : index
    %c0_227 = arith.constant 0 : index
    %453 = vector.load %arg6[%c82, %c0_226, %c0_227] : memref<128x16x16xf32, #tpu.memory_space<vmem>>, vector<1x16x16xf32>
    %454 = vector.shape_cast %453 : vector<1x16x16xf32> to vector<16x16xf32>
    %455 = vector.shape_cast %452 : vector<16x16xf32> to vector<1x16x16xf32>
    tpu.vector_store %arg6[%c82, %c0_226, %c0_227], %455 {strides = array<i32>} : memref<128x16x16xf32, #tpu.memory_space<vmem>>, vector<1x16x16xf32>,
    %c19 = arith.constant 19 : index
    %c0_228 = arith.constant 0 : index
    %456 = vector.load %arg2[%c19, %c0_228] : memref<64x16xf32, #tpu.memory_space<vmem>>, vector<1x16xf32>
    %c19_229 = arith.constant 19 : index
    %c0_230 = arith.constant 0 : index
    %457 = vector.load %arg3[%c19_229, %c0_230] : memref<64x16xf32, #tpu.memory_space<vmem>>, vector<1x16xf32>
    %c0_231 = arith.constant 0 : index
    %c19_232 = arith.constant 19 : index
    %458 = vector.load %arg4[%c0_231, %c19_232] : memref<16x64xf32, #tpu.memory_space<vmem>>, vector<16x1xf32>
    %c0_233 = arith.constant 0 : index
    %c19_234 = arith.constant 19 : index
    %459 = vector.load %arg5[%c0_233, %c19_234] : memref<16x64xf32, #tpu.memory_space<vmem>>, vector<16x1xf32>
    %460 = vector.broadcast %456 : vector<1x16xf32> to vector<16x16xf32>
    %461 = vector.broadcast %459 : vector<16x1xf32> to vector<16x16xf32>
    %462 = arith.mulf %460, %461 : vector<16x16xf32>
    %463 = vector.broadcast %457 : vector<1x16xf32> to vector<16x16xf32>
    %464 = vector.broadcast %458 : vector<16x1xf32> to vector<16x16xf32>
    %465 = arith.mulf %463, %464 : vector<16x16xf32>
    %466 = arith.addf %462, %465 : vector<16x16xf32>
    %c19_235 = arith.constant 19 : index
    %c0_236 = arith.constant 0 : index
    %c0_237 = arith.constant 0 : index
    %467 = vector.load %arg6[%c19_235, %c0_236, %c0_237] : memref<128x16x16xf32, #tpu.memory_space<vmem>>, vector<1x16x16xf32>
    %468 = vector.shape_cast %467 : vector<1x16x16xf32> to vector<16x16xf32>
    %469 = vector.shape_cast %466 : vector<16x16xf32> to vector<1x16x16xf32>
    tpu.vector_store %arg6[%c19_235, %c0_236, %c0_237], %469 {strides = array<i32>} : memref<128x16x16xf32, #tpu.memory_space<vmem>>, vector<1x16x16xf32>,
    %470 = vector.broadcast %457 : vector<1x16xf32> to vector<16x16xf32>
    %471 = vector.broadcast %459 : vector<16x1xf32> to vector<16x16xf32>
    %472 = arith.mulf %470, %471 : vector<16x16xf32>
    %473 = vector.broadcast %456 : vector<1x16xf32> to vector<16x16xf32>
    %474 = vector.broadcast %458 : vector<16x1xf32> to vector<16x16xf32>
    %475 = arith.mulf %473, %474 : vector<16x16xf32>
    %476 = arith.subf %472, %475 : vector<16x16xf32>
    %c83 = arith.constant 83 : index
    %c0_238 = arith.constant 0 : index
    %c0_239 = arith.constant 0 : index
    %477 = vector.load %arg6[%c83, %c0_238, %c0_239] : memref<128x16x16xf32, #tpu.memory_space<vmem>>, vector<1x16x16xf32>
    %478 = vector.shape_cast %477 : vector<1x16x16xf32> to vector<16x16xf32>
    %479 = vector.shape_cast %476 : vector<16x16xf32> to vector<1x16x16xf32>
    tpu.vector_store %arg6[%c83, %c0_238, %c0_239], %479 {strides = array<i32>} : memref<128x16x16xf32, #tpu.memory_space<vmem>>, vector<1x16x16xf32>,
    %c20 = arith.constant 20 : index
    %c0_240 = arith.constant 0 : index
    %480 = vector.load %arg2[%c20, %c0_240] : memref<64x16xf32, #tpu.memory_space<vmem>>, vector<1x16xf32>
    %c20_241 = arith.constant 20 : index
    %c0_242 = arith.constant 0 : index
    %481 = vector.load %arg3[%c20_241, %c0_242] : memref<64x16xf32, #tpu.memory_space<vmem>>, vector<1x16xf32>
    %c0_243 = arith.constant 0 : index
    %c20_244 = arith.constant 20 : index
    %482 = vector.load %arg4[%c0_243, %c20_244] : memref<16x64xf32, #tpu.memory_space<vmem>>, vector<16x1xf32>
    %c0_245 = arith.constant 0 : index
    %c20_246 = arith.constant 20 : index
    %483 = vector.load %arg5[%c0_245, %c20_246] : memref<16x64xf32, #tpu.memory_space<vmem>>, vector<16x1xf32>
    %484 = vector.broadcast %480 : vector<1x16xf32> to vector<16x16xf32>
    %485 = vector.broadcast %483 : vector<16x1xf32> to vector<16x16xf32>
    %486 = arith.mulf %484, %485 : vector<16x16xf32>
    %487 = vector.broadcast %481 : vector<1x16xf32> to vector<16x16xf32>
    %488 = vector.broadcast %482 : vector<16x1xf32> to vector<16x16xf32>
    %489 = arith.mulf %487, %488 : vector<16x16xf32>
    %490 = arith.addf %486, %489 : vector<16x16xf32>
    %c20_247 = arith.constant 20 : index
    %c0_248 = arith.constant 0 : index
    %c0_249 = arith.constant 0 : index
    %491 = vector.load %arg6[%c20_247, %c0_248, %c0_249] : memref<128x16x16xf32, #tpu.memory_space<vmem>>, vector<1x16x16xf32>
    %492 = vector.shape_cast %491 : vector<1x16x16xf32> to vector<16x16xf32>
    %493 = vector.shape_cast %490 : vector<16x16xf32> to vector<1x16x16xf32>
    tpu.vector_store %arg6[%c20_247, %c0_248, %c0_249], %493 {strides = array<i32>} : memref<128x16x16xf32, #tpu.memory_space<vmem>>, vector<1x16x16xf32>,
    %494 = vector.broadcast %481 : vector<1x16xf32> to vector<16x16xf32>
    %495 = vector.broadcast %483 : vector<16x1xf32> to vector<16x16xf32>
    %496 = arith.mulf %494, %495 : vector<16x16xf32>
    %497 = vector.broadcast %480 : vector<1x16xf32> to vector<16x16xf32>
    %498 = vector.broadcast %482 : vector<16x1xf32> to vector<16x16xf32>
    %499 = arith.mulf %497, %498 : vector<16x16xf32>
    %500 = arith.subf %496, %499 : vector<16x16xf32>
    %c84 = arith.constant 84 : index
    %c0_250 = arith.constant 0 : index
    %c0_251 = arith.constant 0 : index
    %501 = vector.load %arg6[%c84, %c0_250, %c0_251] : memref<128x16x16xf32, #tpu.memory_space<vmem>>, vector<1x16x16xf32>
    %502 = vector.shape_cast %501 : vector<1x16x16xf32> to vector<16x16xf32>
    %503 = vector.shape_cast %500 : vector<16x16xf32> to vector<1x16x16xf32>
    tpu.vector_store %arg6[%c84, %c0_250, %c0_251], %503 {strides = array<i32>} : memref<128x16x16xf32, #tpu.memory_space<vmem>>, vector<1x16x16xf32>,
    %c21 = arith.constant 21 : index
    %c0_252 = arith.constant 0 : index
    %504 = vector.load %arg2[%c21, %c0_252] : memref<64x16xf32, #tpu.memory_space<vmem>>, vector<1x16xf32>
    %c21_253 = arith.constant 21 : index
    %c0_254 = arith.constant 0 : index
    %505 = vector.load %arg3[%c21_253, %c0_254] : memref<64x16xf32, #tpu.memory_space<vmem>>, vector<1x16xf32>
    %c0_255 = arith.constant 0 : index
    %c21_256 = arith.constant 21 : index
    %506 = vector.load %arg4[%c0_255, %c21_256] : memref<16x64xf32, #tpu.memory_space<vmem>>, vector<16x1xf32>
    %c0_257 = arith.constant 0 : index
    %c21_258 = arith.constant 21 : index
    %507 = vector.load %arg5[%c0_257, %c21_258] : memref<16x64xf32, #tpu.memory_space<vmem>>, vector<16x1xf32>
    %508 = vector.broadcast %504 : vector<1x16xf32> to vector<16x16xf32>
    %509 = vector.broadcast %507 : vector<16x1xf32> to vector<16x16xf32>
    %510 = arith.mulf %508, %509 : vector<16x16xf32>
    %511 = vector.broadcast %505 : vector<1x16xf32> to vector<16x16xf32>
    %512 = vector.broadcast %506 : vector<16x1xf32> to vector<16x16xf32>
    %513 = arith.mulf %511, %512 : vector<16x16xf32>
    %514 = arith.addf %510, %513 : vector<16x16xf32>
    %c21_259 = arith.constant 21 : index
    %c0_260 = arith.constant 0 : index
    %c0_261 = arith.constant 0 : index
    %515 = vector.load %arg6[%c21_259, %c0_260, %c0_261] : memref<128x16x16xf32, #tpu.memory_space<vmem>>, vector<1x16x16xf32>
    %516 = vector.shape_cast %515 : vector<1x16x16xf32> to vector<16x16xf32>
    %517 = vector.shape_cast %514 : vector<16x16xf32> to vector<1x16x16xf32>
    tpu.vector_store %arg6[%c21_259, %c0_260, %c0_261], %517 {strides = array<i32>} : memref<128x16x16xf32, #tpu.memory_space<vmem>>, vector<1x16x16xf32>,
    %518 = vector.broadcast %505 : vector<1x16xf32> to vector<16x16xf32>
    %519 = vector.broadcast %507 : vector<16x1xf32> to vector<16x16xf32>
    %520 = arith.mulf %518, %519 : vector<16x16xf32>
    %521 = vector.broadcast %504 : vector<1x16xf32> to vector<16x16xf32>
    %522 = vector.broadcast %506 : vector<16x1xf32> to vector<16x16xf32>
    %523 = arith.mulf %521, %522 : vector<16x16xf32>
    %524 = arith.subf %520, %523 : vector<16x16xf32>
    %c85 = arith.constant 85 : index
    %c0_262 = arith.constant 0 : index
    %c0_263 = arith.constant 0 : index
    %525 = vector.load %arg6[%c85, %c0_262, %c0_263] : memref<128x16x16xf32, #tpu.memory_space<vmem>>, vector<1x16x16xf32>
    %526 = vector.shape_cast %525 : vector<1x16x16xf32> to vector<16x16xf32>
    %527 = vector.shape_cast %524 : vector<16x16xf32> to vector<1x16x16xf32>
    tpu.vector_store %arg6[%c85, %c0_262, %c0_263], %527 {strides = array<i32>} : memref<128x16x16xf32, #tpu.memory_space<vmem>>, vector<1x16x16xf32>,
    %c22 = arith.constant 22 : index
    %c0_264 = arith.constant 0 : index
    %528 = vector.load %arg2[%c22, %c0_264] : memref<64x16xf32, #tpu.memory_space<vmem>>, vector<1x16xf32>
    %c22_265 = arith.constant 22 : index
    %c0_266 = arith.constant 0 : index
    %529 = vector.load %arg3[%c22_265, %c0_266] : memref<64x16xf32, #tpu.memory_space<vmem>>, vector<1x16xf32>
    %c0_267 = arith.constant 0 : index
    %c22_268 = arith.constant 22 : index
    %530 = vector.load %arg4[%c0_267, %c22_268] : memref<16x64xf32, #tpu.memory_space<vmem>>, vector<16x1xf32>
    %c0_269 = arith.constant 0 : index
    %c22_270 = arith.constant 22 : index
    %531 = vector.load %arg5[%c0_269, %c22_270] : memref<16x64xf32, #tpu.memory_space<vmem>>, vector<16x1xf32>
    %532 = vector.broadcast %528 : vector<1x16xf32> to vector<16x16xf32>
    %533 = vector.broadcast %531 : vector<16x1xf32> to vector<16x16xf32>
    %534 = arith.mulf %532, %533 : vector<16x16xf32>
    %535 = vector.broadcast %529 : vector<1x16xf32> to vector<16x16xf32>
    %536 = vector.broadcast %530 : vector<16x1xf32> to vector<16x16xf32>
    %537 = arith.mulf %535, %536 : vector<16x16xf32>
    %538 = arith.addf %534, %537 : vector<16x16xf32>
    %c22_271 = arith.constant 22 : index
    %c0_272 = arith.constant 0 : index
    %c0_273 = arith.constant 0 : index
    %539 = vector.load %arg6[%c22_271, %c0_272, %c0_273] : memref<128x16x16xf32, #tpu.memory_space<vmem>>, vector<1x16x16xf32>
    %540 = vector.shape_cast %539 : vector<1x16x16xf32> to vector<16x16xf32>
    %541 = vector.shape_cast %538 : vector<16x16xf32> to vector<1x16x16xf32>
    tpu.vector_store %arg6[%c22_271, %c0_272, %c0_273], %541 {strides = array<i32>} : memref<128x16x16xf32, #tpu.memory_space<vmem>>, vector<1x16x16xf32>,
    %542 = vector.broadcast %529 : vector<1x16xf32> to vector<16x16xf32>
    %543 = vector.broadcast %531 : vector<16x1xf32> to vector<16x16xf32>
    %544 = arith.mulf %542, %543 : vector<16x16xf32>
    %545 = vector.broadcast %528 : vector<1x16xf32> to vector<16x16xf32>
    %546 = vector.broadcast %530 : vector<16x1xf32> to vector<16x16xf32>
    %547 = arith.mulf %545, %546 : vector<16x16xf32>
    %548 = arith.subf %544, %547 : vector<16x16xf32>
    %c86 = arith.constant 86 : index
    %c0_274 = arith.constant 0 : index
    %c0_275 = arith.constant 0 : index
    %549 = vector.load %arg6[%c86, %c0_274, %c0_275] : memref<128x16x16xf32, #tpu.memory_space<vmem>>, vector<1x16x16xf32>
    %550 = vector.shape_cast %549 : vector<1x16x16xf32> to vector<16x16xf32>
    %551 = vector.shape_cast %548 : vector<16x16xf32> to vector<1x16x16xf32>
    tpu.vector_store %arg6[%c86, %c0_274, %c0_275], %551 {strides = array<i32>} : memref<128x16x16xf32, #tpu.memory_space<vmem>>, vector<1x16x16xf32>,
    %c23 = arith.constant 23 : index
    %c0_276 = arith.constant 0 : index
    %552 = vector.load %arg2[%c23, %c0_276] : memref<64x16xf32, #tpu.memory_space<vmem>>, vector<1x16xf32>
    %c23_277 = arith.constant 23 : index
    %c0_278 = arith.constant 0 : index
    %553 = vector.load %arg3[%c23_277, %c0_278] : memref<64x16xf32, #tpu.memory_space<vmem>>, vector<1x16xf32>
    %c0_279 = arith.constant 0 : index
    %c23_280 = arith.constant 23 : index
    %554 = vector.load %arg4[%c0_279, %c23_280] : memref<16x64xf32, #tpu.memory_space<vmem>>, vector<16x1xf32>
    %c0_281 = arith.constant 0 : index
    %c23_282 = arith.constant 23 : index
    %555 = vector.load %arg5[%c0_281, %c23_282] : memref<16x64xf32, #tpu.memory_space<vmem>>, vector<16x1xf32>
    %556 = vector.broadcast %552 : vector<1x16xf32> to vector<16x16xf32>
    %557 = vector.broadcast %555 : vector<16x1xf32> to vector<16x16xf32>
    %558 = arith.mulf %556, %557 : vector<16x16xf32>
    %559 = vector.broadcast %553 : vector<1x16xf32> to vector<16x16xf32>
    %560 = vector.broadcast %554 : vector<16x1xf32> to vector<16x16xf32>
    %561 = arith.mulf %559, %560 : vector<16x16xf32>
    %562 = arith.addf %558, %561 : vector<16x16xf32>
    %c23_283 = arith.constant 23 : index
    %c0_284 = arith.constant 0 : index
    %c0_285 = arith.constant 0 : index
    %563 = vector.load %arg6[%c23_283, %c0_284, %c0_285] : memref<128x16x16xf32, #tpu.memory_space<vmem>>, vector<1x16x16xf32>
    %564 = vector.shape_cast %563 : vector<1x16x16xf32> to vector<16x16xf32>
    %565 = vector.shape_cast %562 : vector<16x16xf32> to vector<1x16x16xf32>
    tpu.vector_store %arg6[%c23_283, %c0_284, %c0_285], %565 {strides = array<i32>} : memref<128x16x16xf32, #tpu.memory_space<vmem>>, vector<1x16x16xf32>,
    %566 = vector.broadcast %553 : vector<1x16xf32> to vector<16x16xf32>
    %567 = vector.broadcast %555 : vector<16x1xf32> to vector<16x16xf32>
    %568 = arith.mulf %566, %567 : vector<16x16xf32>
    %569 = vector.broadcast %552 : vector<1x16xf32> to vector<16x16xf32>
    %570 = vector.broadcast %554 : vector<16x1xf32> to vector<16x16xf32>
    %571 = arith.mulf %569, %570 : vector<16x16xf32>
    %572 = arith.subf %568, %571 : vector<16x16xf32>
    %c87 = arith.constant 87 : index
    %c0_286 = arith.constant 0 : index
    %c0_287 = arith.constant 0 : index
    %573 = vector.load %arg6[%c87, %c0_286, %c0_287] : memref<128x16x16xf32, #tpu.memory_space<vmem>>, vector<1x16x16xf32>
    %574 = vector.shape_cast %573 : vector<1x16x16xf32> to vector<16x16xf32>
    %575 = vector.shape_cast %572 : vector<16x16xf32> to vector<1x16x16xf32>
    tpu.vector_store %arg6[%c87, %c0_286, %c0_287], %575 {strides = array<i32>} : memref<128x16x16xf32, #tpu.memory_space<vmem>>, vector<1x16x16xf32>,
    %c24 = arith.constant 24 : index
    %c0_288 = arith.constant 0 : index
    %576 = vector.load %arg2[%c24, %c0_288] : memref<64x16xf32, #tpu.memory_space<vmem>>, vector<1x16xf32>
    %c24_289 = arith.constant 24 : index
    %c0_290 = arith.constant 0 : index
    %577 = vector.load %arg3[%c24_289, %c0_290] : memref<64x16xf32, #tpu.memory_space<vmem>>, vector<1x16xf32>
    %c0_291 = arith.constant 0 : index
    %c24_292 = arith.constant 24 : index
    %578 = vector.load %arg4[%c0_291, %c24_292] : memref<16x64xf32, #tpu.memory_space<vmem>>, vector<16x1xf32>
    %c0_293 = arith.constant 0 : index
    %c24_294 = arith.constant 24 : index
    %579 = vector.load %arg5[%c0_293, %c24_294] : memref<16x64xf32, #tpu.memory_space<vmem>>, vector<16x1xf32>
    %580 = vector.broadcast %576 : vector<1x16xf32> to vector<16x16xf32>
    %581 = vector.broadcast %579 : vector<16x1xf32> to vector<16x16xf32>
    %582 = arith.mulf %580, %581 : vector<16x16xf32>
    %583 = vector.broadcast %577 : vector<1x16xf32> to vector<16x16xf32>
    %584 = vector.broadcast %578 : vector<16x1xf32> to vector<16x16xf32>
    %585 = arith.mulf %583, %584 : vector<16x16xf32>
    %586 = arith.addf %582, %585 : vector<16x16xf32>
    %c24_295 = arith.constant 24 : index
    %c0_296 = arith.constant 0 : index
    %c0_297 = arith.constant 0 : index
    %587 = vector.load %arg6[%c24_295, %c0_296, %c0_297] : memref<128x16x16xf32, #tpu.memory_space<vmem>>, vector<1x16x16xf32>
    %588 = vector.shape_cast %587 : vector<1x16x16xf32> to vector<16x16xf32>
    %589 = vector.shape_cast %586 : vector<16x16xf32> to vector<1x16x16xf32>
    tpu.vector_store %arg6[%c24_295, %c0_296, %c0_297], %589 {strides = array<i32>} : memref<128x16x16xf32, #tpu.memory_space<vmem>>, vector<1x16x16xf32>,
    %590 = vector.broadcast %577 : vector<1x16xf32> to vector<16x16xf32>
    %591 = vector.broadcast %579 : vector<16x1xf32> to vector<16x16xf32>
    %592 = arith.mulf %590, %591 : vector<16x16xf32>
    %593 = vector.broadcast %576 : vector<1x16xf32> to vector<16x16xf32>
    %594 = vector.broadcast %578 : vector<16x1xf32> to vector<16x16xf32>
    %595 = arith.mulf %593, %594 : vector<16x16xf32>
    %596 = arith.subf %592, %595 : vector<16x16xf32>
    %c88 = arith.constant 88 : index
    %c0_298 = arith.constant 0 : index
    %c0_299 = arith.constant 0 : index
    %597 = vector.load %arg6[%c88, %c0_298, %c0_299] : memref<128x16x16xf32, #tpu.memory_space<vmem>>, vector<1x16x16xf32>
    %598 = vector.shape_cast %597 : vector<1x16x16xf32> to vector<16x16xf32>
    %599 = vector.shape_cast %596 : vector<16x16xf32> to vector<1x16x16xf32>
    tpu.vector_store %arg6[%c88, %c0_298, %c0_299], %599 {strides = array<i32>} : memref<128x16x16xf32, #tpu.memory_space<vmem>>, vector<1x16x16xf32>,
    %c25 = arith.constant 25 : index
    %c0_300 = arith.constant 0 : index
    %600 = vector.load %arg2[%c25, %c0_300] : memref<64x16xf32, #tpu.memory_space<vmem>>, vector<1x16xf32>
    %c25_301 = arith.constant 25 : index
    %c0_302 = arith.constant 0 : index
    %601 = vector.load %arg3[%c25_301, %c0_302] : memref<64x16xf32, #tpu.memory_space<vmem>>, vector<1x16xf32>
    %c0_303 = arith.constant 0 : index
    %c25_304 = arith.constant 25 : index
    %602 = vector.load %arg4[%c0_303, %c25_304] : memref<16x64xf32, #tpu.memory_space<vmem>>, vector<16x1xf32>
    %c0_305 = arith.constant 0 : index
    %c25_306 = arith.constant 25 : index
    %603 = vector.load %arg5[%c0_305, %c25_306] : memref<16x64xf32, #tpu.memory_space<vmem>>, vector<16x1xf32>
    %604 = vector.broadcast %600 : vector<1x16xf32> to vector<16x16xf32>
    %605 = vector.broadcast %603 : vector<16x1xf32> to vector<16x16xf32>
    %606 = arith.mulf %604, %605 : vector<16x16xf32>
    %607 = vector.broadcast %601 : vector<1x16xf32> to vector<16x16xf32>
    %608 = vector.broadcast %602 : vector<16x1xf32> to vector<16x16xf32>
    %609 = arith.mulf %607, %608 : vector<16x16xf32>
    %610 = arith.addf %606, %609 : vector<16x16xf32>
    %c25_307 = arith.constant 25 : index
    %c0_308 = arith.constant 0 : index
    %c0_309 = arith.constant 0 : index
    %611 = vector.load %arg6[%c25_307, %c0_308, %c0_309] : memref<128x16x16xf32, #tpu.memory_space<vmem>>, vector<1x16x16xf32>
    %612 = vector.shape_cast %611 : vector<1x16x16xf32> to vector<16x16xf32>
    %613 = vector.shape_cast %610 : vector<16x16xf32> to vector<1x16x16xf32>
    tpu.vector_store %arg6[%c25_307, %c0_308, %c0_309], %613 {strides = array<i32>} : memref<128x16x16xf32, #tpu.memory_space<vmem>>, vector<1x16x16xf32>,
    %614 = vector.broadcast %601 : vector<1x16xf32> to vector<16x16xf32>
    %615 = vector.broadcast %603 : vector<16x1xf32> to vector<16x16xf32>
    %616 = arith.mulf %614, %615 : vector<16x16xf32>
    %617 = vector.broadcast %600 : vector<1x16xf32> to vector<16x16xf32>
    %618 = vector.broadcast %602 : vector<16x1xf32> to vector<16x16xf32>
    %619 = arith.mulf %617, %618 : vector<16x16xf32>
    %620 = arith.subf %616, %619 : vector<16x16xf32>
    %c89 = arith.constant 89 : index
    %c0_310 = arith.constant 0 : index
    %c0_311 = arith.constant 0 : index
    %621 = vector.load %arg6[%c89, %c0_310, %c0_311] : memref<128x16x16xf32, #tpu.memory_space<vmem>>, vector<1x16x16xf32>
    %622 = vector.shape_cast %621 : vector<1x16x16xf32> to vector<16x16xf32>
    %623 = vector.shape_cast %620 : vector<16x16xf32> to vector<1x16x16xf32>
    tpu.vector_store %arg6[%c89, %c0_310, %c0_311], %623 {strides = array<i32>} : memref<128x16x16xf32, #tpu.memory_space<vmem>>, vector<1x16x16xf32>,
    %c26 = arith.constant 26 : index
    %c0_312 = arith.constant 0 : index
    %624 = vector.load %arg2[%c26, %c0_312] : memref<64x16xf32, #tpu.memory_space<vmem>>, vector<1x16xf32>
    %c26_313 = arith.constant 26 : index
    %c0_314 = arith.constant 0 : index
    %625 = vector.load %arg3[%c26_313, %c0_314] : memref<64x16xf32, #tpu.memory_space<vmem>>, vector<1x16xf32>
    %c0_315 = arith.constant 0 : index
    %c26_316 = arith.constant 26 : index
    %626 = vector.load %arg4[%c0_315, %c26_316] : memref<16x64xf32, #tpu.memory_space<vmem>>, vector<16x1xf32>
    %c0_317 = arith.constant 0 : index
    %c26_318 = arith.constant 26 : index
    %627 = vector.load %arg5[%c0_317, %c26_318] : memref<16x64xf32, #tpu.memory_space<vmem>>, vector<16x1xf32>
    %628 = vector.broadcast %624 : vector<1x16xf32> to vector<16x16xf32>
    %629 = vector.broadcast %627 : vector<16x1xf32> to vector<16x16xf32>
    %630 = arith.mulf %628, %629 : vector<16x16xf32>
    %631 = vector.broadcast %625 : vector<1x16xf32> to vector<16x16xf32>
    %632 = vector.broadcast %626 : vector<16x1xf32> to vector<16x16xf32>
    %633 = arith.mulf %631, %632 : vector<16x16xf32>
    %634 = arith.addf %630, %633 : vector<16x16xf32>
    %c26_319 = arith.constant 26 : index
    %c0_320 = arith.constant 0 : index
    %c0_321 = arith.constant 0 : index
    %635 = vector.load %arg6[%c26_319, %c0_320, %c0_321] : memref<128x16x16xf32, #tpu.memory_space<vmem>>, vector<1x16x16xf32>
    %636 = vector.shape_cast %635 : vector<1x16x16xf32> to vector<16x16xf32>
    %637 = vector.shape_cast %634 : vector<16x16xf32> to vector<1x16x16xf32>
    tpu.vector_store %arg6[%c26_319, %c0_320, %c0_321], %637 {strides = array<i32>} : memref<128x16x16xf32, #tpu.memory_space<vmem>>, vector<1x16x16xf32>,
    %638 = vector.broadcast %625 : vector<1x16xf32> to vector<16x16xf32>
    %639 = vector.broadcast %627 : vector<16x1xf32> to vector<16x16xf32>
    %640 = arith.mulf %638, %639 : vector<16x16xf32>
    %641 = vector.broadcast %624 : vector<1x16xf32> to vector<16x16xf32>
    %642 = vector.broadcast %626 : vector<16x1xf32> to vector<16x16xf32>
    %643 = arith.mulf %641, %642 : vector<16x16xf32>
    %644 = arith.subf %640, %643 : vector<16x16xf32>
    %c90 = arith.constant 90 : index
    %c0_322 = arith.constant 0 : index
    %c0_323 = arith.constant 0 : index
    %645 = vector.load %arg6[%c90, %c0_322, %c0_323] : memref<128x16x16xf32, #tpu.memory_space<vmem>>, vector<1x16x16xf32>
    %646 = vector.shape_cast %645 : vector<1x16x16xf32> to vector<16x16xf32>
    %647 = vector.shape_cast %644 : vector<16x16xf32> to vector<1x16x16xf32>
    tpu.vector_store %arg6[%c90, %c0_322, %c0_323], %647 {strides = array<i32>} : memref<128x16x16xf32, #tpu.memory_space<vmem>>, vector<1x16x16xf32>,
    %c27 = arith.constant 27 : index
    %c0_324 = arith.constant 0 : index
    %648 = vector.load %arg2[%c27, %c0_324] : memref<64x16xf32, #tpu.memory_space<vmem>>, vector<1x16xf32>
    %c27_325 = arith.constant 27 : index
    %c0_326 = arith.constant 0 : index
    %649 = vector.load %arg3[%c27_325, %c0_326] : memref<64x16xf32, #tpu.memory_space<vmem>>, vector<1x16xf32>
    %c0_327 = arith.constant 0 : index
    %c27_328 = arith.constant 27 : index
    %650 = vector.load %arg4[%c0_327, %c27_328] : memref<16x64xf32, #tpu.memory_space<vmem>>, vector<16x1xf32>
    %c0_329 = arith.constant 0 : index
    %c27_330 = arith.constant 27 : index
    %651 = vector.load %arg5[%c0_329, %c27_330] : memref<16x64xf32, #tpu.memory_space<vmem>>, vector<16x1xf32>
    %652 = vector.broadcast %648 : vector<1x16xf32> to vector<16x16xf32>
    %653 = vector.broadcast %651 : vector<16x1xf32> to vector<16x16xf32>
    %654 = arith.mulf %652, %653 : vector<16x16xf32>
    %655 = vector.broadcast %649 : vector<1x16xf32> to vector<16x16xf32>
    %656 = vector.broadcast %650 : vector<16x1xf32> to vector<16x16xf32>
    %657 = arith.mulf %655, %656 : vector<16x16xf32>
    %658 = arith.addf %654, %657 : vector<16x16xf32>
    %c27_331 = arith.constant 27 : index
    %c0_332 = arith.constant 0 : index
    %c0_333 = arith.constant 0 : index
    %659 = vector.load %arg6[%c27_331, %c0_332, %c0_333] : memref<128x16x16xf32, #tpu.memory_space<vmem>>, vector<1x16x16xf32>
    %660 = vector.shape_cast %659 : vector<1x16x16xf32> to vector<16x16xf32>
    %661 = vector.shape_cast %658 : vector<16x16xf32> to vector<1x16x16xf32>
    tpu.vector_store %arg6[%c27_331, %c0_332, %c0_333], %661 {strides = array<i32>} : memref<128x16x16xf32, #tpu.memory_space<vmem>>, vector<1x16x16xf32>,
    %662 = vector.broadcast %649 : vector<1x16xf32> to vector<16x16xf32>
    %663 = vector.broadcast %651 : vector<16x1xf32> to vector<16x16xf32>
    %664 = arith.mulf %662, %663 : vector<16x16xf32>
    %665 = vector.broadcast %648 : vector<1x16xf32> to vector<16x16xf32>
    %666 = vector.broadcast %650 : vector<16x1xf32> to vector<16x16xf32>
    %667 = arith.mulf %665, %666 : vector<16x16xf32>
    %668 = arith.subf %664, %667 : vector<16x16xf32>
    %c91 = arith.constant 91 : index
    %c0_334 = arith.constant 0 : index
    %c0_335 = arith.constant 0 : index
    %669 = vector.load %arg6[%c91, %c0_334, %c0_335] : memref<128x16x16xf32, #tpu.memory_space<vmem>>, vector<1x16x16xf32>
    %670 = vector.shape_cast %669 : vector<1x16x16xf32> to vector<16x16xf32>
    %671 = vector.shape_cast %668 : vector<16x16xf32> to vector<1x16x16xf32>
    tpu.vector_store %arg6[%c91, %c0_334, %c0_335], %671 {strides = array<i32>} : memref<128x16x16xf32, #tpu.memory_space<vmem>>, vector<1x16x16xf32>,
    %c28 = arith.constant 28 : index
    %c0_336 = arith.constant 0 : index
    %672 = vector.load %arg2[%c28, %c0_336] : memref<64x16xf32, #tpu.memory_space<vmem>>, vector<1x16xf32>
    %c28_337 = arith.constant 28 : index
    %c0_338 = arith.constant 0 : index
    %673 = vector.load %arg3[%c28_337, %c0_338] : memref<64x16xf32, #tpu.memory_space<vmem>>, vector<1x16xf32>
    %c0_339 = arith.constant 0 : index
    %c28_340 = arith.constant 28 : index
    %674 = vector.load %arg4[%c0_339, %c28_340] : memref<16x64xf32, #tpu.memory_space<vmem>>, vector<16x1xf32>
    %c0_341 = arith.constant 0 : index
    %c28_342 = arith.constant 28 : index
    %675 = vector.load %arg5[%c0_341, %c28_342] : memref<16x64xf32, #tpu.memory_space<vmem>>, vector<16x1xf32>
    %676 = vector.broadcast %672 : vector<1x16xf32> to vector<16x16xf32>
    %677 = vector.broadcast %675 : vector<16x1xf32> to vector<16x16xf32>
    %678 = arith.mulf %676, %677 : vector<16x16xf32>
    %679 = vector.broadcast %673 : vector<1x16xf32> to vector<16x16xf32>
    %680 = vector.broadcast %674 : vector<16x1xf32> to vector<16x16xf32>
    %681 = arith.mulf %679, %680 : vector<16x16xf32>
    %682 = arith.addf %678, %681 : vector<16x16xf32>
    %c28_343 = arith.constant 28 : index
    %c0_344 = arith.constant 0 : index
    %c0_345 = arith.constant 0 : index
    %683 = vector.load %arg6[%c28_343, %c0_344, %c0_345] : memref<128x16x16xf32, #tpu.memory_space<vmem>>, vector<1x16x16xf32>
    %684 = vector.shape_cast %683 : vector<1x16x16xf32> to vector<16x16xf32>
    %685 = vector.shape_cast %682 : vector<16x16xf32> to vector<1x16x16xf32>
    tpu.vector_store %arg6[%c28_343, %c0_344, %c0_345], %685 {strides = array<i32>} : memref<128x16x16xf32, #tpu.memory_space<vmem>>, vector<1x16x16xf32>,
    %686 = vector.broadcast %673 : vector<1x16xf32> to vector<16x16xf32>
    %687 = vector.broadcast %675 : vector<16x1xf32> to vector<16x16xf32>
    %688 = arith.mulf %686, %687 : vector<16x16xf32>
    %689 = vector.broadcast %672 : vector<1x16xf32> to vector<16x16xf32>
    %690 = vector.broadcast %674 : vector<16x1xf32> to vector<16x16xf32>
    %691 = arith.mulf %689, %690 : vector<16x16xf32>
    %692 = arith.subf %688, %691 : vector<16x16xf32>
    %c92 = arith.constant 92 : index
    %c0_346 = arith.constant 0 : index
    %c0_347 = arith.constant 0 : index
    %693 = vector.load %arg6[%c92, %c0_346, %c0_347] : memref<128x16x16xf32, #tpu.memory_space<vmem>>, vector<1x16x16xf32>
    %694 = vector.shape_cast %693 : vector<1x16x16xf32> to vector<16x16xf32>
    %695 = vector.shape_cast %692 : vector<16x16xf32> to vector<1x16x16xf32>
    tpu.vector_store %arg6[%c92, %c0_346, %c0_347], %695 {strides = array<i32>} : memref<128x16x16xf32, #tpu.memory_space<vmem>>, vector<1x16x16xf32>,
    %c29 = arith.constant 29 : index
    %c0_348 = arith.constant 0 : index
    %696 = vector.load %arg2[%c29, %c0_348] : memref<64x16xf32, #tpu.memory_space<vmem>>, vector<1x16xf32>
    %c29_349 = arith.constant 29 : index
    %c0_350 = arith.constant 0 : index
    %697 = vector.load %arg3[%c29_349, %c0_350] : memref<64x16xf32, #tpu.memory_space<vmem>>, vector<1x16xf32>
    %c0_351 = arith.constant 0 : index
    %c29_352 = arith.constant 29 : index
    %698 = vector.load %arg4[%c0_351, %c29_352] : memref<16x64xf32, #tpu.memory_space<vmem>>, vector<16x1xf32>
    %c0_353 = arith.constant 0 : index
    %c29_354 = arith.constant 29 : index
    %699 = vector.load %arg5[%c0_353, %c29_354] : memref<16x64xf32, #tpu.memory_space<vmem>>, vector<16x1xf32>
    %700 = vector.broadcast %696 : vector<1x16xf32> to vector<16x16xf32>
    %701 = vector.broadcast %699 : vector<16x1xf32> to vector<16x16xf32>
    %702 = arith.mulf %700, %701 : vector<16x16xf32>
    %703 = vector.broadcast %697 : vector<1x16xf32> to vector<16x16xf32>
    %704 = vector.broadcast %698 : vector<16x1xf32> to vector<16x16xf32>
    %705 = arith.mulf %703, %704 : vector<16x16xf32>
    %706 = arith.addf %702, %705 : vector<16x16xf32>
    %c29_355 = arith.constant 29 : index
    %c0_356 = arith.constant 0 : index
    %c0_357 = arith.constant 0 : index
    %707 = vector.load %arg6[%c29_355, %c0_356, %c0_357] : memref<128x16x16xf32, #tpu.memory_space<vmem>>, vector<1x16x16xf32>
    %708 = vector.shape_cast %707 : vector<1x16x16xf32> to vector<16x16xf32>
    %709 = vector.shape_cast %706 : vector<16x16xf32> to vector<1x16x16xf32>
    tpu.vector_store %arg6[%c29_355, %c0_356, %c0_357], %709 {strides = array<i32>} : memref<128x16x16xf32, #tpu.memory_space<vmem>>, vector<1x16x16xf32>,
    %710 = vector.broadcast %697 : vector<1x16xf32> to vector<16x16xf32>
    %711 = vector.broadcast %699 : vector<16x1xf32> to vector<16x16xf32>
    %712 = arith.mulf %710, %711 : vector<16x16xf32>
    %713 = vector.broadcast %696 : vector<1x16xf32> to vector<16x16xf32>
    %714 = vector.broadcast %698 : vector<16x1xf32> to vector<16x16xf32>
    %715 = arith.mulf %713, %714 : vector<16x16xf32>
    %716 = arith.subf %712, %715 : vector<16x16xf32>
    %c93 = arith.constant 93 : index
    %c0_358 = arith.constant 0 : index
    %c0_359 = arith.constant 0 : index
    %717 = vector.load %arg6[%c93, %c0_358, %c0_359] : memref<128x16x16xf32, #tpu.memory_space<vmem>>, vector<1x16x16xf32>
    %718 = vector.shape_cast %717 : vector<1x16x16xf32> to vector<16x16xf32>
    %719 = vector.shape_cast %716 : vector<16x16xf32> to vector<1x16x16xf32>
    tpu.vector_store %arg6[%c93, %c0_358, %c0_359], %719 {strides = array<i32>} : memref<128x16x16xf32, #tpu.memory_space<vmem>>, vector<1x16x16xf32>,
    %c30 = arith.constant 30 : index
    %c0_360 = arith.constant 0 : index
    %720 = vector.load %arg2[%c30, %c0_360] : memref<64x16xf32, #tpu.memory_space<vmem>>, vector<1x16xf32>
    %c30_361 = arith.constant 30 : index
    %c0_362 = arith.constant 0 : index
    %721 = vector.load %arg3[%c30_361, %c0_362] : memref<64x16xf32, #tpu.memory_space<vmem>>, vector<1x16xf32>
    %c0_363 = arith.constant 0 : index
    %c30_364 = arith.constant 30 : index
    %722 = vector.load %arg4[%c0_363, %c30_364] : memref<16x64xf32, #tpu.memory_space<vmem>>, vector<16x1xf32>
    %c0_365 = arith.constant 0 : index
    %c30_366 = arith.constant 30 : index
    %723 = vector.load %arg5[%c0_365, %c30_366] : memref<16x64xf32, #tpu.memory_space<vmem>>, vector<16x1xf32>
    %724 = vector.broadcast %720 : vector<1x16xf32> to vector<16x16xf32>
    %725 = vector.broadcast %723 : vector<16x1xf32> to vector<16x16xf32>
    %726 = arith.mulf %724, %725 : vector<16x16xf32>
    %727 = vector.broadcast %721 : vector<1x16xf32> to vector<16x16xf32>
    %728 = vector.broadcast %722 : vector<16x1xf32> to vector<16x16xf32>
    %729 = arith.mulf %727, %728 : vector<16x16xf32>
    %730 = arith.addf %726, %729 : vector<16x16xf32>
    %c30_367 = arith.constant 30 : index
    %c0_368 = arith.constant 0 : index
    %c0_369 = arith.constant 0 : index
    %731 = vector.load %arg6[%c30_367, %c0_368, %c0_369] : memref<128x16x16xf32, #tpu.memory_space<vmem>>, vector<1x16x16xf32>
    %732 = vector.shape_cast %731 : vector<1x16x16xf32> to vector<16x16xf32>
    %733 = vector.shape_cast %730 : vector<16x16xf32> to vector<1x16x16xf32>
    tpu.vector_store %arg6[%c30_367, %c0_368, %c0_369], %733 {strides = array<i32>} : memref<128x16x16xf32, #tpu.memory_space<vmem>>, vector<1x16x16xf32>,
    %734 = vector.broadcast %721 : vector<1x16xf32> to vector<16x16xf32>
    %735 = vector.broadcast %723 : vector<16x1xf32> to vector<16x16xf32>
    %736 = arith.mulf %734, %735 : vector<16x16xf32>
    %737 = vector.broadcast %720 : vector<1x16xf32> to vector<16x16xf32>
    %738 = vector.broadcast %722 : vector<16x1xf32> to vector<16x16xf32>
    %739 = arith.mulf %737, %738 : vector<16x16xf32>
    %740 = arith.subf %736, %739 : vector<16x16xf32>
    %c94 = arith.constant 94 : index
    %c0_370 = arith.constant 0 : index
    %c0_371 = arith.constant 0 : index
    %741 = vector.load %arg6[%c94, %c0_370, %c0_371] : memref<128x16x16xf32, #tpu.memory_space<vmem>>, vector<1x16x16xf32>
    %742 = vector.shape_cast %741 : vector<1x16x16xf32> to vector<16x16xf32>
    %743 = vector.shape_cast %740 : vector<16x16xf32> to vector<1x16x16xf32>
    tpu.vector_store %arg6[%c94, %c0_370, %c0_371], %743 {strides = array<i32>} : memref<128x16x16xf32, #tpu.memory_space<vmem>>, vector<1x16x16xf32>,
    %c31 = arith.constant 31 : index
    %c0_372 = arith.constant 0 : index
    %744 = vector.load %arg2[%c31, %c0_372] : memref<64x16xf32, #tpu.memory_space<vmem>>, vector<1x16xf32>
    %c31_373 = arith.constant 31 : index
    %c0_374 = arith.constant 0 : index
    %745 = vector.load %arg3[%c31_373, %c0_374] : memref<64x16xf32, #tpu.memory_space<vmem>>, vector<1x16xf32>
    %c0_375 = arith.constant 0 : index
    %c31_376 = arith.constant 31 : index
    %746 = vector.load %arg4[%c0_375, %c31_376] : memref<16x64xf32, #tpu.memory_space<vmem>>, vector<16x1xf32>
    %c0_377 = arith.constant 0 : index
    %c31_378 = arith.constant 31 : index
    %747 = vector.load %arg5[%c0_377, %c31_378] : memref<16x64xf32, #tpu.memory_space<vmem>>, vector<16x1xf32>
    %748 = vector.broadcast %744 : vector<1x16xf32> to vector<16x16xf32>
    %749 = vector.broadcast %747 : vector<16x1xf32> to vector<16x16xf32>
    %750 = arith.mulf %748, %749 : vector<16x16xf32>
    %751 = vector.broadcast %745 : vector<1x16xf32> to vector<16x16xf32>
    %752 = vector.broadcast %746 : vector<16x1xf32> to vector<16x16xf32>
    %753 = arith.mulf %751, %752 : vector<16x16xf32>
    %754 = arith.addf %750, %753 : vector<16x16xf32>
    %c31_379 = arith.constant 31 : index
    %c0_380 = arith.constant 0 : index
    %c0_381 = arith.constant 0 : index
    %755 = vector.load %arg6[%c31_379, %c0_380, %c0_381] : memref<128x16x16xf32, #tpu.memory_space<vmem>>, vector<1x16x16xf32>
    %756 = vector.shape_cast %755 : vector<1x16x16xf32> to vector<16x16xf32>
    %757 = vector.shape_cast %754 : vector<16x16xf32> to vector<1x16x16xf32>
    tpu.vector_store %arg6[%c31_379, %c0_380, %c0_381], %757 {strides = array<i32>} : memref<128x16x16xf32, #tpu.memory_space<vmem>>, vector<1x16x16xf32>,
    %758 = vector.broadcast %745 : vector<1x16xf32> to vector<16x16xf32>
    %759 = vector.broadcast %747 : vector<16x1xf32> to vector<16x16xf32>
    %760 = arith.mulf %758, %759 : vector<16x16xf32>
    %761 = vector.broadcast %744 : vector<1x16xf32> to vector<16x16xf32>
    %762 = vector.broadcast %746 : vector<16x1xf32> to vector<16x16xf32>
    %763 = arith.mulf %761, %762 : vector<16x16xf32>
    %764 = arith.subf %760, %763 : vector<16x16xf32>
    %c95 = arith.constant 95 : index
    %c0_382 = arith.constant 0 : index
    %c0_383 = arith.constant 0 : index
    %765 = vector.load %arg6[%c95, %c0_382, %c0_383] : memref<128x16x16xf32, #tpu.memory_space<vmem>>, vector<1x16x16xf32>
    %766 = vector.shape_cast %765 : vector<1x16x16xf32> to vector<16x16xf32>
    %767 = vector.shape_cast %764 : vector<16x16xf32> to vector<1x16x16xf32>
    tpu.vector_store %arg6[%c95, %c0_382, %c0_383], %767 {strides = array<i32>} : memref<128x16x16xf32, #tpu.memory_space<vmem>>, vector<1x16x16xf32>,
    %c32 = arith.constant 32 : index
    %c0_384 = arith.constant 0 : index
    %768 = vector.load %arg2[%c32, %c0_384] : memref<64x16xf32, #tpu.memory_space<vmem>>, vector<1x16xf32>
    %c32_385 = arith.constant 32 : index
    %c0_386 = arith.constant 0 : index
    %769 = vector.load %arg3[%c32_385, %c0_386] : memref<64x16xf32, #tpu.memory_space<vmem>>, vector<1x16xf32>
    %c0_387 = arith.constant 0 : index
    %c32_388 = arith.constant 32 : index
    %770 = vector.load %arg4[%c0_387, %c32_388] : memref<16x64xf32, #tpu.memory_space<vmem>>, vector<16x1xf32>
    %c0_389 = arith.constant 0 : index
    %c32_390 = arith.constant 32 : index
    %771 = vector.load %arg5[%c0_389, %c32_390] : memref<16x64xf32, #tpu.memory_space<vmem>>, vector<16x1xf32>
    %772 = vector.broadcast %768 : vector<1x16xf32> to vector<16x16xf32>
    %773 = vector.broadcast %771 : vector<16x1xf32> to vector<16x16xf32>
    %774 = arith.mulf %772, %773 : vector<16x16xf32>
    %775 = vector.broadcast %769 : vector<1x16xf32> to vector<16x16xf32>
    %776 = vector.broadcast %770 : vector<16x1xf32> to vector<16x16xf32>
    %777 = arith.mulf %775, %776 : vector<16x16xf32>
    %778 = arith.addf %774, %777 : vector<16x16xf32>
    %c32_391 = arith.constant 32 : index
    %c0_392 = arith.constant 0 : index
    %c0_393 = arith.constant 0 : index
    %779 = vector.load %arg6[%c32_391, %c0_392, %c0_393] : memref<128x16x16xf32, #tpu.memory_space<vmem>>, vector<1x16x16xf32>
    %780 = vector.shape_cast %779 : vector<1x16x16xf32> to vector<16x16xf32>
    %781 = vector.shape_cast %778 : vector<16x16xf32> to vector<1x16x16xf32>
    tpu.vector_store %arg6[%c32_391, %c0_392, %c0_393], %781 {strides = array<i32>} : memref<128x16x16xf32, #tpu.memory_space<vmem>>, vector<1x16x16xf32>,
    %782 = vector.broadcast %769 : vector<1x16xf32> to vector<16x16xf32>
    %783 = vector.broadcast %771 : vector<16x1xf32> to vector<16x16xf32>
    %784 = arith.mulf %782, %783 : vector<16x16xf32>
    %785 = vector.broadcast %768 : vector<1x16xf32> to vector<16x16xf32>
    %786 = vector.broadcast %770 : vector<16x1xf32> to vector<16x16xf32>
    %787 = arith.mulf %785, %786 : vector<16x16xf32>
    %788 = arith.subf %784, %787 : vector<16x16xf32>
    %c96 = arith.constant 96 : index
    %c0_394 = arith.constant 0 : index
    %c0_395 = arith.constant 0 : index
    %789 = vector.load %arg6[%c96, %c0_394, %c0_395] : memref<128x16x16xf32, #tpu.memory_space<vmem>>, vector<1x16x16xf32>
    %790 = vector.shape_cast %789 : vector<1x16x16xf32> to vector<16x16xf32>
    %791 = vector.shape_cast %788 : vector<16x16xf32> to vector<1x16x16xf32>
    tpu.vector_store %arg6[%c96, %c0_394, %c0_395], %791 {strides = array<i32>} : memref<128x16x16xf32, #tpu.memory_space<vmem>>, vector<1x16x16xf32>,
    %c33 = arith.constant 33 : index
    %c0_396 = arith.constant 0 : index
    %792 = vector.load %arg2[%c33, %c0_396] : memref<64x16xf32, #tpu.memory_space<vmem>>, vector<1x16xf32>
    %c33_397 = arith.constant 33 : index
    %c0_398 = arith.constant 0 : index
    %793 = vector.load %arg3[%c33_397, %c0_398] : memref<64x16xf32, #tpu.memory_space<vmem>>, vector<1x16xf32>
    %c0_399 = arith.constant 0 : index
    %c33_400 = arith.constant 33 : index
    %794 = vector.load %arg4[%c0_399, %c33_400] : memref<16x64xf32, #tpu.memory_space<vmem>>, vector<16x1xf32>
    %c0_401 = arith.constant 0 : index
    %c33_402 = arith.constant 33 : index
    %795 = vector.load %arg5[%c0_401, %c33_402] : memref<16x64xf32, #tpu.memory_space<vmem>>, vector<16x1xf32>
    %796 = vector.broadcast %792 : vector<1x16xf32> to vector<16x16xf32>
    %797 = vector.broadcast %795 : vector<16x1xf32> to vector<16x16xf32>
    %798 = arith.mulf %796, %797 : vector<16x16xf32>
    %799 = vector.broadcast %793 : vector<1x16xf32> to vector<16x16xf32>
    %800 = vector.broadcast %794 : vector<16x1xf32> to vector<16x16xf32>
    %801 = arith.mulf %799, %800 : vector<16x16xf32>
    %802 = arith.addf %798, %801 : vector<16x16xf32>
    %c33_403 = arith.constant 33 : index
    %c0_404 = arith.constant 0 : index
    %c0_405 = arith.constant 0 : index
    %803 = vector.load %arg6[%c33_403, %c0_404, %c0_405] : memref<128x16x16xf32, #tpu.memory_space<vmem>>, vector<1x16x16xf32>
    %804 = vector.shape_cast %803 : vector<1x16x16xf32> to vector<16x16xf32>
    %805 = vector.shape_cast %802 : vector<16x16xf32> to vector<1x16x16xf32>
    tpu.vector_store %arg6[%c33_403, %c0_404, %c0_405], %805 {strides = array<i32>} : memref<128x16x16xf32, #tpu.memory_space<vmem>>, vector<1x16x16xf32>,
    %806 = vector.broadcast %793 : vector<1x16xf32> to vector<16x16xf32>
    %807 = vector.broadcast %795 : vector<16x1xf32> to vector<16x16xf32>
    %808 = arith.mulf %806, %807 : vector<16x16xf32>
    %809 = vector.broadcast %792 : vector<1x16xf32> to vector<16x16xf32>
    %810 = vector.broadcast %794 : vector<16x1xf32> to vector<16x16xf32>
    %811 = arith.mulf %809, %810 : vector<16x16xf32>
    %812 = arith.subf %808, %811 : vector<16x16xf32>
    %c97 = arith.constant 97 : index
    %c0_406 = arith.constant 0 : index
    %c0_407 = arith.constant 0 : index
    %813 = vector.load %arg6[%c97, %c0_406, %c0_407] : memref<128x16x16xf32, #tpu.memory_space<vmem>>, vector<1x16x16xf32>
    %814 = vector.shape_cast %813 : vector<1x16x16xf32> to vector<16x16xf32>
    %815 = vector.shape_cast %812 : vector<16x16xf32> to vector<1x16x16xf32>
    tpu.vector_store %arg6[%c97, %c0_406, %c0_407], %815 {strides = array<i32>} : memref<128x16x16xf32, #tpu.memory_space<vmem>>, vector<1x16x16xf32>,
    %c34 = arith.constant 34 : index
    %c0_408 = arith.constant 0 : index
    %816 = vector.load %arg2[%c34, %c0_408] : memref<64x16xf32, #tpu.memory_space<vmem>>, vector<1x16xf32>
    %c34_409 = arith.constant 34 : index
    %c0_410 = arith.constant 0 : index
    %817 = vector.load %arg3[%c34_409, %c0_410] : memref<64x16xf32, #tpu.memory_space<vmem>>, vector<1x16xf32>
    %c0_411 = arith.constant 0 : index
    %c34_412 = arith.constant 34 : index
    %818 = vector.load %arg4[%c0_411, %c34_412] : memref<16x64xf32, #tpu.memory_space<vmem>>, vector<16x1xf32>
    %c0_413 = arith.constant 0 : index
    %c34_414 = arith.constant 34 : index
    %819 = vector.load %arg5[%c0_413, %c34_414] : memref<16x64xf32, #tpu.memory_space<vmem>>, vector<16x1xf32>
    %820 = vector.broadcast %816 : vector<1x16xf32> to vector<16x16xf32>
    %821 = vector.broadcast %819 : vector<16x1xf32> to vector<16x16xf32>
    %822 = arith.mulf %820, %821 : vector<16x16xf32>
    %823 = vector.broadcast %817 : vector<1x16xf32> to vector<16x16xf32>
    %824 = vector.broadcast %818 : vector<16x1xf32> to vector<16x16xf32>
    %825 = arith.mulf %823, %824 : vector<16x16xf32>
    %826 = arith.addf %822, %825 : vector<16x16xf32>
    %c34_415 = arith.constant 34 : index
    %c0_416 = arith.constant 0 : index
    %c0_417 = arith.constant 0 : index
    %827 = vector.load %arg6[%c34_415, %c0_416, %c0_417] : memref<128x16x16xf32, #tpu.memory_space<vmem>>, vector<1x16x16xf32>
    %828 = vector.shape_cast %827 : vector<1x16x16xf32> to vector<16x16xf32>
    %829 = vector.shape_cast %826 : vector<16x16xf32> to vector<1x16x16xf32>
    tpu.vector_store %arg6[%c34_415, %c0_416, %c0_417], %829 {strides = array<i32>} : memref<128x16x16xf32, #tpu.memory_space<vmem>>, vector<1x16x16xf32>,
    %830 = vector.broadcast %817 : vector<1x16xf32> to vector<16x16xf32>
    %831 = vector.broadcast %819 : vector<16x1xf32> to vector<16x16xf32>
    %832 = arith.mulf %830, %831 : vector<16x16xf32>
    %833 = vector.broadcast %816 : vector<1x16xf32> to vector<16x16xf32>
    %834 = vector.broadcast %818 : vector<16x1xf32> to vector<16x16xf32>
    %835 = arith.mulf %833, %834 : vector<16x16xf32>
    %836 = arith.subf %832, %835 : vector<16x16xf32>
    %c98 = arith.constant 98 : index
    %c0_418 = arith.constant 0 : index
    %c0_419 = arith.constant 0 : index
    %837 = vector.load %arg6[%c98, %c0_418, %c0_419] : memref<128x16x16xf32, #tpu.memory_space<vmem>>, vector<1x16x16xf32>
    %838 = vector.shape_cast %837 : vector<1x16x16xf32> to vector<16x16xf32>
    %839 = vector.shape_cast %836 : vector<16x16xf32> to vector<1x16x16xf32>
    tpu.vector_store %arg6[%c98, %c0_418, %c0_419], %839 {strides = array<i32>} : memref<128x16x16xf32, #tpu.memory_space<vmem>>, vector<1x16x16xf32>,
    %c35 = arith.constant 35 : index
    %c0_420 = arith.constant 0 : index
    %840 = vector.load %arg2[%c35, %c0_420] : memref<64x16xf32, #tpu.memory_space<vmem>>, vector<1x16xf32>
    %c35_421 = arith.constant 35 : index
    %c0_422 = arith.constant 0 : index
    %841 = vector.load %arg3[%c35_421, %c0_422] : memref<64x16xf32, #tpu.memory_space<vmem>>, vector<1x16xf32>
    %c0_423 = arith.constant 0 : index
    %c35_424 = arith.constant 35 : index
    %842 = vector.load %arg4[%c0_423, %c35_424] : memref<16x64xf32, #tpu.memory_space<vmem>>, vector<16x1xf32>
    %c0_425 = arith.constant 0 : index
    %c35_426 = arith.constant 35 : index
    %843 = vector.load %arg5[%c0_425, %c35_426] : memref<16x64xf32, #tpu.memory_space<vmem>>, vector<16x1xf32>
    %844 = vector.broadcast %840 : vector<1x16xf32> to vector<16x16xf32>
    %845 = vector.broadcast %843 : vector<16x1xf32> to vector<16x16xf32>
    %846 = arith.mulf %844, %845 : vector<16x16xf32>
    %847 = vector.broadcast %841 : vector<1x16xf32> to vector<16x16xf32>
    %848 = vector.broadcast %842 : vector<16x1xf32> to vector<16x16xf32>
    %849 = arith.mulf %847, %848 : vector<16x16xf32>
    %850 = arith.addf %846, %849 : vector<16x16xf32>
    %c35_427 = arith.constant 35 : index
    %c0_428 = arith.constant 0 : index
    %c0_429 = arith.constant 0 : index
    %851 = vector.load %arg6[%c35_427, %c0_428, %c0_429] : memref<128x16x16xf32, #tpu.memory_space<vmem>>, vector<1x16x16xf32>
    %852 = vector.shape_cast %851 : vector<1x16x16xf32> to vector<16x16xf32>
    %853 = vector.shape_cast %850 : vector<16x16xf32> to vector<1x16x16xf32>
    tpu.vector_store %arg6[%c35_427, %c0_428, %c0_429], %853 {strides = array<i32>} : memref<128x16x16xf32, #tpu.memory_space<vmem>>, vector<1x16x16xf32>,
    %854 = vector.broadcast %841 : vector<1x16xf32> to vector<16x16xf32>
    %855 = vector.broadcast %843 : vector<16x1xf32> to vector<16x16xf32>
    %856 = arith.mulf %854, %855 : vector<16x16xf32>
    %857 = vector.broadcast %840 : vector<1x16xf32> to vector<16x16xf32>
    %858 = vector.broadcast %842 : vector<16x1xf32> to vector<16x16xf32>
    %859 = arith.mulf %857, %858 : vector<16x16xf32>
    %860 = arith.subf %856, %859 : vector<16x16xf32>
    %c99 = arith.constant 99 : index
    %c0_430 = arith.constant 0 : index
    %c0_431 = arith.constant 0 : index
    %861 = vector.load %arg6[%c99, %c0_430, %c0_431] : memref<128x16x16xf32, #tpu.memory_space<vmem>>, vector<1x16x16xf32>
    %862 = vector.shape_cast %861 : vector<1x16x16xf32> to vector<16x16xf32>
    %863 = vector.shape_cast %860 : vector<16x16xf32> to vector<1x16x16xf32>
    tpu.vector_store %arg6[%c99, %c0_430, %c0_431], %863 {strides = array<i32>} : memref<128x16x16xf32, #tpu.memory_space<vmem>>, vector<1x16x16xf32>,
    %c36 = arith.constant 36 : index
    %c0_432 = arith.constant 0 : index
    %864 = vector.load %arg2[%c36, %c0_432] : memref<64x16xf32, #tpu.memory_space<vmem>>, vector<1x16xf32>
    %c36_433 = arith.constant 36 : index
    %c0_434 = arith.constant 0 : index
    %865 = vector.load %arg3[%c36_433, %c0_434] : memref<64x16xf32, #tpu.memory_space<vmem>>, vector<1x16xf32>
    %c0_435 = arith.constant 0 : index
    %c36_436 = arith.constant 36 : index
    %866 = vector.load %arg4[%c0_435, %c36_436] : memref<16x64xf32, #tpu.memory_space<vmem>>, vector<16x1xf32>
    %c0_437 = arith.constant 0 : index
    %c36_438 = arith.constant 36 : index
    %867 = vector.load %arg5[%c0_437, %c36_438] : memref<16x64xf32, #tpu.memory_space<vmem>>, vector<16x1xf32>
    %868 = vector.broadcast %864 : vector<1x16xf32> to vector<16x16xf32>
    %869 = vector.broadcast %867 : vector<16x1xf32> to vector<16x16xf32>
    %870 = arith.mulf %868, %869 : vector<16x16xf32>
    %871 = vector.broadcast %865 : vector<1x16xf32> to vector<16x16xf32>
    %872 = vector.broadcast %866 : vector<16x1xf32> to vector<16x16xf32>
    %873 = arith.mulf %871, %872 : vector<16x16xf32>
    %874 = arith.addf %870, %873 : vector<16x16xf32>
    %c36_439 = arith.constant 36 : index
    %c0_440 = arith.constant 0 : index
    %c0_441 = arith.constant 0 : index
    %875 = vector.load %arg6[%c36_439, %c0_440, %c0_441] : memref<128x16x16xf32, #tpu.memory_space<vmem>>, vector<1x16x16xf32>
    %876 = vector.shape_cast %875 : vector<1x16x16xf32> to vector<16x16xf32>
    %877 = vector.shape_cast %874 : vector<16x16xf32> to vector<1x16x16xf32>
    tpu.vector_store %arg6[%c36_439, %c0_440, %c0_441], %877 {strides = array<i32>} : memref<128x16x16xf32, #tpu.memory_space<vmem>>, vector<1x16x16xf32>,
    %878 = vector.broadcast %865 : vector<1x16xf32> to vector<16x16xf32>
    %879 = vector.broadcast %867 : vector<16x1xf32> to vector<16x16xf32>
    %880 = arith.mulf %878, %879 : vector<16x16xf32>
    %881 = vector.broadcast %864 : vector<1x16xf32> to vector<16x16xf32>
    %882 = vector.broadcast %866 : vector<16x1xf32> to vector<16x16xf32>
    %883 = arith.mulf %881, %882 : vector<16x16xf32>
    %884 = arith.subf %880, %883 : vector<16x16xf32>
    %c100 = arith.constant 100 : index
    %c0_442 = arith.constant 0 : index
    %c0_443 = arith.constant 0 : index
    %885 = vector.load %arg6[%c100, %c0_442, %c0_443] : memref<128x16x16xf32, #tpu.memory_space<vmem>>, vector<1x16x16xf32>
    %886 = vector.shape_cast %885 : vector<1x16x16xf32> to vector<16x16xf32>
    %887 = vector.shape_cast %884 : vector<16x16xf32> to vector<1x16x16xf32>
    tpu.vector_store %arg6[%c100, %c0_442, %c0_443], %887 {strides = array<i32>} : memref<128x16x16xf32, #tpu.memory_space<vmem>>, vector<1x16x16xf32>,
    %c37 = arith.constant 37 : index
    %c0_444 = arith.constant 0 : index
    %888 = vector.load %arg2[%c37, %c0_444] : memref<64x16xf32, #tpu.memory_space<vmem>>, vector<1x16xf32>
    %c37_445 = arith.constant 37 : index
    %c0_446 = arith.constant 0 : index
    %889 = vector.load %arg3[%c37_445, %c0_446] : memref<64x16xf32, #tpu.memory_space<vmem>>, vector<1x16xf32>
    %c0_447 = arith.constant 0 : index
    %c37_448 = arith.constant 37 : index
    %890 = vector.load %arg4[%c0_447, %c37_448] : memref<16x64xf32, #tpu.memory_space<vmem>>, vector<16x1xf32>
    %c0_449 = arith.constant 0 : index
    %c37_450 = arith.constant 37 : index
    %891 = vector.load %arg5[%c0_449, %c37_450] : memref<16x64xf32, #tpu.memory_space<vmem>>, vector<16x1xf32>
    %892 = vector.broadcast %888 : vector<1x16xf32> to vector<16x16xf32>
    %893 = vector.broadcast %891 : vector<16x1xf32> to vector<16x16xf32>
    %894 = arith.mulf %892, %893 : vector<16x16xf32>
    %895 = vector.broadcast %889 : vector<1x16xf32> to vector<16x16xf32>
    %896 = vector.broadcast %890 : vector<16x1xf32> to vector<16x16xf32>
    %897 = arith.mulf %895, %896 : vector<16x16xf32>
    %898 = arith.addf %894, %897 : vector<16x16xf32>
    %c37_451 = arith.constant 37 : index
    %c0_452 = arith.constant 0 : index
    %c0_453 = arith.constant 0 : index
    %899 = vector.load %arg6[%c37_451, %c0_452, %c0_453] : memref<128x16x16xf32, #tpu.memory_space<vmem>>, vector<1x16x16xf32>
    %900 = vector.shape_cast %899 : vector<1x16x16xf32> to vector<16x16xf32>
    %901 = vector.shape_cast %898 : vector<16x16xf32> to vector<1x16x16xf32>
    tpu.vector_store %arg6[%c37_451, %c0_452, %c0_453], %901 {strides = array<i32>} : memref<128x16x16xf32, #tpu.memory_space<vmem>>, vector<1x16x16xf32>,
    %902 = vector.broadcast %889 : vector<1x16xf32> to vector<16x16xf32>
    %903 = vector.broadcast %891 : vector<16x1xf32> to vector<16x16xf32>
    %904 = arith.mulf %902, %903 : vector<16x16xf32>
    %905 = vector.broadcast %888 : vector<1x16xf32> to vector<16x16xf32>
    %906 = vector.broadcast %890 : vector<16x1xf32> to vector<16x16xf32>
    %907 = arith.mulf %905, %906 : vector<16x16xf32>
    %908 = arith.subf %904, %907 : vector<16x16xf32>
    %c101 = arith.constant 101 : index
    %c0_454 = arith.constant 0 : index
    %c0_455 = arith.constant 0 : index
    %909 = vector.load %arg6[%c101, %c0_454, %c0_455] : memref<128x16x16xf32, #tpu.memory_space<vmem>>, vector<1x16x16xf32>
    %910 = vector.shape_cast %909 : vector<1x16x16xf32> to vector<16x16xf32>
    %911 = vector.shape_cast %908 : vector<16x16xf32> to vector<1x16x16xf32>
    tpu.vector_store %arg6[%c101, %c0_454, %c0_455], %911 {strides = array<i32>} : memref<128x16x16xf32, #tpu.memory_space<vmem>>, vector<1x16x16xf32>,
    %c38 = arith.constant 38 : index
    %c0_456 = arith.constant 0 : index
    %912 = vector.load %arg2[%c38, %c0_456] : memref<64x16xf32, #tpu.memory_space<vmem>>, vector<1x16xf32>
    %c38_457 = arith.constant 38 : index
    %c0_458 = arith.constant 0 : index
    %913 = vector.load %arg3[%c38_457, %c0_458] : memref<64x16xf32, #tpu.memory_space<vmem>>, vector<1x16xf32>
    %c0_459 = arith.constant 0 : index
    %c38_460 = arith.constant 38 : index
    %914 = vector.load %arg4[%c0_459, %c38_460] : memref<16x64xf32, #tpu.memory_space<vmem>>, vector<16x1xf32>
    %c0_461 = arith.constant 0 : index
    %c38_462 = arith.constant 38 : index
    %915 = vector.load %arg5[%c0_461, %c38_462] : memref<16x64xf32, #tpu.memory_space<vmem>>, vector<16x1xf32>
    %916 = vector.broadcast %912 : vector<1x16xf32> to vector<16x16xf32>
    %917 = vector.broadcast %915 : vector<16x1xf32> to vector<16x16xf32>
    %918 = arith.mulf %916, %917 : vector<16x16xf32>
    %919 = vector.broadcast %913 : vector<1x16xf32> to vector<16x16xf32>
    %920 = vector.broadcast %914 : vector<16x1xf32> to vector<16x16xf32>
    %921 = arith.mulf %919, %920 : vector<16x16xf32>
    %922 = arith.addf %918, %921 : vector<16x16xf32>
    %c38_463 = arith.constant 38 : index
    %c0_464 = arith.constant 0 : index
    %c0_465 = arith.constant 0 : index
    %923 = vector.load %arg6[%c38_463, %c0_464, %c0_465] : memref<128x16x16xf32, #tpu.memory_space<vmem>>, vector<1x16x16xf32>
    %924 = vector.shape_cast %923 : vector<1x16x16xf32> to vector<16x16xf32>
    %925 = vector.shape_cast %922 : vector<16x16xf32> to vector<1x16x16xf32>
    tpu.vector_store %arg6[%c38_463, %c0_464, %c0_465], %925 {strides = array<i32>} : memref<128x16x16xf32, #tpu.memory_space<vmem>>, vector<1x16x16xf32>,
    %926 = vector.broadcast %913 : vector<1x16xf32> to vector<16x16xf32>
    %927 = vector.broadcast %915 : vector<16x1xf32> to vector<16x16xf32>
    %928 = arith.mulf %926, %927 : vector<16x16xf32>
    %929 = vector.broadcast %912 : vector<1x16xf32> to vector<16x16xf32>
    %930 = vector.broadcast %914 : vector<16x1xf32> to vector<16x16xf32>
    %931 = arith.mulf %929, %930 : vector<16x16xf32>
    %932 = arith.subf %928, %931 : vector<16x16xf32>
    %c102 = arith.constant 102 : index
    %c0_466 = arith.constant 0 : index
    %c0_467 = arith.constant 0 : index
    %933 = vector.load %arg6[%c102, %c0_466, %c0_467] : memref<128x16x16xf32, #tpu.memory_space<vmem>>, vector<1x16x16xf32>
    %934 = vector.shape_cast %933 : vector<1x16x16xf32> to vector<16x16xf32>
    %935 = vector.shape_cast %932 : vector<16x16xf32> to vector<1x16x16xf32>
    tpu.vector_store %arg6[%c102, %c0_466, %c0_467], %935 {strides = array<i32>} : memref<128x16x16xf32, #tpu.memory_space<vmem>>, vector<1x16x16xf32>,
    %c39 = arith.constant 39 : index
    %c0_468 = arith.constant 0 : index
    %936 = vector.load %arg2[%c39, %c0_468] : memref<64x16xf32, #tpu.memory_space<vmem>>, vector<1x16xf32>
    %c39_469 = arith.constant 39 : index
    %c0_470 = arith.constant 0 : index
    %937 = vector.load %arg3[%c39_469, %c0_470] : memref<64x16xf32, #tpu.memory_space<vmem>>, vector<1x16xf32>
    %c0_471 = arith.constant 0 : index
    %c39_472 = arith.constant 39 : index
    %938 = vector.load %arg4[%c0_471, %c39_472] : memref<16x64xf32, #tpu.memory_space<vmem>>, vector<16x1xf32>
    %c0_473 = arith.constant 0 : index
    %c39_474 = arith.constant 39 : index
    %939 = vector.load %arg5[%c0_473, %c39_474] : memref<16x64xf32, #tpu.memory_space<vmem>>, vector<16x1xf32>
    %940 = vector.broadcast %936 : vector<1x16xf32> to vector<16x16xf32>
    %941 = vector.broadcast %939 : vector<16x1xf32> to vector<16x16xf32>
    %942 = arith.mulf %940, %941 : vector<16x16xf32>
    %943 = vector.broadcast %937 : vector<1x16xf32> to vector<16x16xf32>
    %944 = vector.broadcast %938 : vector<16x1xf32> to vector<16x16xf32>
    %945 = arith.mulf %943, %944 : vector<16x16xf32>
    %946 = arith.addf %942, %945 : vector<16x16xf32>
    %c39_475 = arith.constant 39 : index
    %c0_476 = arith.constant 0 : index
    %c0_477 = arith.constant 0 : index
    %947 = vector.load %arg6[%c39_475, %c0_476, %c0_477] : memref<128x16x16xf32, #tpu.memory_space<vmem>>, vector<1x16x16xf32>
    %948 = vector.shape_cast %947 : vector<1x16x16xf32> to vector<16x16xf32>
    %949 = vector.shape_cast %946 : vector<16x16xf32> to vector<1x16x16xf32>
    tpu.vector_store %arg6[%c39_475, %c0_476, %c0_477], %949 {strides = array<i32>} : memref<128x16x16xf32, #tpu.memory_space<vmem>>, vector<1x16x16xf32>,
    %950 = vector.broadcast %937 : vector<1x16xf32> to vector<16x16xf32>
    %951 = vector.broadcast %939 : vector<16x1xf32> to vector<16x16xf32>
    %952 = arith.mulf %950, %951 : vector<16x16xf32>
    %953 = vector.broadcast %936 : vector<1x16xf32> to vector<16x16xf32>
    %954 = vector.broadcast %938 : vector<16x1xf32> to vector<16x16xf32>
    %955 = arith.mulf %953, %954 : vector<16x16xf32>
    %956 = arith.subf %952, %955 : vector<16x16xf32>
    %c103 = arith.constant 103 : index
    %c0_478 = arith.constant 0 : index
    %c0_479 = arith.constant 0 : index
    %957 = vector.load %arg6[%c103, %c0_478, %c0_479] : memref<128x16x16xf32, #tpu.memory_space<vmem>>, vector<1x16x16xf32>
    %958 = vector.shape_cast %957 : vector<1x16x16xf32> to vector<16x16xf32>
    %959 = vector.shape_cast %956 : vector<16x16xf32> to vector<1x16x16xf32>
    tpu.vector_store %arg6[%c103, %c0_478, %c0_479], %959 {strides = array<i32>} : memref<128x16x16xf32, #tpu.memory_space<vmem>>, vector<1x16x16xf32>,
    %c40 = arith.constant 40 : index
    %c0_480 = arith.constant 0 : index
    %960 = vector.load %arg2[%c40, %c0_480] : memref<64x16xf32, #tpu.memory_space<vmem>>, vector<1x16xf32>
    %c40_481 = arith.constant 40 : index
    %c0_482 = arith.constant 0 : index
    %961 = vector.load %arg3[%c40_481, %c0_482] : memref<64x16xf32, #tpu.memory_space<vmem>>, vector<1x16xf32>
    %c0_483 = arith.constant 0 : index
    %c40_484 = arith.constant 40 : index
    %962 = vector.load %arg4[%c0_483, %c40_484] : memref<16x64xf32, #tpu.memory_space<vmem>>, vector<16x1xf32>
    %c0_485 = arith.constant 0 : index
    %c40_486 = arith.constant 40 : index
    %963 = vector.load %arg5[%c0_485, %c40_486] : memref<16x64xf32, #tpu.memory_space<vmem>>, vector<16x1xf32>
    %964 = vector.broadcast %960 : vector<1x16xf32> to vector<16x16xf32>
    %965 = vector.broadcast %963 : vector<16x1xf32> to vector<16x16xf32>
    %966 = arith.mulf %964, %965 : vector<16x16xf32>
    %967 = vector.broadcast %961 : vector<1x16xf32> to vector<16x16xf32>
    %968 = vector.broadcast %962 : vector<16x1xf32> to vector<16x16xf32>
    %969 = arith.mulf %967, %968 : vector<16x16xf32>
    %970 = arith.addf %966, %969 : vector<16x16xf32>
    %c40_487 = arith.constant 40 : index
    %c0_488 = arith.constant 0 : index
    %c0_489 = arith.constant 0 : index
    %971 = vector.load %arg6[%c40_487, %c0_488, %c0_489] : memref<128x16x16xf32, #tpu.memory_space<vmem>>, vector<1x16x16xf32>
    %972 = vector.shape_cast %971 : vector<1x16x16xf32> to vector<16x16xf32>
    %973 = vector.shape_cast %970 : vector<16x16xf32> to vector<1x16x16xf32>
    tpu.vector_store %arg6[%c40_487, %c0_488, %c0_489], %973 {strides = array<i32>} : memref<128x16x16xf32, #tpu.memory_space<vmem>>, vector<1x16x16xf32>,
    %974 = vector.broadcast %961 : vector<1x16xf32> to vector<16x16xf32>
    %975 = vector.broadcast %963 : vector<16x1xf32> to vector<16x16xf32>
    %976 = arith.mulf %974, %975 : vector<16x16xf32>
    %977 = vector.broadcast %960 : vector<1x16xf32> to vector<16x16xf32>
    %978 = vector.broadcast %962 : vector<16x1xf32> to vector<16x16xf32>
    %979 = arith.mulf %977, %978 : vector<16x16xf32>
    %980 = arith.subf %976, %979 : vector<16x16xf32>
    %c104 = arith.constant 104 : index
    %c0_490 = arith.constant 0 : index
    %c0_491 = arith.constant 0 : index
    %981 = vector.load %arg6[%c104, %c0_490, %c0_491] : memref<128x16x16xf32, #tpu.memory_space<vmem>>, vector<1x16x16xf32>
    %982 = vector.shape_cast %981 : vector<1x16x16xf32> to vector<16x16xf32>
    %983 = vector.shape_cast %980 : vector<16x16xf32> to vector<1x16x16xf32>
    tpu.vector_store %arg6[%c104, %c0_490, %c0_491], %983 {strides = array<i32>} : memref<128x16x16xf32, #tpu.memory_space<vmem>>, vector<1x16x16xf32>,
    %c41 = arith.constant 41 : index
    %c0_492 = arith.constant 0 : index
    %984 = vector.load %arg2[%c41, %c0_492] : memref<64x16xf32, #tpu.memory_space<vmem>>, vector<1x16xf32>
    %c41_493 = arith.constant 41 : index
    %c0_494 = arith.constant 0 : index
    %985 = vector.load %arg3[%c41_493, %c0_494] : memref<64x16xf32, #tpu.memory_space<vmem>>, vector<1x16xf32>
    %c0_495 = arith.constant 0 : index
    %c41_496 = arith.constant 41 : index
    %986 = vector.load %arg4[%c0_495, %c41_496] : memref<16x64xf32, #tpu.memory_space<vmem>>, vector<16x1xf32>
    %c0_497 = arith.constant 0 : index
    %c41_498 = arith.constant 41 : index
    %987 = vector.load %arg5[%c0_497, %c41_498] : memref<16x64xf32, #tpu.memory_space<vmem>>, vector<16x1xf32>
    %988 = vector.broadcast %984 : vector<1x16xf32> to vector<16x16xf32>
    %989 = vector.broadcast %987 : vector<16x1xf32> to vector<16x16xf32>
    %990 = arith.mulf %988, %989 : vector<16x16xf32>
    %991 = vector.broadcast %985 : vector<1x16xf32> to vector<16x16xf32>
    %992 = vector.broadcast %986 : vector<16x1xf32> to vector<16x16xf32>
    %993 = arith.mulf %991, %992 : vector<16x16xf32>
    %994 = arith.addf %990, %993 : vector<16x16xf32>
    %c41_499 = arith.constant 41 : index
    %c0_500 = arith.constant 0 : index
    %c0_501 = arith.constant 0 : index
    %995 = vector.load %arg6[%c41_499, %c0_500, %c0_501] : memref<128x16x16xf32, #tpu.memory_space<vmem>>, vector<1x16x16xf32>
    %996 = vector.shape_cast %995 : vector<1x16x16xf32> to vector<16x16xf32>
    %997 = vector.shape_cast %994 : vector<16x16xf32> to vector<1x16x16xf32>
    tpu.vector_store %arg6[%c41_499, %c0_500, %c0_501], %997 {strides = array<i32>} : memref<128x16x16xf32, #tpu.memory_space<vmem>>, vector<1x16x16xf32>,
    %998 = vector.broadcast %985 : vector<1x16xf32> to vector<16x16xf32>
    %999 = vector.broadcast %987 : vector<16x1xf32> to vector<16x16xf32>
    %1000 = arith.mulf %998, %999 : vector<16x16xf32>
    %1001 = vector.broadcast %984 : vector<1x16xf32> to vector<16x16xf32>
    %1002 = vector.broadcast %986 : vector<16x1xf32> to vector<16x16xf32>
    %1003 = arith.mulf %1001, %1002 : vector<16x16xf32>
    %1004 = arith.subf %1000, %1003 : vector<16x16xf32>
    %c105 = arith.constant 105 : index
    %c0_502 = arith.constant 0 : index
    %c0_503 = arith.constant 0 : index
    %1005 = vector.load %arg6[%c105, %c0_502, %c0_503] : memref<128x16x16xf32, #tpu.memory_space<vmem>>, vector<1x16x16xf32>
    %1006 = vector.shape_cast %1005 : vector<1x16x16xf32> to vector<16x16xf32>
    %1007 = vector.shape_cast %1004 : vector<16x16xf32> to vector<1x16x16xf32>
    tpu.vector_store %arg6[%c105, %c0_502, %c0_503], %1007 {strides = array<i32>} : memref<128x16x16xf32, #tpu.memory_space<vmem>>, vector<1x16x16xf32>,
    %c42 = arith.constant 42 : index
    %c0_504 = arith.constant 0 : index
    %1008 = vector.load %arg2[%c42, %c0_504] : memref<64x16xf32, #tpu.memory_space<vmem>>, vector<1x16xf32>
    %c42_505 = arith.constant 42 : index
    %c0_506 = arith.constant 0 : index
    %1009 = vector.load %arg3[%c42_505, %c0_506] : memref<64x16xf32, #tpu.memory_space<vmem>>, vector<1x16xf32>
    %c0_507 = arith.constant 0 : index
    %c42_508 = arith.constant 42 : index
    %1010 = vector.load %arg4[%c0_507, %c42_508] : memref<16x64xf32, #tpu.memory_space<vmem>>, vector<16x1xf32>
    %c0_509 = arith.constant 0 : index
    %c42_510 = arith.constant 42 : index
    %1011 = vector.load %arg5[%c0_509, %c42_510] : memref<16x64xf32, #tpu.memory_space<vmem>>, vector<16x1xf32>
    %1012 = vector.broadcast %1008 : vector<1x16xf32> to vector<16x16xf32>
    %1013 = vector.broadcast %1011 : vector<16x1xf32> to vector<16x16xf32>
    %1014 = arith.mulf %1012, %1013 : vector<16x16xf32>
    %1015 = vector.broadcast %1009 : vector<1x16xf32> to vector<16x16xf32>
    %1016 = vector.broadcast %1010 : vector<16x1xf32> to vector<16x16xf32>
    %1017 = arith.mulf %1015, %1016 : vector<16x16xf32>
    %1018 = arith.addf %1014, %1017 : vector<16x16xf32>
    %c42_511 = arith.constant 42 : index
    %c0_512 = arith.constant 0 : index
    %c0_513 = arith.constant 0 : index
    %1019 = vector.load %arg6[%c42_511, %c0_512, %c0_513] : memref<128x16x16xf32, #tpu.memory_space<vmem>>, vector<1x16x16xf32>
    %1020 = vector.shape_cast %1019 : vector<1x16x16xf32> to vector<16x16xf32>
    %1021 = vector.shape_cast %1018 : vector<16x16xf32> to vector<1x16x16xf32>
    tpu.vector_store %arg6[%c42_511, %c0_512, %c0_513], %1021 {strides = array<i32>} : memref<128x16x16xf32, #tpu.memory_space<vmem>>, vector<1x16x16xf32>,
    %1022 = vector.broadcast %1009 : vector<1x16xf32> to vector<16x16xf32>
    %1023 = vector.broadcast %1011 : vector<16x1xf32> to vector<16x16xf32>
    %1024 = arith.mulf %1022, %1023 : vector<16x16xf32>
    %1025 = vector.broadcast %1008 : vector<1x16xf32> to vector<16x16xf32>
    %1026 = vector.broadcast %1010 : vector<16x1xf32> to vector<16x16xf32>
    %1027 = arith.mulf %1025, %1026 : vector<16x16xf32>
    %1028 = arith.subf %1024, %1027 : vector<16x16xf32>
    %c106 = arith.constant 106 : index
    %c0_514 = arith.constant 0 : index
    %c0_515 = arith.constant 0 : index
    %1029 = vector.load %arg6[%c106, %c0_514, %c0_515] : memref<128x16x16xf32, #tpu.memory_space<vmem>>, vector<1x16x16xf32>
    %1030 = vector.shape_cast %1029 : vector<1x16x16xf32> to vector<16x16xf32>
    %1031 = vector.shape_cast %1028 : vector<16x16xf32> to vector<1x16x16xf32>
    tpu.vector_store %arg6[%c106, %c0_514, %c0_515], %1031 {strides = array<i32>} : memref<128x16x16xf32, #tpu.memory_space<vmem>>, vector<1x16x16xf32>,
    %c43 = arith.constant 43 : index
    %c0_516 = arith.constant 0 : index
    %1032 = vector.load %arg2[%c43, %c0_516] : memref<64x16xf32, #tpu.memory_space<vmem>>, vector<1x16xf32>
    %c43_517 = arith.constant 43 : index
    %c0_518 = arith.constant 0 : index
    %1033 = vector.load %arg3[%c43_517, %c0_518] : memref<64x16xf32, #tpu.memory_space<vmem>>, vector<1x16xf32>
    %c0_519 = arith.constant 0 : index
    %c43_520 = arith.constant 43 : index
    %1034 = vector.load %arg4[%c0_519, %c43_520] : memref<16x64xf32, #tpu.memory_space<vmem>>, vector<16x1xf32>
    %c0_521 = arith.constant 0 : index
    %c43_522 = arith.constant 43 : index
    %1035 = vector.load %arg5[%c0_521, %c43_522] : memref<16x64xf32, #tpu.memory_space<vmem>>, vector<16x1xf32>
    %1036 = vector.broadcast %1032 : vector<1x16xf32> to vector<16x16xf32>
    %1037 = vector.broadcast %1035 : vector<16x1xf32> to vector<16x16xf32>
    %1038 = arith.mulf %1036, %1037 : vector<16x16xf32>
    %1039 = vector.broadcast %1033 : vector<1x16xf32> to vector<16x16xf32>
    %1040 = vector.broadcast %1034 : vector<16x1xf32> to vector<16x16xf32>
    %1041 = arith.mulf %1039, %1040 : vector<16x16xf32>
    %1042 = arith.addf %1038, %1041 : vector<16x16xf32>
    %c43_523 = arith.constant 43 : index
    %c0_524 = arith.constant 0 : index
    %c0_525 = arith.constant 0 : index
    %1043 = vector.load %arg6[%c43_523, %c0_524, %c0_525] : memref<128x16x16xf32, #tpu.memory_space<vmem>>, vector<1x16x16xf32>
    %1044 = vector.shape_cast %1043 : vector<1x16x16xf32> to vector<16x16xf32>
    %1045 = vector.shape_cast %1042 : vector<16x16xf32> to vector<1x16x16xf32>
    tpu.vector_store %arg6[%c43_523, %c0_524, %c0_525], %1045 {strides = array<i32>} : memref<128x16x16xf32, #tpu.memory_space<vmem>>, vector<1x16x16xf32>,
    %1046 = vector.broadcast %1033 : vector<1x16xf32> to vector<16x16xf32>
    %1047 = vector.broadcast %1035 : vector<16x1xf32> to vector<16x16xf32>
    %1048 = arith.mulf %1046, %1047 : vector<16x16xf32>
    %1049 = vector.broadcast %1032 : vector<1x16xf32> to vector<16x16xf32>
    %1050 = vector.broadcast %1034 : vector<16x1xf32> to vector<16x16xf32>
    %1051 = arith.mulf %1049, %1050 : vector<16x16xf32>
    %1052 = arith.subf %1048, %1051 : vector<16x16xf32>
    %c107 = arith.constant 107 : index
    %c0_526 = arith.constant 0 : index
    %c0_527 = arith.constant 0 : index
    %1053 = vector.load %arg6[%c107, %c0_526, %c0_527] : memref<128x16x16xf32, #tpu.memory_space<vmem>>, vector<1x16x16xf32>
    %1054 = vector.shape_cast %1053 : vector<1x16x16xf32> to vector<16x16xf32>
    %1055 = vector.shape_cast %1052 : vector<16x16xf32> to vector<1x16x16xf32>
    tpu.vector_store %arg6[%c107, %c0_526, %c0_527], %1055 {strides = array<i32>} : memref<128x16x16xf32, #tpu.memory_space<vmem>>, vector<1x16x16xf32>,
    %c44 = arith.constant 44 : index
    %c0_528 = arith.constant 0 : index
    %1056 = vector.load %arg2[%c44, %c0_528] : memref<64x16xf32, #tpu.memory_space<vmem>>, vector<1x16xf32>
    %c44_529 = arith.constant 44 : index
    %c0_530 = arith.constant 0 : index
    %1057 = vector.load %arg3[%c44_529, %c0_530] : memref<64x16xf32, #tpu.memory_space<vmem>>, vector<1x16xf32>
    %c0_531 = arith.constant 0 : index
    %c44_532 = arith.constant 44 : index
    %1058 = vector.load %arg4[%c0_531, %c44_532] : memref<16x64xf32, #tpu.memory_space<vmem>>, vector<16x1xf32>
    %c0_533 = arith.constant 0 : index
    %c44_534 = arith.constant 44 : index
    %1059 = vector.load %arg5[%c0_533, %c44_534] : memref<16x64xf32, #tpu.memory_space<vmem>>, vector<16x1xf32>
    %1060 = vector.broadcast %1056 : vector<1x16xf32> to vector<16x16xf32>
    %1061 = vector.broadcast %1059 : vector<16x1xf32> to vector<16x16xf32>
    %1062 = arith.mulf %1060, %1061 : vector<16x16xf32>
    %1063 = vector.broadcast %1057 : vector<1x16xf32> to vector<16x16xf32>
    %1064 = vector.broadcast %1058 : vector<16x1xf32> to vector<16x16xf32>
    %1065 = arith.mulf %1063, %1064 : vector<16x16xf32>
    %1066 = arith.addf %1062, %1065 : vector<16x16xf32>
    %c44_535 = arith.constant 44 : index
    %c0_536 = arith.constant 0 : index
    %c0_537 = arith.constant 0 : index
    %1067 = vector.load %arg6[%c44_535, %c0_536, %c0_537] : memref<128x16x16xf32, #tpu.memory_space<vmem>>, vector<1x16x16xf32>
    %1068 = vector.shape_cast %1067 : vector<1x16x16xf32> to vector<16x16xf32>
    %1069 = vector.shape_cast %1066 : vector<16x16xf32> to vector<1x16x16xf32>
    tpu.vector_store %arg6[%c44_535, %c0_536, %c0_537], %1069 {strides = array<i32>} : memref<128x16x16xf32, #tpu.memory_space<vmem>>, vector<1x16x16xf32>,
    %1070 = vector.broadcast %1057 : vector<1x16xf32> to vector<16x16xf32>
    %1071 = vector.broadcast %1059 : vector<16x1xf32> to vector<16x16xf32>
    %1072 = arith.mulf %1070, %1071 : vector<16x16xf32>
    %1073 = vector.broadcast %1056 : vector<1x16xf32> to vector<16x16xf32>
    %1074 = vector.broadcast %1058 : vector<16x1xf32> to vector<16x16xf32>
    %1075 = arith.mulf %1073, %1074 : vector<16x16xf32>
    %1076 = arith.subf %1072, %1075 : vector<16x16xf32>
    %c108 = arith.constant 108 : index
    %c0_538 = arith.constant 0 : index
    %c0_539 = arith.constant 0 : index
    %1077 = vector.load %arg6[%c108, %c0_538, %c0_539] : memref<128x16x16xf32, #tpu.memory_space<vmem>>, vector<1x16x16xf32>
    %1078 = vector.shape_cast %1077 : vector<1x16x16xf32> to vector<16x16xf32>
    %1079 = vector.shape_cast %1076 : vector<16x16xf32> to vector<1x16x16xf32>
    tpu.vector_store %arg6[%c108, %c0_538, %c0_539], %1079 {strides = array<i32>} : memref<128x16x16xf32, #tpu.memory_space<vmem>>, vector<1x16x16xf32>,
    %c45 = arith.constant 45 : index
    %c0_540 = arith.constant 0 : index
    %1080 = vector.load %arg2[%c45, %c0_540] : memref<64x16xf32, #tpu.memory_space<vmem>>, vector<1x16xf32>
    %c45_541 = arith.constant 45 : index
    %c0_542 = arith.constant 0 : index
    %1081 = vector.load %arg3[%c45_541, %c0_542] : memref<64x16xf32, #tpu.memory_space<vmem>>, vector<1x16xf32>
    %c0_543 = arith.constant 0 : index
    %c45_544 = arith.constant 45 : index
    %1082 = vector.load %arg4[%c0_543, %c45_544] : memref<16x64xf32, #tpu.memory_space<vmem>>, vector<16x1xf32>
    %c0_545 = arith.constant 0 : index
    %c45_546 = arith.constant 45 : index
    %1083 = vector.load %arg5[%c0_545, %c45_546] : memref<16x64xf32, #tpu.memory_space<vmem>>, vector<16x1xf32>
    %1084 = vector.broadcast %1080 : vector<1x16xf32> to vector<16x16xf32>
    %1085 = vector.broadcast %1083 : vector<16x1xf32> to vector<16x16xf32>
    %1086 = arith.mulf %1084, %1085 : vector<16x16xf32>
    %1087 = vector.broadcast %1081 : vector<1x16xf32> to vector<16x16xf32>
    %1088 = vector.broadcast %1082 : vector<16x1xf32> to vector<16x16xf32>
    %1089 = arith.mulf %1087, %1088 : vector<16x16xf32>
    %1090 = arith.addf %1086, %1089 : vector<16x16xf32>
    %c45_547 = arith.constant 45 : index
    %c0_548 = arith.constant 0 : index
    %c0_549 = arith.constant 0 : index
    %1091 = vector.load %arg6[%c45_547, %c0_548, %c0_549] : memref<128x16x16xf32, #tpu.memory_space<vmem>>, vector<1x16x16xf32>
    %1092 = vector.shape_cast %1091 : vector<1x16x16xf32> to vector<16x16xf32>
    %1093 = vector.shape_cast %1090 : vector<16x16xf32> to vector<1x16x16xf32>
    tpu.vector_store %arg6[%c45_547, %c0_548, %c0_549], %1093 {strides = array<i32>} : memref<128x16x16xf32, #tpu.memory_space<vmem>>, vector<1x16x16xf32>,
    %1094 = vector.broadcast %1081 : vector<1x16xf32> to vector<16x16xf32>
    %1095 = vector.broadcast %1083 : vector<16x1xf32> to vector<16x16xf32>
    %1096 = arith.mulf %1094, %1095 : vector<16x16xf32>
    %1097 = vector.broadcast %1080 : vector<1x16xf32> to vector<16x16xf32>
    %1098 = vector.broadcast %1082 : vector<16x1xf32> to vector<16x16xf32>
    %1099 = arith.mulf %1097, %1098 : vector<16x16xf32>
    %1100 = arith.subf %1096, %1099 : vector<16x16xf32>
    %c109 = arith.constant 109 : index
    %c0_550 = arith.constant 0 : index
    %c0_551 = arith.constant 0 : index
    %1101 = vector.load %arg6[%c109, %c0_550, %c0_551] : memref<128x16x16xf32, #tpu.memory_space<vmem>>, vector<1x16x16xf32>
    %1102 = vector.shape_cast %1101 : vector<1x16x16xf32> to vector<16x16xf32>
    %1103 = vector.shape_cast %1100 : vector<16x16xf32> to vector<1x16x16xf32>
    tpu.vector_store %arg6[%c109, %c0_550, %c0_551], %1103 {strides = array<i32>} : memref<128x16x16xf32, #tpu.memory_space<vmem>>, vector<1x16x16xf32>,
    %c46 = arith.constant 46 : index
    %c0_552 = arith.constant 0 : index
    %1104 = vector.load %arg2[%c46, %c0_552] : memref<64x16xf32, #tpu.memory_space<vmem>>, vector<1x16xf32>
    %c46_553 = arith.constant 46 : index
    %c0_554 = arith.constant 0 : index
    %1105 = vector.load %arg3[%c46_553, %c0_554] : memref<64x16xf32, #tpu.memory_space<vmem>>, vector<1x16xf32>
    %c0_555 = arith.constant 0 : index
    %c46_556 = arith.constant 46 : index
    %1106 = vector.load %arg4[%c0_555, %c46_556] : memref<16x64xf32, #tpu.memory_space<vmem>>, vector<16x1xf32>
    %c0_557 = arith.constant 0 : index
    %c46_558 = arith.constant 46 : index
    %1107 = vector.load %arg5[%c0_557, %c46_558] : memref<16x64xf32, #tpu.memory_space<vmem>>, vector<16x1xf32>
    %1108 = vector.broadcast %1104 : vector<1x16xf32> to vector<16x16xf32>
    %1109 = vector.broadcast %1107 : vector<16x1xf32> to vector<16x16xf32>
    %1110 = arith.mulf %1108, %1109 : vector<16x16xf32>
    %1111 = vector.broadcast %1105 : vector<1x16xf32> to vector<16x16xf32>
    %1112 = vector.broadcast %1106 : vector<16x1xf32> to vector<16x16xf32>
    %1113 = arith.mulf %1111, %1112 : vector<16x16xf32>
    %1114 = arith.addf %1110, %1113 : vector<16x16xf32>
    %c46_559 = arith.constant 46 : index
    %c0_560 = arith.constant 0 : index
    %c0_561 = arith.constant 0 : index
    %1115 = vector.load %arg6[%c46_559, %c0_560, %c0_561] : memref<128x16x16xf32, #tpu.memory_space<vmem>>, vector<1x16x16xf32>
    %1116 = vector.shape_cast %1115 : vector<1x16x16xf32> to vector<16x16xf32>
    %1117 = vector.shape_cast %1114 : vector<16x16xf32> to vector<1x16x16xf32>
    tpu.vector_store %arg6[%c46_559, %c0_560, %c0_561], %1117 {strides = array<i32>} : memref<128x16x16xf32, #tpu.memory_space<vmem>>, vector<1x16x16xf32>,
    %1118 = vector.broadcast %1105 : vector<1x16xf32> to vector<16x16xf32>
    %1119 = vector.broadcast %1107 : vector<16x1xf32> to vector<16x16xf32>
    %1120 = arith.mulf %1118, %1119 : vector<16x16xf32>
    %1121 = vector.broadcast %1104 : vector<1x16xf32> to vector<16x16xf32>
    %1122 = vector.broadcast %1106 : vector<16x1xf32> to vector<16x16xf32>
    %1123 = arith.mulf %1121, %1122 : vector<16x16xf32>
    %1124 = arith.subf %1120, %1123 : vector<16x16xf32>
    %c110 = arith.constant 110 : index
    %c0_562 = arith.constant 0 : index
    %c0_563 = arith.constant 0 : index
    %1125 = vector.load %arg6[%c110, %c0_562, %c0_563] : memref<128x16x16xf32, #tpu.memory_space<vmem>>, vector<1x16x16xf32>
    %1126 = vector.shape_cast %1125 : vector<1x16x16xf32> to vector<16x16xf32>
    %1127 = vector.shape_cast %1124 : vector<16x16xf32> to vector<1x16x16xf32>
    tpu.vector_store %arg6[%c110, %c0_562, %c0_563], %1127 {strides = array<i32>} : memref<128x16x16xf32, #tpu.memory_space<vmem>>, vector<1x16x16xf32>,
    %c47 = arith.constant 47 : index
    %c0_564 = arith.constant 0 : index
    %1128 = vector.load %arg2[%c47, %c0_564] : memref<64x16xf32, #tpu.memory_space<vmem>>, vector<1x16xf32>
    %c47_565 = arith.constant 47 : index
    %c0_566 = arith.constant 0 : index
    %1129 = vector.load %arg3[%c47_565, %c0_566] : memref<64x16xf32, #tpu.memory_space<vmem>>, vector<1x16xf32>
    %c0_567 = arith.constant 0 : index
    %c47_568 = arith.constant 47 : index
    %1130 = vector.load %arg4[%c0_567, %c47_568] : memref<16x64xf32, #tpu.memory_space<vmem>>, vector<16x1xf32>
    %c0_569 = arith.constant 0 : index
    %c47_570 = arith.constant 47 : index
    %1131 = vector.load %arg5[%c0_569, %c47_570] : memref<16x64xf32, #tpu.memory_space<vmem>>, vector<16x1xf32>
    %1132 = vector.broadcast %1128 : vector<1x16xf32> to vector<16x16xf32>
    %1133 = vector.broadcast %1131 : vector<16x1xf32> to vector<16x16xf32>
    %1134 = arith.mulf %1132, %1133 : vector<16x16xf32>
    %1135 = vector.broadcast %1129 : vector<1x16xf32> to vector<16x16xf32>
    %1136 = vector.broadcast %1130 : vector<16x1xf32> to vector<16x16xf32>
    %1137 = arith.mulf %1135, %1136 : vector<16x16xf32>
    %1138 = arith.addf %1134, %1137 : vector<16x16xf32>
    %c47_571 = arith.constant 47 : index
    %c0_572 = arith.constant 0 : index
    %c0_573 = arith.constant 0 : index
    %1139 = vector.load %arg6[%c47_571, %c0_572, %c0_573] : memref<128x16x16xf32, #tpu.memory_space<vmem>>, vector<1x16x16xf32>
    %1140 = vector.shape_cast %1139 : vector<1x16x16xf32> to vector<16x16xf32>
    %1141 = vector.shape_cast %1138 : vector<16x16xf32> to vector<1x16x16xf32>
    tpu.vector_store %arg6[%c47_571, %c0_572, %c0_573], %1141 {strides = array<i32>} : memref<128x16x16xf32, #tpu.memory_space<vmem>>, vector<1x16x16xf32>,
    %1142 = vector.broadcast %1129 : vector<1x16xf32> to vector<16x16xf32>
    %1143 = vector.broadcast %1131 : vector<16x1xf32> to vector<16x16xf32>
    %1144 = arith.mulf %1142, %1143 : vector<16x16xf32>
    %1145 = vector.broadcast %1128 : vector<1x16xf32> to vector<16x16xf32>
    %1146 = vector.broadcast %1130 : vector<16x1xf32> to vector<16x16xf32>
    %1147 = arith.mulf %1145, %1146 : vector<16x16xf32>
    %1148 = arith.subf %1144, %1147 : vector<16x16xf32>
    %c111 = arith.constant 111 : index
    %c0_574 = arith.constant 0 : index
    %c0_575 = arith.constant 0 : index
    %1149 = vector.load %arg6[%c111, %c0_574, %c0_575] : memref<128x16x16xf32, #tpu.memory_space<vmem>>, vector<1x16x16xf32>
    %1150 = vector.shape_cast %1149 : vector<1x16x16xf32> to vector<16x16xf32>
    %1151 = vector.shape_cast %1148 : vector<16x16xf32> to vector<1x16x16xf32>
    tpu.vector_store %arg6[%c111, %c0_574, %c0_575], %1151 {strides = array<i32>} : memref<128x16x16xf32, #tpu.memory_space<vmem>>, vector<1x16x16xf32>,
    %c48 = arith.constant 48 : index
    %c0_576 = arith.constant 0 : index
    %1152 = vector.load %arg2[%c48, %c0_576] : memref<64x16xf32, #tpu.memory_space<vmem>>, vector<1x16xf32>
    %c48_577 = arith.constant 48 : index
    %c0_578 = arith.constant 0 : index
    %1153 = vector.load %arg3[%c48_577, %c0_578] : memref<64x16xf32, #tpu.memory_space<vmem>>, vector<1x16xf32>
    %c0_579 = arith.constant 0 : index
    %c48_580 = arith.constant 48 : index
    %1154 = vector.load %arg4[%c0_579, %c48_580] : memref<16x64xf32, #tpu.memory_space<vmem>>, vector<16x1xf32>
    %c0_581 = arith.constant 0 : index
    %c48_582 = arith.constant 48 : index
    %1155 = vector.load %arg5[%c0_581, %c48_582] : memref<16x64xf32, #tpu.memory_space<vmem>>, vector<16x1xf32>
    %1156 = vector.broadcast %1152 : vector<1x16xf32> to vector<16x16xf32>
    %1157 = vector.broadcast %1155 : vector<16x1xf32> to vector<16x16xf32>
    %1158 = arith.mulf %1156, %1157 : vector<16x16xf32>
    %1159 = vector.broadcast %1153 : vector<1x16xf32> to vector<16x16xf32>
    %1160 = vector.broadcast %1154 : vector<16x1xf32> to vector<16x16xf32>
    %1161 = arith.mulf %1159, %1160 : vector<16x16xf32>
    %1162 = arith.addf %1158, %1161 : vector<16x16xf32>
    %c48_583 = arith.constant 48 : index
    %c0_584 = arith.constant 0 : index
    %c0_585 = arith.constant 0 : index
    %1163 = vector.load %arg6[%c48_583, %c0_584, %c0_585] : memref<128x16x16xf32, #tpu.memory_space<vmem>>, vector<1x16x16xf32>
    %1164 = vector.shape_cast %1163 : vector<1x16x16xf32> to vector<16x16xf32>
    %1165 = vector.shape_cast %1162 : vector<16x16xf32> to vector<1x16x16xf32>
    tpu.vector_store %arg6[%c48_583, %c0_584, %c0_585], %1165 {strides = array<i32>} : memref<128x16x16xf32, #tpu.memory_space<vmem>>, vector<1x16x16xf32>,
    %1166 = vector.broadcast %1153 : vector<1x16xf32> to vector<16x16xf32>
    %1167 = vector.broadcast %1155 : vector<16x1xf32> to vector<16x16xf32>
    %1168 = arith.mulf %1166, %1167 : vector<16x16xf32>
    %1169 = vector.broadcast %1152 : vector<1x16xf32> to vector<16x16xf32>
    %1170 = vector.broadcast %1154 : vector<16x1xf32> to vector<16x16xf32>
    %1171 = arith.mulf %1169, %1170 : vector<16x16xf32>
    %1172 = arith.subf %1168, %1171 : vector<16x16xf32>
    %c112 = arith.constant 112 : index
    %c0_586 = arith.constant 0 : index
    %c0_587 = arith.constant 0 : index
    %1173 = vector.load %arg6[%c112, %c0_586, %c0_587] : memref<128x16x16xf32, #tpu.memory_space<vmem>>, vector<1x16x16xf32>
    %1174 = vector.shape_cast %1173 : vector<1x16x16xf32> to vector<16x16xf32>
    %1175 = vector.shape_cast %1172 : vector<16x16xf32> to vector<1x16x16xf32>
    tpu.vector_store %arg6[%c112, %c0_586, %c0_587], %1175 {strides = array<i32>} : memref<128x16x16xf32, #tpu.memory_space<vmem>>, vector<1x16x16xf32>,
    %c49 = arith.constant 49 : index
    %c0_588 = arith.constant 0 : index
    %1176 = vector.load %arg2[%c49, %c0_588] : memref<64x16xf32, #tpu.memory_space<vmem>>, vector<1x16xf32>
    %c49_589 = arith.constant 49 : index
    %c0_590 = arith.constant 0 : index
    %1177 = vector.load %arg3[%c49_589, %c0_590] : memref<64x16xf32, #tpu.memory_space<vmem>>, vector<1x16xf32>
    %c0_591 = arith.constant 0 : index
    %c49_592 = arith.constant 49 : index
    %1178 = vector.load %arg4[%c0_591, %c49_592] : memref<16x64xf32, #tpu.memory_space<vmem>>, vector<16x1xf32>
    %c0_593 = arith.constant 0 : index
    %c49_594 = arith.constant 49 : index
    %1179 = vector.load %arg5[%c0_593, %c49_594] : memref<16x64xf32, #tpu.memory_space<vmem>>, vector<16x1xf32>
    %1180 = vector.broadcast %1176 : vector<1x16xf32> to vector<16x16xf32>
    %1181 = vector.broadcast %1179 : vector<16x1xf32> to vector<16x16xf32>
    %1182 = arith.mulf %1180, %1181 : vector<16x16xf32>
    %1183 = vector.broadcast %1177 : vector<1x16xf32> to vector<16x16xf32>
    %1184 = vector.broadcast %1178 : vector<16x1xf32> to vector<16x16xf32>
    %1185 = arith.mulf %1183, %1184 : vector<16x16xf32>
    %1186 = arith.addf %1182, %1185 : vector<16x16xf32>
    %c49_595 = arith.constant 49 : index
    %c0_596 = arith.constant 0 : index
    %c0_597 = arith.constant 0 : index
    %1187 = vector.load %arg6[%c49_595, %c0_596, %c0_597] : memref<128x16x16xf32, #tpu.memory_space<vmem>>, vector<1x16x16xf32>
    %1188 = vector.shape_cast %1187 : vector<1x16x16xf32> to vector<16x16xf32>
    %1189 = vector.shape_cast %1186 : vector<16x16xf32> to vector<1x16x16xf32>
    tpu.vector_store %arg6[%c49_595, %c0_596, %c0_597], %1189 {strides = array<i32>} : memref<128x16x16xf32, #tpu.memory_space<vmem>>, vector<1x16x16xf32>,
    %1190 = vector.broadcast %1177 : vector<1x16xf32> to vector<16x16xf32>
    %1191 = vector.broadcast %1179 : vector<16x1xf32> to vector<16x16xf32>
    %1192 = arith.mulf %1190, %1191 : vector<16x16xf32>
    %1193 = vector.broadcast %1176 : vector<1x16xf32> to vector<16x16xf32>
    %1194 = vector.broadcast %1178 : vector<16x1xf32> to vector<16x16xf32>
    %1195 = arith.mulf %1193, %1194 : vector<16x16xf32>
    %1196 = arith.subf %1192, %1195 : vector<16x16xf32>
    %c113 = arith.constant 113 : index
    %c0_598 = arith.constant 0 : index
    %c0_599 = arith.constant 0 : index
    %1197 = vector.load %arg6[%c113, %c0_598, %c0_599] : memref<128x16x16xf32, #tpu.memory_space<vmem>>, vector<1x16x16xf32>
    %1198 = vector.shape_cast %1197 : vector<1x16x16xf32> to vector<16x16xf32>
    %1199 = vector.shape_cast %1196 : vector<16x16xf32> to vector<1x16x16xf32>
    tpu.vector_store %arg6[%c113, %c0_598, %c0_599], %1199 {strides = array<i32>} : memref<128x16x16xf32, #tpu.memory_space<vmem>>, vector<1x16x16xf32>,
    %c50 = arith.constant 50 : index
    %c0_600 = arith.constant 0 : index
    %1200 = vector.load %arg2[%c50, %c0_600] : memref<64x16xf32, #tpu.memory_space<vmem>>, vector<1x16xf32>
    %c50_601 = arith.constant 50 : index
    %c0_602 = arith.constant 0 : index
    %1201 = vector.load %arg3[%c50_601, %c0_602] : memref<64x16xf32, #tpu.memory_space<vmem>>, vector<1x16xf32>
    %c0_603 = arith.constant 0 : index
    %c50_604 = arith.constant 50 : index
    %1202 = vector.load %arg4[%c0_603, %c50_604] : memref<16x64xf32, #tpu.memory_space<vmem>>, vector<16x1xf32>
    %c0_605 = arith.constant 0 : index
    %c50_606 = arith.constant 50 : index
    %1203 = vector.load %arg5[%c0_605, %c50_606] : memref<16x64xf32, #tpu.memory_space<vmem>>, vector<16x1xf32>
    %1204 = vector.broadcast %1200 : vector<1x16xf32> to vector<16x16xf32>
    %1205 = vector.broadcast %1203 : vector<16x1xf32> to vector<16x16xf32>
    %1206 = arith.mulf %1204, %1205 : vector<16x16xf32>
    %1207 = vector.broadcast %1201 : vector<1x16xf32> to vector<16x16xf32>
    %1208 = vector.broadcast %1202 : vector<16x1xf32> to vector<16x16xf32>
    %1209 = arith.mulf %1207, %1208 : vector<16x16xf32>
    %1210 = arith.addf %1206, %1209 : vector<16x16xf32>
    %c50_607 = arith.constant 50 : index
    %c0_608 = arith.constant 0 : index
    %c0_609 = arith.constant 0 : index
    %1211 = vector.load %arg6[%c50_607, %c0_608, %c0_609] : memref<128x16x16xf32, #tpu.memory_space<vmem>>, vector<1x16x16xf32>
    %1212 = vector.shape_cast %1211 : vector<1x16x16xf32> to vector<16x16xf32>
    %1213 = vector.shape_cast %1210 : vector<16x16xf32> to vector<1x16x16xf32>
    tpu.vector_store %arg6[%c50_607, %c0_608, %c0_609], %1213 {strides = array<i32>} : memref<128x16x16xf32, #tpu.memory_space<vmem>>, vector<1x16x16xf32>,
    %1214 = vector.broadcast %1201 : vector<1x16xf32> to vector<16x16xf32>
    %1215 = vector.broadcast %1203 : vector<16x1xf32> to vector<16x16xf32>
    %1216 = arith.mulf %1214, %1215 : vector<16x16xf32>
    %1217 = vector.broadcast %1200 : vector<1x16xf32> to vector<16x16xf32>
    %1218 = vector.broadcast %1202 : vector<16x1xf32> to vector<16x16xf32>
    %1219 = arith.mulf %1217, %1218 : vector<16x16xf32>
    %1220 = arith.subf %1216, %1219 : vector<16x16xf32>
    %c114 = arith.constant 114 : index
    %c0_610 = arith.constant 0 : index
    %c0_611 = arith.constant 0 : index
    %1221 = vector.load %arg6[%c114, %c0_610, %c0_611] : memref<128x16x16xf32, #tpu.memory_space<vmem>>, vector<1x16x16xf32>
    %1222 = vector.shape_cast %1221 : vector<1x16x16xf32> to vector<16x16xf32>
    %1223 = vector.shape_cast %1220 : vector<16x16xf32> to vector<1x16x16xf32>
    tpu.vector_store %arg6[%c114, %c0_610, %c0_611], %1223 {strides = array<i32>} : memref<128x16x16xf32, #tpu.memory_space<vmem>>, vector<1x16x16xf32>,
    %c51 = arith.constant 51 : index
    %c0_612 = arith.constant 0 : index
    %1224 = vector.load %arg2[%c51, %c0_612] : memref<64x16xf32, #tpu.memory_space<vmem>>, vector<1x16xf32>
    %c51_613 = arith.constant 51 : index
    %c0_614 = arith.constant 0 : index
    %1225 = vector.load %arg3[%c51_613, %c0_614] : memref<64x16xf32, #tpu.memory_space<vmem>>, vector<1x16xf32>
    %c0_615 = arith.constant 0 : index
    %c51_616 = arith.constant 51 : index
    %1226 = vector.load %arg4[%c0_615, %c51_616] : memref<16x64xf32, #tpu.memory_space<vmem>>, vector<16x1xf32>
    %c0_617 = arith.constant 0 : index
    %c51_618 = arith.constant 51 : index
    %1227 = vector.load %arg5[%c0_617, %c51_618] : memref<16x64xf32, #tpu.memory_space<vmem>>, vector<16x1xf32>
    %1228 = vector.broadcast %1224 : vector<1x16xf32> to vector<16x16xf32>
    %1229 = vector.broadcast %1227 : vector<16x1xf32> to vector<16x16xf32>
    %1230 = arith.mulf %1228, %1229 : vector<16x16xf32>
    %1231 = vector.broadcast %1225 : vector<1x16xf32> to vector<16x16xf32>
    %1232 = vector.broadcast %1226 : vector<16x1xf32> to vector<16x16xf32>
    %1233 = arith.mulf %1231, %1232 : vector<16x16xf32>
    %1234 = arith.addf %1230, %1233 : vector<16x16xf32>
    %c51_619 = arith.constant 51 : index
    %c0_620 = arith.constant 0 : index
    %c0_621 = arith.constant 0 : index
    %1235 = vector.load %arg6[%c51_619, %c0_620, %c0_621] : memref<128x16x16xf32, #tpu.memory_space<vmem>>, vector<1x16x16xf32>
    %1236 = vector.shape_cast %1235 : vector<1x16x16xf32> to vector<16x16xf32>
    %1237 = vector.shape_cast %1234 : vector<16x16xf32> to vector<1x16x16xf32>
    tpu.vector_store %arg6[%c51_619, %c0_620, %c0_621], %1237 {strides = array<i32>} : memref<128x16x16xf32, #tpu.memory_space<vmem>>, vector<1x16x16xf32>,
    %1238 = vector.broadcast %1225 : vector<1x16xf32> to vector<16x16xf32>
    %1239 = vector.broadcast %1227 : vector<16x1xf32> to vector<16x16xf32>
    %1240 = arith.mulf %1238, %1239 : vector<16x16xf32>
    %1241 = vector.broadcast %1224 : vector<1x16xf32> to vector<16x16xf32>
    %1242 = vector.broadcast %1226 : vector<16x1xf32> to vector<16x16xf32>
    %1243 = arith.mulf %1241, %1242 : vector<16x16xf32>
    %1244 = arith.subf %1240, %1243 : vector<16x16xf32>
    %c115 = arith.constant 115 : index
    %c0_622 = arith.constant 0 : index
    %c0_623 = arith.constant 0 : index
    %1245 = vector.load %arg6[%c115, %c0_622, %c0_623] : memref<128x16x16xf32, #tpu.memory_space<vmem>>, vector<1x16x16xf32>
    %1246 = vector.shape_cast %1245 : vector<1x16x16xf32> to vector<16x16xf32>
    %1247 = vector.shape_cast %1244 : vector<16x16xf32> to vector<1x16x16xf32>
    tpu.vector_store %arg6[%c115, %c0_622, %c0_623], %1247 {strides = array<i32>} : memref<128x16x16xf32, #tpu.memory_space<vmem>>, vector<1x16x16xf32>,
    %c52 = arith.constant 52 : index
    %c0_624 = arith.constant 0 : index
    %1248 = vector.load %arg2[%c52, %c0_624] : memref<64x16xf32, #tpu.memory_space<vmem>>, vector<1x16xf32>
    %c52_625 = arith.constant 52 : index
    %c0_626 = arith.constant 0 : index
    %1249 = vector.load %arg3[%c52_625, %c0_626] : memref<64x16xf32, #tpu.memory_space<vmem>>, vector<1x16xf32>
    %c0_627 = arith.constant 0 : index
    %c52_628 = arith.constant 52 : index
    %1250 = vector.load %arg4[%c0_627, %c52_628] : memref<16x64xf32, #tpu.memory_space<vmem>>, vector<16x1xf32>
    %c0_629 = arith.constant 0 : index
    %c52_630 = arith.constant 52 : index
    %1251 = vector.load %arg5[%c0_629, %c52_630] : memref<16x64xf32, #tpu.memory_space<vmem>>, vector<16x1xf32>
    %1252 = vector.broadcast %1248 : vector<1x16xf32> to vector<16x16xf32>
    %1253 = vector.broadcast %1251 : vector<16x1xf32> to vector<16x16xf32>
    %1254 = arith.mulf %1252, %1253 : vector<16x16xf32>
    %1255 = vector.broadcast %1249 : vector<1x16xf32> to vector<16x16xf32>
    %1256 = vector.broadcast %1250 : vector<16x1xf32> to vector<16x16xf32>
    %1257 = arith.mulf %1255, %1256 : vector<16x16xf32>
    %1258 = arith.addf %1254, %1257 : vector<16x16xf32>
    %c52_631 = arith.constant 52 : index
    %c0_632 = arith.constant 0 : index
    %c0_633 = arith.constant 0 : index
    %1259 = vector.load %arg6[%c52_631, %c0_632, %c0_633] : memref<128x16x16xf32, #tpu.memory_space<vmem>>, vector<1x16x16xf32>
    %1260 = vector.shape_cast %1259 : vector<1x16x16xf32> to vector<16x16xf32>
    %1261 = vector.shape_cast %1258 : vector<16x16xf32> to vector<1x16x16xf32>
    tpu.vector_store %arg6[%c52_631, %c0_632, %c0_633], %1261 {strides = array<i32>} : memref<128x16x16xf32, #tpu.memory_space<vmem>>, vector<1x16x16xf32>,
    %1262 = vector.broadcast %1249 : vector<1x16xf32> to vector<16x16xf32>
    %1263 = vector.broadcast %1251 : vector<16x1xf32> to vector<16x16xf32>
    %1264 = arith.mulf %1262, %1263 : vector<16x16xf32>
    %1265 = vector.broadcast %1248 : vector<1x16xf32> to vector<16x16xf32>
    %1266 = vector.broadcast %1250 : vector<16x1xf32> to vector<16x16xf32>
    %1267 = arith.mulf %1265, %1266 : vector<16x16xf32>
    %1268 = arith.subf %1264, %1267 : vector<16x16xf32>
    %c116 = arith.constant 116 : index
    %c0_634 = arith.constant 0 : index
    %c0_635 = arith.constant 0 : index
    %1269 = vector.load %arg6[%c116, %c0_634, %c0_635] : memref<128x16x16xf32, #tpu.memory_space<vmem>>, vector<1x16x16xf32>
    %1270 = vector.shape_cast %1269 : vector<1x16x16xf32> to vector<16x16xf32>
    %1271 = vector.shape_cast %1268 : vector<16x16xf32> to vector<1x16x16xf32>
    tpu.vector_store %arg6[%c116, %c0_634, %c0_635], %1271 {strides = array<i32>} : memref<128x16x16xf32, #tpu.memory_space<vmem>>, vector<1x16x16xf32>,
    %c53 = arith.constant 53 : index
    %c0_636 = arith.constant 0 : index
    %1272 = vector.load %arg2[%c53, %c0_636] : memref<64x16xf32, #tpu.memory_space<vmem>>, vector<1x16xf32>
    %c53_637 = arith.constant 53 : index
    %c0_638 = arith.constant 0 : index
    %1273 = vector.load %arg3[%c53_637, %c0_638] : memref<64x16xf32, #tpu.memory_space<vmem>>, vector<1x16xf32>
    %c0_639 = arith.constant 0 : index
    %c53_640 = arith.constant 53 : index
    %1274 = vector.load %arg4[%c0_639, %c53_640] : memref<16x64xf32, #tpu.memory_space<vmem>>, vector<16x1xf32>
    %c0_641 = arith.constant 0 : index
    %c53_642 = arith.constant 53 : index
    %1275 = vector.load %arg5[%c0_641, %c53_642] : memref<16x64xf32, #tpu.memory_space<vmem>>, vector<16x1xf32>
    %1276 = vector.broadcast %1272 : vector<1x16xf32> to vector<16x16xf32>
    %1277 = vector.broadcast %1275 : vector<16x1xf32> to vector<16x16xf32>
    %1278 = arith.mulf %1276, %1277 : vector<16x16xf32>
    %1279 = vector.broadcast %1273 : vector<1x16xf32> to vector<16x16xf32>
    %1280 = vector.broadcast %1274 : vector<16x1xf32> to vector<16x16xf32>
    %1281 = arith.mulf %1279, %1280 : vector<16x16xf32>
    %1282 = arith.addf %1278, %1281 : vector<16x16xf32>
    %c53_643 = arith.constant 53 : index
    %c0_644 = arith.constant 0 : index
    %c0_645 = arith.constant 0 : index
    %1283 = vector.load %arg6[%c53_643, %c0_644, %c0_645] : memref<128x16x16xf32, #tpu.memory_space<vmem>>, vector<1x16x16xf32>
    %1284 = vector.shape_cast %1283 : vector<1x16x16xf32> to vector<16x16xf32>
    %1285 = vector.shape_cast %1282 : vector<16x16xf32> to vector<1x16x16xf32>
    tpu.vector_store %arg6[%c53_643, %c0_644, %c0_645], %1285 {strides = array<i32>} : memref<128x16x16xf32, #tpu.memory_space<vmem>>, vector<1x16x16xf32>,
    %1286 = vector.broadcast %1273 : vector<1x16xf32> to vector<16x16xf32>
    %1287 = vector.broadcast %1275 : vector<16x1xf32> to vector<16x16xf32>
    %1288 = arith.mulf %1286, %1287 : vector<16x16xf32>
    %1289 = vector.broadcast %1272 : vector<1x16xf32> to vector<16x16xf32>
    %1290 = vector.broadcast %1274 : vector<16x1xf32> to vector<16x16xf32>
    %1291 = arith.mulf %1289, %1290 : vector<16x16xf32>
    %1292 = arith.subf %1288, %1291 : vector<16x16xf32>
    %c117 = arith.constant 117 : index
    %c0_646 = arith.constant 0 : index
    %c0_647 = arith.constant 0 : index
    %1293 = vector.load %arg6[%c117, %c0_646, %c0_647] : memref<128x16x16xf32, #tpu.memory_space<vmem>>, vector<1x16x16xf32>
    %1294 = vector.shape_cast %1293 : vector<1x16x16xf32> to vector<16x16xf32>
    %1295 = vector.shape_cast %1292 : vector<16x16xf32> to vector<1x16x16xf32>
    tpu.vector_store %arg6[%c117, %c0_646, %c0_647], %1295 {strides = array<i32>} : memref<128x16x16xf32, #tpu.memory_space<vmem>>, vector<1x16x16xf32>,
    %c54 = arith.constant 54 : index
    %c0_648 = arith.constant 0 : index
    %1296 = vector.load %arg2[%c54, %c0_648] : memref<64x16xf32, #tpu.memory_space<vmem>>, vector<1x16xf32>
    %c54_649 = arith.constant 54 : index
    %c0_650 = arith.constant 0 : index
    %1297 = vector.load %arg3[%c54_649, %c0_650] : memref<64x16xf32, #tpu.memory_space<vmem>>, vector<1x16xf32>
    %c0_651 = arith.constant 0 : index
    %c54_652 = arith.constant 54 : index
    %1298 = vector.load %arg4[%c0_651, %c54_652] : memref<16x64xf32, #tpu.memory_space<vmem>>, vector<16x1xf32>
    %c0_653 = arith.constant 0 : index
    %c54_654 = arith.constant 54 : index
    %1299 = vector.load %arg5[%c0_653, %c54_654] : memref<16x64xf32, #tpu.memory_space<vmem>>, vector<16x1xf32>
    %1300 = vector.broadcast %1296 : vector<1x16xf32> to vector<16x16xf32>
    %1301 = vector.broadcast %1299 : vector<16x1xf32> to vector<16x16xf32>
    %1302 = arith.mulf %1300, %1301 : vector<16x16xf32>
    %1303 = vector.broadcast %1297 : vector<1x16xf32> to vector<16x16xf32>
    %1304 = vector.broadcast %1298 : vector<16x1xf32> to vector<16x16xf32>
    %1305 = arith.mulf %1303, %1304 : vector<16x16xf32>
    %1306 = arith.addf %1302, %1305 : vector<16x16xf32>
    %c54_655 = arith.constant 54 : index
    %c0_656 = arith.constant 0 : index
    %c0_657 = arith.constant 0 : index
    %1307 = vector.load %arg6[%c54_655, %c0_656, %c0_657] : memref<128x16x16xf32, #tpu.memory_space<vmem>>, vector<1x16x16xf32>
    %1308 = vector.shape_cast %1307 : vector<1x16x16xf32> to vector<16x16xf32>
    %1309 = vector.shape_cast %1306 : vector<16x16xf32> to vector<1x16x16xf32>
    tpu.vector_store %arg6[%c54_655, %c0_656, %c0_657], %1309 {strides = array<i32>} : memref<128x16x16xf32, #tpu.memory_space<vmem>>, vector<1x16x16xf32>,
    %1310 = vector.broadcast %1297 : vector<1x16xf32> to vector<16x16xf32>
    %1311 = vector.broadcast %1299 : vector<16x1xf32> to vector<16x16xf32>
    %1312 = arith.mulf %1310, %1311 : vector<16x16xf32>
    %1313 = vector.broadcast %1296 : vector<1x16xf32> to vector<16x16xf32>
    %1314 = vector.broadcast %1298 : vector<16x1xf32> to vector<16x16xf32>
    %1315 = arith.mulf %1313, %1314 : vector<16x16xf32>
    %1316 = arith.subf %1312, %1315 : vector<16x16xf32>
    %c118 = arith.constant 118 : index
    %c0_658 = arith.constant 0 : index
    %c0_659 = arith.constant 0 : index
    %1317 = vector.load %arg6[%c118, %c0_658, %c0_659] : memref<128x16x16xf32, #tpu.memory_space<vmem>>, vector<1x16x16xf32>
    %1318 = vector.shape_cast %1317 : vector<1x16x16xf32> to vector<16x16xf32>
    %1319 = vector.shape_cast %1316 : vector<16x16xf32> to vector<1x16x16xf32>
    tpu.vector_store %arg6[%c118, %c0_658, %c0_659], %1319 {strides = array<i32>} : memref<128x16x16xf32, #tpu.memory_space<vmem>>, vector<1x16x16xf32>,
    %c55 = arith.constant 55 : index
    %c0_660 = arith.constant 0 : index
    %1320 = vector.load %arg2[%c55, %c0_660] : memref<64x16xf32, #tpu.memory_space<vmem>>, vector<1x16xf32>
    %c55_661 = arith.constant 55 : index
    %c0_662 = arith.constant 0 : index
    %1321 = vector.load %arg3[%c55_661, %c0_662] : memref<64x16xf32, #tpu.memory_space<vmem>>, vector<1x16xf32>
    %c0_663 = arith.constant 0 : index
    %c55_664 = arith.constant 55 : index
    %1322 = vector.load %arg4[%c0_663, %c55_664] : memref<16x64xf32, #tpu.memory_space<vmem>>, vector<16x1xf32>
    %c0_665 = arith.constant 0 : index
    %c55_666 = arith.constant 55 : index
    %1323 = vector.load %arg5[%c0_665, %c55_666] : memref<16x64xf32, #tpu.memory_space<vmem>>, vector<16x1xf32>
    %1324 = vector.broadcast %1320 : vector<1x16xf32> to vector<16x16xf32>
    %1325 = vector.broadcast %1323 : vector<16x1xf32> to vector<16x16xf32>
    %1326 = arith.mulf %1324, %1325 : vector<16x16xf32>
    %1327 = vector.broadcast %1321 : vector<1x16xf32> to vector<16x16xf32>
    %1328 = vector.broadcast %1322 : vector<16x1xf32> to vector<16x16xf32>
    %1329 = arith.mulf %1327, %1328 : vector<16x16xf32>
    %1330 = arith.addf %1326, %1329 : vector<16x16xf32>
    %c55_667 = arith.constant 55 : index
    %c0_668 = arith.constant 0 : index
    %c0_669 = arith.constant 0 : index
    %1331 = vector.load %arg6[%c55_667, %c0_668, %c0_669] : memref<128x16x16xf32, #tpu.memory_space<vmem>>, vector<1x16x16xf32>
    %1332 = vector.shape_cast %1331 : vector<1x16x16xf32> to vector<16x16xf32>
    %1333 = vector.shape_cast %1330 : vector<16x16xf32> to vector<1x16x16xf32>
    tpu.vector_store %arg6[%c55_667, %c0_668, %c0_669], %1333 {strides = array<i32>} : memref<128x16x16xf32, #tpu.memory_space<vmem>>, vector<1x16x16xf32>,
    %1334 = vector.broadcast %1321 : vector<1x16xf32> to vector<16x16xf32>
    %1335 = vector.broadcast %1323 : vector<16x1xf32> to vector<16x16xf32>
    %1336 = arith.mulf %1334, %1335 : vector<16x16xf32>
    %1337 = vector.broadcast %1320 : vector<1x16xf32> to vector<16x16xf32>
    %1338 = vector.broadcast %1322 : vector<16x1xf32> to vector<16x16xf32>
    %1339 = arith.mulf %1337, %1338 : vector<16x16xf32>
    %1340 = arith.subf %1336, %1339 : vector<16x16xf32>
    %c119 = arith.constant 119 : index
    %c0_670 = arith.constant 0 : index
    %c0_671 = arith.constant 0 : index
    %1341 = vector.load %arg6[%c119, %c0_670, %c0_671] : memref<128x16x16xf32, #tpu.memory_space<vmem>>, vector<1x16x16xf32>
    %1342 = vector.shape_cast %1341 : vector<1x16x16xf32> to vector<16x16xf32>
    %1343 = vector.shape_cast %1340 : vector<16x16xf32> to vector<1x16x16xf32>
    tpu.vector_store %arg6[%c119, %c0_670, %c0_671], %1343 {strides = array<i32>} : memref<128x16x16xf32, #tpu.memory_space<vmem>>, vector<1x16x16xf32>,
    %c56 = arith.constant 56 : index
    %c0_672 = arith.constant 0 : index
    %1344 = vector.load %arg2[%c56, %c0_672] : memref<64x16xf32, #tpu.memory_space<vmem>>, vector<1x16xf32>
    %c56_673 = arith.constant 56 : index
    %c0_674 = arith.constant 0 : index
    %1345 = vector.load %arg3[%c56_673, %c0_674] : memref<64x16xf32, #tpu.memory_space<vmem>>, vector<1x16xf32>
    %c0_675 = arith.constant 0 : index
    %c56_676 = arith.constant 56 : index
    %1346 = vector.load %arg4[%c0_675, %c56_676] : memref<16x64xf32, #tpu.memory_space<vmem>>, vector<16x1xf32>
    %c0_677 = arith.constant 0 : index
    %c56_678 = arith.constant 56 : index
    %1347 = vector.load %arg5[%c0_677, %c56_678] : memref<16x64xf32, #tpu.memory_space<vmem>>, vector<16x1xf32>
    %1348 = vector.broadcast %1344 : vector<1x16xf32> to vector<16x16xf32>
    %1349 = vector.broadcast %1347 : vector<16x1xf32> to vector<16x16xf32>
    %1350 = arith.mulf %1348, %1349 : vector<16x16xf32>
    %1351 = vector.broadcast %1345 : vector<1x16xf32> to vector<16x16xf32>
    %1352 = vector.broadcast %1346 : vector<16x1xf32> to vector<16x16xf32>
    %1353 = arith.mulf %1351, %1352 : vector<16x16xf32>
    %1354 = arith.addf %1350, %1353 : vector<16x16xf32>
    %c56_679 = arith.constant 56 : index
    %c0_680 = arith.constant 0 : index
    %c0_681 = arith.constant 0 : index
    %1355 = vector.load %arg6[%c56_679, %c0_680, %c0_681] : memref<128x16x16xf32, #tpu.memory_space<vmem>>, vector<1x16x16xf32>
    %1356 = vector.shape_cast %1355 : vector<1x16x16xf32> to vector<16x16xf32>
    %1357 = vector.shape_cast %1354 : vector<16x16xf32> to vector<1x16x16xf32>
    tpu.vector_store %arg6[%c56_679, %c0_680, %c0_681], %1357 {strides = array<i32>} : memref<128x16x16xf32, #tpu.memory_space<vmem>>, vector<1x16x16xf32>,
    %1358 = vector.broadcast %1345 : vector<1x16xf32> to vector<16x16xf32>
    %1359 = vector.broadcast %1347 : vector<16x1xf32> to vector<16x16xf32>
    %1360 = arith.mulf %1358, %1359 : vector<16x16xf32>
    %1361 = vector.broadcast %1344 : vector<1x16xf32> to vector<16x16xf32>
    %1362 = vector.broadcast %1346 : vector<16x1xf32> to vector<16x16xf32>
    %1363 = arith.mulf %1361, %1362 : vector<16x16xf32>
    %1364 = arith.subf %1360, %1363 : vector<16x16xf32>
    %c120 = arith.constant 120 : index
    %c0_682 = arith.constant 0 : index
    %c0_683 = arith.constant 0 : index
    %1365 = vector.load %arg6[%c120, %c0_682, %c0_683] : memref<128x16x16xf32, #tpu.memory_space<vmem>>, vector<1x16x16xf32>
    %1366 = vector.shape_cast %1365 : vector<1x16x16xf32> to vector<16x16xf32>
    %1367 = vector.shape_cast %1364 : vector<16x16xf32> to vector<1x16x16xf32>
    tpu.vector_store %arg6[%c120, %c0_682, %c0_683], %1367 {strides = array<i32>} : memref<128x16x16xf32, #tpu.memory_space<vmem>>, vector<1x16x16xf32>,
    %c57 = arith.constant 57 : index
    %c0_684 = arith.constant 0 : index
    %1368 = vector.load %arg2[%c57, %c0_684] : memref<64x16xf32, #tpu.memory_space<vmem>>, vector<1x16xf32>
    %c57_685 = arith.constant 57 : index
    %c0_686 = arith.constant 0 : index
    %1369 = vector.load %arg3[%c57_685, %c0_686] : memref<64x16xf32, #tpu.memory_space<vmem>>, vector<1x16xf32>
    %c0_687 = arith.constant 0 : index
    %c57_688 = arith.constant 57 : index
    %1370 = vector.load %arg4[%c0_687, %c57_688] : memref<16x64xf32, #tpu.memory_space<vmem>>, vector<16x1xf32>
    %c0_689 = arith.constant 0 : index
    %c57_690 = arith.constant 57 : index
    %1371 = vector.load %arg5[%c0_689, %c57_690] : memref<16x64xf32, #tpu.memory_space<vmem>>, vector<16x1xf32>
    %1372 = vector.broadcast %1368 : vector<1x16xf32> to vector<16x16xf32>
    %1373 = vector.broadcast %1371 : vector<16x1xf32> to vector<16x16xf32>
    %1374 = arith.mulf %1372, %1373 : vector<16x16xf32>
    %1375 = vector.broadcast %1369 : vector<1x16xf32> to vector<16x16xf32>
    %1376 = vector.broadcast %1370 : vector<16x1xf32> to vector<16x16xf32>
    %1377 = arith.mulf %1375, %1376 : vector<16x16xf32>
    %1378 = arith.addf %1374, %1377 : vector<16x16xf32>
    %c57_691 = arith.constant 57 : index
    %c0_692 = arith.constant 0 : index
    %c0_693 = arith.constant 0 : index
    %1379 = vector.load %arg6[%c57_691, %c0_692, %c0_693] : memref<128x16x16xf32, #tpu.memory_space<vmem>>, vector<1x16x16xf32>
    %1380 = vector.shape_cast %1379 : vector<1x16x16xf32> to vector<16x16xf32>
    %1381 = vector.shape_cast %1378 : vector<16x16xf32> to vector<1x16x16xf32>
    tpu.vector_store %arg6[%c57_691, %c0_692, %c0_693], %1381 {strides = array<i32>} : memref<128x16x16xf32, #tpu.memory_space<vmem>>, vector<1x16x16xf32>,
    %1382 = vector.broadcast %1369 : vector<1x16xf32> to vector<16x16xf32>
    %1383 = vector.broadcast %1371 : vector<16x1xf32> to vector<16x16xf32>
    %1384 = arith.mulf %1382, %1383 : vector<16x16xf32>
    %1385 = vector.broadcast %1368 : vector<1x16xf32> to vector<16x16xf32>
    %1386 = vector.broadcast %1370 : vector<16x1xf32> to vector<16x16xf32>
    %1387 = arith.mulf %1385, %1386 : vector<16x16xf32>
    %1388 = arith.subf %1384, %1387 : vector<16x16xf32>
    %c121 = arith.constant 121 : index
    %c0_694 = arith.constant 0 : index
    %c0_695 = arith.constant 0 : index
    %1389 = vector.load %arg6[%c121, %c0_694, %c0_695] : memref<128x16x16xf32, #tpu.memory_space<vmem>>, vector<1x16x16xf32>
    %1390 = vector.shape_cast %1389 : vector<1x16x16xf32> to vector<16x16xf32>
    %1391 = vector.shape_cast %1388 : vector<16x16xf32> to vector<1x16x16xf32>
    tpu.vector_store %arg6[%c121, %c0_694, %c0_695], %1391 {strides = array<i32>} : memref<128x16x16xf32, #tpu.memory_space<vmem>>, vector<1x16x16xf32>,
    %c58 = arith.constant 58 : index
    %c0_696 = arith.constant 0 : index
    %1392 = vector.load %arg2[%c58, %c0_696] : memref<64x16xf32, #tpu.memory_space<vmem>>, vector<1x16xf32>
    %c58_697 = arith.constant 58 : index
    %c0_698 = arith.constant 0 : index
    %1393 = vector.load %arg3[%c58_697, %c0_698] : memref<64x16xf32, #tpu.memory_space<vmem>>, vector<1x16xf32>
    %c0_699 = arith.constant 0 : index
    %c58_700 = arith.constant 58 : index
    %1394 = vector.load %arg4[%c0_699, %c58_700] : memref<16x64xf32, #tpu.memory_space<vmem>>, vector<16x1xf32>
    %c0_701 = arith.constant 0 : index
    %c58_702 = arith.constant 58 : index
    %1395 = vector.load %arg5[%c0_701, %c58_702] : memref<16x64xf32, #tpu.memory_space<vmem>>, vector<16x1xf32>
    %1396 = vector.broadcast %1392 : vector<1x16xf32> to vector<16x16xf32>
    %1397 = vector.broadcast %1395 : vector<16x1xf32> to vector<16x16xf32>
    %1398 = arith.mulf %1396, %1397 : vector<16x16xf32>
    %1399 = vector.broadcast %1393 : vector<1x16xf32> to vector<16x16xf32>
    %1400 = vector.broadcast %1394 : vector<16x1xf32> to vector<16x16xf32>
    %1401 = arith.mulf %1399, %1400 : vector<16x16xf32>
    %1402 = arith.addf %1398, %1401 : vector<16x16xf32>
    %c58_703 = arith.constant 58 : index
    %c0_704 = arith.constant 0 : index
    %c0_705 = arith.constant 0 : index
    %1403 = vector.load %arg6[%c58_703, %c0_704, %c0_705] : memref<128x16x16xf32, #tpu.memory_space<vmem>>, vector<1x16x16xf32>
    %1404 = vector.shape_cast %1403 : vector<1x16x16xf32> to vector<16x16xf32>
    %1405 = vector.shape_cast %1402 : vector<16x16xf32> to vector<1x16x16xf32>
    tpu.vector_store %arg6[%c58_703, %c0_704, %c0_705], %1405 {strides = array<i32>} : memref<128x16x16xf32, #tpu.memory_space<vmem>>, vector<1x16x16xf32>,
    %1406 = vector.broadcast %1393 : vector<1x16xf32> to vector<16x16xf32>
    %1407 = vector.broadcast %1395 : vector<16x1xf32> to vector<16x16xf32>
    %1408 = arith.mulf %1406, %1407 : vector<16x16xf32>
    %1409 = vector.broadcast %1392 : vector<1x16xf32> to vector<16x16xf32>
    %1410 = vector.broadcast %1394 : vector<16x1xf32> to vector<16x16xf32>
    %1411 = arith.mulf %1409, %1410 : vector<16x16xf32>
    %1412 = arith.subf %1408, %1411 : vector<16x16xf32>
    %c122 = arith.constant 122 : index
    %c0_706 = arith.constant 0 : index
    %c0_707 = arith.constant 0 : index
    %1413 = vector.load %arg6[%c122, %c0_706, %c0_707] : memref<128x16x16xf32, #tpu.memory_space<vmem>>, vector<1x16x16xf32>
    %1414 = vector.shape_cast %1413 : vector<1x16x16xf32> to vector<16x16xf32>
    %1415 = vector.shape_cast %1412 : vector<16x16xf32> to vector<1x16x16xf32>
    tpu.vector_store %arg6[%c122, %c0_706, %c0_707], %1415 {strides = array<i32>} : memref<128x16x16xf32, #tpu.memory_space<vmem>>, vector<1x16x16xf32>,
    %c59 = arith.constant 59 : index
    %c0_708 = arith.constant 0 : index
    %1416 = vector.load %arg2[%c59, %c0_708] : memref<64x16xf32, #tpu.memory_space<vmem>>, vector<1x16xf32>
    %c59_709 = arith.constant 59 : index
    %c0_710 = arith.constant 0 : index
    %1417 = vector.load %arg3[%c59_709, %c0_710] : memref<64x16xf32, #tpu.memory_space<vmem>>, vector<1x16xf32>
    %c0_711 = arith.constant 0 : index
    %c59_712 = arith.constant 59 : index
    %1418 = vector.load %arg4[%c0_711, %c59_712] : memref<16x64xf32, #tpu.memory_space<vmem>>, vector<16x1xf32>
    %c0_713 = arith.constant 0 : index
    %c59_714 = arith.constant 59 : index
    %1419 = vector.load %arg5[%c0_713, %c59_714] : memref<16x64xf32, #tpu.memory_space<vmem>>, vector<16x1xf32>
    %1420 = vector.broadcast %1416 : vector<1x16xf32> to vector<16x16xf32>
    %1421 = vector.broadcast %1419 : vector<16x1xf32> to vector<16x16xf32>
    %1422 = arith.mulf %1420, %1421 : vector<16x16xf32>
    %1423 = vector.broadcast %1417 : vector<1x16xf32> to vector<16x16xf32>
    %1424 = vector.broadcast %1418 : vector<16x1xf32> to vector<16x16xf32>
    %1425 = arith.mulf %1423, %1424 : vector<16x16xf32>
    %1426 = arith.addf %1422, %1425 : vector<16x16xf32>
    %c59_715 = arith.constant 59 : index
    %c0_716 = arith.constant 0 : index
    %c0_717 = arith.constant 0 : index
    %1427 = vector.load %arg6[%c59_715, %c0_716, %c0_717] : memref<128x16x16xf32, #tpu.memory_space<vmem>>, vector<1x16x16xf32>
    %1428 = vector.shape_cast %1427 : vector<1x16x16xf32> to vector<16x16xf32>
    %1429 = vector.shape_cast %1426 : vector<16x16xf32> to vector<1x16x16xf32>
    tpu.vector_store %arg6[%c59_715, %c0_716, %c0_717], %1429 {strides = array<i32>} : memref<128x16x16xf32, #tpu.memory_space<vmem>>, vector<1x16x16xf32>,
    %1430 = vector.broadcast %1417 : vector<1x16xf32> to vector<16x16xf32>
    %1431 = vector.broadcast %1419 : vector<16x1xf32> to vector<16x16xf32>
    %1432 = arith.mulf %1430, %1431 : vector<16x16xf32>
    %1433 = vector.broadcast %1416 : vector<1x16xf32> to vector<16x16xf32>
    %1434 = vector.broadcast %1418 : vector<16x1xf32> to vector<16x16xf32>
    %1435 = arith.mulf %1433, %1434 : vector<16x16xf32>
    %1436 = arith.subf %1432, %1435 : vector<16x16xf32>
    %c123 = arith.constant 123 : index
    %c0_718 = arith.constant 0 : index
    %c0_719 = arith.constant 0 : index
    %1437 = vector.load %arg6[%c123, %c0_718, %c0_719] : memref<128x16x16xf32, #tpu.memory_space<vmem>>, vector<1x16x16xf32>
    %1438 = vector.shape_cast %1437 : vector<1x16x16xf32> to vector<16x16xf32>
    %1439 = vector.shape_cast %1436 : vector<16x16xf32> to vector<1x16x16xf32>
    tpu.vector_store %arg6[%c123, %c0_718, %c0_719], %1439 {strides = array<i32>} : memref<128x16x16xf32, #tpu.memory_space<vmem>>, vector<1x16x16xf32>,
    %c60 = arith.constant 60 : index
    %c0_720 = arith.constant 0 : index
    %1440 = vector.load %arg2[%c60, %c0_720] : memref<64x16xf32, #tpu.memory_space<vmem>>, vector<1x16xf32>
    %c60_721 = arith.constant 60 : index
    %c0_722 = arith.constant 0 : index
    %1441 = vector.load %arg3[%c60_721, %c0_722] : memref<64x16xf32, #tpu.memory_space<vmem>>, vector<1x16xf32>
    %c0_723 = arith.constant 0 : index
    %c60_724 = arith.constant 60 : index
    %1442 = vector.load %arg4[%c0_723, %c60_724] : memref<16x64xf32, #tpu.memory_space<vmem>>, vector<16x1xf32>
    %c0_725 = arith.constant 0 : index
    %c60_726 = arith.constant 60 : index
    %1443 = vector.load %arg5[%c0_725, %c60_726] : memref<16x64xf32, #tpu.memory_space<vmem>>, vector<16x1xf32>
    %1444 = vector.broadcast %1440 : vector<1x16xf32> to vector<16x16xf32>
    %1445 = vector.broadcast %1443 : vector<16x1xf32> to vector<16x16xf32>
    %1446 = arith.mulf %1444, %1445 : vector<16x16xf32>
    %1447 = vector.broadcast %1441 : vector<1x16xf32> to vector<16x16xf32>
    %1448 = vector.broadcast %1442 : vector<16x1xf32> to vector<16x16xf32>
    %1449 = arith.mulf %1447, %1448 : vector<16x16xf32>
    %1450 = arith.addf %1446, %1449 : vector<16x16xf32>
    %c60_727 = arith.constant 60 : index
    %c0_728 = arith.constant 0 : index
    %c0_729 = arith.constant 0 : index
    %1451 = vector.load %arg6[%c60_727, %c0_728, %c0_729] : memref<128x16x16xf32, #tpu.memory_space<vmem>>, vector<1x16x16xf32>
    %1452 = vector.shape_cast %1451 : vector<1x16x16xf32> to vector<16x16xf32>
    %1453 = vector.shape_cast %1450 : vector<16x16xf32> to vector<1x16x16xf32>
    tpu.vector_store %arg6[%c60_727, %c0_728, %c0_729], %1453 {strides = array<i32>} : memref<128x16x16xf32, #tpu.memory_space<vmem>>, vector<1x16x16xf32>,
    %1454 = vector.broadcast %1441 : vector<1x16xf32> to vector<16x16xf32>
    %1455 = vector.broadcast %1443 : vector<16x1xf32> to vector<16x16xf32>
    %1456 = arith.mulf %1454, %1455 : vector<16x16xf32>
    %1457 = vector.broadcast %1440 : vector<1x16xf32> to vector<16x16xf32>
    %1458 = vector.broadcast %1442 : vector<16x1xf32> to vector<16x16xf32>
    %1459 = arith.mulf %1457, %1458 : vector<16x16xf32>
    %1460 = arith.subf %1456, %1459 : vector<16x16xf32>
    %c124 = arith.constant 124 : index
    %c0_730 = arith.constant 0 : index
    %c0_731 = arith.constant 0 : index
    %1461 = vector.load %arg6[%c124, %c0_730, %c0_731] : memref<128x16x16xf32, #tpu.memory_space<vmem>>, vector<1x16x16xf32>
    %1462 = vector.shape_cast %1461 : vector<1x16x16xf32> to vector<16x16xf32>
    %1463 = vector.shape_cast %1460 : vector<16x16xf32> to vector<1x16x16xf32>
    tpu.vector_store %arg6[%c124, %c0_730, %c0_731], %1463 {strides = array<i32>} : memref<128x16x16xf32, #tpu.memory_space<vmem>>, vector<1x16x16xf32>,
    %c61 = arith.constant 61 : index
    %c0_732 = arith.constant 0 : index
    %1464 = vector.load %arg2[%c61, %c0_732] : memref<64x16xf32, #tpu.memory_space<vmem>>, vector<1x16xf32>
    %c61_733 = arith.constant 61 : index
    %c0_734 = arith.constant 0 : index
    %1465 = vector.load %arg3[%c61_733, %c0_734] : memref<64x16xf32, #tpu.memory_space<vmem>>, vector<1x16xf32>
    %c0_735 = arith.constant 0 : index
    %c61_736 = arith.constant 61 : index
    %1466 = vector.load %arg4[%c0_735, %c61_736] : memref<16x64xf32, #tpu.memory_space<vmem>>, vector<16x1xf32>
    %c0_737 = arith.constant 0 : index
    %c61_738 = arith.constant 61 : index
    %1467 = vector.load %arg5[%c0_737, %c61_738] : memref<16x64xf32, #tpu.memory_space<vmem>>, vector<16x1xf32>
    %1468 = vector.broadcast %1464 : vector<1x16xf32> to vector<16x16xf32>
    %1469 = vector.broadcast %1467 : vector<16x1xf32> to vector<16x16xf32>
    %1470 = arith.mulf %1468, %1469 : vector<16x16xf32>
    %1471 = vector.broadcast %1465 : vector<1x16xf32> to vector<16x16xf32>
    %1472 = vector.broadcast %1466 : vector<16x1xf32> to vector<16x16xf32>
    %1473 = arith.mulf %1471, %1472 : vector<16x16xf32>
    %1474 = arith.addf %1470, %1473 : vector<16x16xf32>
    %c61_739 = arith.constant 61 : index
    %c0_740 = arith.constant 0 : index
    %c0_741 = arith.constant 0 : index
    %1475 = vector.load %arg6[%c61_739, %c0_740, %c0_741] : memref<128x16x16xf32, #tpu.memory_space<vmem>>, vector<1x16x16xf32>
    %1476 = vector.shape_cast %1475 : vector<1x16x16xf32> to vector<16x16xf32>
    %1477 = vector.shape_cast %1474 : vector<16x16xf32> to vector<1x16x16xf32>
    tpu.vector_store %arg6[%c61_739, %c0_740, %c0_741], %1477 {strides = array<i32>} : memref<128x16x16xf32, #tpu.memory_space<vmem>>, vector<1x16x16xf32>,
    %1478 = vector.broadcast %1465 : vector<1x16xf32> to vector<16x16xf32>
    %1479 = vector.broadcast %1467 : vector<16x1xf32> to vector<16x16xf32>
    %1480 = arith.mulf %1478, %1479 : vector<16x16xf32>
    %1481 = vector.broadcast %1464 : vector<1x16xf32> to vector<16x16xf32>
    %1482 = vector.broadcast %1466 : vector<16x1xf32> to vector<16x16xf32>
    %1483 = arith.mulf %1481, %1482 : vector<16x16xf32>
    %1484 = arith.subf %1480, %1483 : vector<16x16xf32>
    %c125 = arith.constant 125 : index
    %c0_742 = arith.constant 0 : index
    %c0_743 = arith.constant 0 : index
    %1485 = vector.load %arg6[%c125, %c0_742, %c0_743] : memref<128x16x16xf32, #tpu.memory_space<vmem>>, vector<1x16x16xf32>
    %1486 = vector.shape_cast %1485 : vector<1x16x16xf32> to vector<16x16xf32>
    %1487 = vector.shape_cast %1484 : vector<16x16xf32> to vector<1x16x16xf32>
    tpu.vector_store %arg6[%c125, %c0_742, %c0_743], %1487 {strides = array<i32>} : memref<128x16x16xf32, #tpu.memory_space<vmem>>, vector<1x16x16xf32>,
    %c62 = arith.constant 62 : index
    %c0_744 = arith.constant 0 : index
    %1488 = vector.load %arg2[%c62, %c0_744] : memref<64x16xf32, #tpu.memory_space<vmem>>, vector<1x16xf32>
    %c62_745 = arith.constant 62 : index
    %c0_746 = arith.constant 0 : index
    %1489 = vector.load %arg3[%c62_745, %c0_746] : memref<64x16xf32, #tpu.memory_space<vmem>>, vector<1x16xf32>
    %c0_747 = arith.constant 0 : index
    %c62_748 = arith.constant 62 : index
    %1490 = vector.load %arg4[%c0_747, %c62_748] : memref<16x64xf32, #tpu.memory_space<vmem>>, vector<16x1xf32>
    %c0_749 = arith.constant 0 : index
    %c62_750 = arith.constant 62 : index
    %1491 = vector.load %arg5[%c0_749, %c62_750] : memref<16x64xf32, #tpu.memory_space<vmem>>, vector<16x1xf32>
    %1492 = vector.broadcast %1488 : vector<1x16xf32> to vector<16x16xf32>
    %1493 = vector.broadcast %1491 : vector<16x1xf32> to vector<16x16xf32>
    %1494 = arith.mulf %1492, %1493 : vector<16x16xf32>
    %1495 = vector.broadcast %1489 : vector<1x16xf32> to vector<16x16xf32>
    %1496 = vector.broadcast %1490 : vector<16x1xf32> to vector<16x16xf32>
    %1497 = arith.mulf %1495, %1496 : vector<16x16xf32>
    %1498 = arith.addf %1494, %1497 : vector<16x16xf32>
    %c62_751 = arith.constant 62 : index
    %c0_752 = arith.constant 0 : index
    %c0_753 = arith.constant 0 : index
    %1499 = vector.load %arg6[%c62_751, %c0_752, %c0_753] : memref<128x16x16xf32, #tpu.memory_space<vmem>>, vector<1x16x16xf32>
    %1500 = vector.shape_cast %1499 : vector<1x16x16xf32> to vector<16x16xf32>
    %1501 = vector.shape_cast %1498 : vector<16x16xf32> to vector<1x16x16xf32>
    tpu.vector_store %arg6[%c62_751, %c0_752, %c0_753], %1501 {strides = array<i32>} : memref<128x16x16xf32, #tpu.memory_space<vmem>>, vector<1x16x16xf32>,
    %1502 = vector.broadcast %1489 : vector<1x16xf32> to vector<16x16xf32>
    %1503 = vector.broadcast %1491 : vector<16x1xf32> to vector<16x16xf32>
    %1504 = arith.mulf %1502, %1503 : vector<16x16xf32>
    %1505 = vector.broadcast %1488 : vector<1x16xf32> to vector<16x16xf32>
    %1506 = vector.broadcast %1490 : vector<16x1xf32> to vector<16x16xf32>
    %1507 = arith.mulf %1505, %1506 : vector<16x16xf32>
    %1508 = arith.subf %1504, %1507 : vector<16x16xf32>
    %c126 = arith.constant 126 : index
    %c0_754 = arith.constant 0 : index
    %c0_755 = arith.constant 0 : index
    %1509 = vector.load %arg6[%c126, %c0_754, %c0_755] : memref<128x16x16xf32, #tpu.memory_space<vmem>>, vector<1x16x16xf32>
    %1510 = vector.shape_cast %1509 : vector<1x16x16xf32> to vector<16x16xf32>
    %1511 = vector.shape_cast %1508 : vector<16x16xf32> to vector<1x16x16xf32>
    tpu.vector_store %arg6[%c126, %c0_754, %c0_755], %1511 {strides = array<i32>} : memref<128x16x16xf32, #tpu.memory_space<vmem>>, vector<1x16x16xf32>,
    %c63 = arith.constant 63 : index
    %c0_756 = arith.constant 0 : index
    %1512 = vector.load %arg2[%c63, %c0_756] : memref<64x16xf32, #tpu.memory_space<vmem>>, vector<1x16xf32>
    %c63_757 = arith.constant 63 : index
    %c0_758 = arith.constant 0 : index
    %1513 = vector.load %arg3[%c63_757, %c0_758] : memref<64x16xf32, #tpu.memory_space<vmem>>, vector<1x16xf32>
    %c0_759 = arith.constant 0 : index
    %c63_760 = arith.constant 63 : index
    %1514 = vector.load %arg4[%c0_759, %c63_760] : memref<16x64xf32, #tpu.memory_space<vmem>>, vector<16x1xf32>
    %c0_761 = arith.constant 0 : index
    %c63_762 = arith.constant 63 : index
    %1515 = vector.load %arg5[%c0_761, %c63_762] : memref<16x64xf32, #tpu.memory_space<vmem>>, vector<16x1xf32>
    %1516 = vector.broadcast %1512 : vector<1x16xf32> to vector<16x16xf32>
    %1517 = vector.broadcast %1515 : vector<16x1xf32> to vector<16x16xf32>
    %1518 = arith.mulf %1516, %1517 : vector<16x16xf32>
    %1519 = vector.broadcast %1513 : vector<1x16xf32> to vector<16x16xf32>
    %1520 = vector.broadcast %1514 : vector<16x1xf32> to vector<16x16xf32>
    %1521 = arith.mulf %1519, %1520 : vector<16x16xf32>
    %1522 = arith.addf %1518, %1521 : vector<16x16xf32>
    %c63_763 = arith.constant 63 : index
    %c0_764 = arith.constant 0 : index
    %c0_765 = arith.constant 0 : index
    %1523 = vector.load %arg6[%c63_763, %c0_764, %c0_765] : memref<128x16x16xf32, #tpu.memory_space<vmem>>, vector<1x16x16xf32>
    %1524 = vector.shape_cast %1523 : vector<1x16x16xf32> to vector<16x16xf32>
    %1525 = vector.shape_cast %1522 : vector<16x16xf32> to vector<1x16x16xf32>
    tpu.vector_store %arg6[%c63_763, %c0_764, %c0_765], %1525 {strides = array<i32>} : memref<128x16x16xf32, #tpu.memory_space<vmem>>, vector<1x16x16xf32>,
    %1526 = vector.broadcast %1513 : vector<1x16xf32> to vector<16x16xf32>
    %1527 = vector.broadcast %1515 : vector<16x1xf32> to vector<16x16xf32>
    %1528 = arith.mulf %1526, %1527 : vector<16x16xf32>
    %1529 = vector.broadcast %1512 : vector<1x16xf32> to vector<16x16xf32>
    %1530 = vector.broadcast %1514 : vector<16x1xf32> to vector<16x16xf32>
    %1531 = arith.mulf %1529, %1530 : vector<16x16xf32>
    %1532 = arith.subf %1528, %1531 : vector<16x16xf32>
    %c127 = arith.constant 127 : index
    %c0_766 = arith.constant 0 : index
    %c0_767 = arith.constant 0 : index
    %1533 = vector.load %arg6[%c127, %c0_766, %c0_767] : memref<128x16x16xf32, #tpu.memory_space<vmem>>, vector<1x16x16xf32>
    %1534 = vector.shape_cast %1533 : vector<1x16x16xf32> to vector<16x16xf32>
    %1535 = vector.shape_cast %1532 : vector<16x16xf32> to vector<1x16x16xf32>
    tpu.vector_store %arg6[%c127, %c0_766, %c0_767], %1535 {strides = array<i32>} : memref<128x16x16xf32, #tpu.memory_space<vmem>>, vector<1x16x16xf32>,
    return
  }
  func.func @transform_0(%arg0: i32, %arg1: i32) -> (i32, i32) {
    %c0_i32 = arith.constant 0 : i32
    %c0_i32_0 = arith.constant 0 : i32
    return %c0_i32, %arg1 : i32, i32
  }
  func.func @transform_1(%arg0: i32, %arg1: i32) -> (i32, i32) {
    %c0_i32 = arith.constant 0 : i32
    %c0_i32_0 = arith.constant 0 : i32
    return %c0_i32, %arg1 : i32, i32
  }
  func.func @transform_2(%arg0: i32, %arg1: i32) -> (i32, i32) {
    %c0_i32 = arith.constant 0 : i32
    %c0_i32_0 = arith.constant 0 : i32
    return %arg0, %c0_i32 : i32, i32
  }
  func.func @transform_3(%arg0: i32, %arg1: i32) -> (i32, i32) {
    %c0_i32 = arith.constant 0 : i32
    %c0_i32_0 = arith.constant 0 : i32
    return %arg0, %c0_i32 : i32, i32
  }
  func.func @transform_4(%arg0: i32, %arg1: i32) -> (i32, i32, i32) {
    %c0_i32 = arith.constant 0 : i32
    %c0_i32_0 = arith.constant 0 : i32
    return %c0_i32, %arg0, %arg1 : i32, i32, i32
  }
}

</mosaic_0001>

<llo_original>
// kernel: tpu_custom_call.1
$region0: #{tpu_custom_call.1}
  #allocation0 [shape = 'u32[]', space=smem, size = 0x4, offset = 0x4, fixed_abs, tag = 'smem constant byte address 0x4 - core index']
  #allocation1 [shape = 'u32[144,128]{1,0:T(1,128)}', space=vmem, size = 0x12000, scoped, tag = 'internal scratch']
  %s0 = inlined_call_operand.vmem [shape: f32[64,16], index: 0, kind: input, shape index: {}]
  %s1 = inlined_call_operand.vmem [shape: f32[64,16], index: 1, kind: input, shape index: {}]
  %s2 = inlined_call_operand.vmem [shape: f32[16,64], index: 2, kind: input, shape index: {}]
  %s3 = inlined_call_operand.vmem [shape: f32[16,64], index: 3, kind: input, shape index: {}]
  %s4 = inlined_call_operand.vmem [shape: f32[128,16,16], index: 4, kind: output, shape index: {}]
  %s5 = sld [smem:[#allocation0]]
  $region26: #{tpu_custom_call.1} parent=0
    _
  %s7 = ssub.s32 1, %s5
  %s8 = scalar_select 0, %s7, %s5
  // Predicated region
  $region2: #{tpu_custom_call.1} parent=0 // pred_check
    _
  $region3: #{tpu_custom_call.1} parent=0 // pred_check_branch
    %10 = sbr.rel (0) target = $region5
  $region4: #{tpu_custom_call.1} parent=0 // pred_region
    _
  $region5: #{tpu_custom_call.1} parent=0 // pred_fallthru
    _
  // Predicated region
  $region6: #{tpu_custom_call.1} parent=0 // pred_check
    _
  $region7: #{tpu_custom_call.1} parent=0 // pred_check_branch
    %12 = sbr.rel (0) target = $region9
  $region8: #{tpu_custom_call.1} parent=0 // pred_region
    _
  $region9: #{tpu_custom_call.1} parent=0 // pred_fallthru
    _
  // Predicated region
  $region10: #{tpu_custom_call.1} parent=0 // pred_check
    _
  $region11: #{tpu_custom_call.1} parent=0 // pred_check_branch
    %14 = sbr.rel (0) target = $region13
  $region12: #{tpu_custom_call.1} parent=0 // pred_region
    _
  $region13: #{tpu_custom_call.1} parent=0 // pred_fallthru
    _
  // Predicated region
  $region14: #{tpu_custom_call.1} parent=0 // pred_check
    _
  $region15: #{tpu_custom_call.1} parent=0 // pred_check_branch
    %16 = sbr.rel (0) target = $region17
  $region16: #{tpu_custom_call.1} parent=0 // pred_region
    _
  $region17: #{tpu_custom_call.1} parent=0 // pred_fallthru
    _
  %v17 = vld [vmem:[%s0] sm:$0x1]
  %v18 = vld [vmem:[%s1] sm:$0x1]
  %v19 = vld [vmem:[%s2] sm:$0xff]
  %v20 = vld [vmem:[%s2 + $0x8] sm:$0xff]
  %v21 = vld [vmem:[%s3] sm:$0xff]
  %v22 = vld [vmem:[%s3 + $0x8] sm:$0xff]
  %v23 = vlaneseq
  %v24 = vshrl.u32 %v23, 7
  %v25 = vsub.s32 0, %v24
  %v26 = vrot.slane %v17, %v25
  %28 = vset.pattern.permute.xlu0 0
  %29 = vperm.xlu0 %28, %v21
  %v30 = vpop.permute.xlu0 %29
  %33 = vset.pattern.permute.xlu0 0
  %34 = vperm.xlu0 %33, %v22
  %v35 = vpop.permute.xlu0 %34
  %v37 = vmul.f32 %v26, %v30
  %v38 = vmul.f32 %v26, %v35
  %v39 = vlaneseq
  %v40 = vshrl.u32 %v39, 7
  %v41 = vsub.s32 0, %v40
  %v42 = vrot.slane %v18, %v41
  %44 = vset.pattern.permute.xlu0 0
  %45 = vperm.xlu0 %44, %v19
  %v46 = vpop.permute.xlu0 %45
  %49 = vset.pattern.permute.xlu0 0
  %50 = vperm.xlu0 %49, %v20
  %v51 = vpop.permute.xlu0 %50
  %v53 = vmul.f32 %v42, %v46
  %v54 = vmul.f32 %v42, %v51
  %v55 = vadd.f32 %v37, %v53
  %v56 = vadd.f32 %v38, %v54
  %vm57 = vcmask 130048
  %58 = vst.msk [vmem:[%s4] sm:$0xff] %vm57, %v55
  %59 = vst.msk [vmem:[%s4 + $0x8] sm:$0xff] %vm57, %v56
  %v60 = vmul.f32 %v42, %v30
  %v61 = vmul.f32 %v42, %v35
  %v62 = vmul.f32 %v26, %v46
  %v63 = vmul.f32 %v26, %v51
  %v64 = vsub.f32 %v60, %v62
  %v65 = vsub.f32 %v61, %v63
  %s66 = scalar_lea.vmem %s4, 1024
  %67 = vst.msk [vmem:[%s66] sm:$0xff] %vm57, %v64
  %68 = vst.msk [vmem:[%s66 + $0x8] sm:$0xff] %vm57, %v65
  %v69 = vld [vmem:[%s0 + $0x1] sm:$0x1]
  %v70 = vld [vmem:[%s1 + $0x1] sm:$0x1]
  %v71 = vld [vmem:[%s2] sm:$0xff]
  %v72 = vld [vmem:[%s2 + $0x8] sm:$0xff]
  %v73 = vld [vmem:[%s3] sm:$0xff]
  %v74 = vld [vmem:[%s3 + $0x8] sm:$0xff]
  %v75 = vlaneseq
  %v76 = vshrl.u32 %v75, 7
  %v77 = vsub.s32 0, %v76
  %v78 = vrot.slane %v69, %v77
  %80 = vset.pattern.permute.xlu0 1
  %81 = vperm.xlu0 %80, %v73
  %v82 = vpop.permute.xlu0 %81
  %85 = vset.pattern.permute.xlu0 1
  %86 = vperm.xlu0 %85, %v74
  %v87 = vpop.permute.xlu0 %86
  %v89 = vmul.f32 %v78, %v82
  %v90 = vmul.f32 %v78, %v87
  %v91 = vlaneseq
  %v92 = vshrl.u32 %v91, 7
  %v93 = vsub.s32 0, %v92
  %v94 = vrot.slane %v70, %v93
  %96 = vset.pattern.permute.xlu0 1
  %97 = vperm.xlu0 %96, %v71
  %v98 = vpop.permute.xlu0 %97
  %101 = vset.pattern.permute.xlu0 1
  %102 = vperm.xlu0 %101, %v72
  %v103 = vpop.permute.xlu0 %102
  %v105 = vmul.f32 %v94, %v98
  %v106 = vmul.f32 %v94, %v103
  %v107 = vadd.f32 %v89, %v105
  %v108 = vadd.f32 %v90, %v106
  %s109 = scalar_lea.vmem %s4, 16
  %110 = vst.msk [vmem:[%s109] sm:$0xff] %vm57, %v107
  %111 = vst.msk [vmem:[%s109 + $0x8] sm:$0xff] %vm57, %v108
  %v112 = vmul.f32 %v94, %v82
  %v113 = vmul.f32 %v94, %v87
  %v114 = vmul.f32 %v78, %v98
  %v115 = vmul.f32 %v78, %v103
  %v116 = vsub.f32 %v112, %v114
  %v117 = vsub.f32 %v113, %v115
  %s118 = scalar_lea.vmem %s4, 1040
  %119 = vst.msk [vmem:[%s118] sm:$0xff] %vm57, %v116
  %120 = vst.msk [vmem:[%s118 + $0x8] sm:$0xff] %vm57, %v117
  %v121 = vld [vmem:[%s0 + $0x2] sm:$0x1]
  %v122 = vld [vmem:[%s1 + $0x2] sm:$0x1]
  %v123 = vld [vmem:[%s2] sm:$0xff]
  %v124 = vld [vmem:[%s2 + $0x8] sm:$0xff]
  %v125 = vld [vmem:[%s3] sm:$0xff]
  %v126 = vld [vmem:[%s3 + $0x8] sm:$0xff]
  %v127 = vlaneseq
  %v128 = vshrl.u32 %v127, 7
  %v129 = vsub.s32 0, %v128
  %v130 = vrot.slane %v121, %v129
  %132 = vset.pattern.permute.xlu0 2
  %133 = vperm.xlu0 %132, %v125
  %v134 = vpop.permute.xlu0 %133
  %137 = vset.pattern.permute.xlu0 2
  %138 = vperm.xlu0 %137, %v126
  %v139 = vpop.permute.xlu0 %138
  %v141 = vmul.f32 %v130, %v134
  %v142 = vmul.f32 %v130, %v139
  %v143 = vlaneseq
  %v144 = vshrl.u32 %v143, 7
  %v145 = vsub.s32 0, %v144
  %v146 = vrot.slane %v122, %v145
  %148 = vset.pattern.permute.xlu0 2
  %149 = vperm.xlu0 %148, %v123
  %v150 = vpop.permute.xlu0 %149
  %153 = vset.pattern.permute.xlu0 2
  %154 = vperm.xlu0 %153, %v124
  %v155 = vpop.permute.xlu0 %154
  %v157 = vmul.f32 %v146, %v150
  %v158 = vmul.f32 %v146, %v155
  %v159 = vadd.f32 %v141, %v157
  %v160 = vadd.f32 %v142, %v158
  %s161 = scalar_lea.vmem %s4, 32
  %162 = vst.msk [vmem:[%s161] sm:$0xff] %vm57, %v159
  %163 = vst.msk [vmem:[%s161 + $0x8] sm:$0xff] %vm57, %v160
  %v164 = vmul.f32 %v146, %v134
  %v165 = vmul.f32 %v146, %v139
  %v166 = vmul.f32 %v130, %v150
  %v167 = vmul.f32 %v130, %v155
  %v168 = vsub.f32 %v164, %v166
  %v169 = vsub.f32 %v165, %v167
  %s170 = scalar_lea.vmem %s4, 1056
  %171 = vst.msk [vmem:[%s170] sm:$0xff] %vm57, %v168
  %172 = vst.msk [vmem:[%s170 + $0x8] sm:$0xff] %vm57, %v169
  %v173 = vld [vmem:[%s0 + $0x3] sm:$0x1]
  %v174 = vld [vmem:[%s1 + $0x3] sm:$0x1]
  %v175 = vld [vmem:[%s2] sm:$0xff]
  %v176 = vld [vmem:[%s2 + $0x8] sm:$0xff]
  %v177 = vld [vmem:[%s3] sm:$0xff]
  %v178 = vld [vmem:[%s3 + $0x8] sm:$0xff]
  %v179 = vlaneseq
  %v180 = vshrl.u32 %v179, 7
  %v181 = vsub.s32 0, %v180
  %v182 = vrot.slane %v173, %v181
  %184 = vset.pattern.permute.xlu0 3
  %185 = vperm.xlu0 %184, %v177
  %v186 = vpop.permute.xlu0 %185
  %189 = vset.pattern.permute.xlu0 3
  %190 = vperm.xlu0 %189, %v178
  %v191 = vpop.permute.xlu0 %190
  %v193 = vmul.f32 %v182, %v186
  %v194 = vmul.f32 %v182, %v191
  %v195 = vlaneseq
  %v196 = vshrl.u32 %v195, 7
  %v197 = vsub.s32 0, %v196
  %v198 = vrot.slane %v174, %v197
  %200 = vset.pattern.permute.xlu0 3
  %201 = vperm.xlu0 %200, %v175
  %v202 = vpop.permute.xlu0 %201
  %205 = vset.pattern.permute.xlu0 3
  %206 = vperm.xlu0 %205, %v176
  %v207 = vpop.permute.xlu0 %206
  %v209 = vmul.f32 %v198, %v202
  %v210 = vmul.f32 %v198, %v207
  %v211 = vadd.f32 %v193, %v209
  %v212 = vadd.f32 %v194, %v210
  %s213 = scalar_lea.vmem %s4, 48
  %214 = vst.msk [vmem:[%s213] sm:$0xff] %vm57, %v211
  %215 = vst.msk [vmem:[%s213 + $0x8] sm:$0xff] %vm57, %v212
  %v216 = vmul.f32 %v198, %v186
  %v217 = vmul.f32 %v198, %v191
  %v218 = vmul.f32 %v182, %v202
  %v219 = vmul.f32 %v182, %v207
  %v220 = vsub.f32 %v216, %v218
  %v221 = vsub.f32 %v217, %v219
  %s222 = scalar_lea.vmem %s4, 1072
  %223 = vst.msk [vmem:[%s222] sm:$0xff] %vm57, %v220
  %224 = vst.msk [vmem:[%s222 + $0x8] sm:$0xff] %vm57, %v221
  %v225 = vld [vmem:[%s0 + $0x4] sm:$0x1]
  %v226 = vld [vmem:[%s1 + $0x4] sm:$0x1]
  %v227 = vld [vmem:[%s2] sm:$0xff]
  %v228 = vld [vmem:[%s2 + $0x8] sm:$0xff]
  %v229 = vld [vmem:[%s3] sm:$0xff]
  %v230 = vld [vmem:[%s3 + $0x8] sm:$0xff]
  %v231 = vlaneseq
  %v232 = vshrl.u32 %v231, 7
  %v233 = vsub.s32 0, %v232
  %v234 = vrot.slane %v225, %v233
  %236 = vset.pattern.permute.xlu0 4
  %237 = vperm.xlu0 %236, %v229
  %v238 = vpop.permute.xlu0 %237
  %241 = vset.pattern.permute.xlu0 4
  %242 = vperm.xlu0 %241, %v230
  %v243 = vpop.permute.xlu0 %242
  %v245 = vmul.f32 %v234, %v238
  %v246 = vmul.f32 %v234, %v243
  %v247 = vlaneseq
  %v248 = vshrl.u32 %v247, 7
  %v249 = vsub.s32 0, %v248
  %v250 = vrot.slane %v226, %v249
  %252 = vset.pattern.permute.xlu0 4
  %253 = vperm.xlu0 %252, %v227
  %v254 = vpop.permute.xlu0 %253
  %257 = vset.pattern.permute.xlu0 4
  %258 = vperm.xlu0 %257, %v228
  %v259 = vpop.permute.xlu0 %258
  %v261 = vmul.f32 %v250, %v254
  %v262 = vmul.f32 %v250, %v259
  %v263 = vadd.f32 %v245, %v261
  %v264 = vadd.f32 %v246, %v262
  %s265 = scalar_lea.vmem %s4, 64
  %266 = vst.msk [vmem:[%s265] sm:$0xff] %vm57, %v263
  %267 = vst.msk [vmem:[%s265 + $0x8] sm:$0xff] %vm57, %v264
  %v268 = vmul.f32 %v250, %v238
  %v269 = vmul.f32 %v250, %v243
  %v270 = vmul.f32 %v234, %v254
  %v271 = vmul.f32 %v234, %v259
  %v272 = vsub.f32 %v268, %v270
  %v273 = vsub.f32 %v269, %v271
  %s274 = scalar_lea.vmem %s4, 1088
  %275 = vst.msk [vmem:[%s274] sm:$0xff] %vm57, %v272
  %276 = vst.msk [vmem:[%s274 + $0x8] sm:$0xff] %vm57, %v273
  %v277 = vld [vmem:[%s0 + $0x5] sm:$0x1]
  %v278 = vld [vmem:[%s1 + $0x5] sm:$0x1]
  %v279 = vld [vmem:[%s2] sm:$0xff]
  %v280 = vld [vmem:[%s2 + $0x8] sm:$0xff]
  %v281 = vld [vmem:[%s3] sm:$0xff]
  %v282 = vld [vmem:[%s3 + $0x8] sm:$0xff]
  %v283 = vlaneseq
  %v284 = vshrl.u32 %v283, 7
  %v285 = vsub.s32 0, %v284
  %v286 = vrot.slane %v277, %v285
  %288 = vset.pattern.permute.xlu0 5
  %289 = vperm.xlu0 %288, %v281
  %v290 = vpop.permute.xlu0 %289
  %293 = vset.pattern.permute.xlu0 5
  %294 = vperm.xlu0 %293, %v282
  %v295 = vpop.permute.xlu0 %294
  %v297 = vmul.f32 %v286, %v290
  %v298 = vmul.f32 %v286, %v295
  %v299 = vlaneseq
  %v300 = vshrl.u32 %v299, 7
  %v301 = vsub.s32 0, %v300
  %v302 = vrot.slane %v278, %v301
  %304 = vset.pattern.permute.xlu0 5
  %305 = vperm.xlu0 %304, %v279
  %v306 = vpop.permute.xlu0 %305
  %309 = vset.pattern.permute.xlu0 5
  %310 = vperm.xlu0 %309, %v280
  %v311 = vpop.permute.xlu0 %310
  %v313 = vmul.f32 %v302, %v306
  %v314 = vmul.f32 %v302, %v311
  %v315 = vadd.f32 %v297, %v313
  %v316 = vadd.f32 %v298, %v314
  %s317 = scalar_lea.vmem %s4, 80
  %318 = vst.msk [vmem:[%s317] sm:$0xff] %vm57, %v315
  %319 = vst.msk [vmem:[%s317 + $0x8] sm:$0xff] %vm57, %v316
  %v320 = vmul.f32 %v302, %v290
  %v321 = vmul.f32 %v302, %v295
  %v322 = vmul.f32 %v286, %v306
  %v323 = vmul.f32 %v286, %v311
  %v324 = vsub.f32 %v320, %v322
  %v325 = vsub.f32 %v321, %v323
  %s326 = scalar_lea.vmem %s4, 1104
  %327 = vst.msk [vmem:[%s326] sm:$0xff] %vm57, %v324
  %328 = vst.msk [vmem:[%s326 + $0x8] sm:$0xff] %vm57, %v325
  %v329 = vld [vmem:[%s0 + $0x6] sm:$0x1]
  %v330 = vld [vmem:[%s1 + $0x6] sm:$0x1]
  %v331 = vld [vmem:[%s2] sm:$0xff]
  %v332 = vld [vmem:[%s2 + $0x8] sm:$0xff]
  %v333 = vld [vmem:[%s3] sm:$0xff]
  %v334 = vld [vmem:[%s3 + $0x8] sm:$0xff]
  %v335 = vlaneseq
  %v336 = vshrl.u32 %v335, 7
  %v337 = vsub.s32 0, %v336
  %v338 = vrot.slane %v329, %v337
  %340 = vset.pattern.permute.xlu0 6
  %341 = vperm.xlu0 %340, %v333
  %v342 = vpop.permute.xlu0 %341
  %345 = vset.pattern.permute.xlu0 6
  %346 = vperm.xlu0 %345, %v334
  %v347 = vpop.permute.xlu0 %346
  %v349 = vmul.f32 %v338, %v342
  %v350 = vmul.f32 %v338, %v347
  %v351 = vlaneseq
  %v352 = vshrl.u32 %v351, 7
  %v353 = vsub.s32 0, %v352
  %v354 = vrot.slane %v330, %v353
  %356 = vset.pattern.permute.xlu0 6
  %357 = vperm.xlu0 %356, %v331
  %v358 = vpop.permute.xlu0 %357
  %361 = vset.pattern.permute.xlu0 6
  %362 = vperm.xlu0 %361, %v332
  %v363 = vpop.permute.xlu0 %362
  %v365 = vmul.f32 %v354, %v358
  %v366 = vmul.f32 %v354, %v363
  %v367 = vadd.f32 %v349, %v365
  %v368 = vadd.f32 %v350, %v366
  %s369 = scalar_lea.vmem %s4, 96
  %370 = vst.msk [vmem:[%s369] sm:$0xff] %vm57, %v367
  %371 = vst.msk [vmem:[%s369 + $0x8] sm:$0xff] %vm57, %v368
  %v372 = vmul.f32 %v354, %v342
  %v373 = vmul.f32 %v354, %v347
  %v374 = vmul.f32 %v338, %v358
  %v375 = vmul.f32 %v338, %v363
  %v376 = vsub.f32 %v372, %v374
  %v377 = vsub.f32 %v373, %v375
  %s378 = scalar_lea.vmem %s4, 1120
  %379 = vst.msk [vmem:[%s378] sm:$0xff] %vm57, %v376
  %380 = vst.msk [vmem:[%s378 + $0x8] sm:$0xff] %vm57, %v377
  %v381 = vld [vmem:[%s0 + $0x7] sm:$0x1]
  %v382 = vld [vmem:[%s1 + $0x7] sm:$0x1]
  %v383 = vld [vmem:[%s2] sm:$0xff]
  %v384 = vld [vmem:[%s2 + $0x8] sm:$0xff]
  %v385 = vld [vmem:[%s3] sm:$0xff]
  %v386 = vld [vmem:[%s3 + $0x8] sm:$0xff]
  %v387 = vlaneseq
  %v388 = vshrl.u32 %v387, 7
  %v389 = vsub.s32 0, %v388
  %v390 = vrot.slane %v381, %v389
  %392 = vset.pattern.permute.xlu0 7
  %393 = vperm.xlu0 %392, %v385
  %v394 = vpop.permute.xlu0 %393
  %397 = vset.pattern.permute.xlu0 7
  %398 = vperm.xlu0 %397, %v386
  %v399 = vpop.permute.xlu0 %398
  %v401 = vmul.f32 %v390, %v394
  %v402 = vmul.f32 %v390, %v399
  %v403 = vlaneseq
  %v404 = vshrl.u32 %v403, 7
  %v405 = vsub.s32 0, %v404
  %v406 = vrot.slane %v382, %v405
  %408 = vset.pattern.permute.xlu0 7
  %409 = vperm.xlu0 %408, %v383
  %v410 = vpop.permute.xlu0 %409
  %413 = vset.pattern.permute.xlu0 7
  %414 = vperm.xlu0 %413, %v384
  %v415 = vpop.permute.xlu0 %414
  %v417 = vmul.f32 %v406, %v410
  %v418 = vmul.f32 %v406, %v415
  %v419 = vadd.f32 %v401, %v417
  %v420 = vadd.f32 %v402, %v418
  %s421 = scalar_lea.vmem %s4, 112
  %422 = vst.msk [vmem:[%s421] sm:$0xff] %vm57, %v419
  %423 = vst.msk [vmem:[%s421 + $0x8] sm:$0xff] %vm57, %v420
  %v424 = vmul.f32 %v406, %v394
  %v425 = vmul.f32 %v406, %v399
  %v426 = vmul.f32 %v390, %v410
  %v427 = vmul.f32 %v390, %v415
  %v428 = vsub.f32 %v424, %v426
  %v429 = vsub.f32 %v425, %v427
  %s430 = scalar_lea.vmem %s4, 1136
  %431 = vst.msk [vmem:[%s430] sm:$0xff] %vm57, %v428
  %432 = vst.msk [vmem:[%s430 + $0x8] sm:$0xff] %vm57, %v429
  %v433 = vld [vmem:[%s0 + $0x8] sm:$0x1]
  %v434 = vld [vmem:[%s1 + $0x8] sm:$0x1]
  %v435 = vld [vmem:[%s2] sm:$0xff]
  %v436 = vld [vmem:[%s2 + $0x8] sm:$0xff]
  %v437 = vld [vmem:[%s3] sm:$0xff]
  %v438 = vld [vmem:[%s3 + $0x8] sm:$0xff]
  %v439 = vlaneseq
  %v440 = vshrl.u32 %v439, 7
  %v441 = vsub.s32 0, %v440
  %v442 = vrot.slane %v433, %v441
  %444 = vset.pattern.permute.xlu0 8
  %445 = vperm.xlu0 %444, %v437
  %v446 = vpop.permute.xlu0 %445
  %449 = vset.pattern.permute.xlu0 8
  %450 = vperm.xlu0 %449, %v438
  %v451 = vpop.permute.xlu0 %450
  %v453 = vmul.f32 %v442, %v446
  %v454 = vmul.f32 %v442, %v451
  %v455 = vlaneseq
  %v456 = vshrl.u32 %v455, 7
  %v457 = vsub.s32 0, %v456
  %v458 = vrot.slane %v434, %v457
  %460 = vset.pattern.permute.xlu0 8
  %461 = vperm.xlu0 %460, %v435
  %v462 = vpop.permute.xlu0 %461
  %465 = vset.pattern.permute.xlu0 8
  %466 = vperm.xlu0 %465, %v436
  %v467 = vpop.permute.xlu0 %466
  %v469 = vmul.f32 %v458, %v462
  %v470 = vmul.f32 %v458, %v467
  %v471 = vadd.f32 %v453, %v469
  %v472 = vadd.f32 %v454, %v470
  %s473 = scalar_lea.vmem %s4, 128
  %474 = vst.msk [vmem:[%s473] sm:$0xff] %vm57, %v471
  %475 = vst.msk [vmem:[%s473 + $0x8] sm:$0xff] %vm57, %v472
  %v476 = vmul.f32 %v458, %v446
  %v477 = vmul.f32 %v458, %v451
  %v478 = vmul.f32 %v442, %v462
  %v479 = vmul.f32 %v442, %v467
  %v480 = vsub.f32 %v476, %v478
  %v481 = vsub.f32 %v477, %v479
  %s482 = scalar_lea.vmem %s4, 1152
  %483 = vst.msk [vmem:[%s482] sm:$0xff] %vm57, %v480
  %484 = vst.msk [vmem:[%s482 + $0x8] sm:$0xff] %vm57, %v481
  %v485 = vld [vmem:[%s0 + $0x9] sm:$0x1]
  %v486 = vld [vmem:[%s1 + $0x9] sm:$0x1]
  %v487 = vld [vmem:[%s2] sm:$0xff]
  %v488 = vld [vmem:[%s2 + $0x8] sm:$0xff]
  %v489 = vld [vmem:[%s3] sm:$0xff]
  %v490 = vld [vmem:[%s3 + $0x8] sm:$0xff]
  %v491 = vlaneseq
  %v492 = vshrl.u32 %v491, 7
  %v493 = vsub.s32 0, %v492
  %v494 = vrot.slane %v485, %v493
  %496 = vset.pattern.permute.xlu0 9
  %497 = vperm.xlu0 %496, %v489
  %v498 = vpop.permute.xlu0 %497
  %501 = vset.pattern.permute.xlu0 9
  %502 = vperm.xlu0 %501, %v490
  %v503 = vpop.permute.xlu0 %502
  %v505 = vmul.f32 %v494, %v498
  %v506 = vmul.f32 %v494, %v503
  %v507 = vlaneseq
  %v508 = vshrl.u32 %v507, 7
  %v509 = vsub.s32 0, %v508
  %v510 = vrot.slane %v486, %v509
  %512 = vset.pattern.permute.xlu0 9
  %513 = vperm.xlu0 %512, %v487
  %v514 = vpop.permute.xlu0 %513
  %517 = vset.pattern.permute.xlu0 9
  %518 = vperm.xlu0 %517, %v488
  %v519 = vpop.permute.xlu0 %518
  %v521 = vmul.f32 %v510, %v514
  %v522 = vmul.f32 %v510, %v519
  %v523 = vadd.f32 %v505, %v521
  %v524 = vadd.f32 %v506, %v522
  %s525 = scalar_lea.vmem %s4, 144
  %526 = vst.msk [vmem:[%s525] sm:$0xff] %vm57, %v523
  %527 = vst.msk [vmem:[%s525 + $0x8] sm:$0xff] %vm57, %v524
  %v528 = vmul.f32 %v510, %v498
  %v529 = vmul.f32 %v510, %v503
  %v530 = vmul.f32 %v494, %v514
  %v531 = vmul.f32 %v494, %v519
  %v532 = vsub.f32 %v528, %v530
  %v533 = vsub.f32 %v529, %v531
  %s534 = scalar_lea.vmem %s4, 1168
  %535 = vst.msk [vmem:[%s534] sm:$0xff] %vm57, %v532
  %536 = vst.msk [vmem:[%s534 + $0x8] sm:$0xff] %vm57, %v533
  %v537 = vld [vmem:[%s0 + $0xa] sm:$0x1]
  %v538 = vld [vmem:[%s1 + $0xa] sm:$0x1]
  %v539 = vld [vmem:[%s2] sm:$0xff]
  %v540 = vld [vmem:[%s2 + $0x8] sm:$0xff]
  %v541 = vld [vmem:[%s3] sm:$0xff]
  %v542 = vld [vmem:[%s3 + $0x8] sm:$0xff]
  %v543 = vlaneseq
  %v544 = vshrl.u32 %v543, 7
  %v545 = vsub.s32 0, %v544
  %v546 = vrot.slane %v537, %v545
  %548 = vset.pattern.permute.xlu0 10
  %549 = vperm.xlu0 %548, %v541
  %v550 = vpop.permute.xlu0 %549
  %553 = vset.pattern.permute.xlu0 10
  %554 = vperm.xlu0 %553, %v542
  %v555 = vpop.permute.xlu0 %554
  %v557 = vmul.f32 %v546, %v550
  %v558 = vmul.f32 %v546, %v555
  %v559 = vlaneseq
  %v560 = vshrl.u32 %v559, 7
  %v561 = vsub.s32 0, %v560
  %v562 = vrot.slane %v538, %v561
  %564 = vset.pattern.permute.xlu0 10
  %565 = vperm.xlu0 %564, %v539
  %v566 = vpop.permute.xlu0 %565
  %569 = vset.pattern.permute.xlu0 10
  %570 = vperm.xlu0 %569, %v540
  %v571 = vpop.permute.xlu0 %570
  %v573 = vmul.f32 %v562, %v566
  %v574 = vmul.f32 %v562, %v571
  %v575 = vadd.f32 %v557, %v573
  %v576 = vadd.f32 %v558, %v574
  %s577 = scalar_lea.vmem %s4, 160
  %578 = vst.msk [vmem:[%s577] sm:$0xff] %vm57, %v575
  %579 = vst.msk [vmem:[%s577 + $0x8] sm:$0xff] %vm57, %v576
  %v580 = vmul.f32 %v562, %v550
  %v581 = vmul.f32 %v562, %v555
  %v582 = vmul.f32 %v546, %v566
  %v583 = vmul.f32 %v546, %v571
  %v584 = vsub.f32 %v580, %v582
  %v585 = vsub.f32 %v581, %v583
  %s586 = scalar_lea.vmem %s4, 1184
  %587 = vst.msk [vmem:[%s586] sm:$0xff] %vm57, %v584
  %588 = vst.msk [vmem:[%s586 + $0x8] sm:$0xff] %vm57, %v585
  %v589 = vld [vmem:[%s0 + $0xb] sm:$0x1]
  %v590 = vld [vmem:[%s1 + $0xb] sm:$0x1]
  %v591 = vld [vmem:[%s2] sm:$0xff]
  %v592 = vld [vmem:[%s2 + $0x8] sm:$0xff]
  %v593 = vld [vmem:[%s3] sm:$0xff]
  %v594 = vld [vmem:[%s3 + $0x8] sm:$0xff]
  %v595 = vlaneseq
  %v596 = vshrl.u32 %v595, 7
  %v597 = vsub.s32 0, %v596
  %v598 = vrot.slane %v589, %v597
  %600 = vset.pattern.permute.xlu0 11
  %601 = vperm.xlu0 %600, %v593
  %v602 = vpop.permute.xlu0 %601
  %605 = vset.pattern.permute.xlu0 11
  %606 = vperm.xlu0 %605, %v594
  %v607 = vpop.permute.xlu0 %606
  %v609 = vmul.f32 %v598, %v602
  %v610 = vmul.f32 %v598, %v607
  %v611 = vlaneseq
  %v612 = vshrl.u32 %v611, 7
  %v613 = vsub.s32 0, %v612
  %v614 = vrot.slane %v590, %v613
  %616 = vset.pattern.permute.xlu0 11
  %617 = vperm.xlu0 %616, %v591
  %v618 = vpop.permute.xlu0 %617
  %621 = vset.pattern.permute.xlu0 11
  %622 = vperm.xlu0 %621, %v592
  %v623 = vpop.permute.xlu0 %622
  %v625 = vmul.f32 %v614, %v618
  %v626 = vmul.f32 %v614, %v623
  %v627 = vadd.f32 %v609, %v625
  %v628 = vadd.f32 %v610, %v626
  %s629 = scalar_lea.vmem %s4, 176
  %630 = vst.msk [vmem:[%s629] sm:$0xff] %vm57, %v627
  %631 = vst.msk [vmem:[%s629 + $0x8] sm:$0xff] %vm57, %v628
  %v632 = vmul.f32 %v614, %v602
  %v633 = vmul.f32 %v614, %v607
  %v634 = vmul.f32 %v598, %v618
  %v635 = vmul.f32 %v598, %v623
  %v636 = vsub.f32 %v632, %v634
  %v637 = vsub.f32 %v633, %v635
  %s638 = scalar_lea.vmem %s4, 1200
  %639 = vst.msk [vmem:[%s638] sm:$0xff] %vm57, %v636
  %640 = vst.msk [vmem:[%s638 + $0x8] sm:$0xff] %vm57, %v637
  %v641 = vld [vmem:[%s0 + $0xc] sm:$0x1]
  %v642 = vld [vmem:[%s1 + $0xc] sm:$0x1]
  %v643 = vld [vmem:[%s2] sm:$0xff]
  %v644 = vld [vmem:[%s2 + $0x8] sm:$0xff]
  %v645 = vld [vmem:[%s3] sm:$0xff]
  %v646 = vld [vmem:[%s3 + $0x8] sm:$0xff]
  %v647 = vlaneseq
  %v648 = vshrl.u32 %v647, 7
  %v649 = vsub.s32 0, %v648
  %v650 = vrot.slane %v641, %v649
  %652 = vset.pattern.permute.xlu0 12
  %653 = vperm.xlu0 %652, %v645
  %v654 = vpop.permute.xlu0 %653
  %657 = vset.pattern.permute.xlu0 12
  %658 = vperm.xlu0 %657, %v646
  %v659 = vpop.permute.xlu0 %658
  %v661 = vmul.f32 %v650, %v654
  %v662 = vmul.f32 %v650, %v659
  %v663 = vlaneseq
  %v664 = vshrl.u32 %v663, 7
  %v665 = vsub.s32 0, %v664
  %v666 = vrot.slane %v642, %v665
  %668 = vset.pattern.permute.xlu0 12
  %669 = vperm.xlu0 %668, %v643
  %v670 = vpop.permute.xlu0 %669
  %673 = vset.pattern.permute.xlu0 12
  %674 = vperm.xlu0 %673, %v644
  %v675 = vpop.permute.xlu0 %674
  %v677 = vmul.f32 %v666, %v670
  %v678 = vmul.f32 %v666, %v675
  %v679 = vadd.f32 %v661, %v677
  %v680 = vadd.f32 %v662, %v678
  %s681 = scalar_lea.vmem %s4, 192
  %682 = vst.msk [vmem:[%s681] sm:$0xff] %vm57, %v679
  %683 = vst.msk [vmem:[%s681 + $0x8] sm:$0xff] %vm57, %v680
  %v684 = vmul.f32 %v666, %v654
  %v685 = vmul.f32 %v666, %v659
  %v686 = vmul.f32 %v650, %v670
  %v687 = vmul.f32 %v650, %v675
  %v688 = vsub.f32 %v684, %v686
  %v689 = vsub.f32 %v685, %v687
  %s690 = scalar_lea.vmem %s4, 1216
  %691 = vst.msk [vmem:[%s690] sm:$0xff] %vm57, %v688
  %692 = vst.msk [vmem:[%s690 + $0x8] sm:$0xff] %vm57, %v689
  %v693 = vld [vmem:[%s0 + $0xd] sm:$0x1]
  %v694 = vld [vmem:[%s1 + $0xd] sm:$0x1]
  %v695 = vld [vmem:[%s2] sm:$0xff]
  %v696 = vld [vmem:[%s2 + $0x8] sm:$0xff]
  %v697 = vld [vmem:[%s3] sm:$0xff]
  %v698 = vld [vmem:[%s3 + $0x8] sm:$0xff]
  %v699 = vlaneseq
  %v700 = vshrl.u32 %v699, 7
  %v701 = vsub.s32 0, %v700
  %v702 = vrot.slane %v693, %v701
  %704 = vset.pattern.permute.xlu0 13
  %705 = vperm.xlu0 %704, %v697
  %v706 = vpop.permute.xlu0 %705
  %709 = vset.pattern.permute.xlu0 13
  %710 = vperm.xlu0 %709, %v698
  %v711 = vpop.permute.xlu0 %710
  %v713 = vmul.f32 %v702, %v706
  %v714 = vmul.f32 %v702, %v711
  %v715 = vlaneseq
  %v716 = vshrl.u32 %v715, 7
  %v717 = vsub.s32 0, %v716
  %v718 = vrot.slane %v694, %v717
  %720 = vset.pattern.permute.xlu0 13
  %721 = vperm.xlu0 %720, %v695
  %v722 = vpop.permute.xlu0 %721
  %725 = vset.pattern.permute.xlu0 13
  %726 = vperm.xlu0 %725, %v696
  %v727 = vpop.permute.xlu0 %726
  %v729 = vmul.f32 %v718, %v722
  %v730 = vmul.f32 %v718, %v727
  %v731 = vadd.f32 %v713, %v729
  %v732 = vadd.f32 %v714, %v730
  %s733 = scalar_lea.vmem %s4, 208
  %734 = vst.msk [vmem:[%s733] sm:$0xff] %vm57, %v731
  %735 = vst.msk [vmem:[%s733 + $0x8] sm:$0xff] %vm57, %v732
  %v736 = vmul.f32 %v718, %v706
  %v737 = vmul.f32 %v718, %v711
  %v738 = vmul.f32 %v702, %v722
  %v739 = vmul.f32 %v702, %v727
  %v740 = vsub.f32 %v736, %v738
  %v741 = vsub.f32 %v737, %v739
  %s742 = scalar_lea.vmem %s4, 1232
  %743 = vst.msk [vmem:[%s742] sm:$0xff] %vm57, %v740
  %744 = vst.msk [vmem:[%s742 + $0x8] sm:$0xff] %vm57, %v741
  %v745 = vld [vmem:[%s0 + $0xe] sm:$0x1]
  %v746 = vld [vmem:[%s1 + $0xe] sm:$0x1]
  %v747 = vld [vmem:[%s2] sm:$0xff]
  %v748 = vld [vmem:[%s2 + $0x8] sm:$0xff]
  %v749 = vld [vmem:[%s3] sm:$0xff]
  %v750 = vld [vmem:[%s3 + $0x8] sm:$0xff]
  %v751 = vlaneseq
  %v752 = vshrl.u32 %v751, 7
  %v753 = vsub.s32 0, %v752
  %v754 = vrot.slane %v745, %v753
  %756 = vset.pattern.permute.xlu0 14
  %757 = vperm.xlu0 %756, %v749
  %v758 = vpop.permute.xlu0 %757
  %761 = vset.pattern.permute.xlu0 14
  %762 = vperm.xlu0 %761, %v750
  %v763 = vpop.permute.xlu0 %762
  %v765 = vmul.f32 %v754, %v758
  %v766 = vmul.f32 %v754, %v763
  %v767 = vlaneseq
  %v768 = vshrl.u32 %v767, 7
  %v769 = vsub.s32 0, %v768
  %v770 = vrot.slane %v746, %v769
  %772 = vset.pattern.permute.xlu0 14
  %773 = vperm.xlu0 %772, %v747
  %v774 = vpop.permute.xlu0 %773
  %777 = vset.pattern.permute.xlu0 14
  %778 = vperm.xlu0 %777, %v748
  %v779 = vpop.permute.xlu0 %778
  %v781 = vmul.f32 %v770, %v774
  %v782 = vmul.f32 %v770, %v779
  %v783 = vadd.f32 %v765, %v781
  %v784 = vadd.f32 %v766, %v782
  %s785 = scalar_lea.vmem %s4, 224
  %786 = vst.msk [vmem:[%s785] sm:$0xff] %vm57, %v783
  %787 = vst.msk [vmem:[%s785 + $0x8] sm:$0xff] %vm57, %v784
  %v788 = vmul.f32 %v770, %v758
  %v789 = vmul.f32 %v770, %v763
  %v790 = vmul.f32 %v754, %v774
  %v791 = vmul.f32 %v754, %v779
  %v792 = vsub.f32 %v788, %v790
  %v793 = vsub.f32 %v789, %v791
  %s794 = scalar_lea.vmem %s4, 1248
  %795 = vst.msk [vmem:[%s794] sm:$0xff] %vm57, %v792
  %796 = vst.msk [vmem:[%s794 + $0x8] sm:$0xff] %vm57, %v793
  %v797 = vld [vmem:[%s0 + $0xf] sm:$0x1]
  %v798 = vld [vmem:[%s1 + $0xf] sm:$0x1]
  %v799 = vld [vmem:[%s2] sm:$0xff]
  %v800 = vld [vmem:[%s2 + $0x8] sm:$0xff]
  %v801 = vld [vmem:[%s3] sm:$0xff]
  %v802 = vld [vmem:[%s3 + $0x8] sm:$0xff]
  %v803 = vlaneseq
  %v804 = vshrl.u32 %v803, 7
  %v805 = vsub.s32 0, %v804
  %v806 = vrot.slane %v797, %v805
  %808 = vset.pattern.permute.xlu0 15
  %809 = vperm.xlu0 %808, %v801
  %v810 = vpop.permute.xlu0 %809
  %813 = vset.pattern.permute.xlu0 15
  %814 = vperm.xlu0 %813, %v802
  %v815 = vpop.permute.xlu0 %814
  %v817 = vmul.f32 %v806, %v810
  %v818 = vmul.f32 %v806, %v815
  %v819 = vlaneseq
  %v820 = vshrl.u32 %v819, 7
  %v821 = vsub.s32 0, %v820
  %v822 = vrot.slane %v798, %v821
  %824 = vset.pattern.permute.xlu0 15
  %825 = vperm.xlu0 %824, %v799
  %v826 = vpop.permute.xlu0 %825
  %829 = vset.pattern.permute.xlu0 15
  %830 = vperm.xlu0 %829, %v800
  %v831 = vpop.permute.xlu0 %830
  %v833 = vmul.f32 %v822, %v826
  %v834 = vmul.f32 %v822, %v831
  %v835 = vadd.f32 %v817, %v833
  %v836 = vadd.f32 %v818, %v834
  %s837 = scalar_lea.vmem %s4, 240
  %838 = vst.msk [vmem:[%s837] sm:$0xff] %vm57, %v835
  %839 = vst.msk [vmem:[%s837 + $0x8] sm:$0xff] %vm57, %v836
  %v840 = vmul.f32 %v822, %v810
  %v841 = vmul.f32 %v822, %v815
  %v842 = vmul.f32 %v806, %v826
  %v843 = vmul.f32 %v806, %v831
  %v844 = vsub.f32 %v840, %v842
  %v845 = vsub.f32 %v841, %v843
  %s846 = scalar_lea.vmem %s4, 1264
  %847 = vst.msk [vmem:[%s846] sm:$0xff] %vm57, %v844
  %848 = vst.msk [vmem:[%s846 + $0x8] sm:$0xff] %vm57, %v845
  %v849 = vld [vmem:[%s0 + $0x10] sm:$0x1]
  %v850 = vld [vmem:[%s1 + $0x10] sm:$0x1]
  %v851 = vld [vmem:[%s2] sm:$0xff]
  %v852 = vld [vmem:[%s2 + $0x8] sm:$0xff]
  %v853 = vld [vmem:[%s3] sm:$0xff]
  %v854 = vld [vmem:[%s3 + $0x8] sm:$0xff]
  %v855 = vlaneseq
  %v856 = vshrl.u32 %v855, 7
  %v857 = vsub.s32 0, %v856
  %v858 = vrot.slane %v849, %v857
  %860 = vset.pattern.permute.xlu0 16
  %861 = vperm.xlu0 %860, %v853
  %v862 = vpop.permute.xlu0 %861
  %865 = vset.pattern.permute.xlu0 16
  %866 = vperm.xlu0 %865, %v854
  %v867 = vpop.permute.xlu0 %866
  %v869 = vmul.f32 %v858, %v862
  %v870 = vmul.f32 %v858, %v867
  %v871 = vlaneseq
  %v872 = vshrl.u32 %v871, 7
  %v873 = vsub.s32 0, %v872
  %v874 = vrot.slane %v850, %v873
  %876 = vset.pattern.permute.xlu0 16
  %877 = vperm.xlu0 %876, %v851
  %v878 = vpop.permute.xlu0 %877
  %881 = vset.pattern.permute.xlu0 16
  %882 = vperm.xlu0 %881, %v852
  %v883 = vpop.permute.xlu0 %882
  %v885 = vmul.f32 %v874, %v878
  %v886 = vmul.f32 %v874, %v883
  %v887 = vadd.f32 %v869, %v885
  %v888 = vadd.f32 %v870, %v886
  %s889 = scalar_lea.vmem %s4, 256
  %890 = vst.msk [vmem:[%s889] sm:$0xff] %vm57, %v887
  %891 = vst.msk [vmem:[%s889 + $0x8] sm:$0xff] %vm57, %v888
  %v892 = vmul.f32 %v874, %v862
  %v893 = vmul.f32 %v874, %v867
  %v894 = vmul.f32 %v858, %v878
  %v895 = vmul.f32 %v858, %v883
  %v896 = vsub.f32 %v892, %v894
  %v897 = vsub.f32 %v893, %v895
  %s898 = scalar_lea.vmem %s4, 1280
  %899 = vst.msk [vmem:[%s898] sm:$0xff] %vm57, %v896
  %900 = vst.msk [vmem:[%s898 + $0x8] sm:$0xff] %vm57, %v897
  %v901 = vld [vmem:[%s0 + $0x11] sm:$0x1]
  %v902 = vld [vmem:[%s1 + $0x11] sm:$0x1]
  %v903 = vld [vmem:[%s2] sm:$0xff]
  %v904 = vld [vmem:[%s2 + $0x8] sm:$0xff]
  %v905 = vld [vmem:[%s3] sm:$0xff]
  %v906 = vld [vmem:[%s3 + $0x8] sm:$0xff]
  %v907 = vlaneseq
  %v908 = vshrl.u32 %v907, 7
  %v909 = vsub.s32 0, %v908
  %v910 = vrot.slane %v901, %v909
  %912 = vset.pattern.permute.xlu0 17
  %913 = vperm.xlu0 %912, %v905
  %v914 = vpop.permute.xlu0 %913
  %917 = vset.pattern.permute.xlu0 17
  %918 = vperm.xlu0 %917, %v906
  %v919 = vpop.permute.xlu0 %918
  %v921 = vmul.f32 %v910, %v914
  %v922 = vmul.f32 %v910, %v919
  %v923 = vlaneseq
  %v924 = vshrl.u32 %v923, 7
  %v925 = vsub.s32 0, %v924
  %v926 = vrot.slane %v902, %v925
  %928 = vset.pattern.permute.xlu0 17
  %929 = vperm.xlu0 %928, %v903
  %v930 = vpop.permute.xlu0 %929
  %933 = vset.pattern.permute.xlu0 17
  %934 = vperm.xlu0 %933, %v904
  %v935 = vpop.permute.xlu0 %934
  %v937 = vmul.f32 %v926, %v930
  %v938 = vmul.f32 %v926, %v935
  %v939 = vadd.f32 %v921, %v937
  %v940 = vadd.f32 %v922, %v938
  %s941 = scalar_lea.vmem %s4, 272
  %942 = vst.msk [vmem:[%s941] sm:$0xff] %vm57, %v939
  %943 = vst.msk [vmem:[%s941 + $0x8] sm:$0xff] %vm57, %v940
  %v944 = vmul.f32 %v926, %v914
  %v945 = vmul.f32 %v926, %v919
  %v946 = vmul.f32 %v910, %v930
  %v947 = vmul.f32 %v910, %v935
  %v948 = vsub.f32 %v944, %v946
  %v949 = vsub.f32 %v945, %v947
  %s950 = scalar_lea.vmem %s4, 1296
  %951 = vst.msk [vmem:[%s950] sm:$0xff] %vm57, %v948
  %952 = vst.msk [vmem:[%s950 + $0x8] sm:$0xff] %vm57, %v949
  %v953 = vld [vmem:[%s0 + $0x12] sm:$0x1]
  %v954 = vld [vmem:[%s1 + $0x12] sm:$0x1]
  %v955 = vld [vmem:[%s2] sm:$0xff]
  %v956 = vld [vmem:[%s2 + $0x8] sm:$0xff]
  %v957 = vld [vmem:[%s3] sm:$0xff]
  %v958 = vld [vmem:[%s3 + $0x8] sm:$0xff]
  %v959 = vlaneseq
  %v960 = vshrl.u32 %v959, 7
  %v961 = vsub.s32 0, %v960
  %v962 = vrot.slane %v953, %v961
  %964 = vset.pattern.permute.xlu0 18
  %965 = vperm.xlu0 %964, %v957
  %v966 = vpop.permute.xlu0 %965
  %969 = vset.pattern.permute.xlu0 18
  %970 = vperm.xlu0 %969, %v958
  %v971 = vpop.permute.xlu0 %970
  %v973 = vmul.f32 %v962, %v966
  %v974 = vmul.f32 %v962, %v971
  %v975 = vlaneseq
  %v976 = vshrl.u32 %v975, 7
  %v977 = vsub.s32 0, %v976
  %v978 = vrot.slane %v954, %v977
  %980 = vset.pattern.permute.xlu0 18
  %981 = vperm.xlu0 %980, %v955
  %v982 = vpop.permute.xlu0 %981
  %985 = vset.pattern.permute.xlu0 18
  %986 = vperm.xlu0 %985, %v956
  %v987 = vpop.permute.xlu0 %986
  %v989 = vmul.f32 %v978, %v982
  %v990 = vmul.f32 %v978, %v987
  %v991 = vadd.f32 %v973, %v989
  %v992 = vadd.f32 %v974, %v990
  %s993 = scalar_lea.vmem %s4, 288
  %994 = vst.msk [vmem:[%s993] sm:$0xff] %vm57, %v991
  %995 = vst.msk [vmem:[%s993 + $0x8] sm:$0xff] %vm57, %v992
  %v996 = vmul.f32 %v978, %v966
  %v997 = vmul.f32 %v978, %v971
  %v998 = vmul.f32 %v962, %v982
  %v999 = vmul.f32 %v962, %v987
  %v1000 = vsub.f32 %v996, %v998
  %v1001 = vsub.f32 %v997, %v999
  %s1002 = scalar_lea.vmem %s4, 1312
  %1003 = vst.msk [vmem:[%s1002] sm:$0xff] %vm57, %v1000
  %1004 = vst.msk [vmem:[%s1002 + $0x8] sm:$0xff] %vm57, %v1001
  %v1005 = vld [vmem:[%s0 + $0x13] sm:$0x1]
  %v1006 = vld [vmem:[%s1 + $0x13] sm:$0x1]
  %v1007 = vld [vmem:[%s2] sm:$0xff]
  %v1008 = vld [vmem:[%s2 + $0x8] sm:$0xff]
  %v1009 = vld [vmem:[%s3] sm:$0xff]
  %v1010 = vld [vmem:[%s3 + $0x8] sm:$0xff]
  %v1011 = vlaneseq
  %v1012 = vshrl.u32 %v1011, 7
  %v1013 = vsub.s32 0, %v1012
  %v1014 = vrot.slane %v1005, %v1013
  %1016 = vset.pattern.permute.xlu0 19
  %1017 = vperm.xlu0 %1016, %v1009
  %v1018 = vpop.permute.xlu0 %1017
  %1021 = vset.pattern.permute.xlu0 19
  %1022 = vperm.xlu0 %1021, %v1010
  %v1023 = vpop.permute.xlu0 %1022
  %v1025 = vmul.f32 %v1014, %v1018
  %v1026 = vmul.f32 %v1014, %v1023
  %v1027 = vlaneseq
  %v1028 = vshrl.u32 %v1027, 7
  %v1029 = vsub.s32 0, %v1028
  %v1030 = vrot.slane %v1006, %v1029
  %1032 = vset.pattern.permute.xlu0 19
  %1033 = vperm.xlu0 %1032, %v1007
  %v1034 = vpop.permute.xlu0 %1033
  %1037 = vset.pattern.permute.xlu0 19
  %1038 = vperm.xlu0 %1037, %v1008
  %v1039 = vpop.permute.xlu0 %1038
  %v1041 = vmul.f32 %v1030, %v1034
  %v1042 = vmul.f32 %v1030, %v1039
  %v1043 = vadd.f32 %v1025, %v1041
  %v1044 = vadd.f32 %v1026, %v1042
  %s1045 = scalar_lea.vmem %s4, 304
  %1046 = vst.msk [vmem:[%s1045] sm:$0xff] %vm57, %v1043
  %1047 = vst.msk [vmem:[%s1045 + $0x8] sm:$0xff] %vm57, %v1044
  %v1048 = vmul.f32 %v1030, %v1018
  %v1049 = vmul.f32 %v1030, %v1023
  %v1050 = vmul.f32 %v1014, %v1034
  %v1051 = vmul.f32 %v1014, %v1039
  %v1052 = vsub.f32 %v1048, %v1050
  %v1053 = vsub.f32 %v1049, %v1051
  %s1054 = scalar_lea.vmem %s4, 1328
  %1055 = vst.msk [vmem:[%s1054] sm:$0xff] %vm57, %v1052
  %1056 = vst.msk [vmem:[%s1054 + $0x8] sm:$0xff] %vm57, %v1053
  %v1057 = vld [vmem:[%s0 + $0x14] sm:$0x1]
  %v1058 = vld [vmem:[%s1 + $0x14] sm:$0x1]
  %v1059 = vld [vmem:[%s2] sm:$0xff]
  %v1060 = vld [vmem:[%s2 + $0x8] sm:$0xff]
  %v1061 = vld [vmem:[%s3] sm:$0xff]
  %v1062 = vld [vmem:[%s3 + $0x8] sm:$0xff]
  %v1063 = vlaneseq
  %v1064 = vshrl.u32 %v1063, 7
  %v1065 = vsub.s32 0, %v1064
  %v1066 = vrot.slane %v1057, %v1065
  %1068 = vset.pattern.permute.xlu0 20
  %1069 = vperm.xlu0 %1068, %v1061
  %v1070 = vpop.permute.xlu0 %1069
  %1073 = vset.pattern.permute.xlu0 20
  %1074 = vperm.xlu0 %1073, %v1062
  %v1075 = vpop.permute.xlu0 %1074
  %v1077 = vmul.f32 %v1066, %v1070
  %v1078 = vmul.f32 %v1066, %v1075
  %v1079 = vlaneseq
  %v1080 = vshrl.u32 %v1079, 7
  %v1081 = vsub.s32 0, %v1080
  %v1082 = vrot.slane %v1058, %v1081
  %1084 = vset.pattern.permute.xlu0 20
  %1085 = vperm.xlu0 %1084, %v1059
  %v1086 = vpop.permute.xlu0 %1085
  %1089 = vset.pattern.permute.xlu0 20
  %1090 = vperm.xlu0 %1089, %v1060
  %v1091 = vpop.permute.xlu0 %1090
  %v1093 = vmul.f32 %v1082, %v1086
  %v1094 = vmul.f32 %v1082, %v1091
  %v1095 = vadd.f32 %v1077, %v1093
  %v1096 = vadd.f32 %v1078, %v1094
  %s1097 = scalar_lea.vmem %s4, 320
  %1098 = vst.msk [vmem:[%s1097] sm:$0xff] %vm57, %v1095
  %1099 = vst.msk [vmem:[%s1097 + $0x8] sm:$0xff] %vm57, %v1096
  %v1100 = vmul.f32 %v1082, %v1070
  %v1101 = vmul.f32 %v1082, %v1075
  %v1102 = vmul.f32 %v1066, %v1086
  %v1103 = vmul.f32 %v1066, %v1091
  %v1104 = vsub.f32 %v1100, %v1102
  %v1105 = vsub.f32 %v1101, %v1103
  %s1106 = scalar_lea.vmem %s4, 1344
  %1107 = vst.msk [vmem:[%s1106] sm:$0xff] %vm57, %v1104
  %1108 = vst.msk [vmem:[%s1106 + $0x8] sm:$0xff] %vm57, %v1105
  %v1109 = vld [vmem:[%s0 + $0x15] sm:$0x1]
  %v1110 = vld [vmem:[%s1 + $0x15] sm:$0x1]
  %v1111 = vld [vmem:[%s2] sm:$0xff]
  %v1112 = vld [vmem:[%s2 + $0x8] sm:$0xff]
  %v1113 = vld [vmem:[%s3] sm:$0xff]
  %v1114 = vld [vmem:[%s3 + $0x8] sm:$0xff]
  %v1115 = vlaneseq
  %v1116 = vshrl.u32 %v1115, 7
  %v1117 = vsub.s32 0, %v1116
  %v1118 = vrot.slane %v1109, %v1117
  %1120 = vset.pattern.permute.xlu0 21
  %1121 = vperm.xlu0 %1120, %v1113
  %v1122 = vpop.permute.xlu0 %1121
  %1125 = vset.pattern.permute.xlu0 21
  %1126 = vperm.xlu0 %1125, %v1114
  %v1127 = vpop.permute.xlu0 %1126
  %v1129 = vmul.f32 %v1118, %v1122
  %v1130 = vmul.f32 %v1118, %v1127
  %v1131 = vlaneseq
  %v1132 = vshrl.u32 %v1131, 7
  %v1133 = vsub.s32 0, %v1132
  %v1134 = vrot.slane %v1110, %v1133
  %1136 = vset.pattern.permute.xlu0 21
  %1137 = vperm.xlu0 %1136, %v1111
  %v1138 = vpop.permute.xlu0 %1137
  %1141 = vset.pattern.permute.xlu0 21
  %1142 = vperm.xlu0 %1141, %v1112
  %v1143 = vpop.permute.xlu0 %1142
  %v1145 = vmul.f32 %v1134, %v1138
  %v1146 = vmul.f32 %v1134, %v1143
  %v1147 = vadd.f32 %v1129, %v1145
  %v1148 = vadd.f32 %v1130, %v1146
  %s1149 = scalar_lea.vmem %s4, 336
  %1150 = vst.msk [vmem:[%s1149] sm:$0xff] %vm57, %v1147
  %1151 = vst.msk [vmem:[%s1149 + $0x8] sm:$0xff] %vm57, %v1148
  %v1152 = vmul.f32 %v1134, %v1122
  %v1153 = vmul.f32 %v1134, %v1127
  %v1154 = vmul.f32 %v1118, %v1138
  %v1155 = vmul.f32 %v1118, %v1143
  %v1156 = vsub.f32 %v1152, %v1154
  %v1157 = vsub.f32 %v1153, %v1155
  %s1158 = scalar_lea.vmem %s4, 1360
  %1159 = vst.msk [vmem:[%s1158] sm:$0xff] %vm57, %v1156
  %1160 = vst.msk [vmem:[%s1158 + $0x8] sm:$0xff] %vm57, %v1157
  %v1161 = vld [vmem:[%s0 + $0x16] sm:$0x1]
  %v1162 = vld [vmem:[%s1 + $0x16] sm:$0x1]
  %v1163 = vld [vmem:[%s2] sm:$0xff]
  %v1164 = vld [vmem:[%s2 + $0x8] sm:$0xff]
  %v1165 = vld [vmem:[%s3] sm:$0xff]
  %v1166 = vld [vmem:[%s3 + $0x8] sm:$0xff]
  %v1167 = vlaneseq
  %v1168 = vshrl.u32 %v1167, 7
  %v1169 = vsub.s32 0, %v1168
  %v1170 = vrot.slane %v1161, %v1169
  %1172 = vset.pattern.permute.xlu0 22
  %1173 = vperm.xlu0 %1172, %v1165
  %v1174 = vpop.permute.xlu0 %1173
  %1177 = vset.pattern.permute.xlu0 22
  %1178 = vperm.xlu0 %1177, %v1166
  %v1179 = vpop.permute.xlu0 %1178
  %v1181 = vmul.f32 %v1170, %v1174
  %v1182 = vmul.f32 %v1170, %v1179
  %v1183 = vlaneseq
  %v1184 = vshrl.u32 %v1183, 7
  %v1185 = vsub.s32 0, %v1184
  %v1186 = vrot.slane %v1162, %v1185
  %1188 = vset.pattern.permute.xlu0 22
  %1189 = vperm.xlu0 %1188, %v1163
  %v1190 = vpop.permute.xlu0 %1189
  %1193 = vset.pattern.permute.xlu0 22
  %1194 = vperm.xlu0 %1193, %v1164
  %v1195 = vpop.permute.xlu0 %1194
  %v1197 = vmul.f32 %v1186, %v1190
  %v1198 = vmul.f32 %v1186, %v1195
  %v1199 = vadd.f32 %v1181, %v1197
  %v1200 = vadd.f32 %v1182, %v1198
  %s1201 = scalar_lea.vmem %s4, 352
  %1202 = vst.msk [vmem:[%s1201] sm:$0xff] %vm57, %v1199
  %1203 = vst.msk [vmem:[%s1201 + $0x8] sm:$0xff] %vm57, %v1200
  %v1204 = vmul.f32 %v1186, %v1174
  %v1205 = vmul.f32 %v1186, %v1179
  %v1206 = vmul.f32 %v1170, %v1190
  %v1207 = vmul.f32 %v1170, %v1195
  %v1208 = vsub.f32 %v1204, %v1206
  %v1209 = vsub.f32 %v1205, %v1207
  %s1210 = scalar_lea.vmem %s4, 1376
  %1211 = vst.msk [vmem:[%s1210] sm:$0xff] %vm57, %v1208
  %1212 = vst.msk [vmem:[%s1210 + $0x8] sm:$0xff] %vm57, %v1209
  %v1213 = vld [vmem:[%s0 + $0x17] sm:$0x1]
  %v1214 = vld [vmem:[%s1 + $0x17] sm:$0x1]
  %v1215 = vld [vmem:[%s2] sm:$0xff]
  %v1216 = vld [vmem:[%s2 + $0x8] sm:$0xff]
  %v1217 = vld [vmem:[%s3] sm:$0xff]
  %v1218 = vld [vmem:[%s3 + $0x8] sm:$0xff]
  %v1219 = vlaneseq
  %v1220 = vshrl.u32 %v1219, 7
  %v1221 = vsub.s32 0, %v1220
  %v1222 = vrot.slane %v1213, %v1221
  %1224 = vset.pattern.permute.xlu0 23
  %1225 = vperm.xlu0 %1224, %v1217
  %v1226 = vpop.permute.xlu0 %1225
  %1229 = vset.pattern.permute.xlu0 23
  %1230 = vperm.xlu0 %1229, %v1218
  %v1231 = vpop.permute.xlu0 %1230
  %v1233 = vmul.f32 %v1222, %v1226
  %v1234 = vmul.f32 %v1222, %v1231
  %v1235 = vlaneseq
  %v1236 = vshrl.u32 %v1235, 7
  %v1237 = vsub.s32 0, %v1236
  %v1238 = vrot.slane %v1214, %v1237
  %1240 = vset.pattern.permute.xlu0 23
  %1241 = vperm.xlu0 %1240, %v1215
  %v1242 = vpop.permute.xlu0 %1241
  %1245 = vset.pattern.permute.xlu0 23
  %1246 = vperm.xlu0 %1245, %v1216
  %v1247 = vpop.permute.xlu0 %1246
  %v1249 = vmul.f32 %v1238, %v1242
  %v1250 = vmul.f32 %v1238, %v1247
  %v1251 = vadd.f32 %v1233, %v1249
  %v1252 = vadd.f32 %v1234, %v1250
  %s1253 = scalar_lea.vmem %s4, 368
  %1254 = vst.msk [vmem:[%s1253] sm:$0xff] %vm57, %v1251
  %1255 = vst.msk [vmem:[%s1253 + $0x8] sm:$0xff] %vm57, %v1252
  %v1256 = vmul.f32 %v1238, %v1226
  %v1257 = vmul.f32 %v1238, %v1231
  %v1258 = vmul.f32 %v1222, %v1242
  %v1259 = vmul.f32 %v1222, %v1247
  %v1260 = vsub.f32 %v1256, %v1258
  %v1261 = vsub.f32 %v1257, %v1259
  %s1262 = scalar_lea.vmem %s4, 1392
  %1263 = vst.msk [vmem:[%s1262] sm:$0xff] %vm57, %v1260
  %1264 = vst.msk [vmem:[%s1262 + $0x8] sm:$0xff] %vm57, %v1261
  %v1265 = vld [vmem:[%s0 + $0x18] sm:$0x1]
  %v1266 = vld [vmem:[%s1 + $0x18] sm:$0x1]
  %v1267 = vld [vmem:[%s2] sm:$0xff]
  %v1268 = vld [vmem:[%s2 + $0x8] sm:$0xff]
  %v1269 = vld [vmem:[%s3] sm:$0xff]
  %v1270 = vld [vmem:[%s3 + $0x8] sm:$0xff]
  %v1271 = vlaneseq
  %v1272 = vshrl.u32 %v1271, 7
  %v1273 = vsub.s32 0, %v1272
  %v1274 = vrot.slane %v1265, %v1273
  %1276 = vset.pattern.permute.xlu0 24
  %1277 = vperm.xlu0 %1276, %v1269
  %v1278 = vpop.permute.xlu0 %1277
  %1281 = vset.pattern.permute.xlu0 24
  %1282 = vperm.xlu0 %1281, %v1270
  %v1283 = vpop.permute.xlu0 %1282
  %v1285 = vmul.f32 %v1274, %v1278
  %v1286 = vmul.f32 %v1274, %v1283
  %v1287 = vlaneseq
  %v1288 = vshrl.u32 %v1287, 7
  %v1289 = vsub.s32 0, %v1288
  %v1290 = vrot.slane %v1266, %v1289
  %1292 = vset.pattern.permute.xlu0 24
  %1293 = vperm.xlu0 %1292, %v1267
  %v1294 = vpop.permute.xlu0 %1293
  %1297 = vset.pattern.permute.xlu0 24
  %1298 = vperm.xlu0 %1297, %v1268
  %v1299 = vpop.permute.xlu0 %1298
  %v1301 = vmul.f32 %v1290, %v1294
  %v1302 = vmul.f32 %v1290, %v1299
  %v1303 = vadd.f32 %v1285, %v1301
  %v1304 = vadd.f32 %v1286, %v1302
  %s1305 = scalar_lea.vmem %s4, 384
  %1306 = vst.msk [vmem:[%s1305] sm:$0xff] %vm57, %v1303
  %1307 = vst.msk [vmem:[%s1305 + $0x8] sm:$0xff] %vm57, %v1304
  %v1308 = vmul.f32 %v1290, %v1278
  %v1309 = vmul.f32 %v1290, %v1283
  %v1310 = vmul.f32 %v1274, %v1294
  %v1311 = vmul.f32 %v1274, %v1299
  %v1312 = vsub.f32 %v1308, %v1310
  %v1313 = vsub.f32 %v1309, %v1311
  %s1314 = scalar_lea.vmem %s4, 1408
  %1315 = vst.msk [vmem:[%s1314] sm:$0xff] %vm57, %v1312
  %1316 = vst.msk [vmem:[%s1314 + $0x8] sm:$0xff] %vm57, %v1313
  %v1317 = vld [vmem:[%s0 + $0x19] sm:$0x1]
  %v1318 = vld [vmem:[%s1 + $0x19] sm:$0x1]
  %v1319 = vld [vmem:[%s2] sm:$0xff]
  %v1320 = vld [vmem:[%s2 + $0x8] sm:$0xff]
  %v1321 = vld [vmem:[%s3] sm:$0xff]
  %v1322 = vld [vmem:[%s3 + $0x8] sm:$0xff]
  %v1323 = vlaneseq
  %v1324 = vshrl.u32 %v1323, 7
  %v1325 = vsub.s32 0, %v1324
  %v1326 = vrot.slane %v1317, %v1325
  %1328 = vset.pattern.permute.xlu0 25
  %1329 = vperm.xlu0 %1328, %v1321
  %v1330 = vpop.permute.xlu0 %1329
  %1333 = vset.pattern.permute.xlu0 25
  %1334 = vperm.xlu0 %1333, %v1322
  %v1335 = vpop.permute.xlu0 %1334
  %v1337 = vmul.f32 %v1326, %v1330
  %v1338 = vmul.f32 %v1326, %v1335
  %v1339 = vlaneseq
  %v1340 = vshrl.u32 %v1339, 7
  %v1341 = vsub.s32 0, %v1340
  %v1342 = vrot.slane %v1318, %v1341
  %1344 = vset.pattern.permute.xlu0 25
  %1345 = vperm.xlu0 %1344, %v1319
  %v1346 = vpop.permute.xlu0 %1345
  %1349 = vset.pattern.permute.xlu0 25
  %1350 = vperm.xlu0 %1349, %v1320
  %v1351 = vpop.permute.xlu0 %1350
  %v1353 = vmul.f32 %v1342, %v1346
  %v1354 = vmul.f32 %v1342, %v1351
  %v1355 = vadd.f32 %v1337, %v1353
  %v1356 = vadd.f32 %v1338, %v1354
  %s1357 = scalar_lea.vmem %s4, 400
  %1358 = vst.msk [vmem:[%s1357] sm:$0xff] %vm57, %v1355
  %1359 = vst.msk [vmem:[%s1357 + $0x8] sm:$0xff] %vm57, %v1356
  %v1360 = vmul.f32 %v1342, %v1330
  %v1361 = vmul.f32 %v1342, %v1335
  %v1362 = vmul.f32 %v1326, %v1346
  %v1363 = vmul.f32 %v1326, %v1351
  %v1364 = vsub.f32 %v1360, %v1362
  %v1365 = vsub.f32 %v1361, %v1363
  %s1366 = scalar_lea.vmem %s4, 1424
  %1367 = vst.msk [vmem:[%s1366] sm:$0xff] %vm57, %v1364
  %1368 = vst.msk [vmem:[%s1366 + $0x8] sm:$0xff] %vm57, %v1365
  %v1369 = vld [vmem:[%s0 + $0x1a] sm:$0x1]
  %v1370 = vld [vmem:[%s1 + $0x1a] sm:$0x1]
  %v1371 = vld [vmem:[%s2] sm:$0xff]
  %v1372 = vld [vmem:[%s2 + $0x8] sm:$0xff]
  %v1373 = vld [vmem:[%s3] sm:$0xff]
  %v1374 = vld [vmem:[%s3 + $0x8] sm:$0xff]
  %v1375 = vlaneseq
  %v1376 = vshrl.u32 %v1375, 7
  %v1377 = vsub.s32 0, %v1376
  %v1378 = vrot.slane %v1369, %v1377
  %1380 = vset.pattern.permute.xlu0 26
  %1381 = vperm.xlu0 %1380, %v1373
  %v1382 = vpop.permute.xlu0 %1381
  %1385 = vset.pattern.permute.xlu0 26
  %1386 = vperm.xlu0 %1385, %v1374
  %v1387 = vpop.permute.xlu0 %1386
  %v1389 = vmul.f32 %v1378, %v1382
  %v1390 = vmul.f32 %v1378, %v1387
  %v1391 = vlaneseq
  %v1392 = vshrl.u32 %v1391, 7
  %v1393 = vsub.s32 0, %v1392
  %v1394 = vrot.slane %v1370, %v1393
  %1396 = vset.pattern.permute.xlu0 26
  %1397 = vperm.xlu0 %1396, %v1371
  %v1398 = vpop.permute.xlu0 %1397
  %1401 = vset.pattern.permute.xlu0 26
  %1402 = vperm.xlu0 %1401, %v1372
  %v1403 = vpop.permute.xlu0 %1402
  %v1405 = vmul.f32 %v1394, %v1398
  %v1406 = vmul.f32 %v1394, %v1403
  %v1407 = vadd.f32 %v1389, %v1405
  %v1408 = vadd.f32 %v1390, %v1406
  %s1409 = scalar_lea.vmem %s4, 416
  %1410 = vst.msk [vmem:[%s1409] sm:$0xff] %vm57, %v1407
  %1411 = vst.msk [vmem:[%s1409 + $0x8] sm:$0xff] %vm57, %v1408
  %v1412 = vmul.f32 %v1394, %v1382
  %v1413 = vmul.f32 %v1394, %v1387
  %v1414 = vmul.f32 %v1378, %v1398
  %v1415 = vmul.f32 %v1378, %v1403
  %v1416 = vsub.f32 %v1412, %v1414
  %v1417 = vsub.f32 %v1413, %v1415
  %s1418 = scalar_lea.vmem %s4, 1440
  %1419 = vst.msk [vmem:[%s1418] sm:$0xff] %vm57, %v1416
  %1420 = vst.msk [vmem:[%s1418 + $0x8] sm:$0xff] %vm57, %v1417
  %v1421 = vld [vmem:[%s0 + $0x1b] sm:$0x1]
  %v1422 = vld [vmem:[%s1 + $0x1b] sm:$0x1]
  %v1423 = vld [vmem:[%s2] sm:$0xff]
  %v1424 = vld [vmem:[%s2 + $0x8] sm:$0xff]
  %v1425 = vld [vmem:[%s3] sm:$0xff]
  %v1426 = vld [vmem:[%s3 + $0x8] sm:$0xff]
  %v1427 = vlaneseq
  %v1428 = vshrl.u32 %v1427, 7
  %v1429 = vsub.s32 0, %v1428
  %v1430 = vrot.slane %v1421, %v1429
  %1432 = vset.pattern.permute.xlu0 27
  %1433 = vperm.xlu0 %1432, %v1425
  %v1434 = vpop.permute.xlu0 %1433
  %1437 = vset.pattern.permute.xlu0 27
  %1438 = vperm.xlu0 %1437, %v1426
  %v1439 = vpop.permute.xlu0 %1438
  %v1441 = vmul.f32 %v1430, %v1434
  %v1442 = vmul.f32 %v1430, %v1439
  %v1443 = vlaneseq
  %v1444 = vshrl.u32 %v1443, 7
  %v1445 = vsub.s32 0, %v1444
  %v1446 = vrot.slane %v1422, %v1445
  %1448 = vset.pattern.permute.xlu0 27
  %1449 = vperm.xlu0 %1448, %v1423
  %v1450 = vpop.permute.xlu0 %1449
  %1453 = vset.pattern.permute.xlu0 27
  %1454 = vperm.xlu0 %1453, %v1424
  %v1455 = vpop.permute.xlu0 %1454
  %v1457 = vmul.f32 %v1446, %v1450
  %v1458 = vmul.f32 %v1446, %v1455
  %v1459 = vadd.f32 %v1441, %v1457
  %v1460 = vadd.f32 %v1442, %v1458
  %s1461 = scalar_lea.vmem %s4, 432
  %1462 = vst.msk [vmem:[%s1461] sm:$0xff] %vm57, %v1459
  %1463 = vst.msk [vmem:[%s1461 + $0x8] sm:$0xff] %vm57, %v1460
  %v1464 = vmul.f32 %v1446, %v1434
  %v1465 = vmul.f32 %v1446, %v1439
  %v1466 = vmul.f32 %v1430, %v1450
  %v1467 = vmul.f32 %v1430, %v1455
  %v1468 = vsub.f32 %v1464, %v1466
  %v1469 = vsub.f32 %v1465, %v1467
  %s1470 = scalar_lea.vmem %s4, 1456
  %1471 = vst.msk [vmem:[%s1470] sm:$0xff] %vm57, %v1468
  %1472 = vst.msk [vmem:[%s1470 + $0x8] sm:$0xff] %vm57, %v1469
  %v1473 = vld [vmem:[%s0 + $0x1c] sm:$0x1]
  %v1474 = vld [vmem:[%s1 + $0x1c] sm:$0x1]
  %v1475 = vld [vmem:[%s2] sm:$0xff]
  %v1476 = vld [vmem:[%s2 + $0x8] sm:$0xff]
  %v1477 = vld [vmem:[%s3] sm:$0xff]
  %v1478 = vld [vmem:[%s3 + $0x8] sm:$0xff]
  %v1479 = vlaneseq
  %v1480 = vshrl.u32 %v1479, 7
  %v1481 = vsub.s32 0, %v1480
  %v1482 = vrot.slane %v1473, %v1481
  %1484 = vset.pattern.permute.xlu0 28
  %1485 = vperm.xlu0 %1484, %v1477
  %v1486 = vpop.permute.xlu0 %1485
  %1489 = vset.pattern.permute.xlu0 28
  %1490 = vperm.xlu0 %1489, %v1478
  %v1491 = vpop.permute.xlu0 %1490
  %v1493 = vmul.f32 %v1482, %v1486
  %v1494 = vmul.f32 %v1482, %v1491
  %v1495 = vlaneseq
  %v1496 = vshrl.u32 %v1495, 7
  %v1497 = vsub.s32 0, %v1496
  %v1498 = vrot.slane %v1474, %v1497
  %1500 = vset.pattern.permute.xlu0 28
  %1501 = vperm.xlu0 %1500, %v1475
  %v1502 = vpop.permute.xlu0 %1501
  %1505 = vset.pattern.permute.xlu0 28
  %1506 = vperm.xlu0 %1505, %v1476
  %v1507 = vpop.permute.xlu0 %1506
  %v1509 = vmul.f32 %v1498, %v1502
  %v1510 = vmul.f32 %v1498, %v1507
  %v1511 = vadd.f32 %v1493, %v1509
  %v1512 = vadd.f32 %v1494, %v1510
  %s1513 = scalar_lea.vmem %s4, 448
  %1514 = vst.msk [vmem:[%s1513] sm:$0xff] %vm57, %v1511
  %1515 = vst.msk [vmem:[%s1513 + $0x8] sm:$0xff] %vm57, %v1512
  %v1516 = vmul.f32 %v1498, %v1486
  %v1517 = vmul.f32 %v1498, %v1491
  %v1518 = vmul.f32 %v1482, %v1502
  %v1519 = vmul.f32 %v1482, %v1507
  %v1520 = vsub.f32 %v1516, %v1518
  %v1521 = vsub.f32 %v1517, %v1519
  %s1522 = scalar_lea.vmem %s4, 1472
  %1523 = vst.msk [vmem:[%s1522] sm:$0xff] %vm57, %v1520
  %1524 = vst.msk [vmem:[%s1522 + $0x8] sm:$0xff] %vm57, %v1521
  %v1525 = vld [vmem:[%s0 + $0x1d] sm:$0x1]
  %v1526 = vld [vmem:[%s1 + $0x1d] sm:$0x1]
  %v1527 = vld [vmem:[%s2] sm:$0xff]
  %v1528 = vld [vmem:[%s2 + $0x8] sm:$0xff]
  %v1529 = vld [vmem:[%s3] sm:$0xff]
  %v1530 = vld [vmem:[%s3 + $0x8] sm:$0xff]
  %v1531 = vlaneseq
  %v1532 = vshrl.u32 %v1531, 7
  %v1533 = vsub.s32 0, %v1532
  %v1534 = vrot.slane %v1525, %v1533
  %1536 = vset.pattern.permute.xlu0 29
  %1537 = vperm.xlu0 %1536, %v1529
  %v1538 = vpop.permute.xlu0 %1537
  %1541 = vset.pattern.permute.xlu0 29
  %1542 = vperm.xlu0 %1541, %v1530
  %v1543 = vpop.permute.xlu0 %1542
  %v1545 = vmul.f32 %v1534, %v1538
  %v1546 = vmul.f32 %v1534, %v1543
  %v1547 = vlaneseq
  %v1548 = vshrl.u32 %v1547, 7
  %v1549 = vsub.s32 0, %v1548
  %v1550 = vrot.slane %v1526, %v1549
  %1552 = vset.pattern.permute.xlu0 29
  %1553 = vperm.xlu0 %1552, %v1527
  %v1554 = vpop.permute.xlu0 %1553
  %1557 = vset.pattern.permute.xlu0 29
  %1558 = vperm.xlu0 %1557, %v1528
  %v1559 = vpop.permute.xlu0 %1558
  %v1561 = vmul.f32 %v1550, %v1554
  %v1562 = vmul.f32 %v1550, %v1559
  %v1563 = vadd.f32 %v1545, %v1561
  %v1564 = vadd.f32 %v1546, %v1562
  %s1565 = scalar_lea.vmem %s4, 464
  %1566 = vst.msk [vmem:[%s1565] sm:$0xff] %vm57, %v1563
  %1567 = vst.msk [vmem:[%s1565 + $0x8] sm:$0xff] %vm57, %v1564
  %v1568 = vmul.f32 %v1550, %v1538
  %v1569 = vmul.f32 %v1550, %v1543
  %v1570 = vmul.f32 %v1534, %v1554
  %v1571 = vmul.f32 %v1534, %v1559
  %v1572 = vsub.f32 %v1568, %v1570
  %v1573 = vsub.f32 %v1569, %v1571
  %s1574 = scalar_lea.vmem %s4, 1488
  %1575 = vst.msk [vmem:[%s1574] sm:$0xff] %vm57, %v1572
  %1576 = vst.msk [vmem:[%s1574 + $0x8] sm:$0xff] %vm57, %v1573
  %v1577 = vld [vmem:[%s0 + $0x1e] sm:$0x1]
  %v1578 = vld [vmem:[%s1 + $0x1e] sm:$0x1]
  %v1579 = vld [vmem:[%s2] sm:$0xff]
  %v1580 = vld [vmem:[%s2 + $0x8] sm:$0xff]
  %v1581 = vld [vmem:[%s3] sm:$0xff]
  %v1582 = vld [vmem:[%s3 + $0x8] sm:$0xff]
  %v1583 = vlaneseq
  %v1584 = vshrl.u32 %v1583, 7
  %v1585 = vsub.s32 0, %v1584
  %v1586 = vrot.slane %v1577, %v1585
  %1588 = vset.pattern.permute.xlu0 30
  %1589 = vperm.xlu0 %1588, %v1581
  %v1590 = vpop.permute.xlu0 %1589
  %1593 = vset.pattern.permute.xlu0 30
  %1594 = vperm.xlu0 %1593, %v1582
  %v1595 = vpop.permute.xlu0 %1594
  %v1597 = vmul.f32 %v1586, %v1590
  %v1598 = vmul.f32 %v1586, %v1595
  %v1599 = vlaneseq
  %v1600 = vshrl.u32 %v1599, 7
  %v1601 = vsub.s32 0, %v1600
  %v1602 = vrot.slane %v1578, %v1601
  %1604 = vset.pattern.permute.xlu0 30
  %1605 = vperm.xlu0 %1604, %v1579
  %v1606 = vpop.permute.xlu0 %1605
  %1609 = vset.pattern.permute.xlu0 30
  %1610 = vperm.xlu0 %1609, %v1580
  %v1611 = vpop.permute.xlu0 %1610
  %v1613 = vmul.f32 %v1602, %v1606
  %v1614 = vmul.f32 %v1602, %v1611
  %v1615 = vadd.f32 %v1597, %v1613
  %v1616 = vadd.f32 %v1598, %v1614
  %s1617 = scalar_lea.vmem %s4, 480
  %1618 = vst.msk [vmem:[%s1617] sm:$0xff] %vm57, %v1615
  %1619 = vst.msk [vmem:[%s1617 + $0x8] sm:$0xff] %vm57, %v1616
  %v1620 = vmul.f32 %v1602, %v1590
  %v1621 = vmul.f32 %v1602, %v1595
  %v1622 = vmul.f32 %v1586, %v1606
  %v1623 = vmul.f32 %v1586, %v1611
  %v1624 = vsub.f32 %v1620, %v1622
  %v1625 = vsub.f32 %v1621, %v1623
  %s1626 = scalar_lea.vmem %s4, 1504
  %1627 = vst.msk [vmem:[%s1626] sm:$0xff] %vm57, %v1624
  %1628 = vst.msk [vmem:[%s1626 + $0x8] sm:$0xff] %vm57, %v1625
  %v1629 = vld [vmem:[%s0 + $0x1f] sm:$0x1]
  %v1630 = vld [vmem:[%s1 + $0x1f] sm:$0x1]
  %v1631 = vld [vmem:[%s2] sm:$0xff]
  %v1632 = vld [vmem:[%s2 + $0x8] sm:$0xff]
  %v1633 = vld [vmem:[%s3] sm:$0xff]
  %v1634 = vld [vmem:[%s3 + $0x8] sm:$0xff]
  %v1635 = vlaneseq
  %v1636 = vshrl.u32 %v1635, 7
  %v1637 = vsub.s32 0, %v1636
  %v1638 = vrot.slane %v1629, %v1637
  %1640 = vset.pattern.permute.xlu0 31
  %1641 = vperm.xlu0 %1640, %v1633
  %v1642 = vpop.permute.xlu0 %1641
  %1645 = vset.pattern.permute.xlu0 31
  %1646 = vperm.xlu0 %1645, %v1634
  %v1647 = vpop.permute.xlu0 %1646
  %v1649 = vmul.f32 %v1638, %v1642
  %v1650 = vmul.f32 %v1638, %v1647
  %v1651 = vlaneseq
  %v1652 = vshrl.u32 %v1651, 7
  %v1653 = vsub.s32 0, %v1652
  %v1654 = vrot.slane %v1630, %v1653
  %1656 = vset.pattern.permute.xlu0 31
  %1657 = vperm.xlu0 %1656, %v1631
  %v1658 = vpop.permute.xlu0 %1657
  %1661 = vset.pattern.permute.xlu0 31
  %1662 = vperm.xlu0 %1661, %v1632
  %v1663 = vpop.permute.xlu0 %1662
  %v1665 = vmul.f32 %v1654, %v1658
  %v1666 = vmul.f32 %v1654, %v1663
  %v1667 = vadd.f32 %v1649, %v1665
  %v1668 = vadd.f32 %v1650, %v1666
  %s1669 = scalar_lea.vmem %s4, 496
  %1670 = vst.msk [vmem:[%s1669] sm:$0xff] %vm57, %v1667
  %1671 = vst.msk [vmem:[%s1669 + $0x8] sm:$0xff] %vm57, %v1668
  %v1672 = vmul.f32 %v1654, %v1642
  %v1673 = vmul.f32 %v1654, %v1647
  %v1674 = vmul.f32 %v1638, %v1658
  %v1675 = vmul.f32 %v1638, %v1663
  %v1676 = vsub.f32 %v1672, %v1674
  %v1677 = vsub.f32 %v1673, %v1675
  %s1678 = scalar_lea.vmem %s4, 1520
  %1679 = vst.msk [vmem:[%s1678] sm:$0xff] %vm57, %v1676
  %1680 = vst.msk [vmem:[%s1678 + $0x8] sm:$0xff] %vm57, %v1677
  %v1681 = vld [vmem:[%s0 + $0x20] sm:$0x1]
  %v1682 = vld [vmem:[%s1 + $0x20] sm:$0x1]
  %v1683 = vld [vmem:[%s2] sm:$0xff]
  %v1684 = vld [vmem:[%s2 + $0x8] sm:$0xff]
  %v1685 = vld [vmem:[%s3] sm:$0xff]
  %v1686 = vld [vmem:[%s3 + $0x8] sm:$0xff]
  %v1687 = vlaneseq
  %v1688 = vshrl.u32 %v1687, 7
  %v1689 = vsub.s32 0, %v1688
  %v1690 = vrot.slane %v1681, %v1689
  %1692 = vset.pattern.permute.xlu0 32
  %1693 = vperm.xlu0 %1692, %v1685
  %v1694 = vpop.permute.xlu0 %1693
  %1697 = vset.pattern.permute.xlu0 32
  %1698 = vperm.xlu0 %1697, %v1686
  %v1699 = vpop.permute.xlu0 %1698
  %v1701 = vmul.f32 %v1690, %v1694
  %v1702 = vmul.f32 %v1690, %v1699
  %v1703 = vlaneseq
  %v1704 = vshrl.u32 %v1703, 7
  %v1705 = vsub.s32 0, %v1704
  %v1706 = vrot.slane %v1682, %v1705
  %1708 = vset.pattern.permute.xlu0 32
  %1709 = vperm.xlu0 %1708, %v1683
  %v1710 = vpop.permute.xlu0 %1709
  %1713 = vset.pattern.permute.xlu0 32
  %1714 = vperm.xlu0 %1713, %v1684
  %v1715 = vpop.permute.xlu0 %1714
  %v1717 = vmul.f32 %v1706, %v1710
  %v1718 = vmul.f32 %v1706, %v1715
  %v1719 = vadd.f32 %v1701, %v1717
  %v1720 = vadd.f32 %v1702, %v1718
  %s1721 = scalar_lea.vmem %s4, 512
  %1722 = vst.msk [vmem:[%s1721] sm:$0xff] %vm57, %v1719
  %1723 = vst.msk [vmem:[%s1721 + $0x8] sm:$0xff] %vm57, %v1720
  %v1724 = vmul.f32 %v1706, %v1694
  %v1725 = vmul.f32 %v1706, %v1699
  %v1726 = vmul.f32 %v1690, %v1710
  %v1727 = vmul.f32 %v1690, %v1715
  %v1728 = vsub.f32 %v1724, %v1726
  %v1729 = vsub.f32 %v1725, %v1727
  %s1730 = scalar_lea.vmem %s4, 1536
  %1731 = vst.msk [vmem:[%s1730] sm:$0xff] %vm57, %v1728
  %1732 = vst.msk [vmem:[%s1730 + $0x8] sm:$0xff] %vm57, %v1729
  %v1733 = vld [vmem:[%s0 + $0x21] sm:$0x1]
  %v1734 = vld [vmem:[%s1 + $0x21] sm:$0x1]
  %v1735 = vld [vmem:[%s2] sm:$0xff]
  %v1736 = vld [vmem:[%s2 + $0x8] sm:$0xff]
  %v1737 = vld [vmem:[%s3] sm:$0xff]
  %v1738 = vld [vmem:[%s3 + $0x8] sm:$0xff]
  %v1739 = vlaneseq
  %v1740 = vshrl.u32 %v1739, 7
  %v1741 = vsub.s32 0, %v1740
  %v1742 = vrot.slane %v1733, %v1741
  %1744 = vset.pattern.permute.xlu0 33
  %1745 = vperm.xlu0 %1744, %v1737
  %v1746 = vpop.permute.xlu0 %1745
  %1749 = vset.pattern.permute.xlu0 33
  %1750 = vperm.xlu0 %1749, %v1738
  %v1751 = vpop.permute.xlu0 %1750
  %v1753 = vmul.f32 %v1742, %v1746
  %v1754 = vmul.f32 %v1742, %v1751
  %v1755 = vlaneseq
  %v1756 = vshrl.u32 %v1755, 7
  %v1757 = vsub.s32 0, %v1756
  %v1758 = vrot.slane %v1734, %v1757
  %1760 = vset.pattern.permute.xlu0 33
  %1761 = vperm.xlu0 %1760, %v1735
  %v1762 = vpop.permute.xlu0 %1761
  %1765 = vset.pattern.permute.xlu0 33
  %1766 = vperm.xlu0 %1765, %v1736
  %v1767 = vpop.permute.xlu0 %1766
  %v1769 = vmul.f32 %v1758, %v1762
  %v1770 = vmul.f32 %v1758, %v1767
  %v1771 = vadd.f32 %v1753, %v1769
  %v1772 = vadd.f32 %v1754, %v1770
  %s1773 = scalar_lea.vmem %s4, 528
  %1774 = vst.msk [vmem:[%s1773] sm:$0xff] %vm57, %v1771
  %1775 = vst.msk [vmem:[%s1773 + $0x8] sm:$0xff] %vm57, %v1772
  %v1776 = vmul.f32 %v1758, %v1746
  %v1777 = vmul.f32 %v1758, %v1751
  %v1778 = vmul.f32 %v1742, %v1762
  %v1779 = vmul.f32 %v1742, %v1767
  %v1780 = vsub.f32 %v1776, %v1778
  %v1781 = vsub.f32 %v1777, %v1779
  %s1782 = scalar_lea.vmem %s4, 1552
  %1783 = vst.msk [vmem:[%s1782] sm:$0xff] %vm57, %v1780
  %1784 = vst.msk [vmem:[%s1782 + $0x8] sm:$0xff] %vm57, %v1781
  %v1785 = vld [vmem:[%s0 + $0x22] sm:$0x1]
  %v1786 = vld [vmem:[%s1 + $0x22] sm:$0x1]
  %v1787 = vld [vmem:[%s2] sm:$0xff]
  %v1788 = vld [vmem:[%s2 + $0x8] sm:$0xff]
  %v1789 = vld [vmem:[%s3] sm:$0xff]
  %v1790 = vld [vmem:[%s3 + $0x8] sm:$0xff]
  %v1791 = vlaneseq
  %v1792 = vshrl.u32 %v1791, 7
  %v1793 = vsub.s32 0, %v1792
  %v1794 = vrot.slane %v1785, %v1793
  %1796 = vset.pattern.permute.xlu0 34
  %1797 = vperm.xlu0 %1796, %v1789
  %v1798 = vpop.permute.xlu0 %1797
  %1801 = vset.pattern.permute.xlu0 34
  %1802 = vperm.xlu0 %1801, %v1790
  %v1803 = vpop.permute.xlu0 %1802
  %v1805 = vmul.f32 %v1794, %v1798
  %v1806 = vmul.f32 %v1794, %v1803
  %v1807 = vlaneseq
  %v1808 = vshrl.u32 %v1807, 7
  %v1809 = vsub.s32 0, %v1808
  %v1810 = vrot.slane %v1786, %v1809
  %1812 = vset.pattern.permute.xlu0 34
  %1813 = vperm.xlu0 %1812, %v1787
  %v1814 = vpop.permute.xlu0 %1813
  %1817 = vset.pattern.permute.xlu0 34
  %1818 = vperm.xlu0 %1817, %v1788
  %v1819 = vpop.permute.xlu0 %1818
  %v1821 = vmul.f32 %v1810, %v1814
  %v1822 = vmul.f32 %v1810, %v1819
  %v1823 = vadd.f32 %v1805, %v1821
  %v1824 = vadd.f32 %v1806, %v1822
  %s1825 = scalar_lea.vmem %s4, 544
  %1826 = vst.msk [vmem:[%s1825] sm:$0xff] %vm57, %v1823
  %1827 = vst.msk [vmem:[%s1825 + $0x8] sm:$0xff] %vm57, %v1824
  %v1828 = vmul.f32 %v1810, %v1798
  %v1829 = vmul.f32 %v1810, %v1803
  %v1830 = vmul.f32 %v1794, %v1814
  %v1831 = vmul.f32 %v1794, %v1819
  %v1832 = vsub.f32 %v1828, %v1830
  %v1833 = vsub.f32 %v1829, %v1831
  %s1834 = scalar_lea.vmem %s4, 1568
  %1835 = vst.msk [vmem:[%s1834] sm:$0xff] %vm57, %v1832
  %1836 = vst.msk [vmem:[%s1834 + $0x8] sm:$0xff] %vm57, %v1833
  %v1837 = vld [vmem:[%s0 + $0x23] sm:$0x1]
  %v1838 = vld [vmem:[%s1 + $0x23] sm:$0x1]
  %v1839 = vld [vmem:[%s2] sm:$0xff]
  %v1840 = vld [vmem:[%s2 + $0x8] sm:$0xff]
  %v1841 = vld [vmem:[%s3] sm:$0xff]
  %v1842 = vld [vmem:[%s3 + $0x8] sm:$0xff]
  %v1843 = vlaneseq
  %v1844 = vshrl.u32 %v1843, 7
  %v1845 = vsub.s32 0, %v1844
  %v1846 = vrot.slane %v1837, %v1845
  %1848 = vset.pattern.permute.xlu0 35
  %1849 = vperm.xlu0 %1848, %v1841
  %v1850 = vpop.permute.xlu0 %1849
  %1853 = vset.pattern.permute.xlu0 35
  %1854 = vperm.xlu0 %1853, %v1842
  %v1855 = vpop.permute.xlu0 %1854
  %v1857 = vmul.f32 %v1846, %v1850
  %v1858 = vmul.f32 %v1846, %v1855
  %v1859 = vlaneseq
  %v1860 = vshrl.u32 %v1859, 7
  %v1861 = vsub.s32 0, %v1860
  %v1862 = vrot.slane %v1838, %v1861
  %1864 = vset.pattern.permute.xlu0 35
  %1865 = vperm.xlu0 %1864, %v1839
  %v1866 = vpop.permute.xlu0 %1865
  %1869 = vset.pattern.permute.xlu0 35
  %1870 = vperm.xlu0 %1869, %v1840
  %v1871 = vpop.permute.xlu0 %1870
  %v1873 = vmul.f32 %v1862, %v1866
  %v1874 = vmul.f32 %v1862, %v1871
  %v1875 = vadd.f32 %v1857, %v1873
  %v1876 = vadd.f32 %v1858, %v1874
  %s1877 = scalar_lea.vmem %s4, 560
  %1878 = vst.msk [vmem:[%s1877] sm:$0xff] %vm57, %v1875
  %1879 = vst.msk [vmem:[%s1877 + $0x8] sm:$0xff] %vm57, %v1876
  %v1880 = vmul.f32 %v1862, %v1850
  %v1881 = vmul.f32 %v1862, %v1855
  %v1882 = vmul.f32 %v1846, %v1866
  %v1883 = vmul.f32 %v1846, %v1871
  %v1884 = vsub.f32 %v1880, %v1882
  %v1885 = vsub.f32 %v1881, %v1883
  %s1886 = scalar_lea.vmem %s4, 1584
  %1887 = vst.msk [vmem:[%s1886] sm:$0xff] %vm57, %v1884
  %1888 = vst.msk [vmem:[%s1886 + $0x8] sm:$0xff] %vm57, %v1885
  %v1889 = vld [vmem:[%s0 + $0x24] sm:$0x1]
  %v1890 = vld [vmem:[%s1 + $0x24] sm:$0x1]
  %v1891 = vld [vmem:[%s2] sm:$0xff]
  %v1892 = vld [vmem:[%s2 + $0x8] sm:$0xff]
  %v1893 = vld [vmem:[%s3] sm:$0xff]
  %v1894 = vld [vmem:[%s3 + $0x8] sm:$0xff]
  %v1895 = vlaneseq
  %v1896 = vshrl.u32 %v1895, 7
  %v1897 = vsub.s32 0, %v1896
  %v1898 = vrot.slane %v1889, %v1897
  %1900 = vset.pattern.permute.xlu0 36
  %1901 = vperm.xlu0 %1900, %v1893
  %v1902 = vpop.permute.xlu0 %1901
  %1905 = vset.pattern.permute.xlu0 36
  %1906 = vperm.xlu0 %1905, %v1894
  %v1907 = vpop.permute.xlu0 %1906
  %v1909 = vmul.f32 %v1898, %v1902
  %v1910 = vmul.f32 %v1898, %v1907
  %v1911 = vlaneseq
  %v1912 = vshrl.u32 %v1911, 7
  %v1913 = vsub.s32 0, %v1912
  %v1914 = vrot.slane %v1890, %v1913
  %1916 = vset.pattern.permute.xlu0 36
  %1917 = vperm.xlu0 %1916, %v1891
  %v1918 = vpop.permute.xlu0 %1917
  %1921 = vset.pattern.permute.xlu0 36
  %1922 = vperm.xlu0 %1921, %v1892
  %v1923 = vpop.permute.xlu0 %1922
  %v1925 = vmul.f32 %v1914, %v1918
  %v1926 = vmul.f32 %v1914, %v1923
  %v1927 = vadd.f32 %v1909, %v1925
  %v1928 = vadd.f32 %v1910, %v1926
  %s1929 = scalar_lea.vmem %s4, 576
  %1930 = vst.msk [vmem:[%s1929] sm:$0xff] %vm57, %v1927
  %1931 = vst.msk [vmem:[%s1929 + $0x8] sm:$0xff] %vm57, %v1928
  %v1932 = vmul.f32 %v1914, %v1902
  %v1933 = vmul.f32 %v1914, %v1907
  %v1934 = vmul.f32 %v1898, %v1918
  %v1935 = vmul.f32 %v1898, %v1923
  %v1936 = vsub.f32 %v1932, %v1934
  %v1937 = vsub.f32 %v1933, %v1935
  %s1938 = scalar_lea.vmem %s4, 1600
  %1939 = vst.msk [vmem:[%s1938] sm:$0xff] %vm57, %v1936
  %1940 = vst.msk [vmem:[%s1938 + $0x8] sm:$0xff] %vm57, %v1937
  %v1941 = vld [vmem:[%s0 + $0x25] sm:$0x1]
  %v1942 = vld [vmem:[%s1 + $0x25] sm:$0x1]
  %v1943 = vld [vmem:[%s2] sm:$0xff]
  %v1944 = vld [vmem:[%s2 + $0x8] sm:$0xff]
  %v1945 = vld [vmem:[%s3] sm:$0xff]
  %v1946 = vld [vmem:[%s3 + $0x8] sm:$0xff]
  %v1947 = vlaneseq
  %v1948 = vshrl.u32 %v1947, 7
  %v1949 = vsub.s32 0, %v1948
  %v1950 = vrot.slane %v1941, %v1949
  %1952 = vset.pattern.permute.xlu0 37
  %1953 = vperm.xlu0 %1952, %v1945
  %v1954 = vpop.permute.xlu0 %1953
  %1957 = vset.pattern.permute.xlu0 37
  %1958 = vperm.xlu0 %1957, %v1946
  %v1959 = vpop.permute.xlu0 %1958
  %v1961 = vmul.f32 %v1950, %v1954
  %v1962 = vmul.f32 %v1950, %v1959
  %v1963 = vlaneseq
  %v1964 = vshrl.u32 %v1963, 7
  %v1965 = vsub.s32 0, %v1964
  %v1966 = vrot.slane %v1942, %v1965
  %1968 = vset.pattern.permute.xlu0 37
  %1969 = vperm.xlu0 %1968, %v1943
  %v1970 = vpop.permute.xlu0 %1969
  %1973 = vset.pattern.permute.xlu0 37
  %1974 = vperm.xlu0 %1973, %v1944
  %v1975 = vpop.permute.xlu0 %1974
  %v1977 = vmul.f32 %v1966, %v1970
  %v1978 = vmul.f32 %v1966, %v1975
  %v1979 = vadd.f32 %v1961, %v1977
  %v1980 = vadd.f32 %v1962, %v1978
  %s1981 = scalar_lea.vmem %s4, 592
  %1982 = vst.msk [vmem:[%s1981] sm:$0xff] %vm57, %v1979
  %1983 = vst.msk [vmem:[%s1981 + $0x8] sm:$0xff] %vm57, %v1980
  %v1984 = vmul.f32 %v1966, %v1954
  %v1985 = vmul.f32 %v1966, %v1959
  %v1986 = vmul.f32 %v1950, %v1970
  %v1987 = vmul.f32 %v1950, %v1975
  %v1988 = vsub.f32 %v1984, %v1986
  %v1989 = vsub.f32 %v1985, %v1987
  %s1990 = scalar_lea.vmem %s4, 1616
  %1991 = vst.msk [vmem:[%s1990] sm:$0xff] %vm57, %v1988
  %1992 = vst.msk [vmem:[%s1990 + $0x8] sm:$0xff] %vm57, %v1989
  %v1993 = vld [vmem:[%s0 + $0x26] sm:$0x1]
  %v1994 = vld [vmem:[%s1 + $0x26] sm:$0x1]
  %v1995 = vld [vmem:[%s2] sm:$0xff]
  %v1996 = vld [vmem:[%s2 + $0x8] sm:$0xff]
  %v1997 = vld [vmem:[%s3] sm:$0xff]
  %v1998 = vld [vmem:[%s3 + $0x8] sm:$0xff]
  %v1999 = vlaneseq
  %v2000 = vshrl.u32 %v1999, 7
  %v2001 = vsub.s32 0, %v2000
  %v2002 = vrot.slane %v1993, %v2001
  %2004 = vset.pattern.permute.xlu0 38
  %2005 = vperm.xlu0 %2004, %v1997
  %v2006 = vpop.permute.xlu0 %2005
  %2009 = vset.pattern.permute.xlu0 38
  %2010 = vperm.xlu0 %2009, %v1998
  %v2011 = vpop.permute.xlu0 %2010
  %v2013 = vmul.f32 %v2002, %v2006
  %v2014 = vmul.f32 %v2002, %v2011
  %v2015 = vlaneseq
  %v2016 = vshrl.u32 %v2015, 7
  %v2017 = vsub.s32 0, %v2016
  %v2018 = vrot.slane %v1994, %v2017
  %2020 = vset.pattern.permute.xlu0 38
  %2021 = vperm.xlu0 %2020, %v1995
  %v2022 = vpop.permute.xlu0 %2021
  %2025 = vset.pattern.permute.xlu0 38
  %2026 = vperm.xlu0 %2025, %v1996
  %v2027 = vpop.permute.xlu0 %2026
  %v2029 = vmul.f32 %v2018, %v2022
  %v2030 = vmul.f32 %v2018, %v2027
  %v2031 = vadd.f32 %v2013, %v2029
  %v2032 = vadd.f32 %v2014, %v2030
  %s2033 = scalar_lea.vmem %s4, 608
  %2034 = vst.msk [vmem:[%s2033] sm:$0xff] %vm57, %v2031
  %2035 = vst.msk [vmem:[%s2033 + $0x8] sm:$0xff] %vm57, %v2032
  %v2036 = vmul.f32 %v2018, %v2006
  %v2037 = vmul.f32 %v2018, %v2011
  %v2038 = vmul.f32 %v2002, %v2022
  %v2039 = vmul.f32 %v2002, %v2027
  %v2040 = vsub.f32 %v2036, %v2038
  %v2041 = vsub.f32 %v2037, %v2039
  %s2042 = scalar_lea.vmem %s4, 1632
  %2043 = vst.msk [vmem:[%s2042] sm:$0xff] %vm57, %v2040
  %2044 = vst.msk [vmem:[%s2042 + $0x8] sm:$0xff] %vm57, %v2041
  %v2045 = vld [vmem:[%s0 + $0x27] sm:$0x1]
  %v2046 = vld [vmem:[%s1 + $0x27] sm:$0x1]
  %v2047 = vld [vmem:[%s2] sm:$0xff]
  %v2048 = vld [vmem:[%s2 + $0x8] sm:$0xff]
  %v2049 = vld [vmem:[%s3] sm:$0xff]
  %v2050 = vld [vmem:[%s3 + $0x8] sm:$0xff]
  %v2051 = vlaneseq
  %v2052 = vshrl.u32 %v2051, 7
  %v2053 = vsub.s32 0, %v2052
  %v2054 = vrot.slane %v2045, %v2053
  %2056 = vset.pattern.permute.xlu0 39
  %2057 = vperm.xlu0 %2056, %v2049
  %v2058 = vpop.permute.xlu0 %2057
  %2061 = vset.pattern.permute.xlu0 39
  %2062 = vperm.xlu0 %2061, %v2050
  %v2063 = vpop.permute.xlu0 %2062
  %v2065 = vmul.f32 %v2054, %v2058
  %v2066 = vmul.f32 %v2054, %v2063
  %v2067 = vlaneseq
  %v2068 = vshrl.u32 %v2067, 7
  %v2069 = vsub.s32 0, %v2068
  %v2070 = vrot.slane %v2046, %v2069
  %2072 = vset.pattern.permute.xlu0 39
  %2073 = vperm.xlu0 %2072, %v2047
  %v2074 = vpop.permute.xlu0 %2073
  %2077 = vset.pattern.permute.xlu0 39
  %2078 = vperm.xlu0 %2077, %v2048
  %v2079 = vpop.permute.xlu0 %2078
  %v2081 = vmul.f32 %v2070, %v2074
  %v2082 = vmul.f32 %v2070, %v2079
  %v2083 = vadd.f32 %v2065, %v2081
  %v2084 = vadd.f32 %v2066, %v2082
  %s2085 = scalar_lea.vmem %s4, 624
  %2086 = vst.msk [vmem:[%s2085] sm:$0xff] %vm57, %v2083
  %2087 = vst.msk [vmem:[%s2085 + $0x8] sm:$0xff] %vm57, %v2084
  %v2088 = vmul.f32 %v2070, %v2058
  %v2089 = vmul.f32 %v2070, %v2063
  %v2090 = vmul.f32 %v2054, %v2074
  %v2091 = vmul.f32 %v2054, %v2079
  %v2092 = vsub.f32 %v2088, %v2090
  %v2093 = vsub.f32 %v2089, %v2091
  %s2094 = scalar_lea.vmem %s4, 1648
  %2095 = vst.msk [vmem:[%s2094] sm:$0xff] %vm57, %v2092
  %2096 = vst.msk [vmem:[%s2094 + $0x8] sm:$0xff] %vm57, %v2093
  %v2097 = vld [vmem:[%s0 + $0x28] sm:$0x1]
  %v2098 = vld [vmem:[%s1 + $0x28] sm:$0x1]
  %v2099 = vld [vmem:[%s2] sm:$0xff]
  %v2100 = vld [vmem:[%s2 + $0x8] sm:$0xff]
  %v2101 = vld [vmem:[%s3] sm:$0xff]
  %v2102 = vld [vmem:[%s3 + $0x8] sm:$0xff]
  %v2103 = vlaneseq
  %v2104 = vshrl.u32 %v2103, 7
  %v2105 = vsub.s32 0, %v2104
  %v2106 = vrot.slane %v2097, %v2105
  %2108 = vset.pattern.permute.xlu0 40
  %2109 = vperm.xlu0 %2108, %v2101
  %v2110 = vpop.permute.xlu0 %2109
  %2113 = vset.pattern.permute.xlu0 40
  %2114 = vperm.xlu0 %2113, %v2102
  %v2115 = vpop.permute.xlu0 %2114
  %v2117 = vmul.f32 %v2106, %v2110
  %v2118 = vmul.f32 %v2106, %v2115
  %v2119 = vlaneseq
  %v2120 = vshrl.u32 %v2119, 7
  %v2121 = vsub.s32 0, %v2120
  %v2122 = vrot.slane %v2098, %v2121
  %2124 = vset.pattern.permute.xlu0 40
  %2125 = vperm.xlu0 %2124, %v2099
  %v2126 = vpop.permute.xlu0 %2125
  %2129 = vset.pattern.permute.xlu0 40
  %2130 = vperm.xlu0 %2129, %v2100
  %v2131 = vpop.permute.xlu0 %2130
  %v2133 = vmul.f32 %v2122, %v2126
  %v2134 = vmul.f32 %v2122, %v2131
  %v2135 = vadd.f32 %v2117, %v2133
  %v2136 = vadd.f32 %v2118, %v2134
  %s2137 = scalar_lea.vmem %s4, 640
  %2138 = vst.msk [vmem:[%s2137] sm:$0xff] %vm57, %v2135
  %2139 = vst.msk [vmem:[%s2137 + $0x8] sm:$0xff] %vm57, %v2136
  %v2140 = vmul.f32 %v2122, %v2110
  %v2141 = vmul.f32 %v2122, %v2115
  %v2142 = vmul.f32 %v2106, %v2126
  %v2143 = vmul.f32 %v2106, %v2131
  %v2144 = vsub.f32 %v2140, %v2142
  %v2145 = vsub.f32 %v2141, %v2143
  %s2146 = scalar_lea.vmem %s4, 1664
  %2147 = vst.msk [vmem:[%s2146] sm:$0xff] %vm57, %v2144
  %2148 = vst.msk [vmem:[%s2146 + $0x8] sm:$0xff] %vm57, %v2145
  %v2149 = vld [vmem:[%s0 + $0x29] sm:$0x1]
  %v2150 = vld [vmem:[%s1 + $0x29] sm:$0x1]
  %v2151 = vld [vmem:[%s2] sm:$0xff]
  %v2152 = vld [vmem:[%s2 + $0x8] sm:$0xff]
  %v2153 = vld [vmem:[%s3] sm:$0xff]
  %v2154 = vld [vmem:[%s3 + $0x8] sm:$0xff]
  %v2155 = vlaneseq
  %v2156 = vshrl.u32 %v2155, 7
  %v2157 = vsub.s32 0, %v2156
  %v2158 = vrot.slane %v2149, %v2157
  %2160 = vset.pattern.permute.xlu0 41
  %2161 = vperm.xlu0 %2160, %v2153
  %v2162 = vpop.permute.xlu0 %2161
  %2165 = vset.pattern.permute.xlu0 41
  %2166 = vperm.xlu0 %2165, %v2154
  %v2167 = vpop.permute.xlu0 %2166
  %v2169 = vmul.f32 %v2158, %v2162
  %v2170 = vmul.f32 %v2158, %v2167
  %v2171 = vlaneseq
  %v2172 = vshrl.u32 %v2171, 7
  %v2173 = vsub.s32 0, %v2172
  %v2174 = vrot.slane %v2150, %v2173
  %2176 = vset.pattern.permute.xlu0 41
  %2177 = vperm.xlu0 %2176, %v2151
  %v2178 = vpop.permute.xlu0 %2177
  %2181 = vset.pattern.permute.xlu0 41
  %2182 = vperm.xlu0 %2181, %v2152
  %v2183 = vpop.permute.xlu0 %2182
  %v2185 = vmul.f32 %v2174, %v2178
  %v2186 = vmul.f32 %v2174, %v2183
  %v2187 = vadd.f32 %v2169, %v2185
  %v2188 = vadd.f32 %v2170, %v2186
  %s2189 = scalar_lea.vmem %s4, 656
  %2190 = vst.msk [vmem:[%s2189] sm:$0xff] %vm57, %v2187
  %2191 = vst.msk [vmem:[%s2189 + $0x8] sm:$0xff] %vm57, %v2188
  %v2192 = vmul.f32 %v2174, %v2162
  %v2193 = vmul.f32 %v2174, %v2167
  %v2194 = vmul.f32 %v2158, %v2178
  %v2195 = vmul.f32 %v2158, %v2183
  %v2196 = vsub.f32 %v2192, %v2194
  %v2197 = vsub.f32 %v2193, %v2195
  %s2198 = scalar_lea.vmem %s4, 1680
  %2199 = vst.msk [vmem:[%s2198] sm:$0xff] %vm57, %v2196
  %2200 = vst.msk [vmem:[%s2198 + $0x8] sm:$0xff] %vm57, %v2197
  %v2201 = vld [vmem:[%s0 + $0x2a] sm:$0x1]
  %v2202 = vld [vmem:[%s1 + $0x2a] sm:$0x1]
  %v2203 = vld [vmem:[%s2] sm:$0xff]
  %v2204 = vld [vmem:[%s2 + $0x8] sm:$0xff]
  %v2205 = vld [vmem:[%s3] sm:$0xff]
  %v2206 = vld [vmem:[%s3 + $0x8] sm:$0xff]
  %v2207 = vlaneseq
  %v2208 = vshrl.u32 %v2207, 7
  %v2209 = vsub.s32 0, %v2208
  %v2210 = vrot.slane %v2201, %v2209
  %2212 = vset.pattern.permute.xlu0 42
  %2213 = vperm.xlu0 %2212, %v2205
  %v2214 = vpop.permute.xlu0 %2213
  %2217 = vset.pattern.permute.xlu0 42
  %2218 = vperm.xlu0 %2217, %v2206
  %v2219 = vpop.permute.xlu0 %2218
  %v2221 = vmul.f32 %v2210, %v2214
  %v2222 = vmul.f32 %v2210, %v2219
  %v2223 = vlaneseq
  %v2224 = vshrl.u32 %v2223, 7
  %v2225 = vsub.s32 0, %v2224
  %v2226 = vrot.slane %v2202, %v2225
  %2228 = vset.pattern.permute.xlu0 42
  %2229 = vperm.xlu0 %2228, %v2203
  %v2230 = vpop.permute.xlu0 %2229
  %2233 = vset.pattern.permute.xlu0 42
  %2234 = vperm.xlu0 %2233, %v2204
  %v2235 = vpop.permute.xlu0 %2234
  %v2237 = vmul.f32 %v2226, %v2230
  %v2238 = vmul.f32 %v2226, %v2235
  %v2239 = vadd.f32 %v2221, %v2237
  %v2240 = vadd.f32 %v2222, %v2238
  %s2241 = scalar_lea.vmem %s4, 672
  %2242 = vst.msk [vmem:[%s2241] sm:$0xff] %vm57, %v2239
  %2243 = vst.msk [vmem:[%s2241 + $0x8] sm:$0xff] %vm57, %v2240
  %v2244 = vmul.f32 %v2226, %v2214
  %v2245 = vmul.f32 %v2226, %v2219
  %v2246 = vmul.f32 %v2210, %v2230
  %v2247 = vmul.f32 %v2210, %v2235
  %v2248 = vsub.f32 %v2244, %v2246
  %v2249 = vsub.f32 %v2245, %v2247
  %s2250 = scalar_lea.vmem %s4, 1696
  %2251 = vst.msk [vmem:[%s2250] sm:$0xff] %vm57, %v2248
  %2252 = vst.msk [vmem:[%s2250 + $0x8] sm:$0xff] %vm57, %v2249
  %v2253 = vld [vmem:[%s0 + $0x2b] sm:$0x1]
  %v2254 = vld [vmem:[%s1 + $0x2b] sm:$0x1]
  %v2255 = vld [vmem:[%s2] sm:$0xff]
  %v2256 = vld [vmem:[%s2 + $0x8] sm:$0xff]
  %v2257 = vld [vmem:[%s3] sm:$0xff]
  %v2258 = vld [vmem:[%s3 + $0x8] sm:$0xff]
  %v2259 = vlaneseq
  %v2260 = vshrl.u32 %v2259, 7
  %v2261 = vsub.s32 0, %v2260
  %v2262 = vrot.slane %v2253, %v2261
  %2264 = vset.pattern.permute.xlu0 43
  %2265 = vperm.xlu0 %2264, %v2257
  %v2266 = vpop.permute.xlu0 %2265
  %2269 = vset.pattern.permute.xlu0 43
  %2270 = vperm.xlu0 %2269, %v2258
  %v2271 = vpop.permute.xlu0 %2270
  %v2273 = vmul.f32 %v2262, %v2266
  %v2274 = vmul.f32 %v2262, %v2271
  %v2275 = vlaneseq
  %v2276 = vshrl.u32 %v2275, 7
  %v2277 = vsub.s32 0, %v2276
  %v2278 = vrot.slane %v2254, %v2277
  %2280 = vset.pattern.permute.xlu0 43
  %2281 = vperm.xlu0 %2280, %v2255
  %v2282 = vpop.permute.xlu0 %2281
  %2285 = vset.pattern.permute.xlu0 43
  %2286 = vperm.xlu0 %2285, %v2256
  %v2287 = vpop.permute.xlu0 %2286
  %v2289 = vmul.f32 %v2278, %v2282
  %v2290 = vmul.f32 %v2278, %v2287
  %v2291 = vadd.f32 %v2273, %v2289
  %v2292 = vadd.f32 %v2274, %v2290
  %s2293 = scalar_lea.vmem %s4, 688
  %2294 = vst.msk [vmem:[%s2293] sm:$0xff] %vm57, %v2291
  %2295 = vst.msk [vmem:[%s2293 + $0x8] sm:$0xff] %vm57, %v2292
  %v2296 = vmul.f32 %v2278, %v2266
  %v2297 = vmul.f32 %v2278, %v2271
  %v2298 = vmul.f32 %v2262, %v2282
  %v2299 = vmul.f32 %v2262, %v2287
  %v2300 = vsub.f32 %v2296, %v2298
  %v2301 = vsub.f32 %v2297, %v2299
  %s2302 = scalar_lea.vmem %s4, 1712
  %2303 = vst.msk [vmem:[%s2302] sm:$0xff] %vm57, %v2300
  %2304 = vst.msk [vmem:[%s2302 + $0x8] sm:$0xff] %vm57, %v2301
  %v2305 = vld [vmem:[%s0 + $0x2c] sm:$0x1]
  %v2306 = vld [vmem:[%s1 + $0x2c] sm:$0x1]
  %v2307 = vld [vmem:[%s2] sm:$0xff]
  %v2308 = vld [vmem:[%s2 + $0x8] sm:$0xff]
  %v2309 = vld [vmem:[%s3] sm:$0xff]
  %v2310 = vld [vmem:[%s3 + $0x8] sm:$0xff]
  %v2311 = vlaneseq
  %v2312 = vshrl.u32 %v2311, 7
  %v2313 = vsub.s32 0, %v2312
  %v2314 = vrot.slane %v2305, %v2313
  %2316 = vset.pattern.permute.xlu0 44
  %2317 = vperm.xlu0 %2316, %v2309
  %v2318 = vpop.permute.xlu0 %2317
  %2321 = vset.pattern.permute.xlu0 44
  %2322 = vperm.xlu0 %2321, %v2310
  %v2323 = vpop.permute.xlu0 %2322
  %v2325 = vmul.f32 %v2314, %v2318
  %v2326 = vmul.f32 %v2314, %v2323
  %v2327 = vlaneseq
  %v2328 = vshrl.u32 %v2327, 7
  %v2329 = vsub.s32 0, %v2328
  %v2330 = vrot.slane %v2306, %v2329
  %2332 = vset.pattern.permute.xlu0 44
  %2333 = vperm.xlu0 %2332, %v2307
  %v2334 = vpop.permute.xlu0 %2333
  %2337 = vset.pattern.permute.xlu0 44
  %2338 = vperm.xlu0 %2337, %v2308
  %v2339 = vpop.permute.xlu0 %2338
  %v2341 = vmul.f32 %v2330, %v2334
  %v2342 = vmul.f32 %v2330, %v2339
  %v2343 = vadd.f32 %v2325, %v2341
  %v2344 = vadd.f32 %v2326, %v2342
  %s2345 = scalar_lea.vmem %s4, 704
  %2346 = vst.msk [vmem:[%s2345] sm:$0xff] %vm57, %v2343
  %2347 = vst.msk [vmem:[%s2345 + $0x8] sm:$0xff] %vm57, %v2344
  %v2348 = vmul.f32 %v2330, %v2318
  %v2349 = vmul.f32 %v2330, %v2323
  %v2350 = vmul.f32 %v2314, %v2334
  %v2351 = vmul.f32 %v2314, %v2339
  %v2352 = vsub.f32 %v2348, %v2350
  %v2353 = vsub.f32 %v2349, %v2351
  %s2354 = scalar_lea.vmem %s4, 1728
  %2355 = vst.msk [vmem:[%s2354] sm:$0xff] %vm57, %v2352
  %2356 = vst.msk [vmem:[%s2354 + $0x8] sm:$0xff] %vm57, %v2353
  %v2357 = vld [vmem:[%s0 + $0x2d] sm:$0x1]
  %v2358 = vld [vmem:[%s1 + $0x2d] sm:$0x1]
  %v2359 = vld [vmem:[%s2] sm:$0xff]
  %v2360 = vld [vmem:[%s2 + $0x8] sm:$0xff]
  %v2361 = vld [vmem:[%s3] sm:$0xff]
  %v2362 = vld [vmem:[%s3 + $0x8] sm:$0xff]
  %v2363 = vlaneseq
  %v2364 = vshrl.u32 %v2363, 7
  %v2365 = vsub.s32 0, %v2364
  %v2366 = vrot.slane %v2357, %v2365
  %2368 = vset.pattern.permute.xlu0 45
  %2369 = vperm.xlu0 %2368, %v2361
  %v2370 = vpop.permute.xlu0 %2369
  %2373 = vset.pattern.permute.xlu0 45
  %2374 = vperm.xlu0 %2373, %v2362
  %v2375 = vpop.permute.xlu0 %2374
  %v2377 = vmul.f32 %v2366, %v2370
  %v2378 = vmul.f32 %v2366, %v2375
  %v2379 = vlaneseq
  %v2380 = vshrl.u32 %v2379, 7
  %v2381 = vsub.s32 0, %v2380
  %v2382 = vrot.slane %v2358, %v2381
  %2384 = vset.pattern.permute.xlu0 45
  %2385 = vperm.xlu0 %2384, %v2359
  %v2386 = vpop.permute.xlu0 %2385
  %2389 = vset.pattern.permute.xlu0 45
  %2390 = vperm.xlu0 %2389, %v2360
  %v2391 = vpop.permute.xlu0 %2390
  %v2393 = vmul.f32 %v2382, %v2386
  %v2394 = vmul.f32 %v2382, %v2391
  %v2395 = vadd.f32 %v2377, %v2393
  %v2396 = vadd.f32 %v2378, %v2394
  %s2397 = scalar_lea.vmem %s4, 720
  %2398 = vst.msk [vmem:[%s2397] sm:$0xff] %vm57, %v2395
  %2399 = vst.msk [vmem:[%s2397 + $0x8] sm:$0xff] %vm57, %v2396
  %v2400 = vmul.f32 %v2382, %v2370
  %v2401 = vmul.f32 %v2382, %v2375
  %v2402 = vmul.f32 %v2366, %v2386
  %v2403 = vmul.f32 %v2366, %v2391
  %v2404 = vsub.f32 %v2400, %v2402
  %v2405 = vsub.f32 %v2401, %v2403
  %s2406 = scalar_lea.vmem %s4, 1744
  %2407 = vst.msk [vmem:[%s2406] sm:$0xff] %vm57, %v2404
  %2408 = vst.msk [vmem:[%s2406 + $0x8] sm:$0xff] %vm57, %v2405
  %v2409 = vld [vmem:[%s0 + $0x2e] sm:$0x1]
  %v2410 = vld [vmem:[%s1 + $0x2e] sm:$0x1]
  %v2411 = vld [vmem:[%s2] sm:$0xff]
  %v2412 = vld [vmem:[%s2 + $0x8] sm:$0xff]
  %v2413 = vld [vmem:[%s3] sm:$0xff]
  %v2414 = vld [vmem:[%s3 + $0x8] sm:$0xff]
  %v2415 = vlaneseq
  %v2416 = vshrl.u32 %v2415, 7
  %v2417 = vsub.s32 0, %v2416
  %v2418 = vrot.slane %v2409, %v2417
  %2420 = vset.pattern.permute.xlu0 46
  %2421 = vperm.xlu0 %2420, %v2413
  %v2422 = vpop.permute.xlu0 %2421
  %2425 = vset.pattern.permute.xlu0 46
  %2426 = vperm.xlu0 %2425, %v2414
  %v2427 = vpop.permute.xlu0 %2426
  %v2429 = vmul.f32 %v2418, %v2422
  %v2430 = vmul.f32 %v2418, %v2427
  %v2431 = vlaneseq
  %v2432 = vshrl.u32 %v2431, 7
  %v2433 = vsub.s32 0, %v2432
  %v2434 = vrot.slane %v2410, %v2433
  %2436 = vset.pattern.permute.xlu0 46
  %2437 = vperm.xlu0 %2436, %v2411
  %v2438 = vpop.permute.xlu0 %2437
  %2441 = vset.pattern.permute.xlu0 46
  %2442 = vperm.xlu0 %2441, %v2412
  %v2443 = vpop.permute.xlu0 %2442
  %v2445 = vmul.f32 %v2434, %v2438
  %v2446 = vmul.f32 %v2434, %v2443
  %v2447 = vadd.f32 %v2429, %v2445
  %v2448 = vadd.f32 %v2430, %v2446
  %s2449 = scalar_lea.vmem %s4, 736
  %2450 = vst.msk [vmem:[%s2449] sm:$0xff] %vm57, %v2447
  %2451 = vst.msk [vmem:[%s2449 + $0x8] sm:$0xff] %vm57, %v2448
  %v2452 = vmul.f32 %v2434, %v2422
  %v2453 = vmul.f32 %v2434, %v2427
  %v2454 = vmul.f32 %v2418, %v2438
  %v2455 = vmul.f32 %v2418, %v2443
  %v2456 = vsub.f32 %v2452, %v2454
  %v2457 = vsub.f32 %v2453, %v2455
  %s2458 = scalar_lea.vmem %s4, 1760
  %2459 = vst.msk [vmem:[%s2458] sm:$0xff] %vm57, %v2456
  %2460 = vst.msk [vmem:[%s2458 + $0x8] sm:$0xff] %vm57, %v2457
  %v2461 = vld [vmem:[%s0 + $0x2f] sm:$0x1]
  %v2462 = vld [vmem:[%s1 + $0x2f] sm:$0x1]
  %v2463 = vld [vmem:[%s2] sm:$0xff]
  %v2464 = vld [vmem:[%s2 + $0x8] sm:$0xff]
  %v2465 = vld [vmem:[%s3] sm:$0xff]
  %v2466 = vld [vmem:[%s3 + $0x8] sm:$0xff]
  %v2467 = vlaneseq
  %v2468 = vshrl.u32 %v2467, 7
  %v2469 = vsub.s32 0, %v2468
  %v2470 = vrot.slane %v2461, %v2469
  %2472 = vset.pattern.permute.xlu0 47
  %2473 = vperm.xlu0 %2472, %v2465
  %v2474 = vpop.permute.xlu0 %2473
  %2477 = vset.pattern.permute.xlu0 47
  %2478 = vperm.xlu0 %2477, %v2466
  %v2479 = vpop.permute.xlu0 %2478
  %v2481 = vmul.f32 %v2470, %v2474
  %v2482 = vmul.f32 %v2470, %v2479
  %v2483 = vlaneseq
  %v2484 = vshrl.u32 %v2483, 7
  %v2485 = vsub.s32 0, %v2484
  %v2486 = vrot.slane %v2462, %v2485
  %2488 = vset.pattern.permute.xlu0 47
  %2489 = vperm.xlu0 %2488, %v2463
  %v2490 = vpop.permute.xlu0 %2489
  %2493 = vset.pattern.permute.xlu0 47
  %2494 = vperm.xlu0 %2493, %v2464
  %v2495 = vpop.permute.xlu0 %2494
  %v2497 = vmul.f32 %v2486, %v2490
  %v2498 = vmul.f32 %v2486, %v2495
  %v2499 = vadd.f32 %v2481, %v2497
  %v2500 = vadd.f32 %v2482, %v2498
  %s2501 = scalar_lea.vmem %s4, 752
  %2502 = vst.msk [vmem:[%s2501] sm:$0xff] %vm57, %v2499
  %2503 = vst.msk [vmem:[%s2501 + $0x8] sm:$0xff] %vm57, %v2500
  %v2504 = vmul.f32 %v2486, %v2474
  %v2505 = vmul.f32 %v2486, %v2479
  %v2506 = vmul.f32 %v2470, %v2490
  %v2507 = vmul.f32 %v2470, %v2495
  %v2508 = vsub.f32 %v2504, %v2506
  %v2509 = vsub.f32 %v2505, %v2507
  %s2510 = scalar_lea.vmem %s4, 1776
  %2511 = vst.msk [vmem:[%s2510] sm:$0xff] %vm57, %v2508
  %2512 = vst.msk [vmem:[%s2510 + $0x8] sm:$0xff] %vm57, %v2509
  %v2513 = vld [vmem:[%s0 + $0x30] sm:$0x1]
  %v2514 = vld [vmem:[%s1 + $0x30] sm:$0x1]
  %v2515 = vld [vmem:[%s2] sm:$0xff]
  %v2516 = vld [vmem:[%s2 + $0x8] sm:$0xff]
  %v2517 = vld [vmem:[%s3] sm:$0xff]
  %v2518 = vld [vmem:[%s3 + $0x8] sm:$0xff]
  %v2519 = vlaneseq
  %v2520 = vshrl.u32 %v2519, 7
  %v2521 = vsub.s32 0, %v2520
  %v2522 = vrot.slane %v2513, %v2521
  %2524 = vset.pattern.permute.xlu0 48
  %2525 = vperm.xlu0 %2524, %v2517
  %v2526 = vpop.permute.xlu0 %2525
  %2529 = vset.pattern.permute.xlu0 48
  %2530 = vperm.xlu0 %2529, %v2518
  %v2531 = vpop.permute.xlu0 %2530
  %v2533 = vmul.f32 %v2522, %v2526
  %v2534 = vmul.f32 %v2522, %v2531
  %v2535 = vlaneseq
  %v2536 = vshrl.u32 %v2535, 7
  %v2537 = vsub.s32 0, %v2536
  %v2538 = vrot.slane %v2514, %v2537
  %2540 = vset.pattern.permute.xlu0 48
  %2541 = vperm.xlu0 %2540, %v2515
  %v2542 = vpop.permute.xlu0 %2541
  %2545 = vset.pattern.permute.xlu0 48
  %2546 = vperm.xlu0 %2545, %v2516
  %v2547 = vpop.permute.xlu0 %2546
  %v2549 = vmul.f32 %v2538, %v2542
  %v2550 = vmul.f32 %v2538, %v2547
  %v2551 = vadd.f32 %v2533, %v2549
  %v2552 = vadd.f32 %v2534, %v2550
  %s2553 = scalar_lea.vmem %s4, 768
  %2554 = vst.msk [vmem:[%s2553] sm:$0xff] %vm57, %v2551
  %2555 = vst.msk [vmem:[%s2553 + $0x8] sm:$0xff] %vm57, %v2552
  %v2556 = vmul.f32 %v2538, %v2526
  %v2557 = vmul.f32 %v2538, %v2531
  %v2558 = vmul.f32 %v2522, %v2542
  %v2559 = vmul.f32 %v2522, %v2547
  %v2560 = vsub.f32 %v2556, %v2558
  %v2561 = vsub.f32 %v2557, %v2559
  %s2562 = scalar_lea.vmem %s4, 1792
  %2563 = vst.msk [vmem:[%s2562] sm:$0xff] %vm57, %v2560
  %2564 = vst.msk [vmem:[%s2562 + $0x8] sm:$0xff] %vm57, %v2561
  %v2565 = vld [vmem:[%s0 + $0x31] sm:$0x1]
  %v2566 = vld [vmem:[%s1 + $0x31] sm:$0x1]
  %v2567 = vld [vmem:[%s2] sm:$0xff]
  %v2568 = vld [vmem:[%s2 + $0x8] sm:$0xff]
  %v2569 = vld [vmem:[%s3] sm:$0xff]
  %v2570 = vld [vmem:[%s3 + $0x8] sm:$0xff]
  %v2571 = vlaneseq
  %v2572 = vshrl.u32 %v2571, 7
  %v2573 = vsub.s32 0, %v2572
  %v2574 = vrot.slane %v2565, %v2573
  %2576 = vset.pattern.permute.xlu0 49
  %2577 = vperm.xlu0 %2576, %v2569
  %v2578 = vpop.permute.xlu0 %2577
  %2581 = vset.pattern.permute.xlu0 49
  %2582 = vperm.xlu0 %2581, %v2570
  %v2583 = vpop.permute.xlu0 %2582
  %v2585 = vmul.f32 %v2574, %v2578
  %v2586 = vmul.f32 %v2574, %v2583
  %v2587 = vlaneseq
  %v2588 = vshrl.u32 %v2587, 7
  %v2589 = vsub.s32 0, %v2588
  %v2590 = vrot.slane %v2566, %v2589
  %2592 = vset.pattern.permute.xlu0 49
  %2593 = vperm.xlu0 %2592, %v2567
  %v2594 = vpop.permute.xlu0 %2593
  %2597 = vset.pattern.permute.xlu0 49
  %2598 = vperm.xlu0 %2597, %v2568
  %v2599 = vpop.permute.xlu0 %2598
  %v2601 = vmul.f32 %v2590, %v2594
  %v2602 = vmul.f32 %v2590, %v2599
  %v2603 = vadd.f32 %v2585, %v2601
  %v2604 = vadd.f32 %v2586, %v2602
  %s2605 = scalar_lea.vmem %s4, 784
  %2606 = vst.msk [vmem:[%s2605] sm:$0xff] %vm57, %v2603
  %2607 = vst.msk [vmem:[%s2605 + $0x8] sm:$0xff] %vm57, %v2604
  %v2608 = vmul.f32 %v2590, %v2578
  %v2609 = vmul.f32 %v2590, %v2583
  %v2610 = vmul.f32 %v2574, %v2594
  %v2611 = vmul.f32 %v2574, %v2599
  %v2612 = vsub.f32 %v2608, %v2610
  %v2613 = vsub.f32 %v2609, %v2611
  %s2614 = scalar_lea.vmem %s4, 1808
  %2615 = vst.msk [vmem:[%s2614] sm:$0xff] %vm57, %v2612
  %2616 = vst.msk [vmem:[%s2614 + $0x8] sm:$0xff] %vm57, %v2613
  %v2617 = vld [vmem:[%s0 + $0x32] sm:$0x1]
  %v2618 = vld [vmem:[%s1 + $0x32] sm:$0x1]
  %v2619 = vld [vmem:[%s2] sm:$0xff]
  %v2620 = vld [vmem:[%s2 + $0x8] sm:$0xff]
  %v2621 = vld [vmem:[%s3] sm:$0xff]
  %v2622 = vld [vmem:[%s3 + $0x8] sm:$0xff]
  %v2623 = vlaneseq
  %v2624 = vshrl.u32 %v2623, 7
  %v2625 = vsub.s32 0, %v2624
  %v2626 = vrot.slane %v2617, %v2625
  %2628 = vset.pattern.permute.xlu0 50
  %2629 = vperm.xlu0 %2628, %v2621
  %v2630 = vpop.permute.xlu0 %2629
  %2633 = vset.pattern.permute.xlu0 50
  %2634 = vperm.xlu0 %2633, %v2622
  %v2635 = vpop.permute.xlu0 %2634
  %v2637 = vmul.f32 %v2626, %v2630
  %v2638 = vmul.f32 %v2626, %v2635
  %v2639 = vlaneseq
  %v2640 = vshrl.u32 %v2639, 7
  %v2641 = vsub.s32 0, %v2640
  %v2642 = vrot.slane %v2618, %v2641
  %2644 = vset.pattern.permute.xlu0 50
  %2645 = vperm.xlu0 %2644, %v2619
  %v2646 = vpop.permute.xlu0 %2645
  %2649 = vset.pattern.permute.xlu0 50
  %2650 = vperm.xlu0 %2649, %v2620
  %v2651 = vpop.permute.xlu0 %2650
  %v2653 = vmul.f32 %v2642, %v2646
  %v2654 = vmul.f32 %v2642, %v2651
  %v2655 = vadd.f32 %v2637, %v2653
  %v2656 = vadd.f32 %v2638, %v2654
  %s2657 = scalar_lea.vmem %s4, 800
  %2658 = vst.msk [vmem:[%s2657] sm:$0xff] %vm57, %v2655
  %2659 = vst.msk [vmem:[%s2657 + $0x8] sm:$0xff] %vm57, %v2656
  %v2660 = vmul.f32 %v2642, %v2630
  %v2661 = vmul.f32 %v2642, %v2635
  %v2662 = vmul.f32 %v2626, %v2646
  %v2663 = vmul.f32 %v2626, %v2651
  %v2664 = vsub.f32 %v2660, %v2662
  %v2665 = vsub.f32 %v2661, %v2663
  %s2666 = scalar_lea.vmem %s4, 1824
  %2667 = vst.msk [vmem:[%s2666] sm:$0xff] %vm57, %v2664
  %2668 = vst.msk [vmem:[%s2666 + $0x8] sm:$0xff] %vm57, %v2665
  %v2669 = vld [vmem:[%s0 + $0x33] sm:$0x1]
  %v2670 = vld [vmem:[%s1 + $0x33] sm:$0x1]
  %v2671 = vld [vmem:[%s2] sm:$0xff]
  %v2672 = vld [vmem:[%s2 + $0x8] sm:$0xff]
  %v2673 = vld [vmem:[%s3] sm:$0xff]
  %v2674 = vld [vmem:[%s3 + $0x8] sm:$0xff]
  %v2675 = vlaneseq
  %v2676 = vshrl.u32 %v2675, 7
  %v2677 = vsub.s32 0, %v2676
  %v2678 = vrot.slane %v2669, %v2677
  %2680 = vset.pattern.permute.xlu0 51
  %2681 = vperm.xlu0 %2680, %v2673
  %v2682 = vpop.permute.xlu0 %2681
  %2685 = vset.pattern.permute.xlu0 51
  %2686 = vperm.xlu0 %2685, %v2674
  %v2687 = vpop.permute.xlu0 %2686
  %v2689 = vmul.f32 %v2678, %v2682
  %v2690 = vmul.f32 %v2678, %v2687
  %v2691 = vlaneseq
  %v2692 = vshrl.u32 %v2691, 7
  %v2693 = vsub.s32 0, %v2692
  %v2694 = vrot.slane %v2670, %v2693
  %2696 = vset.pattern.permute.xlu0 51
  %2697 = vperm.xlu0 %2696, %v2671
  %v2698 = vpop.permute.xlu0 %2697
  %2701 = vset.pattern.permute.xlu0 51
  %2702 = vperm.xlu0 %2701, %v2672
  %v2703 = vpop.permute.xlu0 %2702
  %v2705 = vmul.f32 %v2694, %v2698
  %v2706 = vmul.f32 %v2694, %v2703
  %v2707 = vadd.f32 %v2689, %v2705
  %v2708 = vadd.f32 %v2690, %v2706
  %s2709 = scalar_lea.vmem %s4, 816
  %2710 = vst.msk [vmem:[%s2709] sm:$0xff] %vm57, %v2707
  %2711 = vst.msk [vmem:[%s2709 + $0x8] sm:$0xff] %vm57, %v2708
  %v2712 = vmul.f32 %v2694, %v2682
  %v2713 = vmul.f32 %v2694, %v2687
  %v2714 = vmul.f32 %v2678, %v2698
  %v2715 = vmul.f32 %v2678, %v2703
  %v2716 = vsub.f32 %v2712, %v2714
  %v2717 = vsub.f32 %v2713, %v2715
  %s2718 = scalar_lea.vmem %s4, 1840
  %2719 = vst.msk [vmem:[%s2718] sm:$0xff] %vm57, %v2716
  %2720 = vst.msk [vmem:[%s2718 + $0x8] sm:$0xff] %vm57, %v2717
  %v2721 = vld [vmem:[%s0 + $0x34] sm:$0x1]
  %v2722 = vld [vmem:[%s1 + $0x34] sm:$0x1]
  %v2723 = vld [vmem:[%s2] sm:$0xff]
  %v2724 = vld [vmem:[%s2 + $0x8] sm:$0xff]
  %v2725 = vld [vmem:[%s3] sm:$0xff]
  %v2726 = vld [vmem:[%s3 + $0x8] sm:$0xff]
  %v2727 = vlaneseq
  %v2728 = vshrl.u32 %v2727, 7
  %v2729 = vsub.s32 0, %v2728
  %v2730 = vrot.slane %v2721, %v2729
  %2732 = vset.pattern.permute.xlu0 52
  %2733 = vperm.xlu0 %2732, %v2725
  %v2734 = vpop.permute.xlu0 %2733
  %2737 = vset.pattern.permute.xlu0 52
  %2738 = vperm.xlu0 %2737, %v2726
  %v2739 = vpop.permute.xlu0 %2738
  %v2741 = vmul.f32 %v2730, %v2734
  %v2742 = vmul.f32 %v2730, %v2739
  %v2743 = vlaneseq
  %v2744 = vshrl.u32 %v2743, 7
  %v2745 = vsub.s32 0, %v2744
  %v2746 = vrot.slane %v2722, %v2745
  %2748 = vset.pattern.permute.xlu0 52
  %2749 = vperm.xlu0 %2748, %v2723
  %v2750 = vpop.permute.xlu0 %2749
  %2753 = vset.pattern.permute.xlu0 52
  %2754 = vperm.xlu0 %2753, %v2724
  %v2755 = vpop.permute.xlu0 %2754
  %v2757 = vmul.f32 %v2746, %v2750
  %v2758 = vmul.f32 %v2746, %v2755
  %v2759 = vadd.f32 %v2741, %v2757
  %v2760 = vadd.f32 %v2742, %v2758
  %s2761 = scalar_lea.vmem %s4, 832
  %2762 = vst.msk [vmem:[%s2761] sm:$0xff] %vm57, %v2759
  %2763 = vst.msk [vmem:[%s2761 + $0x8] sm:$0xff] %vm57, %v2760
  %v2764 = vmul.f32 %v2746, %v2734
  %v2765 = vmul.f32 %v2746, %v2739
  %v2766 = vmul.f32 %v2730, %v2750
  %v2767 = vmul.f32 %v2730, %v2755
  %v2768 = vsub.f32 %v2764, %v2766
  %v2769 = vsub.f32 %v2765, %v2767
  %s2770 = scalar_lea.vmem %s4, 1856
  %2771 = vst.msk [vmem:[%s2770] sm:$0xff] %vm57, %v2768
  %2772 = vst.msk [vmem:[%s2770 + $0x8] sm:$0xff] %vm57, %v2769
  %v2773 = vld [vmem:[%s0 + $0x35] sm:$0x1]
  %v2774 = vld [vmem:[%s1 + $0x35] sm:$0x1]
  %v2775 = vld [vmem:[%s2] sm:$0xff]
  %v2776 = vld [vmem:[%s2 + $0x8] sm:$0xff]
  %v2777 = vld [vmem:[%s3] sm:$0xff]
  %v2778 = vld [vmem:[%s3 + $0x8] sm:$0xff]
  %v2779 = vlaneseq
  %v2780 = vshrl.u32 %v2779, 7
  %v2781 = vsub.s32 0, %v2780
  %v2782 = vrot.slane %v2773, %v2781
  %2784 = vset.pattern.permute.xlu0 53
  %2785 = vperm.xlu0 %2784, %v2777
  %v2786 = vpop.permute.xlu0 %2785
  %2789 = vset.pattern.permute.xlu0 53
  %2790 = vperm.xlu0 %2789, %v2778
  %v2791 = vpop.permute.xlu0 %2790
  %v2793 = vmul.f32 %v2782, %v2786
  %v2794 = vmul.f32 %v2782, %v2791
  %v2795 = vlaneseq
  %v2796 = vshrl.u32 %v2795, 7
  %v2797 = vsub.s32 0, %v2796
  %v2798 = vrot.slane %v2774, %v2797
  %2800 = vset.pattern.permute.xlu0 53
  %2801 = vperm.xlu0 %2800, %v2775
  %v2802 = vpop.permute.xlu0 %2801
  %2805 = vset.pattern.permute.xlu0 53
  %2806 = vperm.xlu0 %2805, %v2776
  %v2807 = vpop.permute.xlu0 %2806
  %v2809 = vmul.f32 %v2798, %v2802
  %v2810 = vmul.f32 %v2798, %v2807
  %v2811 = vadd.f32 %v2793, %v2809
  %v2812 = vadd.f32 %v2794, %v2810
  %s2813 = scalar_lea.vmem %s4, 848
  %2814 = vst.msk [vmem:[%s2813] sm:$0xff] %vm57, %v2811
  %2815 = vst.msk [vmem:[%s2813 + $0x8] sm:$0xff] %vm57, %v2812
  %v2816 = vmul.f32 %v2798, %v2786
  %v2817 = vmul.f32 %v2798, %v2791
  %v2818 = vmul.f32 %v2782, %v2802
  %v2819 = vmul.f32 %v2782, %v2807
  %v2820 = vsub.f32 %v2816, %v2818
  %v2821 = vsub.f32 %v2817, %v2819
  %s2822 = scalar_lea.vmem %s4, 1872
  %2823 = vst.msk [vmem:[%s2822] sm:$0xff] %vm57, %v2820
  %2824 = vst.msk [vmem:[%s2822 + $0x8] sm:$0xff] %vm57, %v2821
  %v2825 = vld [vmem:[%s0 + $0x36] sm:$0x1]
  %v2826 = vld [vmem:[%s1 + $0x36] sm:$0x1]
  %v2827 = vld [vmem:[%s2] sm:$0xff]
  %v2828 = vld [vmem:[%s2 + $0x8] sm:$0xff]
  %v2829 = vld [vmem:[%s3] sm:$0xff]
  %v2830 = vld [vmem:[%s3 + $0x8] sm:$0xff]
  %v2831 = vlaneseq
  %v2832 = vshrl.u32 %v2831, 7
  %v2833 = vsub.s32 0, %v2832
  %v2834 = vrot.slane %v2825, %v2833
  %2836 = vset.pattern.permute.xlu0 54
  %2837 = vperm.xlu0 %2836, %v2829
  %v2838 = vpop.permute.xlu0 %2837
  %2841 = vset.pattern.permute.xlu0 54
  %2842 = vperm.xlu0 %2841, %v2830
  %v2843 = vpop.permute.xlu0 %2842
  %v2845 = vmul.f32 %v2834, %v2838
  %v2846 = vmul.f32 %v2834, %v2843
  %v2847 = vlaneseq
  %v2848 = vshrl.u32 %v2847, 7
  %v2849 = vsub.s32 0, %v2848
  %v2850 = vrot.slane %v2826, %v2849
  %2852 = vset.pattern.permute.xlu0 54
  %2853 = vperm.xlu0 %2852, %v2827
  %v2854 = vpop.permute.xlu0 %2853
  %2857 = vset.pattern.permute.xlu0 54
  %2858 = vperm.xlu0 %2857, %v2828
  %v2859 = vpop.permute.xlu0 %2858
  %v2861 = vmul.f32 %v2850, %v2854
  %v2862 = vmul.f32 %v2850, %v2859
  %v2863 = vadd.f32 %v2845, %v2861
  %v2864 = vadd.f32 %v2846, %v2862
  %s2865 = scalar_lea.vmem %s4, 864
  %2866 = vst.msk [vmem:[%s2865] sm:$0xff] %vm57, %v2863
  %2867 = vst.msk [vmem:[%s2865 + $0x8] sm:$0xff] %vm57, %v2864
  %v2868 = vmul.f32 %v2850, %v2838
  %v2869 = vmul.f32 %v2850, %v2843
  %v2870 = vmul.f32 %v2834, %v2854
  %v2871 = vmul.f32 %v2834, %v2859
  %v2872 = vsub.f32 %v2868, %v2870
  %v2873 = vsub.f32 %v2869, %v2871
  %s2874 = scalar_lea.vmem %s4, 1888
  %2875 = vst.msk [vmem:[%s2874] sm:$0xff] %vm57, %v2872
  %2876 = vst.msk [vmem:[%s2874 + $0x8] sm:$0xff] %vm57, %v2873
  %v2877 = vld [vmem:[%s0 + $0x37] sm:$0x1]
  %v2878 = vld [vmem:[%s1 + $0x37] sm:$0x1]
  %v2879 = vld [vmem:[%s2] sm:$0xff]
  %v2880 = vld [vmem:[%s2 + $0x8] sm:$0xff]
  %v2881 = vld [vmem:[%s3] sm:$0xff]
  %v2882 = vld [vmem:[%s3 + $0x8] sm:$0xff]
  %v2883 = vlaneseq
  %v2884 = vshrl.u32 %v2883, 7
  %v2885 = vsub.s32 0, %v2884
  %v2886 = vrot.slane %v2877, %v2885
  %2888 = vset.pattern.permute.xlu0 55
  %2889 = vperm.xlu0 %2888, %v2881
  %v2890 = vpop.permute.xlu0 %2889
  %2893 = vset.pattern.permute.xlu0 55
  %2894 = vperm.xlu0 %2893, %v2882
  %v2895 = vpop.permute.xlu0 %2894
  %v2897 = vmul.f32 %v2886, %v2890
  %v2898 = vmul.f32 %v2886, %v2895
  %v2899 = vlaneseq
  %v2900 = vshrl.u32 %v2899, 7
  %v2901 = vsub.s32 0, %v2900
  %v2902 = vrot.slane %v2878, %v2901
  %2904 = vset.pattern.permute.xlu0 55
  %2905 = vperm.xlu0 %2904, %v2879
  %v2906 = vpop.permute.xlu0 %2905
  %2909 = vset.pattern.permute.xlu0 55
  %2910 = vperm.xlu0 %2909, %v2880
  %v2911 = vpop.permute.xlu0 %2910
  %v2913 = vmul.f32 %v2902, %v2906
  %v2914 = vmul.f32 %v2902, %v2911
  %v2915 = vadd.f32 %v2897, %v2913
  %v2916 = vadd.f32 %v2898, %v2914
  %s2917 = scalar_lea.vmem %s4, 880
  %2918 = vst.msk [vmem:[%s2917] sm:$0xff] %vm57, %v2915
  %2919 = vst.msk [vmem:[%s2917 + $0x8] sm:$0xff] %vm57, %v2916
  %v2920 = vmul.f32 %v2902, %v2890
  %v2921 = vmul.f32 %v2902, %v2895
  %v2922 = vmul.f32 %v2886, %v2906
  %v2923 = vmul.f32 %v2886, %v2911
  %v2924 = vsub.f32 %v2920, %v2922
  %v2925 = vsub.f32 %v2921, %v2923
  %s2926 = scalar_lea.vmem %s4, 1904
  %2927 = vst.msk [vmem:[%s2926] sm:$0xff] %vm57, %v2924
  %2928 = vst.msk [vmem:[%s2926 + $0x8] sm:$0xff] %vm57, %v2925
  %v2929 = vld [vmem:[%s0 + $0x38] sm:$0x1]
  %v2930 = vld [vmem:[%s1 + $0x38] sm:$0x1]
  %v2931 = vld [vmem:[%s2] sm:$0xff]
  %v2932 = vld [vmem:[%s2 + $0x8] sm:$0xff]
  %v2933 = vld [vmem:[%s3] sm:$0xff]
  %v2934 = vld [vmem:[%s3 + $0x8] sm:$0xff]
  %v2935 = vlaneseq
  %v2936 = vshrl.u32 %v2935, 7
  %v2937 = vsub.s32 0, %v2936
  %v2938 = vrot.slane %v2929, %v2937
  %2940 = vset.pattern.permute.xlu0 56
  %2941 = vperm.xlu0 %2940, %v2933
  %v2942 = vpop.permute.xlu0 %2941
  %2945 = vset.pattern.permute.xlu0 56
  %2946 = vperm.xlu0 %2945, %v2934
  %v2947 = vpop.permute.xlu0 %2946
  %v2949 = vmul.f32 %v2938, %v2942
  %v2950 = vmul.f32 %v2938, %v2947
  %v2951 = vlaneseq
  %v2952 = vshrl.u32 %v2951, 7
  %v2953 = vsub.s32 0, %v2952
  %v2954 = vrot.slane %v2930, %v2953
  %2956 = vset.pattern.permute.xlu0 56
  %2957 = vperm.xlu0 %2956, %v2931
  %v2958 = vpop.permute.xlu0 %2957
  %2961 = vset.pattern.permute.xlu0 56
  %2962 = vperm.xlu0 %2961, %v2932
  %v2963 = vpop.permute.xlu0 %2962
  %v2965 = vmul.f32 %v2954, %v2958
  %v2966 = vmul.f32 %v2954, %v2963
  %v2967 = vadd.f32 %v2949, %v2965
  %v2968 = vadd.f32 %v2950, %v2966
  %s2969 = scalar_lea.vmem %s4, 896
  %2970 = vst.msk [vmem:[%s2969] sm:$0xff] %vm57, %v2967
  %2971 = vst.msk [vmem:[%s2969 + $0x8] sm:$0xff] %vm57, %v2968
  %v2972 = vmul.f32 %v2954, %v2942
  %v2973 = vmul.f32 %v2954, %v2947
  %v2974 = vmul.f32 %v2938, %v2958
  %v2975 = vmul.f32 %v2938, %v2963
  %v2976 = vsub.f32 %v2972, %v2974
  %v2977 = vsub.f32 %v2973, %v2975
  %s2978 = scalar_lea.vmem %s4, 1920
  %2979 = vst.msk [vmem:[%s2978] sm:$0xff] %vm57, %v2976
  %2980 = vst.msk [vmem:[%s2978 + $0x8] sm:$0xff] %vm57, %v2977
  %v2981 = vld [vmem:[%s0 + $0x39] sm:$0x1]
  %v2982 = vld [vmem:[%s1 + $0x39] sm:$0x1]
  %v2983 = vld [vmem:[%s2] sm:$0xff]
  %v2984 = vld [vmem:[%s2 + $0x8] sm:$0xff]
  %v2985 = vld [vmem:[%s3] sm:$0xff]
  %v2986 = vld [vmem:[%s3 + $0x8] sm:$0xff]
  %v2987 = vlaneseq
  %v2988 = vshrl.u32 %v2987, 7
  %v2989 = vsub.s32 0, %v2988
  %v2990 = vrot.slane %v2981, %v2989
  %2992 = vset.pattern.permute.xlu0 57
  %2993 = vperm.xlu0 %2992, %v2985
  %v2994 = vpop.permute.xlu0 %2993
  %2997 = vset.pattern.permute.xlu0 57
  %2998 = vperm.xlu0 %2997, %v2986
  %v2999 = vpop.permute.xlu0 %2998
  %v3001 = vmul.f32 %v2990, %v2994
  %v3002 = vmul.f32 %v2990, %v2999
  %v3003 = vlaneseq
  %v3004 = vshrl.u32 %v3003, 7
  %v3005 = vsub.s32 0, %v3004
  %v3006 = vrot.slane %v2982, %v3005
  %3008 = vset.pattern.permute.xlu0 57
  %3009 = vperm.xlu0 %3008, %v2983
  %v3010 = vpop.permute.xlu0 %3009
  %3013 = vset.pattern.permute.xlu0 57
  %3014 = vperm.xlu0 %3013, %v2984
  %v3015 = vpop.permute.xlu0 %3014
  %v3017 = vmul.f32 %v3006, %v3010
  %v3018 = vmul.f32 %v3006, %v3015
  %v3019 = vadd.f32 %v3001, %v3017
  %v3020 = vadd.f32 %v3002, %v3018
  %s3021 = scalar_lea.vmem %s4, 912
  %3022 = vst.msk [vmem:[%s3021] sm:$0xff] %vm57, %v3019
  %3023 = vst.msk [vmem:[%s3021 + $0x8] sm:$0xff] %vm57, %v3020
  %v3024 = vmul.f32 %v3006, %v2994
  %v3025 = vmul.f32 %v3006, %v2999
  %v3026 = vmul.f32 %v2990, %v3010
  %v3027 = vmul.f32 %v2990, %v3015
  %v3028 = vsub.f32 %v3024, %v3026
  %v3029 = vsub.f32 %v3025, %v3027
  %s3030 = scalar_lea.vmem %s4, 1936
  %3031 = vst.msk [vmem:[%s3030] sm:$0xff] %vm57, %v3028
  %3032 = vst.msk [vmem:[%s3030 + $0x8] sm:$0xff] %vm57, %v3029
  %v3033 = vld [vmem:[%s0 + $0x3a] sm:$0x1]
  %v3034 = vld [vmem:[%s1 + $0x3a] sm:$0x1]
  %v3035 = vld [vmem:[%s2] sm:$0xff]
  %v3036 = vld [vmem:[%s2 + $0x8] sm:$0xff]
  %v3037 = vld [vmem:[%s3] sm:$0xff]
  %v3038 = vld [vmem:[%s3 + $0x8] sm:$0xff]
  %v3039 = vlaneseq
  %v3040 = vshrl.u32 %v3039, 7
  %v3041 = vsub.s32 0, %v3040
  %v3042 = vrot.slane %v3033, %v3041
  %3044 = vset.pattern.permute.xlu0 58
  %3045 = vperm.xlu0 %3044, %v3037
  %v3046 = vpop.permute.xlu0 %3045
  %3049 = vset.pattern.permute.xlu0 58
  %3050 = vperm.xlu0 %3049, %v3038
  %v3051 = vpop.permute.xlu0 %3050
  %v3053 = vmul.f32 %v3042, %v3046
  %v3054 = vmul.f32 %v3042, %v3051
  %v3055 = vlaneseq
  %v3056 = vshrl.u32 %v3055, 7
  %v3057 = vsub.s32 0, %v3056
  %v3058 = vrot.slane %v3034, %v3057
  %3060 = vset.pattern.permute.xlu0 58
  %3061 = vperm.xlu0 %3060, %v3035
  %v3062 = vpop.permute.xlu0 %3061
  %3065 = vset.pattern.permute.xlu0 58
  %3066 = vperm.xlu0 %3065, %v3036
  %v3067 = vpop.permute.xlu0 %3066
  %v3069 = vmul.f32 %v3058, %v3062
  %v3070 = vmul.f32 %v3058, %v3067
  %v3071 = vadd.f32 %v3053, %v3069
  %v3072 = vadd.f32 %v3054, %v3070
  %s3073 = scalar_lea.vmem %s4, 928
  %3074 = vst.msk [vmem:[%s3073] sm:$0xff] %vm57, %v3071
  %3075 = vst.msk [vmem:[%s3073 + $0x8] sm:$0xff] %vm57, %v3072
  %v3076 = vmul.f32 %v3058, %v3046
  %v3077 = vmul.f32 %v3058, %v3051
  %v3078 = vmul.f32 %v3042, %v3062
  %v3079 = vmul.f32 %v3042, %v3067
  %v3080 = vsub.f32 %v3076, %v3078
  %v3081 = vsub.f32 %v3077, %v3079
  %s3082 = scalar_lea.vmem %s4, 1952
  %3083 = vst.msk [vmem:[%s3082] sm:$0xff] %vm57, %v3080
  %3084 = vst.msk [vmem:[%s3082 + $0x8] sm:$0xff] %vm57, %v3081
  %v3085 = vld [vmem:[%s0 + $0x3b] sm:$0x1]
  %v3086 = vld [vmem:[%s1 + $0x3b] sm:$0x1]
  %v3087 = vld [vmem:[%s2] sm:$0xff]
  %v3088 = vld [vmem:[%s2 + $0x8] sm:$0xff]
  %v3089 = vld [vmem:[%s3] sm:$0xff]
  %v3090 = vld [vmem:[%s3 + $0x8] sm:$0xff]
  %v3091 = vlaneseq
  %v3092 = vshrl.u32 %v3091, 7
  %v3093 = vsub.s32 0, %v3092
  %v3094 = vrot.slane %v3085, %v3093
  %3096 = vset.pattern.permute.xlu0 59
  %3097 = vperm.xlu0 %3096, %v3089
  %v3098 = vpop.permute.xlu0 %3097
  %3101 = vset.pattern.permute.xlu0 59
  %3102 = vperm.xlu0 %3101, %v3090
  %v3103 = vpop.permute.xlu0 %3102
  %v3105 = vmul.f32 %v3094, %v3098
  %v3106 = vmul.f32 %v3094, %v3103
  %v3107 = vlaneseq
  %v3108 = vshrl.u32 %v3107, 7
  %v3109 = vsub.s32 0, %v3108
  %v3110 = vrot.slane %v3086, %v3109
  %3112 = vset.pattern.permute.xlu0 59
  %3113 = vperm.xlu0 %3112, %v3087
  %v3114 = vpop.permute.xlu0 %3113
  %3117 = vset.pattern.permute.xlu0 59
  %3118 = vperm.xlu0 %3117, %v3088
  %v3119 = vpop.permute.xlu0 %3118
  %v3121 = vmul.f32 %v3110, %v3114
  %v3122 = vmul.f32 %v3110, %v3119
  %v3123 = vadd.f32 %v3105, %v3121
  %v3124 = vadd.f32 %v3106, %v3122
  %s3125 = scalar_lea.vmem %s4, 944
  %3126 = vst.msk [vmem:[%s3125] sm:$0xff] %vm57, %v3123
  %3127 = vst.msk [vmem:[%s3125 + $0x8] sm:$0xff] %vm57, %v3124
  %v3128 = vmul.f32 %v3110, %v3098
  %v3129 = vmul.f32 %v3110, %v3103
  %v3130 = vmul.f32 %v3094, %v3114
  %v3131 = vmul.f32 %v3094, %v3119
  %v3132 = vsub.f32 %v3128, %v3130
  %v3133 = vsub.f32 %v3129, %v3131
  %s3134 = scalar_lea.vmem %s4, 1968
  %3135 = vst.msk [vmem:[%s3134] sm:$0xff] %vm57, %v3132
  %3136 = vst.msk [vmem:[%s3134 + $0x8] sm:$0xff] %vm57, %v3133
  %v3137 = vld [vmem:[%s0 + $0x3c] sm:$0x1]
  %v3138 = vld [vmem:[%s1 + $0x3c] sm:$0x1]
  %v3139 = vld [vmem:[%s2] sm:$0xff]
  %v3140 = vld [vmem:[%s2 + $0x8] sm:$0xff]
  %v3141 = vld [vmem:[%s3] sm:$0xff]
  %v3142 = vld [vmem:[%s3 + $0x8] sm:$0xff]
  %v3143 = vlaneseq
  %v3144 = vshrl.u32 %v3143, 7
  %v3145 = vsub.s32 0, %v3144
  %v3146 = vrot.slane %v3137, %v3145
  %3148 = vset.pattern.permute.xlu0 60
  %3149 = vperm.xlu0 %3148, %v3141
  %v3150 = vpop.permute.xlu0 %3149
  %3153 = vset.pattern.permute.xlu0 60
  %3154 = vperm.xlu0 %3153, %v3142
  %v3155 = vpop.permute.xlu0 %3154
  %v3157 = vmul.f32 %v3146, %v3150
  %v3158 = vmul.f32 %v3146, %v3155
  %v3159 = vlaneseq
  %v3160 = vshrl.u32 %v3159, 7
  %v3161 = vsub.s32 0, %v3160
  %v3162 = vrot.slane %v3138, %v3161
  %3164 = vset.pattern.permute.xlu0 60
  %3165 = vperm.xlu0 %3164, %v3139
  %v3166 = vpop.permute.xlu0 %3165
  %3169 = vset.pattern.permute.xlu0 60
  %3170 = vperm.xlu0 %3169, %v3140
  %v3171 = vpop.permute.xlu0 %3170
  %v3173 = vmul.f32 %v3162, %v3166
  %v3174 = vmul.f32 %v3162, %v3171
  %v3175 = vadd.f32 %v3157, %v3173
  %v3176 = vadd.f32 %v3158, %v3174
  %s3177 = scalar_lea.vmem %s4, 960
  %3178 = vst.msk [vmem:[%s3177] sm:$0xff] %vm57, %v3175
  %3179 = vst.msk [vmem:[%s3177 + $0x8] sm:$0xff] %vm57, %v3176
  %v3180 = vmul.f32 %v3162, %v3150
  %v3181 = vmul.f32 %v3162, %v3155
  %v3182 = vmul.f32 %v3146, %v3166
  %v3183 = vmul.f32 %v3146, %v3171
  %v3184 = vsub.f32 %v3180, %v3182
  %v3185 = vsub.f32 %v3181, %v3183
  %s3186 = scalar_lea.vmem %s4, 1984
  %3187 = vst.msk [vmem:[%s3186] sm:$0xff] %vm57, %v3184
  %3188 = vst.msk [vmem:[%s3186 + $0x8] sm:$0xff] %vm57, %v3185
  %v3189 = vld [vmem:[%s0 + $0x3d] sm:$0x1]
  %v3190 = vld [vmem:[%s1 + $0x3d] sm:$0x1]
  %v3191 = vld [vmem:[%s2] sm:$0xff]
  %v3192 = vld [vmem:[%s2 + $0x8] sm:$0xff]
  %v3193 = vld [vmem:[%s3] sm:$0xff]
  %v3194 = vld [vmem:[%s3 + $0x8] sm:$0xff]
  %v3195 = vlaneseq
  %v3196 = vshrl.u32 %v3195, 7
  %v3197 = vsub.s32 0, %v3196
  %v3198 = vrot.slane %v3189, %v3197
  %3200 = vset.pattern.permute.xlu0 61
  %3201 = vperm.xlu0 %3200, %v3193
  %v3202 = vpop.permute.xlu0 %3201
  %3205 = vset.pattern.permute.xlu0 61
  %3206 = vperm.xlu0 %3205, %v3194
  %v3207 = vpop.permute.xlu0 %3206
  %v3209 = vmul.f32 %v3198, %v3202
  %v3210 = vmul.f32 %v3198, %v3207
  %v3211 = vlaneseq
  %v3212 = vshrl.u32 %v3211, 7
  %v3213 = vsub.s32 0, %v3212
  %v3214 = vrot.slane %v3190, %v3213
  %3216 = vset.pattern.permute.xlu0 61
  %3217 = vperm.xlu0 %3216, %v3191
  %v3218 = vpop.permute.xlu0 %3217
  %3221 = vset.pattern.permute.xlu0 61
  %3222 = vperm.xlu0 %3221, %v3192
  %v3223 = vpop.permute.xlu0 %3222
  %v3225 = vmul.f32 %v3214, %v3218
  %v3226 = vmul.f32 %v3214, %v3223
  %v3227 = vadd.f32 %v3209, %v3225
  %v3228 = vadd.f32 %v3210, %v3226
  %s3229 = scalar_lea.vmem %s4, 976
  %3230 = vst.msk [vmem:[%s3229] sm:$0xff] %vm57, %v3227
  %3231 = vst.msk [vmem:[%s3229 + $0x8] sm:$0xff] %vm57, %v3228
  %v3232 = vmul.f32 %v3214, %v3202
  %v3233 = vmul.f32 %v3214, %v3207
  %v3234 = vmul.f32 %v3198, %v3218
  %v3235 = vmul.f32 %v3198, %v3223
  %v3236 = vsub.f32 %v3232, %v3234
  %v3237 = vsub.f32 %v3233, %v3235
  %s3238 = scalar_lea.vmem %s4, 2000
  %3239 = vst.msk [vmem:[%s3238] sm:$0xff] %vm57, %v3236
  %3240 = vst.msk [vmem:[%s3238 + $0x8] sm:$0xff] %vm57, %v3237
  %v3241 = vld [vmem:[%s0 + $0x3e] sm:$0x1]
  %v3242 = vld [vmem:[%s1 + $0x3e] sm:$0x1]
  %v3243 = vld [vmem:[%s2] sm:$0xff]
  %v3244 = vld [vmem:[%s2 + $0x8] sm:$0xff]
  %v3245 = vld [vmem:[%s3] sm:$0xff]
  %v3246 = vld [vmem:[%s3 + $0x8] sm:$0xff]
  %v3247 = vlaneseq
  %v3248 = vshrl.u32 %v3247, 7
  %v3249 = vsub.s32 0, %v3248
  %v3250 = vrot.slane %v3241, %v3249
  %3252 = vset.pattern.permute.xlu0 62
  %3253 = vperm.xlu0 %3252, %v3245
  %v3254 = vpop.permute.xlu0 %3253
  %3257 = vset.pattern.permute.xlu0 62
  %3258 = vperm.xlu0 %3257, %v3246
  %v3259 = vpop.permute.xlu0 %3258
  %v3261 = vmul.f32 %v3250, %v3254
  %v3262 = vmul.f32 %v3250, %v3259
  %v3263 = vlaneseq
  %v3264 = vshrl.u32 %v3263, 7
  %v3265 = vsub.s32 0, %v3264
  %v3266 = vrot.slane %v3242, %v3265
  %3268 = vset.pattern.permute.xlu0 62
  %3269 = vperm.xlu0 %3268, %v3243
  %v3270 = vpop.permute.xlu0 %3269
  %3273 = vset.pattern.permute.xlu0 62
  %3274 = vperm.xlu0 %3273, %v3244
  %v3275 = vpop.permute.xlu0 %3274
  %v3277 = vmul.f32 %v3266, %v3270
  %v3278 = vmul.f32 %v3266, %v3275
  %v3279 = vadd.f32 %v3261, %v3277
  %v3280 = vadd.f32 %v3262, %v3278
  %s3281 = scalar_lea.vmem %s4, 992
  %3282 = vst.msk [vmem:[%s3281] sm:$0xff] %vm57, %v3279
  %3283 = vst.msk [vmem:[%s3281 + $0x8] sm:$0xff] %vm57, %v3280
  %v3284 = vmul.f32 %v3266, %v3254
  %v3285 = vmul.f32 %v3266, %v3259
  %v3286 = vmul.f32 %v3250, %v3270
  %v3287 = vmul.f32 %v3250, %v3275
  %v3288 = vsub.f32 %v3284, %v3286
  %v3289 = vsub.f32 %v3285, %v3287
  %s3290 = scalar_lea.vmem %s4, 2016
  %3291 = vst.msk [vmem:[%s3290] sm:$0xff] %vm57, %v3288
  %3292 = vst.msk [vmem:[%s3290 + $0x8] sm:$0xff] %vm57, %v3289
  %v3293 = vld [vmem:[%s0 + $0x3f] sm:$0x1]
  %v3294 = vld [vmem:[%s1 + $0x3f] sm:$0x1]
  %v3295 = vld [vmem:[%s2] sm:$0xff]
  %v3296 = vld [vmem:[%s2 + $0x8] sm:$0xff]
  %v3297 = vld [vmem:[%s3] sm:$0xff]
  %v3298 = vld [vmem:[%s3 + $0x8] sm:$0xff]
  %v3299 = vlaneseq
  %v3300 = vshrl.u32 %v3299, 7
  %v3301 = vsub.s32 0, %v3300
  %v3302 = vrot.slane %v3293, %v3301
  %3304 = vset.pattern.permute.xlu0 63
  %3305 = vperm.xlu0 %3304, %v3297
  %v3306 = vpop.permute.xlu0 %3305
  %3309 = vset.pattern.permute.xlu0 63
  %3310 = vperm.xlu0 %3309, %v3298
  %v3311 = vpop.permute.xlu0 %3310
  %v3313 = vmul.f32 %v3302, %v3306
  %v3314 = vmul.f32 %v3302, %v3311
  %v3315 = vlaneseq
  %v3316 = vshrl.u32 %v3315, 7
  %v3317 = vsub.s32 0, %v3316
  %v3318 = vrot.slane %v3294, %v3317
  %3320 = vset.pattern.permute.xlu0 63
  %3321 = vperm.xlu0 %3320, %v3295
  %v3322 = vpop.permute.xlu0 %3321
  %3325 = vset.pattern.permute.xlu0 63
  %3326 = vperm.xlu0 %3325, %v3296
  %v3327 = vpop.permute.xlu0 %3326
  %v3329 = vmul.f32 %v3318, %v3322
  %v3330 = vmul.f32 %v3318, %v3327
  %v3331 = vadd.f32 %v3313, %v3329
  %v3332 = vadd.f32 %v3314, %v3330
  %s3333 = scalar_lea.vmem %s4, 1008
  %3334 = vst.msk [vmem:[%s3333] sm:$0xff] %vm57, %v3331
  %3335 = vst.msk [vmem:[%s3333 + $0x8] sm:$0xff] %vm57, %v3332
  %v3336 = vmul.f32 %v3318, %v3306
  %v3337 = vmul.f32 %v3318, %v3311
  %v3338 = vmul.f32 %v3302, %v3322
  %v3339 = vmul.f32 %v3302, %v3327
  %v3340 = vsub.f32 %v3336, %v3338
  %v3341 = vsub.f32 %v3337, %v3339
  %s3342 = scalar_lea.vmem %s4, 2032
  %3343 = vst.msk [vmem:[%s3342] sm:$0xff] %vm57, %v3340
  %3344 = vst.msk [vmem:[%s3342 + $0x8] sm:$0xff] %vm57, %v3341
  // Predicated region
  $region18: #{tpu_custom_call.1} parent=0 // pred_check
    _
  $region19: #{tpu_custom_call.1} parent=0 // pred_check_branch
    %3346 = sbr.rel (0) target = $region21
  $region20: #{tpu_custom_call.1} parent=0 // pred_region
    _
  $region21: #{tpu_custom_call.1} parent=0 // pred_fallthru
    _
  // Predicated region
  $region22: #{tpu_custom_call.1} parent=0 // pred_check
    _
  $region23: #{tpu_custom_call.1} parent=0 // pred_check_branch
    %3348 = sbr.rel (0) target = $region25
  $region24: #{tpu_custom_call.1} parent=0 // pred_region
    _
  $region25: #{tpu_custom_call.1} parent=0 // pred_fallthru
    _

</llo_original>
